<compile_context>
chip_gen: v7x
topology: tpu7x:2x2x1
jax: 0.10.0
libtpu: 0.0.40
codegen_flags: <defaults>
</compile_context>

<pallas_src>
import functools
import math

import jax
import jax.numpy as jnp
from jax.experimental import pallas as pl
from jax.experimental.pallas import tpu as pltpu


# ---------------------------------------------------------------------------
# Static per-block geometry
# ---------------------------------------------------------------------------
def _block_geometry(b, h, w, cin, cout, k, stride, padding, pool):
    # TODO(synk): conv stride > 1 would need strided in-kernel gathers; the module's
    # demo config uses stride=1, which is all the fused kernel implements.
    if stride != 1:
        raise NotImplementedError("fused Pallas CNN kernel supports conv stride == 1")
    hout = (h + 2 * padding - k) // stride + 1
    wout = (w + 2 * padding - k) // stride + 1
    return dict(B=b, Hin=h, Win=w, Cin=cin, Cout=cout, K=k, P=padding, POOL=pool,
                Hout=hout, Wout=wout, Hp=hout // pool, Wp=wout // pool)


def _pooled_hw(h, w, k, stride, padding, pool):
    ho = (h + 2 * padding - k) // stride + 1
    wo = (w + 2 * padding - k) // stride + 1
    return ho // pool, wo // pool


# ---------------------------------------------------------------------------
# Fused whole-network kernel (built per static geometry)
# ---------------------------------------------------------------------------
def _make_fused_kernel(blocks):
    n = len(blocks)

    def kernel(*refs):
        # ---- unpack refs: inputs, output, scratch ----------------------------
        x_ref = refs[0]
        pos = 1
        conv_refs = []
        for _ in range(n):
            conv_refs.append((refs[pos], refs[pos + 1]))
            pos += 2
        w1_ref, b1_ref, w2_ref, b2_ref = refs[pos:pos + 4]
        pos += 4
        o_ref = refs[pos]
        pos += 1
        scr = []
        for _ in range(n):
            scr.append((refs[pos], refs[pos + 1], refs[pos + 2]))
            pos += 3
        flat_ref = refs[pos]

        # ---- conv blocks: Conv + BN(folded) + ReLU + MaxPool, all in VMEM -----
        for bi, g in enumerate(blocks):
            w_ref, b_ref = conv_refs[bi]
            pad_ref, cols_ref, yh_ref = scr[bi]
            B, Hin, Win, Cin = g["B"], g["Hin"], g["Win"], g["Cin"]
            Cout, k, p, pool = g["Cout"], g["K"], g["P"], g["POOL"]
            Hout, Wout, Hp, Wp = g["Hout"], g["Wout"], g["Hp"], g["Wp"]

            if bi == 0:
                # Stage the NHWC input into the zero-padded scratch.
                if p > 0:
                    pad_ref[...] = jnp.zeros_like(pad_ref)
                pad_ref[:, p:p + Hin, p:p + Win, :] = x_ref[...]
            # for bi > 0 the previous block already filled pad_ref (incl. zero border)

            # In-kernel im2col: feature order (kh, kw, cin).  Every copy is a static
            # unit-stride VMEM slice; Wout % 8 == 0 makes the collapse reshape free.
            for kh in range(k):
                for kw in range(k):
                    slab = pad_ref[:, kh:kh + Hout, kw:kw + Wout, :]
                    slab = slab.reshape(B * Hout * Wout, Cin)
                    j0 = (kh * k + kw) * Cin
                    cols_ref[:, j0:j0 + Cin] = slab

            # One MXU matmul per block against the BatchNorm-folded conv weight.
            z = jnp.dot(cols_ref[...], w_ref[...],
                        preferred_element_type=jnp.float32)        # (B*Hout*Wout, Cout)

            # MaxPool over rows (H) via a free leading-dim reshape; bias + ReLU are
            # hoisted after the max (they commute with it) and applied once.
            z = z.reshape(B, Hout, Wout, Cout)
            if Hout != Hp * pool:
                z = z[:, :Hp * pool]                               # MaxPool floor crop
            z = z.reshape(B, Hp, pool, Wout, Cout)
            yh = z[:, :, 0]
            for t in range(1, pool):
                yh = jnp.maximum(yh, z[:, :, t])
            yh = jnp.maximum(yh + b_ref[...], 0.0)                 # folded bias + ReLU
            yh_ref[...] = yh                                       # (B, Hp, Wout, Cout)

            if bi != n - 1:
                # MaxPool over columns (W) and write the pooled activation straight
                # into the NEXT block's padded scratch -- no HBM round-trip.
                ng = blocks[bi + 1]
                npad_ref = scr[bi + 1][0]
                np_ = ng["P"]
                if np_ > 0:
                    npad_ref[...] = jnp.zeros_like(npad_ref)
                for j in range(Wp):
                    col = yh_ref[:, :, pool * j, :]
                    for t in range(1, pool):
                        col = jnp.maximum(col, yh_ref[:, :, pool * j + t, :])
                    npad_ref[:, np_:np_ + Hp, np_ + j, :] = col    # (B, Hp, Cout)
            else:
                # Last block: W-pool + flatten directly into the head's lane-dense
                # (B, F) buffer (the NCHW flatten permutation is folded into W1).
                for i in range(Hp):
                    for j in range(Wp):
                        px = yh_ref[:, i, pool * j, :]
                        for t in range(1, pool):
                            px = jnp.maximum(px, yh_ref[:, i, pool * j + t, :])
                        f0 = (i * Wp + j) * Cout
                        flat_ref[:, f0:f0 + Cout] = px             # (B, Cout)
            # TODO(synk): Dropout is inference-mode identity; train-mode RNG masking
            # is not implemented.

        # ---- classifier head: Flatten -> Linear -> ReLU -> Linear -> Sigmoid ---
        h = jnp.dot(flat_ref[...], w1_ref[...],
                    preferred_element_type=jnp.float32) + b1_ref[...]
        h = jnp.maximum(h, 0.0)
        y = jnp.dot(h, w2_ref[...], preferred_element_type=jnp.float32) + b2_ref[...]
        o_ref[...] = 1.0 / (1.0 + jnp.exp(-y))

    return kernel


def _full_spec(shape):
    nd = len(shape)

    def idx(i):
        return (0,) * nd

    return pl.BlockSpec(shape, idx)


# ---------------------------------------------------------------------------
# Forward pass: trace-time weight folding + ONE pallas_call
# ---------------------------------------------------------------------------
def cnn_forward(params, x, *, specs):
    k = specs["kernel_size_conv"]
    pool = specs["kernel_size_pool"]
    stride = specs["stride"]
    padding = specs["padding"]
    eps = 1e-5                                    # PyTorch BatchNorm2d default
    n = specs["num_conv_layers"]
    l1 = specs["l1"]

    B, c0, H, W = x.shape
    x_nhwc = jnp.transpose(x, (0, 2, 3, 1))       # the only layout glue left

    # Static geometry for every block.
    blocks = []
    h, w, cin = H, W, c0
    for i in range(n):
        cout = params["blocks"][i]["conv_w"].shape[0]
        g = _block_geometry(B, h, w, cin, cout, k, stride, padding, pool)
        blocks.append(g)
        h, w, cin = g["Hp"], g["Wp"], cout

    # Fold BatchNorm (eval mode) into conv weight/bias; K rows ordered (kh, kw, cin).
    conv_args = []
    for i, g in enumerate(blocks):
        blk = params["blocks"][i]
        cout = g["Cout"]
        scale = blk["bn_gamma"] / jnp.sqrt(blk["bn_var"] + eps)
        w_fold = (jnp.transpose(blk["conv_w"], (2, 3, 1, 0))
                  .reshape(g["K"] * g["K"] * g["Cin"], cout) * scale[None, :])
        b_fold = ((blk["conv_b"] - blk["bn_mean"]) * scale
                  + blk["bn_beta"]).reshape(1, cout)
        conv_args += [w_fold, b_fold]

    # Fold the NCHW flatten permutation into the first linear weight (rows -> (i, j, c)).
    gl = blocks[-1]
    c2, hp2, wp2 = gl["Cout"], gl["Hp"], gl["Wp"]
    feat = c2 * hp2 * wp2
    w1p = (params["l1_w"].reshape(c2, hp2, wp2, l1)
           .transpose(1, 2, 0, 3).reshape(feat, l1))
    head_args = [w1p, params["l1_b"], params["l2_w"], params["l2_b"]]

    inputs = [x_nhwc] + conv_args + head_args

    scratch = []
    for g in blocks:
        scratch += [
            pltpu.VMEM((g["B"], g["Hin"] + 2 * g["P"], g["Win"] + 2 * g["P"], g["Cin"]),
                       jnp.float32),                                   # padded input
            pltpu.VMEM((g["B"] * g["Hout"] * g["Wout"], g["K"] * g["K"] * g["Cin"]),
                       jnp.float32),                                   # im2col rows
            pltpu.VMEM((g["B"], g["Hp"], g["Wout"], g["Cout"]), jnp.float32),  # H-pooled
        ]
    scratch.append(pltpu.VMEM((B, feat), jnp.float32))                 # flatten buffer

    out = pl.pallas_call(
        _make_fused_kernel(blocks),
        out_shape=jax.ShapeDtypeStruct((B, 1), jnp.float32),
        grid=(1,),
        in_specs=[_full_spec(a.shape) for a in inputs],
        out_specs=_full_spec((B, 1)),
        scratch_shapes=scratch,
        compiler_params=pltpu.CompilerParams(dimension_semantics=("arbitrary",)),
    )(*inputs)
    return out


# ---------------------------------------------------------------------------
# Pure-JAX reference (self-check only)
# ---------------------------------------------------------------------------
def cnn_forward_reference(params, x, *, specs):
    k = specs["kernel_size_conv"]
    pool = specs["kernel_size_pool"]
    stride = specs["stride"]
    padding = specs["padding"]
    eps = 1e-5
    y = x
    for blk in params["blocks"]:
        y = jax.lax.conv_general_dilated(
            y, blk["conv_w"], window_strides=(stride, stride),
            padding=[(padding, padding), (padding, padding)],
            dimension_numbers=("NCHW", "OIHW", "NCHW"))
        y = y + blk["conv_b"][None, :, None, None]
        scale = blk["bn_gamma"] / jnp.sqrt(blk["bn_var"] + eps)
        y = ((y - blk["bn_mean"][None, :, None, None]) * scale[None, :, None, None]
             + blk["bn_beta"][None, :, None, None])
        y = jnp.maximum(y, 0.0)
        y = jax.lax.reduce_window(y, -jnp.inf, jax.lax.max,
                                  (1, 1, pool, pool), (1, 1, pool, pool), "VALID")
    flat = y.reshape(y.shape[0], -1)
    h = jnp.maximum(flat @ params["l1_w"] + params["l1_b"], 0.0)
    return jax.nn.sigmoid(h @ params["l2_w"] + params["l2_b"])


# ---------------------------------------------------------------------------
# Parameter init (deterministic, synthetic — no checkpoint loading)
# ---------------------------------------------------------------------------
def init_params(key, specs, img):
    n = specs["num_conv_layers"]
    k = specs["kernel_size_conv"]
    keys = iter(jax.random.split(key, 2 * n + 4))
    params = {"blocks": []}
    h = w = img
    for i in range(n):
        cin, cout = specs[f"c{i}"], specs[f"c{i + 1}"]
        fan_in = cin * k * k
        params["blocks"].append({
            "conv_w": jax.random.normal(next(keys), (cout, cin, k, k), jnp.float32)
                      / math.sqrt(fan_in),
            "conv_b": 0.01 * jax.random.normal(next(keys), (cout,), jnp.float32),
            "bn_gamma": jnp.ones((cout,), jnp.float32),
            "bn_beta": jnp.zeros((cout,), jnp.float32),
            "bn_mean": jnp.zeros((cout,), jnp.float32),
            "bn_var": jnp.ones((cout,), jnp.float32),
        })
        h, w = _pooled_hw(h, w, k, specs["stride"], specs["padding"],
                          specs["kernel_size_pool"])
    feat = specs[f"c{n}"] * h * w          # analytic replacement for calculate_output_size()
    l1 = specs["l1"]
    params["l1_w"] = jax.random.normal(next(keys), (feat, l1), jnp.float32) / math.sqrt(feat)
    params["l1_b"] = jnp.zeros((1, l1), jnp.float32)
    params["l2_w"] = jax.random.normal(next(keys), (l1, 1), jnp.float32) / math.sqrt(l1)
    params["l2_b"] = jnp.zeros((1, 1), jnp.float32)
    return params


# ---------------------------------------------------------------------------
if __name__ == "__main__":
    # 2 conv blocks: 1 -> 8 -> 16 channels, conv k=3 s=1 p=1, maxpool k=2,
    # image 16x16 -> 8x8 -> 4x4, flatten 16*4*4 = 256 -> Linear(32) -> Linear(1).
    specs = {
        "num_conv_layers": 2,
        "c0": 1, "c1": 8, "c2": 16,
        "kernel_size_conv": 3,
        "kernel_size_pool": 2,
        "stride": 1,
        "padding": 1,
        "dropout_prob": 0.1,
        "l1": 32,
    }
    B, IMG = 2, 16

    key = jax.random.PRNGKey(0)
    pkey, xkey = jax.random.split(key)
    params = init_params(pkey, specs, img=IMG)
    x = jax.random.normal(xkey, (B, specs["c0"], IMG, IMG), jnp.float32)   # NCHW

    fwd = jax.jit(functools.partial(cnn_forward, specs=specs))
    out = jax.block_until_ready(fwd(params, x))

    ref = jax.block_until_ready(
        jax.jit(functools.partial(cnn_forward_reference, specs=specs))(params, x))

    assert out.shape == (B, 1)
    assert bool(jnp.all(jnp.isfinite(out)))
    assert bool(jnp.all((out >= 0.0) & (out <= 1.0)))
    assert bool(jnp.allclose(out, ref, atol=2e-3)), (out, ref)
    print("KERNEL_OK")
</pallas_src>

<mosaic_0001>
module attributes {stable_mosaic.version = 11 : i64} {
  func.func @kernel(%arg0: i32, %arg1: memref<2x16x16x1xf32, #tpu.memory_space<vmem>>, %arg2: memref<9x8xf32, #tpu.memory_space<vmem>>, %arg3: memref<1x8xf32, #tpu.memory_space<vmem>>, %arg4: memref<72x16xf32, #tpu.memory_space<vmem>>, %arg5: memref<1x16xf32, #tpu.memory_space<vmem>>, %arg6: memref<256x32xf32, #tpu.memory_space<vmem>>, %arg7: memref<1x32xf32, #tpu.memory_space<vmem>>, %arg8: memref<32x1xf32, #tpu.memory_space<vmem>>, %arg9: memref<1x1xf32, #tpu.memory_space<vmem>>, %arg10: memref<2x1xf32, #tpu.memory_space<vmem>>, %arg11: memref<2x18x18x1xf32, #tpu.memory_space<vmem>>, %arg12: memref<512x9xf32, #tpu.memory_space<vmem>>, %arg13: memref<2x8x16x8xf32, #tpu.memory_space<vmem>>, %arg14: memref<2x10x10x8xf32, #tpu.memory_space<vmem>>, %arg15: memref<128x72xf32, #tpu.memory_space<vmem>>, %arg16: memref<2x4x8x16xf32, #tpu.memory_space<vmem>>, %arg17: memref<2x256xf32, #tpu.memory_space<vmem>>) attributes {dimension_semantics = [#tpu.dimension_semantics<arbitrary>], iteration_bounds = array<i64: 1>, scalar_prefetch = 0 : i64, scratch_operands = 7 : i64, tpu.core_type = #tpu.core_type<tc>, window_params = [{pipeline_mode = #tpu.pipeline_mode<synchronous>, transform_indices = @transform_0, window_bounds = array<i64: 2, 16, 16, 1>}, {pipeline_mode = #tpu.pipeline_mode<synchronous>, transform_indices = @transform_1, window_bounds = array<i64: 9, 8>}, {pipeline_mode = #tpu.pipeline_mode<synchronous>, transform_indices = @transform_2, window_bounds = array<i64: 1, 8>}, {pipeline_mode = #tpu.pipeline_mode<synchronous>, transform_indices = @transform_3, window_bounds = array<i64: 72, 16>}, {pipeline_mode = #tpu.pipeline_mode<synchronous>, transform_indices = @transform_4, window_bounds = array<i64: 1, 16>}, {pipeline_mode = #tpu.pipeline_mode<synchronous>, transform_indices = @transform_5, window_bounds = array<i64: 256, 32>}, {pipeline_mode = #tpu.pipeline_mode<synchronous>, transform_indices = @transform_6, window_bounds = array<i64: 1, 32>}, {pipeline_mode = #tpu.pipeline_mode<synchronous>, transform_indices = @transform_7, window_bounds = array<i64: 32, 1>}, {pipeline_mode = #tpu.pipeline_mode<synchronous>, transform_indices = @transform_8, window_bounds = array<i64: 1, 1>}, {pipeline_mode = #tpu.pipeline_mode<synchronous>, transform_indices = @transform_9, window_bounds = array<i64: 2, 1>}]} {
    %cst = arith.constant 0.000000e+00 : f32
    %0 = vector.broadcast %cst : f32 to vector<2x18x18x1xf32>
    %c0 = arith.constant 0 : index
    %c0_0 = arith.constant 0 : index
    %c0_1 = arith.constant 0 : index
    %c0_2 = arith.constant 0 : index
    %1 = vector.load %arg11[%c0, %c0_0, %c0_1, %c0_2] : memref<2x18x18x1xf32, #tpu.memory_space<vmem>>, vector<2x18x18x1xf32>
    tpu.vector_store %arg11[%c0, %c0_0, %c0_1, %c0_2], %0 {strides = array<i32>} : memref<2x18x18x1xf32, #tpu.memory_space<vmem>>, vector<2x18x18x1xf32>,
    %c0_3 = arith.constant 0 : index
    %c0_4 = arith.constant 0 : index
    %c0_5 = arith.constant 0 : index
    %c0_6 = arith.constant 0 : index
    %2 = vector.load %arg1[%c0_3, %c0_4, %c0_5, %c0_6] : memref<2x16x16x1xf32, #tpu.memory_space<vmem>>, vector<2x16x16x1xf32>
    %c0_7 = arith.constant 0 : index
    %c1 = arith.constant 1 : index
    %c1_8 = arith.constant 1 : index
    %c0_9 = arith.constant 0 : index
    %3 = vector.load %arg11[%c0_7, %c1, %c1_8, %c0_9] : memref<2x18x18x1xf32, #tpu.memory_space<vmem>>, vector<2x16x16x1xf32>
    tpu.vector_store %arg11[%c0_7, %c1, %c1_8, %c0_9], %2 {strides = array<i32>} : memref<2x18x18x1xf32, #tpu.memory_space<vmem>>, vector<2x16x16x1xf32>,
    %c0_10 = arith.constant 0 : index
    %c0_11 = arith.constant 0 : index
    %c0_12 = arith.constant 0 : index
    %c0_13 = arith.constant 0 : index
    %4 = vector.load %arg11[%c0_10, %c0_11, %c0_12, %c0_13] : memref<2x18x18x1xf32, #tpu.memory_space<vmem>>, vector<2x16x16x1xf32>
    %5 = vector.shape_cast %4 : vector<2x16x16x1xf32> to vector<512x1xf32>
    %c0_14 = arith.constant 0 : index
    %c0_15 = arith.constant 0 : index
    %6 = vector.load %arg12[%c0_14, %c0_15] : memref<512x9xf32, #tpu.memory_space<vmem>>, vector<512x1xf32>
    tpu.vector_store %arg12[%c0_14, %c0_15], %5 {strides = array<i32>} : memref<512x9xf32, #tpu.memory_space<vmem>>, vector<512x1xf32>,
    %c0_16 = arith.constant 0 : index
    %c0_17 = arith.constant 0 : index
    %c1_18 = arith.constant 1 : index
    %c0_19 = arith.constant 0 : index
    %7 = vector.load %arg11[%c0_16, %c0_17, %c1_18, %c0_19] : memref<2x18x18x1xf32, #tpu.memory_space<vmem>>, vector<2x16x16x1xf32>
    %8 = vector.shape_cast %7 : vector<2x16x16x1xf32> to vector<512x1xf32>
    %c0_20 = arith.constant 0 : index
    %c1_21 = arith.constant 1 : index
    %9 = vector.load %arg12[%c0_20, %c1_21] : memref<512x9xf32, #tpu.memory_space<vmem>>, vector<512x1xf32>
    tpu.vector_store %arg12[%c0_20, %c1_21], %8 {strides = array<i32>} : memref<512x9xf32, #tpu.memory_space<vmem>>, vector<512x1xf32>,
    %c0_22 = arith.constant 0 : index
    %c0_23 = arith.constant 0 : index
    %c2 = arith.constant 2 : index
    %c0_24 = arith.constant 0 : index
    %10 = vector.load %arg11[%c0_22, %c0_23, %c2, %c0_24] : memref<2x18x18x1xf32, #tpu.memory_space<vmem>>, vector<2x16x16x1xf32>
    %11 = vector.shape_cast %10 : vector<2x16x16x1xf32> to vector<512x1xf32>
    %c0_25 = arith.constant 0 : index
    %c2_26 = arith.constant 2 : index
    %12 = vector.load %arg12[%c0_25, %c2_26] : memref<512x9xf32, #tpu.memory_space<vmem>>, vector<512x1xf32>
    tpu.vector_store %arg12[%c0_25, %c2_26], %11 {strides = array<i32>} : memref<512x9xf32, #tpu.memory_space<vmem>>, vector<512x1xf32>,
    %c0_27 = arith.constant 0 : index
    %c1_28 = arith.constant 1 : index
    %c0_29 = arith.constant 0 : index
    %c0_30 = arith.constant 0 : index
    %13 = vector.load %arg11[%c0_27, %c1_28, %c0_29, %c0_30] : memref<2x18x18x1xf32, #tpu.memory_space<vmem>>, vector<2x16x16x1xf32>
    %14 = vector.shape_cast %13 : vector<2x16x16x1xf32> to vector<512x1xf32>
    %c0_31 = arith.constant 0 : index
    %c3 = arith.constant 3 : index
    %15 = vector.load %arg12[%c0_31, %c3] : memref<512x9xf32, #tpu.memory_space<vmem>>, vector<512x1xf32>
    tpu.vector_store %arg12[%c0_31, %c3], %14 {strides = array<i32>} : memref<512x9xf32, #tpu.memory_space<vmem>>, vector<512x1xf32>,
    %c0_32 = arith.constant 0 : index
    %c1_33 = arith.constant 1 : index
    %c1_34 = arith.constant 1 : index
    %c0_35 = arith.constant 0 : index
    %16 = vector.load %arg11[%c0_32, %c1_33, %c1_34, %c0_35] : memref<2x18x18x1xf32, #tpu.memory_space<vmem>>, vector<2x16x16x1xf32>
    %17 = vector.shape_cast %16 : vector<2x16x16x1xf32> to vector<512x1xf32>
    %c0_36 = arith.constant 0 : index
    %c4 = arith.constant 4 : index
    %18 = vector.load %arg12[%c0_36, %c4] : memref<512x9xf32, #tpu.memory_space<vmem>>, vector<512x1xf32>
    tpu.vector_store %arg12[%c0_36, %c4], %17 {strides = array<i32>} : memref<512x9xf32, #tpu.memory_space<vmem>>, vector<512x1xf32>,
    %c0_37 = arith.constant 0 : index
    %c1_38 = arith.constant 1 : index
    %c2_39 = arith.constant 2 : index
    %c0_40 = arith.constant 0 : index
    %19 = vector.load %arg11[%c0_37, %c1_38, %c2_39, %c0_40] : memref<2x18x18x1xf32, #tpu.memory_space<vmem>>, vector<2x16x16x1xf32>
    %20 = vector.shape_cast %19 : vector<2x16x16x1xf32> to vector<512x1xf32>
    %c0_41 = arith.constant 0 : index
    %c5 = arith.constant 5 : index
    %21 = vector.load %arg12[%c0_41, %c5] : memref<512x9xf32, #tpu.memory_space<vmem>>, vector<512x1xf32>
    tpu.vector_store %arg12[%c0_41, %c5], %20 {strides = array<i32>} : memref<512x9xf32, #tpu.memory_space<vmem>>, vector<512x1xf32>,
    %c0_42 = arith.constant 0 : index
    %c2_43 = arith.constant 2 : index
    %c0_44 = arith.constant 0 : index
    %c0_45 = arith.constant 0 : index
    %22 = vector.load %arg11[%c0_42, %c2_43, %c0_44, %c0_45] : memref<2x18x18x1xf32, #tpu.memory_space<vmem>>, vector<2x16x16x1xf32>
    %23 = vector.shape_cast %22 : vector<2x16x16x1xf32> to vector<512x1xf32>
    %c0_46 = arith.constant 0 : index
    %c6 = arith.constant 6 : index
    %24 = vector.load %arg12[%c0_46, %c6] : memref<512x9xf32, #tpu.memory_space<vmem>>, vector<512x1xf32>
    tpu.vector_store %arg12[%c0_46, %c6], %23 {strides = array<i32>} : memref<512x9xf32, #tpu.memory_space<vmem>>, vector<512x1xf32>,
    %c0_47 = arith.constant 0 : index
    %c2_48 = arith.constant 2 : index
    %c1_49 = arith.constant 1 : index
    %c0_50 = arith.constant 0 : index
    %25 = vector.load %arg11[%c0_47, %c2_48, %c1_49, %c0_50] : memref<2x18x18x1xf32, #tpu.memory_space<vmem>>, vector<2x16x16x1xf32>
    %26 = vector.shape_cast %25 : vector<2x16x16x1xf32> to vector<512x1xf32>
    %c0_51 = arith.constant 0 : index
    %c7 = arith.constant 7 : index
    %27 = vector.load %arg12[%c0_51, %c7] : memref<512x9xf32, #tpu.memory_space<vmem>>, vector<512x1xf32>
    tpu.vector_store %arg12[%c0_51, %c7], %26 {strides = array<i32>} : memref<512x9xf32, #tpu.memory_space<vmem>>, vector<512x1xf32>,
    %c0_52 = arith.constant 0 : index
    %c2_53 = arith.constant 2 : index
    %c2_54 = arith.constant 2 : index
    %c0_55 = arith.constant 0 : index
    %28 = vector.load %arg11[%c0_52, %c2_53, %c2_54, %c0_55] : memref<2x18x18x1xf32, #tpu.memory_space<vmem>>, vector<2x16x16x1xf32>
    %29 = vector.shape_cast %28 : vector<2x16x16x1xf32> to vector<512x1xf32>
    %c0_56 = arith.constant 0 : index
    %c8 = arith.constant 8 : index
    %30 = vector.load %arg12[%c0_56, %c8] : memref<512x9xf32, #tpu.memory_space<vmem>>, vector<512x1xf32>
    tpu.vector_store %arg12[%c0_56, %c8], %29 {strides = array<i32>} : memref<512x9xf32, #tpu.memory_space<vmem>>, vector<512x1xf32>,
    %c0_57 = arith.constant 0 : index
    %c0_58 = arith.constant 0 : index
    %31 = vector.load %arg12[%c0_57, %c0_58] : memref<512x9xf32, #tpu.memory_space<vmem>>, vector<512x9xf32>
    %c0_59 = arith.constant 0 : index
    %c0_60 = arith.constant 0 : index
    %32 = vector.load %arg2[%c0_59, %c0_60] : memref<9x8xf32, #tpu.memory_space<vmem>>, vector<9x8xf32>
    %cst_61 = arith.constant dense<0.000000e+00> : vector<512x8xf32>
    %33 = tpu.matmul %31, %32, %cst_61 {dimension_numbers = #tpu.dot_dimension_numbers<[1], [0], [0], [1], [0, 0, 1, 1], [], []>} : vector<512x9xf32>, vector<9x8xf32>, vector<512x8xf32> -> vector<512x8xf32>
    %34 = vector.shape_cast %33 : vector<512x8xf32> to vector<2x16x16x8xf32>
    %35 = vector.shape_cast %34 : vector<2x16x16x8xf32> to vector<2x8x2x16x8xf32>
    %36 = vector.extract_strided_slice %35 {offsets = [0, 0, 0, 0, 0], sizes = [2, 8, 1, 16, 8], strides = [1, 1, 1, 1, 1]} : vector<2x8x2x16x8xf32> to vector<2x8x1x16x8xf32>
    %37 = vector.shape_cast %36 : vector<2x8x1x16x8xf32> to vector<2x8x16x8xf32>
    %38 = vector.extract_strided_slice %35 {offsets = [0, 0, 1, 0, 0], sizes = [2, 8, 1, 16, 8], strides = [1, 1, 1, 1, 1]} : vector<2x8x2x16x8xf32> to vector<2x8x1x16x8xf32>
    %39 = vector.shape_cast %38 : vector<2x8x1x16x8xf32> to vector<2x8x16x8xf32>
    %40 = arith.maximumf %37, %39 : vector<2x8x16x8xf32>
    %c0_62 = arith.constant 0 : index
    %c0_63 = arith.constant 0 : index
    %41 = vector.load %arg3[%c0_62, %c0_63] : memref<1x8xf32, #tpu.memory_space<vmem>>, vector<1x8xf32>
    %42 = vector.shape_cast %41 : vector<1x8xf32> to vector<1x1x1x8xf32>
    %43 = vector.broadcast %42 : vector<1x1x1x8xf32> to vector<2x8x16x8xf32>
    %44 = arith.addf %40, %43 : vector<2x8x16x8xf32>
    %cst_64 = arith.constant 0.000000e+00 : f32
    %45 = vector.broadcast %cst_64 : f32 to vector<2x8x16x8xf32>
    %46 = arith.maximumf %44, %45 : vector<2x8x16x8xf32>
    %c0_65 = arith.constant 0 : index
    %c0_66 = arith.constant 0 : index
    %c0_67 = arith.constant 0 : index
    %c0_68 = arith.constant 0 : index
    %47 = vector.load %arg13[%c0_65, %c0_66, %c0_67, %c0_68] : memref<2x8x16x8xf32, #tpu.memory_space<vmem>>, vector<2x8x16x8xf32>
    tpu.vector_store %arg13[%c0_65, %c0_66, %c0_67, %c0_68], %46 {strides = array<i32>} : memref<2x8x16x8xf32, #tpu.memory_space<vmem>>, vector<2x8x16x8xf32>,
    %cst_69 = arith.constant 0.000000e+00 : f32
    %48 = vector.broadcast %cst_69 : f32 to vector<2x10x10x8xf32>
    %c0_70 = arith.constant 0 : index
    %c0_71 = arith.constant 0 : index
    %c0_72 = arith.constant 0 : index
    %c0_73 = arith.constant 0 : index
    %49 = vector.load %arg14[%c0_70, %c0_71, %c0_72, %c0_73] : memref<2x10x10x8xf32, #tpu.memory_space<vmem>>, vector<2x10x10x8xf32>
    tpu.vector_store %arg14[%c0_70, %c0_71, %c0_72, %c0_73], %48 {strides = array<i32>} : memref<2x10x10x8xf32, #tpu.memory_space<vmem>>, vector<2x10x10x8xf32>,
    %c0_74 = arith.constant 0 : index
    %c0_75 = arith.constant 0 : index
    %c0_76 = arith.constant 0 : index
    %c0_77 = arith.constant 0 : index
    %50 = vector.load %arg13[%c0_74, %c0_75, %c0_76, %c0_77] : memref<2x8x16x8xf32, #tpu.memory_space<vmem>>, vector<2x8x1x8xf32>
    %51 = vector.shape_cast %50 : vector<2x8x1x8xf32> to vector<2x8x8xf32>
    %c0_78 = arith.constant 0 : index
    %c0_79 = arith.constant 0 : index
    %c1_80 = arith.constant 1 : index
    %c0_81 = arith.constant 0 : index
    %52 = vector.load %arg13[%c0_78, %c0_79, %c1_80, %c0_81] : memref<2x8x16x8xf32, #tpu.memory_space<vmem>>, vector<2x8x1x8xf32>
    %53 = vector.shape_cast %52 : vector<2x8x1x8xf32> to vector<2x8x8xf32>
    %54 = arith.maximumf %51, %53 : vector<2x8x8xf32>
    %c0_82 = arith.constant 0 : index
    %c1_83 = arith.constant 1 : index
    %c1_84 = arith.constant 1 : index
    %c0_85 = arith.constant 0 : index
    %55 = vector.load %arg14[%c0_82, %c1_83, %c1_84, %c0_85] : memref<2x10x10x8xf32, #tpu.memory_space<vmem>>, vector<2x8x1x8xf32>
    %56 = vector.shape_cast %55 : vector<2x8x1x8xf32> to vector<2x8x8xf32>
    %57 = vector.shape_cast %54 : vector<2x8x8xf32> to vector<2x8x1x8xf32>
    tpu.vector_store %arg14[%c0_82, %c1_83, %c1_84, %c0_85], %57 {strides = array<i32>} : memref<2x10x10x8xf32, #tpu.memory_space<vmem>>, vector<2x8x1x8xf32>,
    %c0_86 = arith.constant 0 : index
    %c0_87 = arith.constant 0 : index
    %c2_88 = arith.constant 2 : index
    %c0_89 = arith.constant 0 : index
    %58 = vector.load %arg13[%c0_86, %c0_87, %c2_88, %c0_89] : memref<2x8x16x8xf32, #tpu.memory_space<vmem>>, vector<2x8x1x8xf32>
    %59 = vector.shape_cast %58 : vector<2x8x1x8xf32> to vector<2x8x8xf32>
    %c0_90 = arith.constant 0 : index
    %c0_91 = arith.constant 0 : index
    %c3_92 = arith.constant 3 : index
    %c0_93 = arith.constant 0 : index
    %60 = vector.load %arg13[%c0_90, %c0_91, %c3_92, %c0_93] : memref<2x8x16x8xf32, #tpu.memory_space<vmem>>, vector<2x8x1x8xf32>
    %61 = vector.shape_cast %60 : vector<2x8x1x8xf32> to vector<2x8x8xf32>
    %62 = arith.maximumf %59, %61 : vector<2x8x8xf32>
    %c0_94 = arith.constant 0 : index
    %c1_95 = arith.constant 1 : index
    %c2_96 = arith.constant 2 : index
    %c0_97 = arith.constant 0 : index
    %63 = vector.load %arg14[%c0_94, %c1_95, %c2_96, %c0_97] : memref<2x10x10x8xf32, #tpu.memory_space<vmem>>, vector<2x8x1x8xf32>
    %64 = vector.shape_cast %63 : vector<2x8x1x8xf32> to vector<2x8x8xf32>
    %65 = vector.shape_cast %62 : vector<2x8x8xf32> to vector<2x8x1x8xf32>
    tpu.vector_store %arg14[%c0_94, %c1_95, %c2_96, %c0_97], %65 {strides = array<i32>} : memref<2x10x10x8xf32, #tpu.memory_space<vmem>>, vector<2x8x1x8xf32>,
    %c0_98 = arith.constant 0 : index
    %c0_99 = arith.constant 0 : index
    %c4_100 = arith.constant 4 : index
    %c0_101 = arith.constant 0 : index
    %66 = vector.load %arg13[%c0_98, %c0_99, %c4_100, %c0_101] : memref<2x8x16x8xf32, #tpu.memory_space<vmem>>, vector<2x8x1x8xf32>
    %67 = vector.shape_cast %66 : vector<2x8x1x8xf32> to vector<2x8x8xf32>
    %c0_102 = arith.constant 0 : index
    %c0_103 = arith.constant 0 : index
    %c5_104 = arith.constant 5 : index
    %c0_105 = arith.constant 0 : index
    %68 = vector.load %arg13[%c0_102, %c0_103, %c5_104, %c0_105] : memref<2x8x16x8xf32, #tpu.memory_space<vmem>>, vector<2x8x1x8xf32>
    %69 = vector.shape_cast %68 : vector<2x8x1x8xf32> to vector<2x8x8xf32>
    %70 = arith.maximumf %67, %69 : vector<2x8x8xf32>
    %c0_106 = arith.constant 0 : index
    %c1_107 = arith.constant 1 : index
    %c3_108 = arith.constant 3 : index
    %c0_109 = arith.constant 0 : index
    %71 = vector.load %arg14[%c0_106, %c1_107, %c3_108, %c0_109] : memref<2x10x10x8xf32, #tpu.memory_space<vmem>>, vector<2x8x1x8xf32>
    %72 = vector.shape_cast %71 : vector<2x8x1x8xf32> to vector<2x8x8xf32>
    %73 = vector.shape_cast %70 : vector<2x8x8xf32> to vector<2x8x1x8xf32>
    tpu.vector_store %arg14[%c0_106, %c1_107, %c3_108, %c0_109], %73 {strides = array<i32>} : memref<2x10x10x8xf32, #tpu.memory_space<vmem>>, vector<2x8x1x8xf32>,
    %c0_110 = arith.constant 0 : index
    %c0_111 = arith.constant 0 : index
    %c6_112 = arith.constant 6 : index
    %c0_113 = arith.constant 0 : index
    %74 = vector.load %arg13[%c0_110, %c0_111, %c6_112, %c0_113] : memref<2x8x16x8xf32, #tpu.memory_space<vmem>>, vector<2x8x1x8xf32>
    %75 = vector.shape_cast %74 : vector<2x8x1x8xf32> to vector<2x8x8xf32>
    %c0_114 = arith.constant 0 : index
    %c0_115 = arith.constant 0 : index
    %c7_116 = arith.constant 7 : index
    %c0_117 = arith.constant 0 : index
    %76 = vector.load %arg13[%c0_114, %c0_115, %c7_116, %c0_117] : memref<2x8x16x8xf32, #tpu.memory_space<vmem>>, vector<2x8x1x8xf32>
    %77 = vector.shape_cast %76 : vector<2x8x1x8xf32> to vector<2x8x8xf32>
    %78 = arith.maximumf %75, %77 : vector<2x8x8xf32>
    %c0_118 = arith.constant 0 : index
    %c1_119 = arith.constant 1 : index
    %c4_120 = arith.constant 4 : index
    %c0_121 = arith.constant 0 : index
    %79 = vector.load %arg14[%c0_118, %c1_119, %c4_120, %c0_121] : memref<2x10x10x8xf32, #tpu.memory_space<vmem>>, vector<2x8x1x8xf32>
    %80 = vector.shape_cast %79 : vector<2x8x1x8xf32> to vector<2x8x8xf32>
    %81 = vector.shape_cast %78 : vector<2x8x8xf32> to vector<2x8x1x8xf32>
    tpu.vector_store %arg14[%c0_118, %c1_119, %c4_120, %c0_121], %81 {strides = array<i32>} : memref<2x10x10x8xf32, #tpu.memory_space<vmem>>, vector<2x8x1x8xf32>,
    %c0_122 = arith.constant 0 : index
    %c0_123 = arith.constant 0 : index
    %c8_124 = arith.constant 8 : index
    %c0_125 = arith.constant 0 : index
    %82 = vector.load %arg13[%c0_122, %c0_123, %c8_124, %c0_125] : memref<2x8x16x8xf32, #tpu.memory_space<vmem>>, vector<2x8x1x8xf32>
    %83 = vector.shape_cast %82 : vector<2x8x1x8xf32> to vector<2x8x8xf32>
    %c0_126 = arith.constant 0 : index
    %c0_127 = arith.constant 0 : index
    %c9 = arith.constant 9 : index
    %c0_128 = arith.constant 0 : index
    %84 = vector.load %arg13[%c0_126, %c0_127, %c9, %c0_128] : memref<2x8x16x8xf32, #tpu.memory_space<vmem>>, vector<2x8x1x8xf32>
    %85 = vector.shape_cast %84 : vector<2x8x1x8xf32> to vector<2x8x8xf32>
    %86 = arith.maximumf %83, %85 : vector<2x8x8xf32>
    %c0_129 = arith.constant 0 : index
    %c1_130 = arith.constant 1 : index
    %c5_131 = arith.constant 5 : index
    %c0_132 = arith.constant 0 : index
    %87 = vector.load %arg14[%c0_129, %c1_130, %c5_131, %c0_132] : memref<2x10x10x8xf32, #tpu.memory_space<vmem>>, vector<2x8x1x8xf32>
    %88 = vector.shape_cast %87 : vector<2x8x1x8xf32> to vector<2x8x8xf32>
    %89 = vector.shape_cast %86 : vector<2x8x8xf32> to vector<2x8x1x8xf32>
    tpu.vector_store %arg14[%c0_129, %c1_130, %c5_131, %c0_132], %89 {strides = array<i32>} : memref<2x10x10x8xf32, #tpu.memory_space<vmem>>, vector<2x8x1x8xf32>,
    %c0_133 = arith.constant 0 : index
    %c0_134 = arith.constant 0 : index
    %c10 = arith.constant 10 : index
    %c0_135 = arith.constant 0 : index
    %90 = vector.load %arg13[%c0_133, %c0_134, %c10, %c0_135] : memref<2x8x16x8xf32, #tpu.memory_space<vmem>>, vector<2x8x1x8xf32>
    %91 = vector.shape_cast %90 : vector<2x8x1x8xf32> to vector<2x8x8xf32>
    %c0_136 = arith.constant 0 : index
    %c0_137 = arith.constant 0 : index
    %c11 = arith.constant 11 : index
    %c0_138 = arith.constant 0 : index
    %92 = vector.load %arg13[%c0_136, %c0_137, %c11, %c0_138] : memref<2x8x16x8xf32, #tpu.memory_space<vmem>>, vector<2x8x1x8xf32>
    %93 = vector.shape_cast %92 : vector<2x8x1x8xf32> to vector<2x8x8xf32>
    %94 = arith.maximumf %91, %93 : vector<2x8x8xf32>
    %c0_139 = arith.constant 0 : index
    %c1_140 = arith.constant 1 : index
    %c6_141 = arith.constant 6 : index
    %c0_142 = arith.constant 0 : index
    %95 = vector.load %arg14[%c0_139, %c1_140, %c6_141, %c0_142] : memref<2x10x10x8xf32, #tpu.memory_space<vmem>>, vector<2x8x1x8xf32>
    %96 = vector.shape_cast %95 : vector<2x8x1x8xf32> to vector<2x8x8xf32>
    %97 = vector.shape_cast %94 : vector<2x8x8xf32> to vector<2x8x1x8xf32>
    tpu.vector_store %arg14[%c0_139, %c1_140, %c6_141, %c0_142], %97 {strides = array<i32>} : memref<2x10x10x8xf32, #tpu.memory_space<vmem>>, vector<2x8x1x8xf32>,
    %c0_143 = arith.constant 0 : index
    %c0_144 = arith.constant 0 : index
    %c12 = arith.constant 12 : index
    %c0_145 = arith.constant 0 : index
    %98 = vector.load %arg13[%c0_143, %c0_144, %c12, %c0_145] : memref<2x8x16x8xf32, #tpu.memory_space<vmem>>, vector<2x8x1x8xf32>
    %99 = vector.shape_cast %98 : vector<2x8x1x8xf32> to vector<2x8x8xf32>
    %c0_146 = arith.constant 0 : index
    %c0_147 = arith.constant 0 : index
    %c13 = arith.constant 13 : index
    %c0_148 = arith.constant 0 : index
    %100 = vector.load %arg13[%c0_146, %c0_147, %c13, %c0_148] : memref<2x8x16x8xf32, #tpu.memory_space<vmem>>, vector<2x8x1x8xf32>
    %101 = vector.shape_cast %100 : vector<2x8x1x8xf32> to vector<2x8x8xf32>
    %102 = arith.maximumf %99, %101 : vector<2x8x8xf32>
    %c0_149 = arith.constant 0 : index
    %c1_150 = arith.constant 1 : index
    %c7_151 = arith.constant 7 : index
    %c0_152 = arith.constant 0 : index
    %103 = vector.load %arg14[%c0_149, %c1_150, %c7_151, %c0_152] : memref<2x10x10x8xf32, #tpu.memory_space<vmem>>, vector<2x8x1x8xf32>
    %104 = vector.shape_cast %103 : vector<2x8x1x8xf32> to vector<2x8x8xf32>
    %105 = vector.shape_cast %102 : vector<2x8x8xf32> to vector<2x8x1x8xf32>
    tpu.vector_store %arg14[%c0_149, %c1_150, %c7_151, %c0_152], %105 {strides = array<i32>} : memref<2x10x10x8xf32, #tpu.memory_space<vmem>>, vector<2x8x1x8xf32>,
    %c0_153 = arith.constant 0 : index
    %c0_154 = arith.constant 0 : index
    %c14 = arith.constant 14 : index
    %c0_155 = arith.constant 0 : index
    %106 = vector.load %arg13[%c0_153, %c0_154, %c14, %c0_155] : memref<2x8x16x8xf32, #tpu.memory_space<vmem>>, vector<2x8x1x8xf32>
    %107 = vector.shape_cast %106 : vector<2x8x1x8xf32> to vector<2x8x8xf32>
    %c0_156 = arith.constant 0 : index
    %c0_157 = arith.constant 0 : index
    %c15 = arith.constant 15 : index
    %c0_158 = arith.constant 0 : index
    %108 = vector.load %arg13[%c0_156, %c0_157, %c15, %c0_158] : memref<2x8x16x8xf32, #tpu.memory_space<vmem>>, vector<2x8x1x8xf32>
    %109 = vector.shape_cast %108 : vector<2x8x1x8xf32> to vector<2x8x8xf32>
    %110 = arith.maximumf %107, %109 : vector<2x8x8xf32>
    %c0_159 = arith.constant 0 : index
    %c1_160 = arith.constant 1 : index
    %c8_161 = arith.constant 8 : index
    %c0_162 = arith.constant 0 : index
    %111 = vector.load %arg14[%c0_159, %c1_160, %c8_161, %c0_162] : memref<2x10x10x8xf32, #tpu.memory_space<vmem>>, vector<2x8x1x8xf32>
    %112 = vector.shape_cast %111 : vector<2x8x1x8xf32> to vector<2x8x8xf32>
    %113 = vector.shape_cast %110 : vector<2x8x8xf32> to vector<2x8x1x8xf32>
    tpu.vector_store %arg14[%c0_159, %c1_160, %c8_161, %c0_162], %113 {strides = array<i32>} : memref<2x10x10x8xf32, #tpu.memory_space<vmem>>, vector<2x8x1x8xf32>,
    %c0_163 = arith.constant 0 : index
    %c0_164 = arith.constant 0 : index
    %c0_165 = arith.constant 0 : index
    %c0_166 = arith.constant 0 : index
    %114 = vector.load %arg14[%c0_163, %c0_164, %c0_165, %c0_166] : memref<2x10x10x8xf32, #tpu.memory_space<vmem>>, vector<2x8x8x8xf32>
    %115 = vector.shape_cast %114 : vector<2x8x8x8xf32> to vector<128x8xf32>
    %c0_167 = arith.constant 0 : index
    %c0_168 = arith.constant 0 : index
    %116 = vector.load %arg15[%c0_167, %c0_168] : memref<128x72xf32, #tpu.memory_space<vmem>>, vector<128x8xf32>
    tpu.vector_store %arg15[%c0_167, %c0_168], %115 {strides = array<i32>} : memref<128x72xf32, #tpu.memory_space<vmem>>, vector<128x8xf32>,
    %c0_169 = arith.constant 0 : index
    %c0_170 = arith.constant 0 : index
    %c1_171 = arith.constant 1 : index
    %c0_172 = arith.constant 0 : index
    %117 = vector.load %arg14[%c0_169, %c0_170, %c1_171, %c0_172] : memref<2x10x10x8xf32, #tpu.memory_space<vmem>>, vector<2x8x8x8xf32>
    %118 = vector.shape_cast %117 : vector<2x8x8x8xf32> to vector<128x8xf32>
    %c0_173 = arith.constant 0 : index
    %c8_174 = arith.constant 8 : index
    %119 = vector.load %arg15[%c0_173, %c8_174] : memref<128x72xf32, #tpu.memory_space<vmem>>, vector<128x8xf32>
    tpu.vector_store %arg15[%c0_173, %c8_174], %118 {strides = array<i32>} : memref<128x72xf32, #tpu.memory_space<vmem>>, vector<128x8xf32>,
    %c0_175 = arith.constant 0 : index
    %c0_176 = arith.constant 0 : index
    %c2_177 = arith.constant 2 : index
    %c0_178 = arith.constant 0 : index
    %120 = vector.load %arg14[%c0_175, %c0_176, %c2_177, %c0_178] : memref<2x10x10x8xf32, #tpu.memory_space<vmem>>, vector<2x8x8x8xf32>
    %121 = vector.shape_cast %120 : vector<2x8x8x8xf32> to vector<128x8xf32>
    %c0_179 = arith.constant 0 : index
    %c16 = arith.constant 16 : index
    %122 = vector.load %arg15[%c0_179, %c16] : memref<128x72xf32, #tpu.memory_space<vmem>>, vector<128x8xf32>
    tpu.vector_store %arg15[%c0_179, %c16], %121 {strides = array<i32>} : memref<128x72xf32, #tpu.memory_space<vmem>>, vector<128x8xf32>,
    %c0_180 = arith.constant 0 : index
    %c1_181 = arith.constant 1 : index
    %c0_182 = arith.constant 0 : index
    %c0_183 = arith.constant 0 : index
    %123 = vector.load %arg14[%c0_180, %c1_181, %c0_182, %c0_183] : memref<2x10x10x8xf32, #tpu.memory_space<vmem>>, vector<2x8x8x8xf32>
    %124 = vector.shape_cast %123 : vector<2x8x8x8xf32> to vector<128x8xf32>
    %c0_184 = arith.constant 0 : index
    %c24 = arith.constant 24 : index
    %125 = vector.load %arg15[%c0_184, %c24] : memref<128x72xf32, #tpu.memory_space<vmem>>, vector<128x8xf32>
    tpu.vector_store %arg15[%c0_184, %c24], %124 {strides = array<i32>} : memref<128x72xf32, #tpu.memory_space<vmem>>, vector<128x8xf32>,
    %c0_185 = arith.constant 0 : index
    %c1_186 = arith.constant 1 : index
    %c1_187 = arith.constant 1 : index
    %c0_188 = arith.constant 0 : index
    %126 = vector.load %arg14[%c0_185, %c1_186, %c1_187, %c0_188] : memref<2x10x10x8xf32, #tpu.memory_space<vmem>>, vector<2x8x8x8xf32>
    %127 = vector.shape_cast %126 : vector<2x8x8x8xf32> to vector<128x8xf32>
    %c0_189 = arith.constant 0 : index
    %c32 = arith.constant 32 : index
    %128 = vector.load %arg15[%c0_189, %c32] : memref<128x72xf32, #tpu.memory_space<vmem>>, vector<128x8xf32>
    tpu.vector_store %arg15[%c0_189, %c32], %127 {strides = array<i32>} : memref<128x72xf32, #tpu.memory_space<vmem>>, vector<128x8xf32>,
    %c0_190 = arith.constant 0 : index
    %c1_191 = arith.constant 1 : index
    %c2_192 = arith.constant 2 : index
    %c0_193 = arith.constant 0 : index
    %129 = vector.load %arg14[%c0_190, %c1_191, %c2_192, %c0_193] : memref<2x10x10x8xf32, #tpu.memory_space<vmem>>, vector<2x8x8x8xf32>
    %130 = vector.shape_cast %129 : vector<2x8x8x8xf32> to vector<128x8xf32>
    %c0_194 = arith.constant 0 : index
    %c40 = arith.constant 40 : index
    %131 = vector.load %arg15[%c0_194, %c40] : memref<128x72xf32, #tpu.memory_space<vmem>>, vector<128x8xf32>
    tpu.vector_store %arg15[%c0_194, %c40], %130 {strides = array<i32>} : memref<128x72xf32, #tpu.memory_space<vmem>>, vector<128x8xf32>,
    %c0_195 = arith.constant 0 : index
    %c2_196 = arith.constant 2 : index
    %c0_197 = arith.constant 0 : index
    %c0_198 = arith.constant 0 : index
    %132 = vector.load %arg14[%c0_195, %c2_196, %c0_197, %c0_198] : memref<2x10x10x8xf32, #tpu.memory_space<vmem>>, vector<2x8x8x8xf32>
    %133 = vector.shape_cast %132 : vector<2x8x8x8xf32> to vector<128x8xf32>
    %c0_199 = arith.constant 0 : index
    %c48 = arith.constant 48 : index
    %134 = vector.load %arg15[%c0_199, %c48] : memref<128x72xf32, #tpu.memory_space<vmem>>, vector<128x8xf32>
    tpu.vector_store %arg15[%c0_199, %c48], %133 {strides = array<i32>} : memref<128x72xf32, #tpu.memory_space<vmem>>, vector<128x8xf32>,
    %c0_200 = arith.constant 0 : index
    %c2_201 = arith.constant 2 : index
    %c1_202 = arith.constant 1 : index
    %c0_203 = arith.constant 0 : index
    %135 = vector.load %arg14[%c0_200, %c2_201, %c1_202, %c0_203] : memref<2x10x10x8xf32, #tpu.memory_space<vmem>>, vector<2x8x8x8xf32>
    %136 = vector.shape_cast %135 : vector<2x8x8x8xf32> to vector<128x8xf32>
    %c0_204 = arith.constant 0 : index
    %c56 = arith.constant 56 : index
    %137 = vector.load %arg15[%c0_204, %c56] : memref<128x72xf32, #tpu.memory_space<vmem>>, vector<128x8xf32>
    tpu.vector_store %arg15[%c0_204, %c56], %136 {strides = array<i32>} : memref<128x72xf32, #tpu.memory_space<vmem>>, vector<128x8xf32>,
    %c0_205 = arith.constant 0 : index
    %c2_206 = arith.constant 2 : index
    %c2_207 = arith.constant 2 : index
    %c0_208 = arith.constant 0 : index
    %138 = vector.load %arg14[%c0_205, %c2_206, %c2_207, %c0_208] : memref<2x10x10x8xf32, #tpu.memory_space<vmem>>, vector<2x8x8x8xf32>
    %139 = vector.shape_cast %138 : vector<2x8x8x8xf32> to vector<128x8xf32>
    %c0_209 = arith.constant 0 : index
    %c64 = arith.constant 64 : index
    %140 = vector.load %arg15[%c0_209, %c64] : memref<128x72xf32, #tpu.memory_space<vmem>>, vector<128x8xf32>
    tpu.vector_store %arg15[%c0_209, %c64], %139 {strides = array<i32>} : memref<128x72xf32, #tpu.memory_space<vmem>>, vector<128x8xf32>,
    %c0_210 = arith.constant 0 : index
    %c0_211 = arith.constant 0 : index
    %141 = vector.load %arg15[%c0_210, %c0_211] : memref<128x72xf32, #tpu.memory_space<vmem>>, vector<128x72xf32>
    %c0_212 = arith.constant 0 : index
    %c0_213 = arith.constant 0 : index
    %142 = vector.load %arg4[%c0_212, %c0_213] : memref<72x16xf32, #tpu.memory_space<vmem>>, vector<72x16xf32>
    %cst_214 = arith.constant dense<0.000000e+00> : vector<128x16xf32>
    %143 = tpu.matmul %141, %142, %cst_214 {dimension_numbers = #tpu.dot_dimension_numbers<[1], [0], [0], [1], [0, 0, 1, 1], [], []>} : vector<128x72xf32>, vector<72x16xf32>, vector<128x16xf32> -> vector<128x16xf32>
    %144 = vector.shape_cast %143 : vector<128x16xf32> to vector<2x8x8x16xf32>
    %145 = vector.shape_cast %144 : vector<2x8x8x16xf32> to vector<2x4x2x8x16xf32>
    %146 = vector.extract_strided_slice %145 {offsets = [0, 0, 0, 0, 0], sizes = [2, 4, 1, 8, 16], strides = [1, 1, 1, 1, 1]} : vector<2x4x2x8x16xf32> to vector<2x4x1x8x16xf32>
    %147 = vector.shape_cast %146 : vector<2x4x1x8x16xf32> to vector<2x4x8x16xf32>
    %148 = vector.extract_strided_slice %145 {offsets = [0, 0, 1, 0, 0], sizes = [2, 4, 1, 8, 16], strides = [1, 1, 1, 1, 1]} : vector<2x4x2x8x16xf32> to vector<2x4x1x8x16xf32>
    %149 = vector.shape_cast %148 : vector<2x4x1x8x16xf32> to vector<2x4x8x16xf32>
    %150 = arith.maximumf %147, %149 : vector<2x4x8x16xf32>
    %c0_215 = arith.constant 0 : index
    %c0_216 = arith.constant 0 : index
    %151 = vector.load %arg5[%c0_215, %c0_216] : memref<1x16xf32, #tpu.memory_space<vmem>>, vector<1x16xf32>
    %152 = vector.shape_cast %151 : vector<1x16xf32> to vector<1x1x1x16xf32>
    %153 = vector.broadcast %152 : vector<1x1x1x16xf32> to vector<2x4x8x16xf32>
    %154 = arith.addf %150, %153 : vector<2x4x8x16xf32>
    %cst_217 = arith.constant 0.000000e+00 : f32
    %155 = vector.broadcast %cst_217 : f32 to vector<2x4x8x16xf32>
    %156 = arith.maximumf %154, %155 : vector<2x4x8x16xf32>
    %c0_218 = arith.constant 0 : index
    %c0_219 = arith.constant 0 : index
    %c0_220 = arith.constant 0 : index
    %c0_221 = arith.constant 0 : index
    %157 = vector.load %arg16[%c0_218, %c0_219, %c0_220, %c0_221] : memref<2x4x8x16xf32, #tpu.memory_space<vmem>>, vector<2x4x8x16xf32>
    tpu.vector_store %arg16[%c0_218, %c0_219, %c0_220, %c0_221], %156 {strides = array<i32>} : memref<2x4x8x16xf32, #tpu.memory_space<vmem>>, vector<2x4x8x16xf32>,
    %c0_222 = arith.constant 0 : index
    %c0_223 = arith.constant 0 : index
    %c0_224 = arith.constant 0 : index
    %c0_225 = arith.constant 0 : index
    %158 = vector.load %arg16[%c0_222, %c0_223, %c0_224, %c0_225] : memref<2x4x8x16xf32, #tpu.memory_space<vmem>>, vector<2x1x1x16xf32>
    %159 = vector.shape_cast %158 : vector<2x1x1x16xf32> to vector<2x16xf32>
    %c0_226 = arith.constant 0 : index
    %c0_227 = arith.constant 0 : index
    %c1_228 = arith.constant 1 : index
    %c0_229 = arith.constant 0 : index
    %160 = vector.load %arg16[%c0_226, %c0_227, %c1_228, %c0_229] : memref<2x4x8x16xf32, #tpu.memory_space<vmem>>, vector<2x1x1x16xf32>
    %161 = vector.shape_cast %160 : vector<2x1x1x16xf32> to vector<2x16xf32>
    %162 = arith.maximumf %159, %161 : vector<2x16xf32>
    %c0_230 = arith.constant 0 : index
    %c0_231 = arith.constant 0 : index
    %163 = vector.load %arg17[%c0_230, %c0_231] : memref<2x256xf32, #tpu.memory_space<vmem>>, vector<2x16xf32>
    tpu.vector_store %arg17[%c0_230, %c0_231], %162 {strides = array<i32>} : memref<2x256xf32, #tpu.memory_space<vmem>>, vector<2x16xf32>,
    %c0_232 = arith.constant 0 : index
    %c0_233 = arith.constant 0 : index
    %c2_234 = arith.constant 2 : index
    %c0_235 = arith.constant 0 : index
    %164 = vector.load %arg16[%c0_232, %c0_233, %c2_234, %c0_235] : memref<2x4x8x16xf32, #tpu.memory_space<vmem>>, vector<2x1x1x16xf32>
    %165 = vector.shape_cast %164 : vector<2x1x1x16xf32> to vector<2x16xf32>
    %c0_236 = arith.constant 0 : index
    %c0_237 = arith.constant 0 : index
    %c3_238 = arith.constant 3 : index
    %c0_239 = arith.constant 0 : index
    %166 = vector.load %arg16[%c0_236, %c0_237, %c3_238, %c0_239] : memref<2x4x8x16xf32, #tpu.memory_space<vmem>>, vector<2x1x1x16xf32>
    %167 = vector.shape_cast %166 : vector<2x1x1x16xf32> to vector<2x16xf32>
    %168 = arith.maximumf %165, %167 : vector<2x16xf32>
    %c0_240 = arith.constant 0 : index
    %c16_241 = arith.constant 16 : index
    %169 = vector.load %arg17[%c0_240, %c16_241] : memref<2x256xf32, #tpu.memory_space<vmem>>, vector<2x16xf32>
    tpu.vector_store %arg17[%c0_240, %c16_241], %168 {strides = array<i32>} : memref<2x256xf32, #tpu.memory_space<vmem>>, vector<2x16xf32>,
    %c0_242 = arith.constant 0 : index
    %c0_243 = arith.constant 0 : index
    %c4_244 = arith.constant 4 : index
    %c0_245 = arith.constant 0 : index
    %170 = vector.load %arg16[%c0_242, %c0_243, %c4_244, %c0_245] : memref<2x4x8x16xf32, #tpu.memory_space<vmem>>, vector<2x1x1x16xf32>
    %171 = vector.shape_cast %170 : vector<2x1x1x16xf32> to vector<2x16xf32>
    %c0_246 = arith.constant 0 : index
    %c0_247 = arith.constant 0 : index
    %c5_248 = arith.constant 5 : index
    %c0_249 = arith.constant 0 : index
    %172 = vector.load %arg16[%c0_246, %c0_247, %c5_248, %c0_249] : memref<2x4x8x16xf32, #tpu.memory_space<vmem>>, vector<2x1x1x16xf32>
    %173 = vector.shape_cast %172 : vector<2x1x1x16xf32> to vector<2x16xf32>
    %174 = arith.maximumf %171, %173 : vector<2x16xf32>
    %c0_250 = arith.constant 0 : index
    %c32_251 = arith.constant 32 : index
    %175 = vector.load %arg17[%c0_250, %c32_251] : memref<2x256xf32, #tpu.memory_space<vmem>>, vector<2x16xf32>
    tpu.vector_store %arg17[%c0_250, %c32_251], %174 {strides = array<i32>} : memref<2x256xf32, #tpu.memory_space<vmem>>, vector<2x16xf32>,
    %c0_252 = arith.constant 0 : index
    %c0_253 = arith.constant 0 : index
    %c6_254 = arith.constant 6 : index
    %c0_255 = arith.constant 0 : index
    %176 = vector.load %arg16[%c0_252, %c0_253, %c6_254, %c0_255] : memref<2x4x8x16xf32, #tpu.memory_space<vmem>>, vector<2x1x1x16xf32>
    %177 = vector.shape_cast %176 : vector<2x1x1x16xf32> to vector<2x16xf32>
    %c0_256 = arith.constant 0 : index
    %c0_257 = arith.constant 0 : index
    %c7_258 = arith.constant 7 : index
    %c0_259 = arith.constant 0 : index
    %178 = vector.load %arg16[%c0_256, %c0_257, %c7_258, %c0_259] : memref<2x4x8x16xf32, #tpu.memory_space<vmem>>, vector<2x1x1x16xf32>
    %179 = vector.shape_cast %178 : vector<2x1x1x16xf32> to vector<2x16xf32>
    %180 = arith.maximumf %177, %179 : vector<2x16xf32>
    %c0_260 = arith.constant 0 : index
    %c48_261 = arith.constant 48 : index
    %181 = vector.load %arg17[%c0_260, %c48_261] : memref<2x256xf32, #tpu.memory_space<vmem>>, vector<2x16xf32>
    tpu.vector_store %arg17[%c0_260, %c48_261], %180 {strides = array<i32>} : memref<2x256xf32, #tpu.memory_space<vmem>>, vector<2x16xf32>,
    %c0_262 = arith.constant 0 : index
    %c1_263 = arith.constant 1 : index
    %c0_264 = arith.constant 0 : index
    %c0_265 = arith.constant 0 : index
    %182 = vector.load %arg16[%c0_262, %c1_263, %c0_264, %c0_265] : memref<2x4x8x16xf32, #tpu.memory_space<vmem>>, vector<2x1x1x16xf32>
    %183 = vector.shape_cast %182 : vector<2x1x1x16xf32> to vector<2x16xf32>
    %c0_266 = arith.constant 0 : index
    %c1_267 = arith.constant 1 : index
    %c1_268 = arith.constant 1 : index
    %c0_269 = arith.constant 0 : index
    %184 = vector.load %arg16[%c0_266, %c1_267, %c1_268, %c0_269] : memref<2x4x8x16xf32, #tpu.memory_space<vmem>>, vector<2x1x1x16xf32>
    %185 = vector.shape_cast %184 : vector<2x1x1x16xf32> to vector<2x16xf32>
    %186 = arith.maximumf %183, %185 : vector<2x16xf32>
    %c0_270 = arith.constant 0 : index
    %c64_271 = arith.constant 64 : index
    %187 = vector.load %arg17[%c0_270, %c64_271] : memref<2x256xf32, #tpu.memory_space<vmem>>, vector<2x16xf32>
    tpu.vector_store %arg17[%c0_270, %c64_271], %186 {strides = array<i32>} : memref<2x256xf32, #tpu.memory_space<vmem>>, vector<2x16xf32>,
    %c0_272 = arith.constant 0 : index
    %c1_273 = arith.constant 1 : index
    %c2_274 = arith.constant 2 : index
    %c0_275 = arith.constant 0 : index
    %188 = vector.load %arg16[%c0_272, %c1_273, %c2_274, %c0_275] : memref<2x4x8x16xf32, #tpu.memory_space<vmem>>, vector<2x1x1x16xf32>
    %189 = vector.shape_cast %188 : vector<2x1x1x16xf32> to vector<2x16xf32>
    %c0_276 = arith.constant 0 : index
    %c1_277 = arith.constant 1 : index
    %c3_278 = arith.constant 3 : index
    %c0_279 = arith.constant 0 : index
    %190 = vector.load %arg16[%c0_276, %c1_277, %c3_278, %c0_279] : memref<2x4x8x16xf32, #tpu.memory_space<vmem>>, vector<2x1x1x16xf32>
    %191 = vector.shape_cast %190 : vector<2x1x1x16xf32> to vector<2x16xf32>
    %192 = arith.maximumf %189, %191 : vector<2x16xf32>
    %c0_280 = arith.constant 0 : index
    %c80 = arith.constant 80 : index
    %193 = vector.load %arg17[%c0_280, %c80] : memref<2x256xf32, #tpu.memory_space<vmem>>, vector<2x16xf32>
    tpu.vector_store %arg17[%c0_280, %c80], %192 {strides = array<i32>} : memref<2x256xf32, #tpu.memory_space<vmem>>, vector<2x16xf32>,
    %c0_281 = arith.constant 0 : index
    %c1_282 = arith.constant 1 : index
    %c4_283 = arith.constant 4 : index
    %c0_284 = arith.constant 0 : index
    %194 = vector.load %arg16[%c0_281, %c1_282, %c4_283, %c0_284] : memref<2x4x8x16xf32, #tpu.memory_space<vmem>>, vector<2x1x1x16xf32>
    %195 = vector.shape_cast %194 : vector<2x1x1x16xf32> to vector<2x16xf32>
    %c0_285 = arith.constant 0 : index
    %c1_286 = arith.constant 1 : index
    %c5_287 = arith.constant 5 : index
    %c0_288 = arith.constant 0 : index
    %196 = vector.load %arg16[%c0_285, %c1_286, %c5_287, %c0_288] : memref<2x4x8x16xf32, #tpu.memory_space<vmem>>, vector<2x1x1x16xf32>
    %197 = vector.shape_cast %196 : vector<2x1x1x16xf32> to vector<2x16xf32>
    %198 = arith.maximumf %195, %197 : vector<2x16xf32>
    %c0_289 = arith.constant 0 : index
    %c96 = arith.constant 96 : index
    %199 = vector.load %arg17[%c0_289, %c96] : memref<2x256xf32, #tpu.memory_space<vmem>>, vector<2x16xf32>
    tpu.vector_store %arg17[%c0_289, %c96], %198 {strides = array<i32>} : memref<2x256xf32, #tpu.memory_space<vmem>>, vector<2x16xf32>,
    %c0_290 = arith.constant 0 : index
    %c1_291 = arith.constant 1 : index
    %c6_292 = arith.constant 6 : index
    %c0_293 = arith.constant 0 : index
    %200 = vector.load %arg16[%c0_290, %c1_291, %c6_292, %c0_293] : memref<2x4x8x16xf32, #tpu.memory_space<vmem>>, vector<2x1x1x16xf32>
    %201 = vector.shape_cast %200 : vector<2x1x1x16xf32> to vector<2x16xf32>
    %c0_294 = arith.constant 0 : index
    %c1_295 = arith.constant 1 : index
    %c7_296 = arith.constant 7 : index
    %c0_297 = arith.constant 0 : index
    %202 = vector.load %arg16[%c0_294, %c1_295, %c7_296, %c0_297] : memref<2x4x8x16xf32, #tpu.memory_space<vmem>>, vector<2x1x1x16xf32>
    %203 = vector.shape_cast %202 : vector<2x1x1x16xf32> to vector<2x16xf32>
    %204 = arith.maximumf %201, %203 : vector<2x16xf32>
    %c0_298 = arith.constant 0 : index
    %c112 = arith.constant 112 : index
    %205 = vector.load %arg17[%c0_298, %c112] : memref<2x256xf32, #tpu.memory_space<vmem>>, vector<2x16xf32>
    tpu.vector_store %arg17[%c0_298, %c112], %204 {strides = array<i32>} : memref<2x256xf32, #tpu.memory_space<vmem>>, vector<2x16xf32>,
    %c0_299 = arith.constant 0 : index
    %c2_300 = arith.constant 2 : index
    %c0_301 = arith.constant 0 : index
    %c0_302 = arith.constant 0 : index
    %206 = vector.load %arg16[%c0_299, %c2_300, %c0_301, %c0_302] : memref<2x4x8x16xf32, #tpu.memory_space<vmem>>, vector<2x1x1x16xf32>
    %207 = vector.shape_cast %206 : vector<2x1x1x16xf32> to vector<2x16xf32>
    %c0_303 = arith.constant 0 : index
    %c2_304 = arith.constant 2 : index
    %c1_305 = arith.constant 1 : index
    %c0_306 = arith.constant 0 : index
    %208 = vector.load %arg16[%c0_303, %c2_304, %c1_305, %c0_306] : memref<2x4x8x16xf32, #tpu.memory_space<vmem>>, vector<2x1x1x16xf32>
    %209 = vector.shape_cast %208 : vector<2x1x1x16xf32> to vector<2x16xf32>
    %210 = arith.maximumf %207, %209 : vector<2x16xf32>
    %c0_307 = arith.constant 0 : index
    %c128 = arith.constant 128 : index
    %211 = vector.load %arg17[%c0_307, %c128] : memref<2x256xf32, #tpu.memory_space<vmem>>, vector<2x16xf32>
    tpu.vector_store %arg17[%c0_307, %c128], %210 {strides = array<i32>} : memref<2x256xf32, #tpu.memory_space<vmem>>, vector<2x16xf32>,
    %c0_308 = arith.constant 0 : index
    %c2_309 = arith.constant 2 : index
    %c2_310 = arith.constant 2 : index
    %c0_311 = arith.constant 0 : index
    %212 = vector.load %arg16[%c0_308, %c2_309, %c2_310, %c0_311] : memref<2x4x8x16xf32, #tpu.memory_space<vmem>>, vector<2x1x1x16xf32>
    %213 = vector.shape_cast %212 : vector<2x1x1x16xf32> to vector<2x16xf32>
    %c0_312 = arith.constant 0 : index
    %c2_313 = arith.constant 2 : index
    %c3_314 = arith.constant 3 : index
    %c0_315 = arith.constant 0 : index
    %214 = vector.load %arg16[%c0_312, %c2_313, %c3_314, %c0_315] : memref<2x4x8x16xf32, #tpu.memory_space<vmem>>, vector<2x1x1x16xf32>
    %215 = vector.shape_cast %214 : vector<2x1x1x16xf32> to vector<2x16xf32>
    %216 = arith.maximumf %213, %215 : vector<2x16xf32>
    %c0_316 = arith.constant 0 : index
    %c144 = arith.constant 144 : index
    %217 = vector.load %arg17[%c0_316, %c144] : memref<2x256xf32, #tpu.memory_space<vmem>>, vector<2x16xf32>
    tpu.vector_store %arg17[%c0_316, %c144], %216 {strides = array<i32>} : memref<2x256xf32, #tpu.memory_space<vmem>>, vector<2x16xf32>,
    %c0_317 = arith.constant 0 : index
    %c2_318 = arith.constant 2 : index
    %c4_319 = arith.constant 4 : index
    %c0_320 = arith.constant 0 : index
    %218 = vector.load %arg16[%c0_317, %c2_318, %c4_319, %c0_320] : memref<2x4x8x16xf32, #tpu.memory_space<vmem>>, vector<2x1x1x16xf32>
    %219 = vector.shape_cast %218 : vector<2x1x1x16xf32> to vector<2x16xf32>
    %c0_321 = arith.constant 0 : index
    %c2_322 = arith.constant 2 : index
    %c5_323 = arith.constant 5 : index
    %c0_324 = arith.constant 0 : index
    %220 = vector.load %arg16[%c0_321, %c2_322, %c5_323, %c0_324] : memref<2x4x8x16xf32, #tpu.memory_space<vmem>>, vector<2x1x1x16xf32>
    %221 = vector.shape_cast %220 : vector<2x1x1x16xf32> to vector<2x16xf32>
    %222 = arith.maximumf %219, %221 : vector<2x16xf32>
    %c0_325 = arith.constant 0 : index
    %c160 = arith.constant 160 : index
    %223 = vector.load %arg17[%c0_325, %c160] : memref<2x256xf32, #tpu.memory_space<vmem>>, vector<2x16xf32>
    tpu.vector_store %arg17[%c0_325, %c160], %222 {strides = array<i32>} : memref<2x256xf32, #tpu.memory_space<vmem>>, vector<2x16xf32>,
    %c0_326 = arith.constant 0 : index
    %c2_327 = arith.constant 2 : index
    %c6_328 = arith.constant 6 : index
    %c0_329 = arith.constant 0 : index
    %224 = vector.load %arg16[%c0_326, %c2_327, %c6_328, %c0_329] : memref<2x4x8x16xf32, #tpu.memory_space<vmem>>, vector<2x1x1x16xf32>
    %225 = vector.shape_cast %224 : vector<2x1x1x16xf32> to vector<2x16xf32>
    %c0_330 = arith.constant 0 : index
    %c2_331 = arith.constant 2 : index
    %c7_332 = arith.constant 7 : index
    %c0_333 = arith.constant 0 : index
    %226 = vector.load %arg16[%c0_330, %c2_331, %c7_332, %c0_333] : memref<2x4x8x16xf32, #tpu.memory_space<vmem>>, vector<2x1x1x16xf32>
    %227 = vector.shape_cast %226 : vector<2x1x1x16xf32> to vector<2x16xf32>
    %228 = arith.maximumf %225, %227 : vector<2x16xf32>
    %c0_334 = arith.constant 0 : index
    %c176 = arith.constant 176 : index
    %229 = vector.load %arg17[%c0_334, %c176] : memref<2x256xf32, #tpu.memory_space<vmem>>, vector<2x16xf32>
    tpu.vector_store %arg17[%c0_334, %c176], %228 {strides = array<i32>} : memref<2x256xf32, #tpu.memory_space<vmem>>, vector<2x16xf32>,
    %c0_335 = arith.constant 0 : index
    %c3_336 = arith.constant 3 : index
    %c0_337 = arith.constant 0 : index
    %c0_338 = arith.constant 0 : index
    %230 = vector.load %arg16[%c0_335, %c3_336, %c0_337, %c0_338] : memref<2x4x8x16xf32, #tpu.memory_space<vmem>>, vector<2x1x1x16xf32>
    %231 = vector.shape_cast %230 : vector<2x1x1x16xf32> to vector<2x16xf32>
    %c0_339 = arith.constant 0 : index
    %c3_340 = arith.constant 3 : index
    %c1_341 = arith.constant 1 : index
    %c0_342 = arith.constant 0 : index
    %232 = vector.load %arg16[%c0_339, %c3_340, %c1_341, %c0_342] : memref<2x4x8x16xf32, #tpu.memory_space<vmem>>, vector<2x1x1x16xf32>
    %233 = vector.shape_cast %232 : vector<2x1x1x16xf32> to vector<2x16xf32>
    %234 = arith.maximumf %231, %233 : vector<2x16xf32>
    %c0_343 = arith.constant 0 : index
    %c192 = arith.constant 192 : index
    %235 = vector.load %arg17[%c0_343, %c192] : memref<2x256xf32, #tpu.memory_space<vmem>>, vector<2x16xf32>
    tpu.vector_store %arg17[%c0_343, %c192], %234 {strides = array<i32>} : memref<2x256xf32, #tpu.memory_space<vmem>>, vector<2x16xf32>,
    %c0_344 = arith.constant 0 : index
    %c3_345 = arith.constant 3 : index
    %c2_346 = arith.constant 2 : index
    %c0_347 = arith.constant 0 : index
    %236 = vector.load %arg16[%c0_344, %c3_345, %c2_346, %c0_347] : memref<2x4x8x16xf32, #tpu.memory_space<vmem>>, vector<2x1x1x16xf32>
    %237 = vector.shape_cast %236 : vector<2x1x1x16xf32> to vector<2x16xf32>
    %c0_348 = arith.constant 0 : index
    %c3_349 = arith.constant 3 : index
    %c3_350 = arith.constant 3 : index
    %c0_351 = arith.constant 0 : index
    %238 = vector.load %arg16[%c0_348, %c3_349, %c3_350, %c0_351] : memref<2x4x8x16xf32, #tpu.memory_space<vmem>>, vector<2x1x1x16xf32>
    %239 = vector.shape_cast %238 : vector<2x1x1x16xf32> to vector<2x16xf32>
    %240 = arith.maximumf %237, %239 : vector<2x16xf32>
    %c0_352 = arith.constant 0 : index
    %c208 = arith.constant 208 : index
    %241 = vector.load %arg17[%c0_352, %c208] : memref<2x256xf32, #tpu.memory_space<vmem>>, vector<2x16xf32>
    tpu.vector_store %arg17[%c0_352, %c208], %240 {strides = array<i32>} : memref<2x256xf32, #tpu.memory_space<vmem>>, vector<2x16xf32>,
    %c0_353 = arith.constant 0 : index
    %c3_354 = arith.constant 3 : index
    %c4_355 = arith.constant 4 : index
    %c0_356 = arith.constant 0 : index
    %242 = vector.load %arg16[%c0_353, %c3_354, %c4_355, %c0_356] : memref<2x4x8x16xf32, #tpu.memory_space<vmem>>, vector<2x1x1x16xf32>
    %243 = vector.shape_cast %242 : vector<2x1x1x16xf32> to vector<2x16xf32>
    %c0_357 = arith.constant 0 : index
    %c3_358 = arith.constant 3 : index
    %c5_359 = arith.constant 5 : index
    %c0_360 = arith.constant 0 : index
    %244 = vector.load %arg16[%c0_357, %c3_358, %c5_359, %c0_360] : memref<2x4x8x16xf32, #tpu.memory_space<vmem>>, vector<2x1x1x16xf32>
    %245 = vector.shape_cast %244 : vector<2x1x1x16xf32> to vector<2x16xf32>
    %246 = arith.maximumf %243, %245 : vector<2x16xf32>
    %c0_361 = arith.constant 0 : index
    %c224 = arith.constant 224 : index
    %247 = vector.load %arg17[%c0_361, %c224] : memref<2x256xf32, #tpu.memory_space<vmem>>, vector<2x16xf32>
    tpu.vector_store %arg17[%c0_361, %c224], %246 {strides = array<i32>} : memref<2x256xf32, #tpu.memory_space<vmem>>, vector<2x16xf32>,
    %c0_362 = arith.constant 0 : index
    %c3_363 = arith.constant 3 : index
    %c6_364 = arith.constant 6 : index
    %c0_365 = arith.constant 0 : index
    %248 = vector.load %arg16[%c0_362, %c3_363, %c6_364, %c0_365] : memref<2x4x8x16xf32, #tpu.memory_space<vmem>>, vector<2x1x1x16xf32>
    %249 = vector.shape_cast %248 : vector<2x1x1x16xf32> to vector<2x16xf32>
    %c0_366 = arith.constant 0 : index
    %c3_367 = arith.constant 3 : index
    %c7_368 = arith.constant 7 : index
    %c0_369 = arith.constant 0 : index
    %250 = vector.load %arg16[%c0_366, %c3_367, %c7_368, %c0_369] : memref<2x4x8x16xf32, #tpu.memory_space<vmem>>, vector<2x1x1x16xf32>
    %251 = vector.shape_cast %250 : vector<2x1x1x16xf32> to vector<2x16xf32>
    %252 = arith.maximumf %249, %251 : vector<2x16xf32>
    %c0_370 = arith.constant 0 : index
    %c240 = arith.constant 240 : index
    %253 = vector.load %arg17[%c0_370, %c240] : memref<2x256xf32, #tpu.memory_space<vmem>>, vector<2x16xf32>
    tpu.vector_store %arg17[%c0_370, %c240], %252 {strides = array<i32>} : memref<2x256xf32, #tpu.memory_space<vmem>>, vector<2x16xf32>,
    %c0_371 = arith.constant 0 : index
    %c0_372 = arith.constant 0 : index
    %254 = vector.load %arg17[%c0_371, %c0_372] : memref<2x256xf32, #tpu.memory_space<vmem>>, vector<2x256xf32>
    %c0_373 = arith.constant 0 : index
    %c0_374 = arith.constant 0 : index
    %255 = vector.load %arg6[%c0_373, %c0_374] : memref<256x32xf32, #tpu.memory_space<vmem>>, vector<256x32xf32>
    %cst_375 = arith.constant dense<0.000000e+00> : vector<2x32xf32>
    %256 = tpu.matmul %254, %255, %cst_375 {dimension_numbers = #tpu.dot_dimension_numbers<[1], [0], [0], [1], [0, 0, 1, 1], [], []>} : vector<2x256xf32>, vector<256x32xf32>, vector<2x32xf32> -> vector<2x32xf32>
    %c0_376 = arith.constant 0 : index
    %c0_377 = arith.constant 0 : index
    %257 = vector.load %arg7[%c0_376, %c0_377] : memref<1x32xf32, #tpu.memory_space<vmem>>, vector<1x32xf32>
    %258 = vector.broadcast %257 : vector<1x32xf32> to vector<2x32xf32>
    %259 = arith.addf %256, %258 : vector<2x32xf32>
    %cst_378 = arith.constant 0.000000e+00 : f32
    %260 = vector.broadcast %cst_378 : f32 to vector<2x32xf32>
    %261 = arith.maximumf %259, %260 : vector<2x32xf32>
    %c0_379 = arith.constant 0 : index
    %c0_380 = arith.constant 0 : index
    %262 = vector.load %arg8[%c0_379, %c0_380] : memref<32x1xf32, #tpu.memory_space<vmem>>, vector<32x1xf32>
    %cst_381 = arith.constant dense<0.000000e+00> : vector<2x1xf32>
    %263 = tpu.matmul %261, %262, %cst_381 {dimension_numbers = #tpu.dot_dimension_numbers<[1], [0], [0], [1], [0, 0, 1, 1], [], []>} : vector<2x32xf32>, vector<32x1xf32>, vector<2x1xf32> -> vector<2x1xf32>
    %c0_382 = arith.constant 0 : index
    %c0_383 = arith.constant 0 : index
    %264 = vector.load %arg9[%c0_382, %c0_383] : memref<1x1xf32, #tpu.memory_space<vmem>>, vector<1x1xf32>
    %265 = vector.broadcast %264 : vector<1x1xf32> to vector<2x1xf32>
    %266 = arith.addf %263, %265 : vector<2x1xf32>
    %cst_384 = arith.constant 0.000000e+00 : f32
    %267 = vector.broadcast %cst_384 : f32 to vector<2x1xf32>
    %268 = arith.subf %267, %266 : vector<2x1xf32>
    %269 = math.exp %268 : vector<2x1xf32>
    %cst_385 = arith.constant 1.000000e+00 : f32
    %270 = vector.broadcast %cst_385 : f32 to vector<2x1xf32>
    %271 = arith.addf %270, %269 : vector<2x1xf32>
    %cst_386 = arith.constant 1.000000e+00 : f32
    %272 = vector.broadcast %cst_386 : f32 to vector<2x1xf32>
    %273 = arith.divf %272, %271 : vector<2x1xf32>
    %c0_387 = arith.constant 0 : index
    %c0_388 = arith.constant 0 : index
    %274 = vector.load %arg10[%c0_387, %c0_388] : memref<2x1xf32, #tpu.memory_space<vmem>>, vector<2x1xf32>
    tpu.vector_store %arg10[%c0_387, %c0_388], %273 {strides = array<i32>} : memref<2x1xf32, #tpu.memory_space<vmem>>, vector<2x1xf32>,
    return
  }
  func.func @transform_0(%arg0: i32) -> (i32, i32, i32, i32) {
    %c0_i32 = arith.constant 0 : i32
    %c0_i32_0 = arith.constant 0 : i32
    %c0_i32_1 = arith.constant 0 : i32
    %c0_i32_2 = arith.constant 0 : i32
    %c0_i32_3 = arith.constant 0 : i32
    return %c0_i32, %c0_i32_0, %c0_i32_1, %c0_i32_2 : i32, i32, i32, i32
  }
  func.func @transform_1(%arg0: i32) -> (i32, i32) {
    %c0_i32 = arith.constant 0 : i32
    %c0_i32_0 = arith.constant 0 : i32
    %c0_i32_1 = arith.constant 0 : i32
    return %c0_i32, %c0_i32_0 : i32, i32
  }
  func.func @transform_2(%arg0: i32) -> (i32, i32) {
    %c0_i32 = arith.constant 0 : i32
    %c0_i32_0 = arith.constant 0 : i32
    %c0_i32_1 = arith.constant 0 : i32
    return %c0_i32, %c0_i32_0 : i32, i32
  }
  func.func @transform_3(%arg0: i32) -> (i32, i32) {
    %c0_i32 = arith.constant 0 : i32
    %c0_i32_0 = arith.constant 0 : i32
    %c0_i32_1 = arith.constant 0 : i32
    return %c0_i32, %c0_i32_0 : i32, i32
  }
  func.func @transform_4(%arg0: i32) -> (i32, i32) {
    %c0_i32 = arith.constant 0 : i32
    %c0_i32_0 = arith.constant 0 : i32
    %c0_i32_1 = arith.constant 0 : i32
    return %c0_i32, %c0_i32_0 : i32, i32
  }
  func.func @transform_5(%arg0: i32) -> (i32, i32) {
    %c0_i32 = arith.constant 0 : i32
    %c0_i32_0 = arith.constant 0 : i32
    %c0_i32_1 = arith.constant 0 : i32
    return %c0_i32, %c0_i32_0 : i32, i32
  }
  func.func @transform_6(%arg0: i32) -> (i32, i32) {
    %c0_i32 = arith.constant 0 : i32
    %c0_i32_0 = arith.constant 0 : i32
    %c0_i32_1 = arith.constant 0 : i32
    return %c0_i32, %c0_i32_0 : i32, i32
  }
  func.func @transform_7(%arg0: i32) -> (i32, i32) {
    %c0_i32 = arith.constant 0 : i32
    %c0_i32_0 = arith.constant 0 : i32
    %c0_i32_1 = arith.constant 0 : i32
    return %c0_i32, %c0_i32_0 : i32, i32
  }
  func.func @transform_8(%arg0: i32) -> (i32, i32) {
    %c0_i32 = arith.constant 0 : i32
    %c0_i32_0 = arith.constant 0 : i32
    %c0_i32_1 = arith.constant 0 : i32
    return %c0_i32, %c0_i32_0 : i32, i32
  }
  func.func @transform_9(%arg0: i32) -> (i32, i32) {
    %c0_i32 = arith.constant 0 : i32
    %c0_i32_0 = arith.constant 0 : i32
    %c0_i32_1 = arith.constant 0 : i32
    return %c0_i32, %c0_i32_0 : i32, i32
  }
}

</mosaic_0001>

<llo_original>
// kernel: cnn_forward.1
$region0: #{cnn_forward.1}
  #allocation0 [shape = 'u32[]', space=smem, size = 0x4, offset = 0x4, fixed_abs, tag = 'smem constant byte address 0x4 - core index']
  #allocation1 [shape = 'u32[144,128]{1,0:T(1,128)}', space=vmem, size = 0x12000, scoped, tag = 'internal scratch']
  #allocation2 [shape = 'f32[2,18,18,1]{3,2,1,0:T(8,128)}', space=vmem, size = 0x6c000, scoped, tag = 'scratch operand']
  #allocation3 [shape = 'f32[512,9]{1,0:T(8,128)}', space=vmem, size = 0x40000, scoped, tag = 'scratch operand']
  #allocation4 [shape = 'f32[2,8,16,8]{3,2,1,0:T(8,128)}', space=vmem, size = 0x20000, scoped, tag = 'scratch operand']
  #allocation5 [shape = 'f32[2,10,10,8]{3,2,1,0:T(8,128)}', space=vmem, size = 0x28000, scoped, tag = 'scratch operand']
  #allocation6 [shape = 'f32[128,72]{1,0:T(8,128)}', space=vmem, size = 0x10000, scoped, tag = 'scratch operand']
  #allocation7 [shape = 'f32[2,4,8,16]{3,2,1,0:T(8,128)}', space=vmem, size = 0x8000, scoped, tag = 'scratch operand']
  #allocation8 [shape = 'f32[2,256]{1,0:T(2,128)}', space=vmem, size = 0x800, scoped, tag = 'scratch operand']
  #allocation9 [shape = 'f32[1,1]{1,0:T(1,128)S(1)}', space=vmem, size = 0x200, scoped, tag = 'scoped memory for cnn_forward.1']
  %s0 = inlined_call_operand.vmem [shape: f32[2,16,16,1], index: 0, kind: input, shape index: {}]
  %s1 = inlined_call_operand.vmem [shape: f32[9,8], index: 1, kind: input, shape index: {}]
  %s2 = inlined_call_operand.vmem [shape: f32[1,8], index: 2, kind: input, shape index: {}]
  %s3 = inlined_call_operand.vmem [shape: f32[72,16], index: 3, kind: input, shape index: {}]
  %s4 = inlined_call_operand.vmem [shape: f32[1,16], index: 4, kind: input, shape index: {}]
  %s5 = inlined_call_operand.vmem [shape: f32[256,32], index: 5, kind: input, shape index: {}]
  %s6 = inlined_call_operand.vmem [shape: f32[1,32], index: 6, kind: input, shape index: {}]
  %s7 = inlined_call_operand.vmem [shape: f32[32,1], index: 7, kind: input, shape index: {}]
  %s8 = inlined_call_operand.<no memory space> [shape: f32[1,1], index: 8, kind: input, shape index: {}]
  %s9 = inlined_call_operand.vmem [shape: f32[2,1], index: 9, kind: output, shape index: {}]
  %s10 = sld [smem:[#allocation0]]
  $region46: #{cnn_forward.1} parent=0
    _
  %s12 = ssub.s32 1, %s10
  %s13 = scalar_select 0, %s12, %s10
  %v14 = vstv %s8
  %15 = vst [vmem:[#allocation9] sm:$0x1] %v14
  // Predicated region
  $region2: #{cnn_forward.1} parent=0 // pred_check
    _
  $region3: #{cnn_forward.1} parent=0 // pred_check_branch
    %17 = sbr.rel (0) target = $region5
  $region4: #{cnn_forward.1} parent=0 // pred_region
    _
  $region5: #{cnn_forward.1} parent=0 // pred_fallthru
    _
  // Predicated region
  $region6: #{cnn_forward.1} parent=0 // pred_check
    _
  $region7: #{cnn_forward.1} parent=0 // pred_check_branch
    %19 = sbr.rel (0) target = $region9
  $region8: #{cnn_forward.1} parent=0 // pred_region
    _
  $region9: #{cnn_forward.1} parent=0 // pred_fallthru
    _
  // Predicated region
  $region10: #{cnn_forward.1} parent=0 // pred_check
    _
  $region11: #{cnn_forward.1} parent=0 // pred_check_branch
    %21 = sbr.rel (0) target = $region13
  $region12: #{cnn_forward.1} parent=0 // pred_region
    _
  $region13: #{cnn_forward.1} parent=0 // pred_fallthru
    _
  // Predicated region
  $region14: #{cnn_forward.1} parent=0 // pred_check
    _
  $region15: #{cnn_forward.1} parent=0 // pred_check_branch
    %23 = sbr.rel (0) target = $region17
  $region16: #{cnn_forward.1} parent=0 // pred_region
    _
  $region17: #{cnn_forward.1} parent=0 // pred_fallthru
    _
  // Predicated region
  $region18: #{cnn_forward.1} parent=0 // pred_check
    _
  $region19: #{cnn_forward.1} parent=0 // pred_check_branch
    %25 = sbr.rel (0) target = $region21
  $region20: #{cnn_forward.1} parent=0 // pred_region
    _
  $region21: #{cnn_forward.1} parent=0 // pred_fallthru
    _
  // Predicated region
  $region22: #{cnn_forward.1} parent=0 // pred_check
    _
  $region23: #{cnn_forward.1} parent=0 // pred_check_branch
    %27 = sbr.rel (0) target = $region25
  $region24: #{cnn_forward.1} parent=0 // pred_region
    _
  $region25: #{cnn_forward.1} parent=0 // pred_fallthru
    _
  // Predicated region
  $region26: #{cnn_forward.1} parent=0 // pred_check
    _
  $region27: #{cnn_forward.1} parent=0 // pred_check_branch
    %29 = sbr.rel (0) target = $region29
  $region28: #{cnn_forward.1} parent=0 // pred_region
    _
  $region29: #{cnn_forward.1} parent=0 // pred_fallthru
    _
  // Predicated region
  $region30: #{cnn_forward.1} parent=0 // pred_check
    _
  $region31: #{cnn_forward.1} parent=0 // pred_check_branch
    %31 = sbr.rel (0) target = $region33
  $region32: #{cnn_forward.1} parent=0 // pred_region
    _
  $region33: #{cnn_forward.1} parent=0 // pred_fallthru
    _
  // Predicated region
  $region34: #{cnn_forward.1} parent=0 // pred_check
    _
  $region35: #{cnn_forward.1} parent=0 // pred_check_branch
    %33 = sbr.rel (0) target = $region37
  $region36: #{cnn_forward.1} parent=0 // pred_region
    _
  $region37: #{cnn_forward.1} parent=0 // pred_fallthru
    _
  %vm34 = vcmask 7168
  %35 = vst.msk [vmem:[#allocation2] sm:$0xff] %vm34, 0.0
  %36 = vst.msk [vmem:[#allocation2 + $0x8] sm:$0xff] %vm34, 0.0
  %vm37 = vcmask 1024
  %38 = vst.msk [vmem:[#allocation2 + $0x10] sm:$0x3] %vm37, 0.0
  %39 = vst.msk [vmem:[#allocation2 + $0x18] sm:$0xff] %vm34, 0.0
  %40 = vst.msk [vmem:[#allocation2 + $0x20] sm:$0xff] %vm34, 0.0
  %41 = vst.msk [vmem:[#allocation2 + $0x28] sm:$0x3] %vm37, 0.0
  %42 = vst.msk [vmem:[#allocation2 + $0x30] sm:$0xff] %vm34, 0.0
  %43 = vst.msk [vmem:[#allocation2 + $0x38] sm:$0xff] %vm34, 0.0
  %44 = vst.msk [vmem:[#allocation2 + $0x40] sm:$0x3] %vm37, 0.0
  %45 = vst.msk [vmem:[#allocation2 + $0x48] sm:$0xff] %vm34, 0.0
  %46 = vst.msk [vmem:[#allocation2 + $0x50] sm:$0xff] %vm34, 0.0
  %47 = vst.msk [vmem:[#allocation2 + $0x58] sm:$0x3] %vm37, 0.0
  %48 = vst.msk [vmem:[#allocation2 + $0x60] sm:$0xff] %vm34, 0.0
  %49 = vst.msk [vmem:[#allocation2 + $0x68] sm:$0xff] %vm34, 0.0
  %50 = vst.msk [vmem:[#allocation2 + $0x70] sm:$0x3] %vm37, 0.0
  %51 = vst.msk [vmem:[#allocation2 + $0x78] sm:$0xff] %vm34, 0.0
  %52 = vst.msk [vmem:[#allocation2 + $0x80] sm:$0xff] %vm34, 0.0
  %53 = vst.msk [vmem:[#allocation2 + $0x88] sm:$0x3] %vm37, 0.0
  %54 = vst.msk [vmem:[#allocation2 + $0x90] sm:$0xff] %vm34, 0.0
  %55 = vst.msk [vmem:[#allocation2 + $0x98] sm:$0xff] %vm34, 0.0
  %56 = vst.msk [vmem:[#allocation2 + $0xa0] sm:$0x3] %vm37, 0.0
  %57 = vst.msk [vmem:[#allocation2 + $0xa8] sm:$0xff] %vm34, 0.0
  %58 = vst.msk [vmem:[#allocation2 + $0xb0] sm:$0xff] %vm34, 0.0
  %59 = vst.msk [vmem:[#allocation2 + $0xb8] sm:$0x3] %vm37, 0.0
  %60 = vst.msk [vmem:[#allocation2 + $0xc0] sm:$0xff] %vm34, 0.0
  %61 = vst.msk [vmem:[#allocation2 + $0xc8] sm:$0xff] %vm34, 0.0
  %62 = vst.msk [vmem:[#allocation2 + $0xd0] sm:$0x3] %vm37, 0.0
  %63 = vst.msk [vmem:[#allocation2 + $0xd8] sm:$0xff] %vm34, 0.0
  %64 = vst.msk [vmem:[#allocation2 + $0xe0] sm:$0xff] %vm34, 0.0
  %65 = vst.msk [vmem:[#allocation2 + $0xe8] sm:$0x3] %vm37, 0.0
  %66 = vst.msk [vmem:[#allocation2 + $0xf0] sm:$0xff] %vm34, 0.0
  %67 = vst.msk [vmem:[#allocation2 + $0xf8] sm:$0xff] %vm34, 0.0
  %68 = vst.msk [vmem:[#allocation2 + $0x100] sm:$0x3] %vm37, 0.0
  %69 = vst.msk [vmem:[#allocation2 + $0x108] sm:$0xff] %vm34, 0.0
  %70 = vst.msk [vmem:[#allocation2 + $0x110] sm:$0xff] %vm34, 0.0
  %71 = vst.msk [vmem:[#allocation2 + $0x118] sm:$0x3] %vm37, 0.0
  %72 = vst.msk [vmem:[#allocation2 + $0x120] sm:$0xff] %vm34, 0.0
  %73 = vst.msk [vmem:[#allocation2 + $0x128] sm:$0xff] %vm34, 0.0
  %74 = vst.msk [vmem:[#allocation2 + $0x130] sm:$0x3] %vm37, 0.0
  %75 = vst.msk [vmem:[#allocation2 + $0x138] sm:$0xff] %vm34, 0.0
  %76 = vst.msk [vmem:[#allocation2 + $0x140] sm:$0xff] %vm34, 0.0
  %77 = vst.msk [vmem:[#allocation2 + $0x148] sm:$0x3] %vm37, 0.0
  %78 = vst.msk [vmem:[#allocation2 + $0x150] sm:$0xff] %vm34, 0.0
  %79 = vst.msk [vmem:[#allocation2 + $0x158] sm:$0xff] %vm34, 0.0
  %80 = vst.msk [vmem:[#allocation2 + $0x160] sm:$0x3] %vm37, 0.0
  %81 = vst.msk [vmem:[#allocation2 + $0x168] sm:$0xff] %vm34, 0.0
  %82 = vst.msk [vmem:[#allocation2 + $0x170] sm:$0xff] %vm34, 0.0
  %83 = vst.msk [vmem:[#allocation2 + $0x178] sm:$0x3] %vm37, 0.0
  %84 = vst.msk [vmem:[#allocation2 + $0x180] sm:$0xff] %vm34, 0.0
  %85 = vst.msk [vmem:[#allocation2 + $0x188] sm:$0xff] %vm34, 0.0
  %86 = vst.msk [vmem:[#allocation2 + $0x190] sm:$0x3] %vm37, 0.0
  %87 = vst.msk [vmem:[#allocation2 + $0x198] sm:$0xff] %vm34, 0.0
  %88 = vst.msk [vmem:[#allocation2 + $0x1a0] sm:$0xff] %vm34, 0.0
  %89 = vst.msk [vmem:[#allocation2 + $0x1a8] sm:$0x3] %vm37, 0.0
  %90 = vst.msk [vmem:[#allocation2 + $0x1b0] sm:$0xff] %vm34, 0.0
  %91 = vst.msk [vmem:[#allocation2 + $0x1b8] sm:$0xff] %vm34, 0.0
  %92 = vst.msk [vmem:[#allocation2 + $0x1c0] sm:$0x3] %vm37, 0.0
  %93 = vst.msk [vmem:[#allocation2 + $0x1c8] sm:$0xff] %vm34, 0.0
  %94 = vst.msk [vmem:[#allocation2 + $0x1d0] sm:$0xff] %vm34, 0.0
  %95 = vst.msk [vmem:[#allocation2 + $0x1d8] sm:$0x3] %vm37, 0.0
  %96 = vst.msk [vmem:[#allocation2 + $0x1e0] sm:$0xff] %vm34, 0.0
  %97 = vst.msk [vmem:[#allocation2 + $0x1e8] sm:$0xff] %vm34, 0.0
  %98 = vst.msk [vmem:[#allocation2 + $0x1f0] sm:$0x3] %vm37, 0.0
  %99 = vst.msk [vmem:[#allocation2 + $0x1f8] sm:$0xff] %vm34, 0.0
  %100 = vst.msk [vmem:[#allocation2 + $0x200] sm:$0xff] %vm34, 0.0
  %101 = vst.msk [vmem:[#allocation2 + $0x208] sm:$0x3] %vm37, 0.0
  %102 = vst.msk [vmem:[#allocation2 + $0x210] sm:$0xff] %vm34, 0.0
  %103 = vst.msk [vmem:[#allocation2 + $0x218] sm:$0xff] %vm34, 0.0
  %104 = vst.msk [vmem:[#allocation2 + $0x220] sm:$0x3] %vm37, 0.0
  %105 = vst.msk [vmem:[#allocation2 + $0x228] sm:$0xff] %vm34, 0.0
  %106 = vst.msk [vmem:[#allocation2 + $0x230] sm:$0xff] %vm34, 0.0
  %107 = vst.msk [vmem:[#allocation2 + $0x238] sm:$0x3] %vm37, 0.0
  %108 = vst.msk [vmem:[#allocation2 + $0x240] sm:$0xff] %vm34, 0.0
  %109 = vst.msk [vmem:[#allocation2 + $0x248] sm:$0xff] %vm34, 0.0
  %110 = vst.msk [vmem:[#allocation2 + $0x250] sm:$0x3] %vm37, 0.0
  %111 = vst.msk [vmem:[#allocation2 + $0x258] sm:$0xff] %vm34, 0.0
  %112 = vst.msk [vmem:[#allocation2 + $0x260] sm:$0xff] %vm34, 0.0
  %113 = vst.msk [vmem:[#allocation2 + $0x268] sm:$0x3] %vm37, 0.0
  %114 = vst.msk [vmem:[#allocation2 + $0x270] sm:$0xff] %vm34, 0.0
  %115 = vst.msk [vmem:[#allocation2 + $0x278] sm:$0xff] %vm34, 0.0
  %116 = vst.msk [vmem:[#allocation2 + $0x280] sm:$0x3] %vm37, 0.0
  %117 = vst.msk [vmem:[#allocation2 + $0x288] sm:$0xff] %vm34, 0.0
  %118 = vst.msk [vmem:[#allocation2 + $0x290] sm:$0xff] %vm34, 0.0
  %119 = vst.msk [vmem:[#allocation2 + $0x298] sm:$0x3] %vm37, 0.0
  %120 = vst.msk [vmem:[#allocation2 + $0x2a0] sm:$0xff] %vm34, 0.0
  %121 = vst.msk [vmem:[#allocation2 + $0x2a8] sm:$0xff] %vm34, 0.0
  %122 = vst.msk [vmem:[#allocation2 + $0x2b0] sm:$0x3] %vm37, 0.0
  %123 = vst.msk [vmem:[#allocation2 + $0x2b8] sm:$0xff] %vm34, 0.0
  %124 = vst.msk [vmem:[#allocation2 + $0x2c0] sm:$0xff] %vm34, 0.0
  %125 = vst.msk [vmem:[#allocation2 + $0x2c8] sm:$0x3] %vm37, 0.0
  %126 = vst.msk [vmem:[#allocation2 + $0x2d0] sm:$0xff] %vm34, 0.0
  %127 = vst.msk [vmem:[#allocation2 + $0x2d8] sm:$0xff] %vm34, 0.0
  %128 = vst.msk [vmem:[#allocation2 + $0x2e0] sm:$0x3] %vm37, 0.0
  %129 = vst.msk [vmem:[#allocation2 + $0x2e8] sm:$0xff] %vm34, 0.0
  %130 = vst.msk [vmem:[#allocation2 + $0x2f0] sm:$0xff] %vm34, 0.0
  %131 = vst.msk [vmem:[#allocation2 + $0x2f8] sm:$0x3] %vm37, 0.0
  %132 = vst.msk [vmem:[#allocation2 + $0x300] sm:$0xff] %vm34, 0.0
  %133 = vst.msk [vmem:[#allocation2 + $0x308] sm:$0xff] %vm34, 0.0
  %134 = vst.msk [vmem:[#allocation2 + $0x310] sm:$0x3] %vm37, 0.0
  %135 = vst.msk [vmem:[#allocation2 + $0x318] sm:$0xff] %vm34, 0.0
  %136 = vst.msk [vmem:[#allocation2 + $0x320] sm:$0xff] %vm34, 0.0
  %137 = vst.msk [vmem:[#allocation2 + $0x328] sm:$0x3] %vm37, 0.0
  %138 = vst.msk [vmem:[#allocation2 + $0x330] sm:$0xff] %vm34, 0.0
  %139 = vst.msk [vmem:[#allocation2 + $0x338] sm:$0xff] %vm34, 0.0
  %140 = vst.msk [vmem:[#allocation2 + $0x340] sm:$0x3] %vm37, 0.0
  %141 = vst.msk [vmem:[#allocation2 + $0x348] sm:$0xff] %vm34, 0.0
  %142 = vst.msk [vmem:[#allocation2 + $0x350] sm:$0xff] %vm34, 0.0
  %143 = vst.msk [vmem:[#allocation2 + $0x358] sm:$0x3] %vm37, 0.0
  %v144 = vld [vmem:[%s0] sm:$0xff]
  %v145 = vld [vmem:[%s0 + $0x8] sm:$0xff]
  %v146 = vld [vmem:[%s0 + $0x10] sm:$0xff]
  %v147 = vld [vmem:[%s0 + $0x18] sm:$0xff]
  %v148 = vld [vmem:[%s0 + $0x20] sm:$0xff]
  %v149 = vld [vmem:[%s0 + $0x28] sm:$0xff]
  %v150 = vld [vmem:[%s0 + $0x30] sm:$0xff]
  %v151 = vld [vmem:[%s0 + $0x38] sm:$0xff]
  %v152 = vld [vmem:[%s0 + $0x40] sm:$0xff]
  %v153 = vld [vmem:[%s0 + $0x48] sm:$0xff]
  %v154 = vld [vmem:[%s0 + $0x50] sm:$0xff]
  %v155 = vld [vmem:[%s0 + $0x58] sm:$0xff]
  %v156 = vld [vmem:[%s0 + $0x60] sm:$0xff]
  %v157 = vld [vmem:[%s0 + $0x68] sm:$0xff]
  %v158 = vld [vmem:[%s0 + $0x70] sm:$0xff]
  %v159 = vld [vmem:[%s0 + $0x78] sm:$0xff]
  %v160 = vld [vmem:[%s0 + $0x80] sm:$0xff]
  %v161 = vld [vmem:[%s0 + $0x88] sm:$0xff]
  %v162 = vld [vmem:[%s0 + $0x90] sm:$0xff]
  %v163 = vld [vmem:[%s0 + $0x98] sm:$0xff]
  %v164 = vld [vmem:[%s0 + $0xa0] sm:$0xff]
  %v165 = vld [vmem:[%s0 + $0xa8] sm:$0xff]
  %v166 = vld [vmem:[%s0 + $0xb0] sm:$0xff]
  %v167 = vld [vmem:[%s0 + $0xb8] sm:$0xff]
  %v168 = vld [vmem:[%s0 + $0xc0] sm:$0xff]
  %v169 = vld [vmem:[%s0 + $0xc8] sm:$0xff]
  %v170 = vld [vmem:[%s0 + $0xd0] sm:$0xff]
  %v171 = vld [vmem:[%s0 + $0xd8] sm:$0xff]
  %v172 = vld [vmem:[%s0 + $0xe0] sm:$0xff]
  %v173 = vld [vmem:[%s0 + $0xe8] sm:$0xff]
  %v174 = vld [vmem:[%s0 + $0xf0] sm:$0xff]
  %v175 = vld [vmem:[%s0 + $0xf8] sm:$0xff]
  %v176 = vld [vmem:[%s0 + $0x100] sm:$0xff]
  %v177 = vld [vmem:[%s0 + $0x108] sm:$0xff]
  %v178 = vld [vmem:[%s0 + $0x110] sm:$0xff]
  %v179 = vld [vmem:[%s0 + $0x118] sm:$0xff]
  %v180 = vld [vmem:[%s0 + $0x120] sm:$0xff]
  %v181 = vld [vmem:[%s0 + $0x128] sm:$0xff]
  %v182 = vld [vmem:[%s0 + $0x130] sm:$0xff]
  %v183 = vld [vmem:[%s0 + $0x138] sm:$0xff]
  %v184 = vld [vmem:[%s0 + $0x140] sm:$0xff]
  %v185 = vld [vmem:[%s0 + $0x148] sm:$0xff]
  %v186 = vld [vmem:[%s0 + $0x150] sm:$0xff]
  %v187 = vld [vmem:[%s0 + $0x158] sm:$0xff]
  %v188 = vld [vmem:[%s0 + $0x160] sm:$0xff]
  %v189 = vld [vmem:[%s0 + $0x168] sm:$0xff]
  %v190 = vld [vmem:[%s0 + $0x170] sm:$0xff]
  %v191 = vld [vmem:[%s0 + $0x178] sm:$0xff]
  %v192 = vld [vmem:[%s0 + $0x180] sm:$0xff]
  %v193 = vld [vmem:[%s0 + $0x188] sm:$0xff]
  %v194 = vld [vmem:[%s0 + $0x190] sm:$0xff]
  %v195 = vld [vmem:[%s0 + $0x198] sm:$0xff]
  %v196 = vld [vmem:[%s0 + $0x1a0] sm:$0xff]
  %v197 = vld [vmem:[%s0 + $0x1a8] sm:$0xff]
  %v198 = vld [vmem:[%s0 + $0x1b0] sm:$0xff]
  %v199 = vld [vmem:[%s0 + $0x1b8] sm:$0xff]
  %v200 = vld [vmem:[%s0 + $0x1c0] sm:$0xff]
  %v201 = vld [vmem:[%s0 + $0x1c8] sm:$0xff]
  %v202 = vld [vmem:[%s0 + $0x1d0] sm:$0xff]
  %v203 = vld [vmem:[%s0 + $0x1d8] sm:$0xff]
  %v204 = vld [vmem:[%s0 + $0x1e0] sm:$0xff]
  %v205 = vld [vmem:[%s0 + $0x1e8] sm:$0xff]
  %v206 = vld [vmem:[%s0 + $0x1f0] sm:$0xff]
  %v207 = vld [vmem:[%s0 + $0x1f8] sm:$0xff]
  %s208 = scalar_lea.vmem [#allocation2], 24
  %209 = vst.msk [vmem:[%s208 + $0x1] sm:$0xff] %vm34, %v144
  %210 = vst.msk [vmem:[%s208 + $0x9] sm:$0xff] %vm34, %v145
  %211 = vst.msk [vmem:[%s208 + $0x19] sm:$0xff] %vm34, %v146
  %212 = vst.msk [vmem:[%s208 + $0x21] sm:$0xff] %vm34, %v147
  %213 = vst.msk [vmem:[%s208 + $0x31] sm:$0xff] %vm34, %v148
  %214 = vst.msk [vmem:[%s208 + $0x39] sm:$0xff] %vm34, %v149
  %215 = vst.msk [vmem:[%s208 + $0x49] sm:$0xff] %vm34, %v150
  %216 = vst.msk [vmem:[%s208 + $0x51] sm:$0xff] %vm34, %v151
  %217 = vst.msk [vmem:[%s208 + $0x61] sm:$0xff] %vm34, %v152
  %218 = vst.msk [vmem:[%s208 + $0x69] sm:$0xff] %vm34, %v153
  %219 = vst.msk [vmem:[%s208 + $0x79] sm:$0xff] %vm34, %v154
  %220 = vst.msk [vmem:[%s208 + $0x81] sm:$0xff] %vm34, %v155
  %221 = vst.msk [vmem:[%s208 + $0x91] sm:$0xff] %vm34, %v156
  %222 = vst.msk [vmem:[%s208 + $0x99] sm:$0xff] %vm34, %v157
  %223 = vst.msk [vmem:[%s208 + $0xa9] sm:$0xff] %vm34, %v158
  %224 = vst.msk [vmem:[%s208 + $0xb1] sm:$0xff] %vm34, %v159
  %225 = vst.msk [vmem:[%s208 + $0xc1] sm:$0xff] %vm34, %v160
  %226 = vst.msk [vmem:[%s208 + $0xc9] sm:$0xff] %vm34, %v161
  %227 = vst.msk [vmem:[%s208 + $0xd9] sm:$0xff] %vm34, %v162
  %228 = vst.msk [vmem:[%s208 + $0xe1] sm:$0xff] %vm34, %v163
  %229 = vst.msk [vmem:[%s208 + $0xf1] sm:$0xff] %vm34, %v164
  %230 = vst.msk [vmem:[%s208 + $0xf9] sm:$0xff] %vm34, %v165
  %231 = vst.msk [vmem:[%s208 + $0x109] sm:$0xff] %vm34, %v166
  %232 = vst.msk [vmem:[%s208 + $0x111] sm:$0xff] %vm34, %v167
  %233 = vst.msk [vmem:[%s208 + $0x121] sm:$0xff] %vm34, %v168
  %234 = vst.msk [vmem:[%s208 + $0x129] sm:$0xff] %vm34, %v169
  %235 = vst.msk [vmem:[%s208 + $0x139] sm:$0xff] %vm34, %v170
  %236 = vst.msk [vmem:[%s208 + $0x141] sm:$0xff] %vm34, %v171
  %237 = vst.msk [vmem:[%s208 + $0x151] sm:$0xff] %vm34, %v172
  %238 = vst.msk [vmem:[%s208 + $0x159] sm:$0xff] %vm34, %v173
  %239 = vst.msk [vmem:[%s208 + $0x169] sm:$0xff] %vm34, %v174
  %240 = vst.msk [vmem:[%s208 + $0x171] sm:$0xff] %vm34, %v175
  %241 = vst.msk [vmem:[%s208 + $0x1b1] sm:$0xff] %vm34, %v176
  %242 = vst.msk [vmem:[%s208 + $0x1b9] sm:$0xff] %vm34, %v177
  %243 = vst.msk [vmem:[%s208 + $0x1c9] sm:$0xff] %vm34, %v178
  %244 = vst.msk [vmem:[%s208 + $0x1d1] sm:$0xff] %vm34, %v179
  %245 = vst.msk [vmem:[%s208 + $0x1e1] sm:$0xff] %vm34, %v180
  %246 = vst.msk [vmem:[%s208 + $0x1e9] sm:$0xff] %vm34, %v181
  %247 = vst.msk [vmem:[%s208 + $0x1f9] sm:$0xff] %vm34, %v182
  %248 = vst.msk [vmem:[%s208 + $0x201] sm:$0xff] %vm34, %v183
  %249 = vst.msk [vmem:[%s208 + $0x211] sm:$0xff] %vm34, %v184
  %250 = vst.msk [vmem:[%s208 + $0x219] sm:$0xff] %vm34, %v185
  %251 = vst.msk [vmem:[%s208 + $0x229] sm:$0xff] %vm34, %v186
  %252 = vst.msk [vmem:[%s208 + $0x231] sm:$0xff] %vm34, %v187
  %253 = vst.msk [vmem:[%s208 + $0x241] sm:$0xff] %vm34, %v188
  %254 = vst.msk [vmem:[%s208 + $0x249] sm:$0xff] %vm34, %v189
  %255 = vst.msk [vmem:[%s208 + $0x259] sm:$0xff] %vm34, %v190
  %256 = vst.msk [vmem:[%s208 + $0x261] sm:$0xff] %vm34, %v191
  %257 = vst.msk [vmem:[%s208 + $0x271] sm:$0xff] %vm34, %v192
  %258 = vst.msk [vmem:[%s208 + $0x279] sm:$0xff] %vm34, %v193
  %259 = vst.msk [vmem:[%s208 + $0x289] sm:$0xff] %vm34, %v194
  %260 = vst.msk [vmem:[%s208 + $0x291] sm:$0xff] %vm34, %v195
  %261 = vst.msk [vmem:[%s208 + $0x2a1] sm:$0xff] %vm34, %v196
  %262 = vst.msk [vmem:[%s208 + $0x2a9] sm:$0xff] %vm34, %v197
  %263 = vst.msk [vmem:[%s208 + $0x2b9] sm:$0xff] %vm34, %v198
  %264 = vst.msk [vmem:[%s208 + $0x2c1] sm:$0xff] %vm34, %v199
  %265 = vst.msk [vmem:[%s208 + $0x2d1] sm:$0xff] %vm34, %v200
  %266 = vst.msk [vmem:[%s208 + $0x2d9] sm:$0xff] %vm34, %v201
  %267 = vst.msk [vmem:[%s208 + $0x2e9] sm:$0xff] %vm34, %v202
  %268 = vst.msk [vmem:[%s208 + $0x2f1] sm:$0xff] %vm34, %v203
  %269 = vst.msk [vmem:[%s208 + $0x301] sm:$0xff] %vm34, %v204
  %270 = vst.msk [vmem:[%s208 + $0x309] sm:$0xff] %vm34, %v205
  %271 = vst.msk [vmem:[%s208 + $0x319] sm:$0xff] %vm34, %v206
  %272 = vst.msk [vmem:[%s208 + $0x321] sm:$0xff] %vm34, %v207
  %v273 = vld [vmem:[#allocation2] sm:$0xff]
  %v274 = vld [vmem:[#allocation2 + $0x8] sm:$0xff]
  %v275 = vld [vmem:[#allocation2 + $0x18] sm:$0xff]
  %v276 = vld [vmem:[#allocation2 + $0x20] sm:$0xff]
  %v277 = vld [vmem:[#allocation2 + $0x30] sm:$0xff]
  %v278 = vld [vmem:[#allocation2 + $0x38] sm:$0xff]
  %v279 = vld [vmem:[#allocation2 + $0x48] sm:$0xff]
  %v280 = vld [vmem:[#allocation2 + $0x50] sm:$0xff]
  %v281 = vld [vmem:[#allocation2 + $0x60] sm:$0xff]
  %v282 = vld [vmem:[#allocation2 + $0x68] sm:$0xff]
  %v283 = vld [vmem:[#allocation2 + $0x78] sm:$0xff]
  %v284 = vld [vmem:[#allocation2 + $0x80] sm:$0xff]
  %v285 = vld [vmem:[#allocation2 + $0x90] sm:$0xff]
  %v286 = vld [vmem:[#allocation2 + $0x98] sm:$0xff]
  %v287 = vld [vmem:[#allocation2 + $0xa8] sm:$0xff]
  %v288 = vld [vmem:[#allocation2 + $0xb0] sm:$0xff]
  %v289 = vld [vmem:[#allocation2 + $0xc0] sm:$0xff]
  %v290 = vld [vmem:[#allocation2 + $0xc8] sm:$0xff]
  %v291 = vld [vmem:[#allocation2 + $0xd8] sm:$0xff]
  %v292 = vld [vmem:[#allocation2 + $0xe0] sm:$0xff]
  %v293 = vld [vmem:[#allocation2 + $0xf0] sm:$0xff]
  %v294 = vld [vmem:[#allocation2 + $0xf8] sm:$0xff]
  %v295 = vld [vmem:[#allocation2 + $0x108] sm:$0xff]
  %v296 = vld [vmem:[#allocation2 + $0x110] sm:$0xff]
  %v297 = vld [vmem:[#allocation2 + $0x120] sm:$0xff]
  %v298 = vld [vmem:[#allocation2 + $0x128] sm:$0xff]
  %v299 = vld [vmem:[#allocation2 + $0x138] sm:$0xff]
  %v300 = vld [vmem:[#allocation2 + $0x140] sm:$0xff]
  %v301 = vld [vmem:[#allocation2 + $0x150] sm:$0xff]
  %v302 = vld [vmem:[#allocation2 + $0x158] sm:$0xff]
  %v303 = vld [vmem:[#allocation2 + $0x168] sm:$0xff]
  %v304 = vld [vmem:[#allocation2 + $0x170] sm:$0xff]
  %v305 = vld [vmem:[#allocation2 + $0x1b0] sm:$0xff]
  %v306 = vld [vmem:[#allocation2 + $0x1b8] sm:$0xff]
  %v307 = vld [vmem:[#allocation2 + $0x1c8] sm:$0xff]
  %v308 = vld [vmem:[#allocation2 + $0x1d0] sm:$0xff]
  %v309 = vld [vmem:[#allocation2 + $0x1e0] sm:$0xff]
  %v310 = vld [vmem:[#allocation2 + $0x1e8] sm:$0xff]
  %v311 = vld [vmem:[#allocation2 + $0x1f8] sm:$0xff]
  %v312 = vld [vmem:[#allocation2 + $0x200] sm:$0xff]
  %v313 = vld [vmem:[#allocation2 + $0x210] sm:$0xff]
  %v314 = vld [vmem:[#allocation2 + $0x218] sm:$0xff]
  %v315 = vld [vmem:[#allocation2 + $0x228] sm:$0xff]
  %v316 = vld [vmem:[#allocation2 + $0x230] sm:$0xff]
  %v317 = vld [vmem:[#allocation2 + $0x240] sm:$0xff]
  %v318 = vld [vmem:[#allocation2 + $0x248] sm:$0xff]
  %v319 = vld [vmem:[#allocation2 + $0x258] sm:$0xff]
  %v320 = vld [vmem:[#allocation2 + $0x260] sm:$0xff]
  %v321 = vld [vmem:[#allocation2 + $0x270] sm:$0xff]
  %v322 = vld [vmem:[#allocation2 + $0x278] sm:$0xff]
  %v323 = vld [vmem:[#allocation2 + $0x288] sm:$0xff]
  %v324 = vld [vmem:[#allocation2 + $0x290] sm:$0xff]
  %v325 = vld [vmem:[#allocation2 + $0x2a0] sm:$0xff]
  %v326 = vld [vmem:[#allocation2 + $0x2a8] sm:$0xff]
  %v327 = vld [vmem:[#allocation2 + $0x2b8] sm:$0xff]
  %v328 = vld [vmem:[#allocation2 + $0x2c0] sm:$0xff]
  %v329 = vld [vmem:[#allocation2 + $0x2d0] sm:$0xff]
  %v330 = vld [vmem:[#allocation2 + $0x2d8] sm:$0xff]
  %v331 = vld [vmem:[#allocation2 + $0x2e8] sm:$0xff]
  %v332 = vld [vmem:[#allocation2 + $0x2f0] sm:$0xff]
  %v333 = vld [vmem:[#allocation2 + $0x300] sm:$0xff]
  %v334 = vld [vmem:[#allocation2 + $0x308] sm:$0xff]
  %v335 = vld [vmem:[#allocation2 + $0x318] sm:$0xff]
  %v336 = vld [vmem:[#allocation2 + $0x320] sm:$0xff]
  %337 = vst.msk [vmem:[#allocation3] sm:$0xff] %vm34, %v273
  %338 = vst.msk [vmem:[#allocation3 + $0x8] sm:$0xff] %vm34, %v274
  %339 = vst.msk [vmem:[#allocation3 + $0x10] sm:$0xff] %vm34, %v275
  %340 = vst.msk [vmem:[#allocation3 + $0x18] sm:$0xff] %vm34, %v276
  %341 = vst.msk [vmem:[#allocation3 + $0x20] sm:$0xff] %vm34, %v277
  %342 = vst.msk [vmem:[#allocation3 + $0x28] sm:$0xff] %vm34, %v278
  %343 = vst.msk [vmem:[#allocation3 + $0x30] sm:$0xff] %vm34, %v279
  %344 = vst.msk [vmem:[#allocation3 + $0x38] sm:$0xff] %vm34, %v280
  %345 = vst.msk [vmem:[#allocation3 + $0x40] sm:$0xff] %vm34, %v281
  %346 = vst.msk [vmem:[#allocation3 + $0x48] sm:$0xff] %vm34, %v282
  %347 = vst.msk [vmem:[#allocation3 + $0x50] sm:$0xff] %vm34, %v283
  %348 = vst.msk [vmem:[#allocation3 + $0x58] sm:$0xff] %vm34, %v284
  %349 = vst.msk [vmem:[#allocation3 + $0x60] sm:$0xff] %vm34, %v285
  %350 = vst.msk [vmem:[#allocation3 + $0x68] sm:$0xff] %vm34, %v286
  %351 = vst.msk [vmem:[#allocation3 + $0x70] sm:$0xff] %vm34, %v287
  %352 = vst.msk [vmem:[#allocation3 + $0x78] sm:$0xff] %vm34, %v288
  %353 = vst.msk [vmem:[#allocation3 + $0x80] sm:$0xff] %vm34, %v289
  %354 = vst.msk [vmem:[#allocation3 + $0x88] sm:$0xff] %vm34, %v290
  %355 = vst.msk [vmem:[#allocation3 + $0x90] sm:$0xff] %vm34, %v291
  %356 = vst.msk [vmem:[#allocation3 + $0x98] sm:$0xff] %vm34, %v292
  %357 = vst.msk [vmem:[#allocation3 + $0xa0] sm:$0xff] %vm34, %v293
  %358 = vst.msk [vmem:[#allocation3 + $0xa8] sm:$0xff] %vm34, %v294
  %359 = vst.msk [vmem:[#allocation3 + $0xb0] sm:$0xff] %vm34, %v295
  %360 = vst.msk [vmem:[#allocation3 + $0xb8] sm:$0xff] %vm34, %v296
  %361 = vst.msk [vmem:[#allocation3 + $0xc0] sm:$0xff] %vm34, %v297
  %362 = vst.msk [vmem:[#allocation3 + $0xc8] sm:$0xff] %vm34, %v298
  %363 = vst.msk [vmem:[#allocation3 + $0xd0] sm:$0xff] %vm34, %v299
  %364 = vst.msk [vmem:[#allocation3 + $0xd8] sm:$0xff] %vm34, %v300
  %365 = vst.msk [vmem:[#allocation3 + $0xe0] sm:$0xff] %vm34, %v301
  %366 = vst.msk [vmem:[#allocation3 + $0xe8] sm:$0xff] %vm34, %v302
  %367 = vst.msk [vmem:[#allocation3 + $0xf0] sm:$0xff] %vm34, %v303
  %368 = vst.msk [vmem:[#allocation3 + $0xf8] sm:$0xff] %vm34, %v304
  %369 = vst.msk [vmem:[#allocation3 + $0x100] sm:$0xff] %vm34, %v305
  %370 = vst.msk [vmem:[#allocation3 + $0x108] sm:$0xff] %vm34, %v306
  %371 = vst.msk [vmem:[#allocation3 + $0x110] sm:$0xff] %vm34, %v307
  %372 = vst.msk [vmem:[#allocation3 + $0x118] sm:$0xff] %vm34, %v308
  %373 = vst.msk [vmem:[#allocation3 + $0x120] sm:$0xff] %vm34, %v309
  %374 = vst.msk [vmem:[#allocation3 + $0x128] sm:$0xff] %vm34, %v310
  %375 = vst.msk [vmem:[#allocation3 + $0x130] sm:$0xff] %vm34, %v311
  %376 = vst.msk [vmem:[#allocation3 + $0x138] sm:$0xff] %vm34, %v312
  %377 = vst.msk [vmem:[#allocation3 + $0x140] sm:$0xff] %vm34, %v313
  %378 = vst.msk [vmem:[#allocation3 + $0x148] sm:$0xff] %vm34, %v314
  %379 = vst.msk [vmem:[#allocation3 + $0x150] sm:$0xff] %vm34, %v315
  %380 = vst.msk [vmem:[#allocation3 + $0x158] sm:$0xff] %vm34, %v316
  %381 = vst.msk [vmem:[#allocation3 + $0x160] sm:$0xff] %vm34, %v317
  %382 = vst.msk [vmem:[#allocation3 + $0x168] sm:$0xff] %vm34, %v318
  %383 = vst.msk [vmem:[#allocation3 + $0x170] sm:$0xff] %vm34, %v319
  %384 = vst.msk [vmem:[#allocation3 + $0x178] sm:$0xff] %vm34, %v320
  %385 = vst.msk [vmem:[#allocation3 + $0x180] sm:$0xff] %vm34, %v321
  %386 = vst.msk [vmem:[#allocation3 + $0x188] sm:$0xff] %vm34, %v322
  %387 = vst.msk [vmem:[#allocation3 + $0x190] sm:$0xff] %vm34, %v323
  %388 = vst.msk [vmem:[#allocation3 + $0x198] sm:$0xff] %vm34, %v324
  %389 = vst.msk [vmem:[#allocation3 + $0x1a0] sm:$0xff] %vm34, %v325
  %390 = vst.msk [vmem:[#allocation3 + $0x1a8] sm:$0xff] %vm34, %v326
  %391 = vst.msk [vmem:[#allocation3 + $0x1b0] sm:$0xff] %vm34, %v327
  %392 = vst.msk [vmem:[#allocation3 + $0x1b8] sm:$0xff] %vm34, %v328
  %393 = vst.msk [vmem:[#allocation3 + $0x1c0] sm:$0xff] %vm34, %v329
  %394 = vst.msk [vmem:[#allocation3 + $0x1c8] sm:$0xff] %vm34, %v330
  %395 = vst.msk [vmem:[#allocation3 + $0x1d0] sm:$0xff] %vm34, %v331
  %396 = vst.msk [vmem:[#allocation3 + $0x1d8] sm:$0xff] %vm34, %v332
  %397 = vst.msk [vmem:[#allocation3 + $0x1e0] sm:$0xff] %vm34, %v333
  %398 = vst.msk [vmem:[#allocation3 + $0x1e8] sm:$0xff] %vm34, %v334
  %399 = vst.msk [vmem:[#allocation3 + $0x1f0] sm:$0xff] %vm34, %v335
  %400 = vst.msk [vmem:[#allocation3 + $0x1f8] sm:$0xff] %vm34, %v336
  %v401 = vld [vmem:[#allocation2 + $0x1] sm:$0xff]
  %v402 = vld [vmem:[#allocation2 + $0x9] sm:$0xff]
  %v403 = vld [vmem:[#allocation2 + $0x19] sm:$0xff]
  %v404 = vld [vmem:[#allocation2 + $0x21] sm:$0xff]
  %v405 = vld [vmem:[#allocation2 + $0x31] sm:$0xff]
  %v406 = vld [vmem:[#allocation2 + $0x39] sm:$0xff]
  %v407 = vld [vmem:[#allocation2 + $0x49] sm:$0xff]
  %v408 = vld [vmem:[#allocation2 + $0x51] sm:$0xff]
  %v409 = vld [vmem:[#allocation2 + $0x61] sm:$0xff]
  %v410 = vld [vmem:[#allocation2 + $0x69] sm:$0xff]
  %v411 = vld [vmem:[#allocation2 + $0x79] sm:$0xff]
  %v412 = vld [vmem:[#allocation2 + $0x81] sm:$0xff]
  %v413 = vld [vmem:[#allocation2 + $0x91] sm:$0xff]
  %v414 = vld [vmem:[#allocation2 + $0x99] sm:$0xff]
  %v415 = vld [vmem:[#allocation2 + $0xa9] sm:$0xff]
  %v416 = vld [vmem:[#allocation2 + $0xb1] sm:$0xff]
  %v417 = vld [vmem:[#allocation2 + $0xc1] sm:$0xff]
  %v418 = vld [vmem:[#allocation2 + $0xc9] sm:$0xff]
  %v419 = vld [vmem:[#allocation2 + $0xd9] sm:$0xff]
  %v420 = vld [vmem:[#allocation2 + $0xe1] sm:$0xff]
  %v421 = vld [vmem:[#allocation2 + $0xf1] sm:$0xff]
  %v422 = vld [vmem:[#allocation2 + $0xf9] sm:$0xff]
  %v423 = vld [vmem:[#allocation2 + $0x109] sm:$0xff]
  %v424 = vld [vmem:[#allocation2 + $0x111] sm:$0xff]
  %v425 = vld [vmem:[#allocation2 + $0x121] sm:$0xff]
  %v426 = vld [vmem:[#allocation2 + $0x129] sm:$0xff]
  %v427 = vld [vmem:[#allocation2 + $0x139] sm:$0xff]
  %v428 = vld [vmem:[#allocation2 + $0x141] sm:$0xff]
  %v429 = vld [vmem:[#allocation2 + $0x151] sm:$0xff]
  %v430 = vld [vmem:[#allocation2 + $0x159] sm:$0xff]
  %v431 = vld [vmem:[#allocation2 + $0x169] sm:$0xff]
  %v432 = vld [vmem:[#allocation2 + $0x171] sm:$0xff]
  %v433 = vld [vmem:[#allocation2 + $0x1b1] sm:$0xff]
  %v434 = vld [vmem:[#allocation2 + $0x1b9] sm:$0xff]
  %v435 = vld [vmem:[#allocation2 + $0x1c9] sm:$0xff]
  %v436 = vld [vmem:[#allocation2 + $0x1d1] sm:$0xff]
  %v437 = vld [vmem:[#allocation2 + $0x1e1] sm:$0xff]
  %v438 = vld [vmem:[#allocation2 + $0x1e9] sm:$0xff]
  %v439 = vld [vmem:[#allocation2 + $0x1f9] sm:$0xff]
  %v440 = vld [vmem:[#allocation2 + $0x201] sm:$0xff]
  %v441 = vld [vmem:[#allocation2 + $0x211] sm:$0xff]
  %v442 = vld [vmem:[#allocation2 + $0x219] sm:$0xff]
  %v443 = vld [vmem:[#allocation2 + $0x229] sm:$0xff]
  %v444 = vld [vmem:[#allocation2 + $0x231] sm:$0xff]
  %v445 = vld [vmem:[#allocation2 + $0x241] sm:$0xff]
  %v446 = vld [vmem:[#allocation2 + $0x249] sm:$0xff]
  %v447 = vld [vmem:[#allocation2 + $0x259] sm:$0xff]
  %v448 = vld [vmem:[#allocation2 + $0x261] sm:$0xff]
  %v449 = vld [vmem:[#allocation2 + $0x271] sm:$0xff]
  %v450 = vld [vmem:[#allocation2 + $0x279] sm:$0xff]
  %v451 = vld [vmem:[#allocation2 + $0x289] sm:$0xff]
  %v452 = vld [vmem:[#allocation2 + $0x291] sm:$0xff]
  %v453 = vld [vmem:[#allocation2 + $0x2a1] sm:$0xff]
  %v454 = vld [vmem:[#allocation2 + $0x2a9] sm:$0xff]
  %v455 = vld [vmem:[#allocation2 + $0x2b9] sm:$0xff]
  %v456 = vld [vmem:[#allocation2 + $0x2c1] sm:$0xff]
  %v457 = vld [vmem:[#allocation2 + $0x2d1] sm:$0xff]
  %v458 = vld [vmem:[#allocation2 + $0x2d9] sm:$0xff]
  %v459 = vld [vmem:[#allocation2 + $0x2e9] sm:$0xff]
  %v460 = vld [vmem:[#allocation2 + $0x2f1] sm:$0xff]
  %v461 = vld [vmem:[#allocation2 + $0x301] sm:$0xff]
  %v462 = vld [vmem:[#allocation2 + $0x309] sm:$0xff]
  %v463 = vld [vmem:[#allocation2 + $0x319] sm:$0xff]
  %v464 = vld [vmem:[#allocation2 + $0x321] sm:$0xff]
  %529 = vrot.lane.b32.xlu0 %v401, 1
  %v530 = vpop.permute.xlu0 %529
  %531 = vrot.lane.b32.xlu0 %v402, 1
  %v532 = vpop.permute.xlu0 %531
  %533 = vrot.lane.b32.xlu0 %v403, 1
  %v534 = vpop.permute.xlu0 %533
  %535 = vrot.lane.b32.xlu0 %v404, 1
  %v536 = vpop.permute.xlu0 %535
  %537 = vrot.lane.b32.xlu0 %v405, 1
  %v538 = vpop.permute.xlu0 %537
  %539 = vrot.lane.b32.xlu0 %v406, 1
  %v540 = vpop.permute.xlu0 %539
  %541 = vrot.lane.b32.xlu0 %v407, 1
  %v542 = vpop.permute.xlu0 %541
  %543 = vrot.lane.b32.xlu0 %v408, 1
  %v544 = vpop.permute.xlu0 %543
  %545 = vrot.lane.b32.xlu0 %v409, 1
  %v546 = vpop.permute.xlu0 %545
  %547 = vrot.lane.b32.xlu0 %v410, 1
  %v548 = vpop.permute.xlu0 %547
  %549 = vrot.lane.b32.xlu0 %v411, 1
  %v550 = vpop.permute.xlu0 %549
  %551 = vrot.lane.b32.xlu0 %v412, 1
  %v552 = vpop.permute.xlu0 %551
  %553 = vrot.lane.b32.xlu0 %v413, 1
  %v554 = vpop.permute.xlu0 %553
  %555 = vrot.lane.b32.xlu0 %v414, 1
  %v556 = vpop.permute.xlu0 %555
  %557 = vrot.lane.b32.xlu0 %v415, 1
  %v558 = vpop.permute.xlu0 %557
  %559 = vrot.lane.b32.xlu0 %v416, 1
  %v560 = vpop.permute.xlu0 %559
  %561 = vrot.lane.b32.xlu0 %v417, 1
  %v562 = vpop.permute.xlu0 %561
  %563 = vrot.lane.b32.xlu0 %v418, 1
  %v564 = vpop.permute.xlu0 %563
  %565 = vrot.lane.b32.xlu0 %v419, 1
  %v566 = vpop.permute.xlu0 %565
  %567 = vrot.lane.b32.xlu0 %v420, 1
  %v568 = vpop.permute.xlu0 %567
  %569 = vrot.lane.b32.xlu0 %v421, 1
  %v570 = vpop.permute.xlu0 %569
  %571 = vrot.lane.b32.xlu0 %v422, 1
  %v572 = vpop.permute.xlu0 %571
  %573 = vrot.lane.b32.xlu0 %v423, 1
  %v574 = vpop.permute.xlu0 %573
  %575 = vrot.lane.b32.xlu0 %v424, 1
  %v576 = vpop.permute.xlu0 %575
  %577 = vrot.lane.b32.xlu0 %v425, 1
  %v578 = vpop.permute.xlu0 %577
  %579 = vrot.lane.b32.xlu0 %v426, 1
  %v580 = vpop.permute.xlu0 %579
  %581 = vrot.lane.b32.xlu0 %v427, 1
  %v582 = vpop.permute.xlu0 %581
  %583 = vrot.lane.b32.xlu0 %v428, 1
  %v584 = vpop.permute.xlu0 %583
  %585 = vrot.lane.b32.xlu0 %v429, 1
  %v586 = vpop.permute.xlu0 %585
  %587 = vrot.lane.b32.xlu0 %v430, 1
  %v588 = vpop.permute.xlu0 %587
  %589 = vrot.lane.b32.xlu0 %v431, 1
  %v590 = vpop.permute.xlu0 %589
  %591 = vrot.lane.b32.xlu0 %v432, 1
  %v592 = vpop.permute.xlu0 %591
  %593 = vrot.lane.b32.xlu0 %v433, 1
  %v594 = vpop.permute.xlu0 %593
  %595 = vrot.lane.b32.xlu0 %v434, 1
  %v596 = vpop.permute.xlu0 %595
  %597 = vrot.lane.b32.xlu0 %v435, 1
  %v598 = vpop.permute.xlu0 %597
  %599 = vrot.lane.b32.xlu0 %v436, 1
  %v600 = vpop.permute.xlu0 %599
  %601 = vrot.lane.b32.xlu0 %v437, 1
  %v602 = vpop.permute.xlu0 %601
  %603 = vrot.lane.b32.xlu0 %v438, 1
  %v604 = vpop.permute.xlu0 %603
  %605 = vrot.lane.b32.xlu0 %v439, 1
  %v606 = vpop.permute.xlu0 %605
  %607 = vrot.lane.b32.xlu0 %v440, 1
  %v608 = vpop.permute.xlu0 %607
  %609 = vrot.lane.b32.xlu0 %v441, 1
  %v610 = vpop.permute.xlu0 %609
  %611 = vrot.lane.b32.xlu0 %v442, 1
  %v612 = vpop.permute.xlu0 %611
  %613 = vrot.lane.b32.xlu0 %v443, 1
  %v614 = vpop.permute.xlu0 %613
  %615 = vrot.lane.b32.xlu0 %v444, 1
  %v616 = vpop.permute.xlu0 %615
  %617 = vrot.lane.b32.xlu0 %v445, 1
  %v618 = vpop.permute.xlu0 %617
  %619 = vrot.lane.b32.xlu0 %v446, 1
  %v620 = vpop.permute.xlu0 %619
  %621 = vrot.lane.b32.xlu0 %v447, 1
  %v622 = vpop.permute.xlu0 %621
  %623 = vrot.lane.b32.xlu0 %v448, 1
  %v624 = vpop.permute.xlu0 %623
  %625 = vrot.lane.b32.xlu0 %v449, 1
  %v626 = vpop.permute.xlu0 %625
  %627 = vrot.lane.b32.xlu0 %v450, 1
  %v628 = vpop.permute.xlu0 %627
  %629 = vrot.lane.b32.xlu0 %v451, 1
  %v630 = vpop.permute.xlu0 %629
  %631 = vrot.lane.b32.xlu0 %v452, 1
  %v632 = vpop.permute.xlu0 %631
  %633 = vrot.lane.b32.xlu0 %v453, 1
  %v634 = vpop.permute.xlu0 %633
  %635 = vrot.lane.b32.xlu0 %v454, 1
  %v636 = vpop.permute.xlu0 %635
  %637 = vrot.lane.b32.xlu0 %v455, 1
  %v638 = vpop.permute.xlu0 %637
  %639 = vrot.lane.b32.xlu0 %v456, 1
  %v640 = vpop.permute.xlu0 %639
  %641 = vrot.lane.b32.xlu0 %v457, 1
  %v642 = vpop.permute.xlu0 %641
  %643 = vrot.lane.b32.xlu0 %v458, 1
  %v644 = vpop.permute.xlu0 %643
  %645 = vrot.lane.b32.xlu0 %v459, 1
  %v646 = vpop.permute.xlu0 %645
  %647 = vrot.lane.b32.xlu0 %v460, 1
  %v648 = vpop.permute.xlu0 %647
  %649 = vrot.lane.b32.xlu0 %v461, 1
  %v650 = vpop.permute.xlu0 %649
  %651 = vrot.lane.b32.xlu0 %v462, 1
  %v652 = vpop.permute.xlu0 %651
  %653 = vrot.lane.b32.xlu0 %v463, 1
  %v654 = vpop.permute.xlu0 %653
  %655 = vrot.lane.b32.xlu0 %v464, 1
  %v656 = vpop.permute.xlu0 %655
  %vm721 = vcmask 15368
  %722 = vst.msk [vmem:[#allocation3] sm:$0xff] %vm721, %v530
  %723 = vst.msk [vmem:[#allocation3 + $0x8] sm:$0xff] %vm721, %v532
  %724 = vst.msk [vmem:[#allocation3 + $0x10] sm:$0xff] %vm721, %v534
  %725 = vst.msk [vmem:[#allocation3 + $0x18] sm:$0xff] %vm721, %v536
  %726 = vst.msk [vmem:[#allocation3 + $0x20] sm:$0xff] %vm721, %v538
  %727 = vst.msk [vmem:[#allocation3 + $0x28] sm:$0xff] %vm721, %v540
  %728 = vst.msk [vmem:[#allocation3 + $0x30] sm:$0xff] %vm721, %v542
  %729 = vst.msk [vmem:[#allocation3 + $0x38] sm:$0xff] %vm721, %v544
  %730 = vst.msk [vmem:[#allocation3 + $0x40] sm:$0xff] %vm721, %v546
  %731 = vst.msk [vmem:[#allocation3 + $0x48] sm:$0xff] %vm721, %v548
  %732 = vst.msk [vmem:[#allocation3 + $0x50] sm:$0xff] %vm721, %v550
  %733 = vst.msk [vmem:[#allocation3 + $0x58] sm:$0xff] %vm721, %v552
  %734 = vst.msk [vmem:[#allocation3 + $0x60] sm:$0xff] %vm721, %v554
  %735 = vst.msk [vmem:[#allocation3 + $0x68] sm:$0xff] %vm721, %v556
  %736 = vst.msk [vmem:[#allocation3 + $0x70] sm:$0xff] %vm721, %v558
  %737 = vst.msk [vmem:[#allocation3 + $0x78] sm:$0xff] %vm721, %v560
  %738 = vst.msk [vmem:[#allocation3 + $0x80] sm:$0xff] %vm721, %v562
  %739 = vst.msk [vmem:[#allocation3 + $0x88] sm:$0xff] %vm721, %v564
  %740 = vst.msk [vmem:[#allocation3 + $0x90] sm:$0xff] %vm721, %v566
  %741 = vst.msk [vmem:[#allocation3 + $0x98] sm:$0xff] %vm721, %v568
  %742 = vst.msk [vmem:[#allocation3 + $0xa0] sm:$0xff] %vm721, %v570
  %743 = vst.msk [vmem:[#allocation3 + $0xa8] sm:$0xff] %vm721, %v572
  %744 = vst.msk [vmem:[#allocation3 + $0xb0] sm:$0xff] %vm721, %v574
  %745 = vst.msk [vmem:[#allocation3 + $0xb8] sm:$0xff] %vm721, %v576
  %746 = vst.msk [vmem:[#allocation3 + $0xc0] sm:$0xff] %vm721, %v578
  %747 = vst.msk [vmem:[#allocation3 + $0xc8] sm:$0xff] %vm721, %v580
  %748 = vst.msk [vmem:[#allocation3 + $0xd0] sm:$0xff] %vm721, %v582
  %749 = vst.msk [vmem:[#allocation3 + $0xd8] sm:$0xff] %vm721, %v584
  %750 = vst.msk [vmem:[#allocation3 + $0xe0] sm:$0xff] %vm721, %v586
  %751 = vst.msk [vmem:[#allocation3 + $0xe8] sm:$0xff] %vm721, %v588
  %752 = vst.msk [vmem:[#allocation3 + $0xf0] sm:$0xff] %vm721, %v590
  %753 = vst.msk [vmem:[#allocation3 + $0xf8] sm:$0xff] %vm721, %v592
  %754 = vst.msk [vmem:[#allocation3 + $0x100] sm:$0xff] %vm721, %v594
  %755 = vst.msk [vmem:[#allocation3 + $0x108] sm:$0xff] %vm721, %v596
  %756 = vst.msk [vmem:[#allocation3 + $0x110] sm:$0xff] %vm721, %v598
  %757 = vst.msk [vmem:[#allocation3 + $0x118] sm:$0xff] %vm721, %v600
  %758 = vst.msk [vmem:[#allocation3 + $0x120] sm:$0xff] %vm721, %v602
  %759 = vst.msk [vmem:[#allocation3 + $0x128] sm:$0xff] %vm721, %v604
  %760 = vst.msk [vmem:[#allocation3 + $0x130] sm:$0xff] %vm721, %v606
  %761 = vst.msk [vmem:[#allocation3 + $0x138] sm:$0xff] %vm721, %v608
  %762 = vst.msk [vmem:[#allocation3 + $0x140] sm:$0xff] %vm721, %v610
  %763 = vst.msk [vmem:[#allocation3 + $0x148] sm:$0xff] %vm721, %v612
  %764 = vst.msk [vmem:[#allocation3 + $0x150] sm:$0xff] %vm721, %v614
  %765 = vst.msk [vmem:[#allocation3 + $0x158] sm:$0xff] %vm721, %v616
  %766 = vst.msk [vmem:[#allocation3 + $0x160] sm:$0xff] %vm721, %v618
  %767 = vst.msk [vmem:[#allocation3 + $0x168] sm:$0xff] %vm721, %v620
  %768 = vst.msk [vmem:[#allocation3 + $0x170] sm:$0xff] %vm721, %v622
  %769 = vst.msk [vmem:[#allocation3 + $0x178] sm:$0xff] %vm721, %v624
  %770 = vst.msk [vmem:[#allocation3 + $0x180] sm:$0xff] %vm721, %v626
  %771 = vst.msk [vmem:[#allocation3 + $0x188] sm:$0xff] %vm721, %v628
  %772 = vst.msk [vmem:[#allocation3 + $0x190] sm:$0xff] %vm721, %v630
  %773 = vst.msk [vmem:[#allocation3 + $0x198] sm:$0xff] %vm721, %v632
  %774 = vst.msk [vmem:[#allocation3 + $0x1a0] sm:$0xff] %vm721, %v634
  %775 = vst.msk [vmem:[#allocation3 + $0x1a8] sm:$0xff] %vm721, %v636
  %776 = vst.msk [vmem:[#allocation3 + $0x1b0] sm:$0xff] %vm721, %v638
  %777 = vst.msk [vmem:[#allocation3 + $0x1b8] sm:$0xff] %vm721, %v640
  %778 = vst.msk [vmem:[#allocation3 + $0x1c0] sm:$0xff] %vm721, %v642
  %779 = vst.msk [vmem:[#allocation3 + $0x1c8] sm:$0xff] %vm721, %v644
  %780 = vst.msk [vmem:[#allocation3 + $0x1d0] sm:$0xff] %vm721, %v646
  %781 = vst.msk [vmem:[#allocation3 + $0x1d8] sm:$0xff] %vm721, %v648
  %782 = vst.msk [vmem:[#allocation3 + $0x1e0] sm:$0xff] %vm721, %v650
  %783 = vst.msk [vmem:[#allocation3 + $0x1e8] sm:$0xff] %vm721, %v652
  %784 = vst.msk [vmem:[#allocation3 + $0x1f0] sm:$0xff] %vm721, %v654
  %785 = vst.msk [vmem:[#allocation3 + $0x1f8] sm:$0xff] %vm721, %v656
  %v786 = vld [vmem:[#allocation2 + $0x2] sm:$0xff]
  %v787 = vld [vmem:[#allocation2 + $0xa] sm:$0xff]
  %v788 = vld [vmem:[#allocation2 + $0x1a] sm:$0xff]
  %v789 = vld [vmem:[#allocation2 + $0x22] sm:$0xff]
  %v790 = vld [vmem:[#allocation2 + $0x32] sm:$0xff]
  %v791 = vld [vmem:[#allocation2 + $0x3a] sm:$0xff]
  %v792 = vld [vmem:[#allocation2 + $0x4a] sm:$0xff]
  %v793 = vld [vmem:[#allocation2 + $0x52] sm:$0xff]
  %v794 = vld [vmem:[#allocation2 + $0x62] sm:$0xff]
  %v795 = vld [vmem:[#allocation2 + $0x6a] sm:$0xff]
  %v796 = vld [vmem:[#allocation2 + $0x7a] sm:$0xff]
  %v797 = vld [vmem:[#allocation2 + $0x82] sm:$0xff]
  %v798 = vld [vmem:[#allocation2 + $0x92] sm:$0xff]
  %v799 = vld [vmem:[#allocation2 + $0x9a] sm:$0xff]
  %v800 = vld [vmem:[#allocation2 + $0xaa] sm:$0xff]
  %v801 = vld [vmem:[#allocation2 + $0xb2] sm:$0xff]
  %v802 = vld [vmem:[#allocation2 + $0xc2] sm:$0xff]
  %v803 = vld [vmem:[#allocation2 + $0xca] sm:$0xff]
  %v804 = vld [vmem:[#allocation2 + $0xda] sm:$0xff]
  %v805 = vld [vmem:[#allocation2 + $0xe2] sm:$0xff]
  %v806 = vld [vmem:[#allocation2 + $0xf2] sm:$0xff]
  %v807 = vld [vmem:[#allocation2 + $0xfa] sm:$0xff]
  %v808 = vld [vmem:[#allocation2 + $0x10a] sm:$0xff]
  %v809 = vld [vmem:[#allocation2 + $0x112] sm:$0xff]
  %v810 = vld [vmem:[#allocation2 + $0x122] sm:$0xff]
  %v811 = vld [vmem:[#allocation2 + $0x12a] sm:$0xff]
  %v812 = vld [vmem:[#allocation2 + $0x13a] sm:$0xff]
  %v813 = vld [vmem:[#allocation2 + $0x142] sm:$0xff]
  %v814 = vld [vmem:[#allocation2 + $0x152] sm:$0xff]
  %v815 = vld [vmem:[#allocation2 + $0x15a] sm:$0xff]
  %v816 = vld [vmem:[#allocation2 + $0x16a] sm:$0xff]
  %v817 = vld [vmem:[#allocation2 + $0x172] sm:$0xff]
  %v818 = vld [vmem:[#allocation2 + $0x1b2] sm:$0xff]
  %v819 = vld [vmem:[#allocation2 + $0x1ba] sm:$0xff]
  %v820 = vld [vmem:[#allocation2 + $0x1ca] sm:$0xff]
  %v821 = vld [vmem:[#allocation2 + $0x1d2] sm:$0xff]
  %v822 = vld [vmem:[#allocation2 + $0x1e2] sm:$0xff]
  %v823 = vld [vmem:[#allocation2 + $0x1ea] sm:$0xff]
  %v824 = vld [vmem:[#allocation2 + $0x1fa] sm:$0xff]
  %v825 = vld [vmem:[#allocation2 + $0x202] sm:$0xff]
  %v826 = vld [vmem:[#allocation2 + $0x212] sm:$0xff]
  %v827 = vld [vmem:[#allocation2 + $0x21a] sm:$0xff]
  %v828 = vld [vmem:[#allocation2 + $0x22a] sm:$0xff]
  %v829 = vld [vmem:[#allocation2 + $0x232] sm:$0xff]
  %v830 = vld [vmem:[#allocation2 + $0x242] sm:$0xff]
  %v831 = vld [vmem:[#allocation2 + $0x24a] sm:$0xff]
  %v832 = vld [vmem:[#allocation2 + $0x25a] sm:$0xff]
  %v833 = vld [vmem:[#allocation2 + $0x262] sm:$0xff]
  %v834 = vld [vmem:[#allocation2 + $0x272] sm:$0xff]
  %v835 = vld [vmem:[#allocation2 + $0x27a] sm:$0xff]
  %v836 = vld [vmem:[#allocation2 + $0x28a] sm:$0xff]
  %v837 = vld [vmem:[#allocation2 + $0x292] sm:$0xff]
  %v838 = vld [vmem:[#allocation2 + $0x2a2] sm:$0xff]
  %v839 = vld [vmem:[#allocation2 + $0x2aa] sm:$0xff]
  %v840 = vld [vmem:[#allocation2 + $0x2ba] sm:$0xff]
  %v841 = vld [vmem:[#allocation2 + $0x2c2] sm:$0xff]
  %v842 = vld [vmem:[#allocation2 + $0x2d2] sm:$0xff]
  %v843 = vld [vmem:[#allocation2 + $0x2da] sm:$0xff]
  %v844 = vld [vmem:[#allocation2 + $0x2ea] sm:$0xff]
  %v845 = vld [vmem:[#allocation2 + $0x2f2] sm:$0xff]
  %v846 = vld [vmem:[#allocation2 + $0x302] sm:$0xff]
  %v847 = vld [vmem:[#allocation2 + $0x30a] sm:$0xff]
  %v848 = vld [vmem:[#allocation2 + $0x31a] sm:$0xff]
  %v849 = vld [vmem:[#allocation2 + $0x322] sm:$0xff]
  %914 = vrot.lane.b32.xlu0 %v786, 2
  %v915 = vpop.permute.xlu0 %914
  %916 = vrot.lane.b32.xlu0 %v787, 2
  %v917 = vpop.permute.xlu0 %916
  %918 = vrot.lane.b32.xlu0 %v788, 2
  %v919 = vpop.permute.xlu0 %918
  %920 = vrot.lane.b32.xlu0 %v789, 2
  %v921 = vpop.permute.xlu0 %920
  %922 = vrot.lane.b32.xlu0 %v790, 2
  %v923 = vpop.permute.xlu0 %922
  %924 = vrot.lane.b32.xlu0 %v791, 2
  %v925 = vpop.permute.xlu0 %924
  %926 = vrot.lane.b32.xlu0 %v792, 2
  %v927 = vpop.permute.xlu0 %926
  %928 = vrot.lane.b32.xlu0 %v793, 2
  %v929 = vpop.permute.xlu0 %928
  %930 = vrot.lane.b32.xlu0 %v794, 2
  %v931 = vpop.permute.xlu0 %930
  %932 = vrot.lane.b32.xlu0 %v795, 2
  %v933 = vpop.permute.xlu0 %932
  %934 = vrot.lane.b32.xlu0 %v796, 2
  %v935 = vpop.permute.xlu0 %934
  %936 = vrot.lane.b32.xlu0 %v797, 2
  %v937 = vpop.permute.xlu0 %936
  %938 = vrot.lane.b32.xlu0 %v798, 2
  %v939 = vpop.permute.xlu0 %938
  %940 = vrot.lane.b32.xlu0 %v799, 2
  %v941 = vpop.permute.xlu0 %940
  %942 = vrot.lane.b32.xlu0 %v800, 2
  %v943 = vpop.permute.xlu0 %942
  %944 = vrot.lane.b32.xlu0 %v801, 2
  %v945 = vpop.permute.xlu0 %944
  %946 = vrot.lane.b32.xlu0 %v802, 2
  %v947 = vpop.permute.xlu0 %946
  %948 = vrot.lane.b32.xlu0 %v803, 2
  %v949 = vpop.permute.xlu0 %948
  %950 = vrot.lane.b32.xlu0 %v804, 2
  %v951 = vpop.permute.xlu0 %950
  %952 = vrot.lane.b32.xlu0 %v805, 2
  %v953 = vpop.permute.xlu0 %952
  %954 = vrot.lane.b32.xlu0 %v806, 2
  %v955 = vpop.permute.xlu0 %954
  %956 = vrot.lane.b32.xlu0 %v807, 2
  %v957 = vpop.permute.xlu0 %956
  %958 = vrot.lane.b32.xlu0 %v808, 2
  %v959 = vpop.permute.xlu0 %958
  %960 = vrot.lane.b32.xlu0 %v809, 2
  %v961 = vpop.permute.xlu0 %960
  %962 = vrot.lane.b32.xlu0 %v810, 2
  %v963 = vpop.permute.xlu0 %962
  %964 = vrot.lane.b32.xlu0 %v811, 2
  %v965 = vpop.permute.xlu0 %964
  %966 = vrot.lane.b32.xlu0 %v812, 2
  %v967 = vpop.permute.xlu0 %966
  %968 = vrot.lane.b32.xlu0 %v813, 2
  %v969 = vpop.permute.xlu0 %968
  %970 = vrot.lane.b32.xlu0 %v814, 2
  %v971 = vpop.permute.xlu0 %970
  %972 = vrot.lane.b32.xlu0 %v815, 2
  %v973 = vpop.permute.xlu0 %972
  %974 = vrot.lane.b32.xlu0 %v816, 2
  %v975 = vpop.permute.xlu0 %974
  %976 = vrot.lane.b32.xlu0 %v817, 2
  %v977 = vpop.permute.xlu0 %976
  %978 = vrot.lane.b32.xlu0 %v818, 2
  %v979 = vpop.permute.xlu0 %978
  %980 = vrot.lane.b32.xlu0 %v819, 2
  %v981 = vpop.permute.xlu0 %980
  %982 = vrot.lane.b32.xlu0 %v820, 2
  %v983 = vpop.permute.xlu0 %982
  %984 = vrot.lane.b32.xlu0 %v821, 2
  %v985 = vpop.permute.xlu0 %984
  %986 = vrot.lane.b32.xlu0 %v822, 2
  %v987 = vpop.permute.xlu0 %986
  %988 = vrot.lane.b32.xlu0 %v823, 2
  %v989 = vpop.permute.xlu0 %988
  %990 = vrot.lane.b32.xlu0 %v824, 2
  %v991 = vpop.permute.xlu0 %990
  %992 = vrot.lane.b32.xlu0 %v825, 2
  %v993 = vpop.permute.xlu0 %992
  %994 = vrot.lane.b32.xlu0 %v826, 2
  %v995 = vpop.permute.xlu0 %994
  %996 = vrot.lane.b32.xlu0 %v827, 2
  %v997 = vpop.permute.xlu0 %996
  %998 = vrot.lane.b32.xlu0 %v828, 2
  %v999 = vpop.permute.xlu0 %998
  %1000 = vrot.lane.b32.xlu0 %v829, 2
  %v1001 = vpop.permute.xlu0 %1000
  %1002 = vrot.lane.b32.xlu0 %v830, 2
  %v1003 = vpop.permute.xlu0 %1002
  %1004 = vrot.lane.b32.xlu0 %v831, 2
  %v1005 = vpop.permute.xlu0 %1004
  %1006 = vrot.lane.b32.xlu0 %v832, 2
  %v1007 = vpop.permute.xlu0 %1006
  %1008 = vrot.lane.b32.xlu0 %v833, 2
  %v1009 = vpop.permute.xlu0 %1008
  %1010 = vrot.lane.b32.xlu0 %v834, 2
  %v1011 = vpop.permute.xlu0 %1010
  %1012 = vrot.lane.b32.xlu0 %v835, 2
  %v1013 = vpop.permute.xlu0 %1012
  %1014 = vrot.lane.b32.xlu0 %v836, 2
  %v1015 = vpop.permute.xlu0 %1014
  %1016 = vrot.lane.b32.xlu0 %v837, 2
  %v1017 = vpop.permute.xlu0 %1016
  %1018 = vrot.lane.b32.xlu0 %v838, 2
  %v1019 = vpop.permute.xlu0 %1018
  %1020 = vrot.lane.b32.xlu0 %v839, 2
  %v1021 = vpop.permute.xlu0 %1020
  %1022 = vrot.lane.b32.xlu0 %v840, 2
  %v1023 = vpop.permute.xlu0 %1022
  %1024 = vrot.lane.b32.xlu0 %v841, 2
  %v1025 = vpop.permute.xlu0 %1024
  %1026 = vrot.lane.b32.xlu0 %v842, 2
  %v1027 = vpop.permute.xlu0 %1026
  %1028 = vrot.lane.b32.xlu0 %v843, 2
  %v1029 = vpop.permute.xlu0 %1028
  %1030 = vrot.lane.b32.xlu0 %v844, 2
  %v1031 = vpop.permute.xlu0 %1030
  %1032 = vrot.lane.b32.xlu0 %v845, 2
  %v1033 = vpop.permute.xlu0 %1032
  %1034 = vrot.lane.b32.xlu0 %v846, 2
  %v1035 = vpop.permute.xlu0 %1034
  %1036 = vrot.lane.b32.xlu0 %v847, 2
  %v1037 = vpop.permute.xlu0 %1036
  %1038 = vrot.lane.b32.xlu0 %v848, 2
  %v1039 = vpop.permute.xlu0 %1038
  %1040 = vrot.lane.b32.xlu0 %v849, 2
  %v1041 = vpop.permute.xlu0 %1040
  %vm1106 = vcmask 23568
  %1107 = vst.msk [vmem:[#allocation3] sm:$0xff] %vm1106, %v915
  %1108 = vst.msk [vmem:[#allocation3 + $0x8] sm:$0xff] %vm1106, %v917
  %1109 = vst.msk [vmem:[#allocation3 + $0x10] sm:$0xff] %vm1106, %v919
  %1110 = vst.msk [vmem:[#allocation3 + $0x18] sm:$0xff] %vm1106, %v921
  %1111 = vst.msk [vmem:[#allocation3 + $0x20] sm:$0xff] %vm1106, %v923
  %1112 = vst.msk [vmem:[#allocation3 + $0x28] sm:$0xff] %vm1106, %v925
  %1113 = vst.msk [vmem:[#allocation3 + $0x30] sm:$0xff] %vm1106, %v927
  %1114 = vst.msk [vmem:[#allocation3 + $0x38] sm:$0xff] %vm1106, %v929
  %1115 = vst.msk [vmem:[#allocation3 + $0x40] sm:$0xff] %vm1106, %v931
  %1116 = vst.msk [vmem:[#allocation3 + $0x48] sm:$0xff] %vm1106, %v933
  %1117 = vst.msk [vmem:[#allocation3 + $0x50] sm:$0xff] %vm1106, %v935
  %1118 = vst.msk [vmem:[#allocation3 + $0x58] sm:$0xff] %vm1106, %v937
  %1119 = vst.msk [vmem:[#allocation3 + $0x60] sm:$0xff] %vm1106, %v939
  %1120 = vst.msk [vmem:[#allocation3 + $0x68] sm:$0xff] %vm1106, %v941
  %1121 = vst.msk [vmem:[#allocation3 + $0x70] sm:$0xff] %vm1106, %v943
  %1122 = vst.msk [vmem:[#allocation3 + $0x78] sm:$0xff] %vm1106, %v945
  %1123 = vst.msk [vmem:[#allocation3 + $0x80] sm:$0xff] %vm1106, %v947
  %1124 = vst.msk [vmem:[#allocation3 + $0x88] sm:$0xff] %vm1106, %v949
  %1125 = vst.msk [vmem:[#allocation3 + $0x90] sm:$0xff] %vm1106, %v951
  %1126 = vst.msk [vmem:[#allocation3 + $0x98] sm:$0xff] %vm1106, %v953
  %1127 = vst.msk [vmem:[#allocation3 + $0xa0] sm:$0xff] %vm1106, %v955
  %1128 = vst.msk [vmem:[#allocation3 + $0xa8] sm:$0xff] %vm1106, %v957
  %1129 = vst.msk [vmem:[#allocation3 + $0xb0] sm:$0xff] %vm1106, %v959
  %1130 = vst.msk [vmem:[#allocation3 + $0xb8] sm:$0xff] %vm1106, %v961
  %1131 = vst.msk [vmem:[#allocation3 + $0xc0] sm:$0xff] %vm1106, %v963
  %1132 = vst.msk [vmem:[#allocation3 + $0xc8] sm:$0xff] %vm1106, %v965
  %1133 = vst.msk [vmem:[#allocation3 + $0xd0] sm:$0xff] %vm1106, %v967
  %1134 = vst.msk [vmem:[#allocation3 + $0xd8] sm:$0xff] %vm1106, %v969
  %1135 = vst.msk [vmem:[#allocation3 + $0xe0] sm:$0xff] %vm1106, %v971
  %1136 = vst.msk [vmem:[#allocation3 + $0xe8] sm:$0xff] %vm1106, %v973
  %1137 = vst.msk [vmem:[#allocation3 + $0xf0] sm:$0xff] %vm1106, %v975
  %1138 = vst.msk [vmem:[#allocation3 + $0xf8] sm:$0xff] %vm1106, %v977
  %1139 = vst.msk [vmem:[#allocation3 + $0x100] sm:$0xff] %vm1106, %v979
  %1140 = vst.msk [vmem:[#allocation3 + $0x108] sm:$0xff] %vm1106, %v981
  %1141 = vst.msk [vmem:[#allocation3 + $0x110] sm:$0xff] %vm1106, %v983
  %1142 = vst.msk [vmem:[#allocation3 + $0x118] sm:$0xff] %vm1106, %v985
  %1143 = vst.msk [vmem:[#allocation3 + $0x120] sm:$0xff] %vm1106, %v987
  %1144 = vst.msk [vmem:[#allocation3 + $0x128] sm:$0xff] %vm1106, %v989
  %1145 = vst.msk [vmem:[#allocation3 + $0x130] sm:$0xff] %vm1106, %v991
  %1146 = vst.msk [vmem:[#allocation3 + $0x138] sm:$0xff] %vm1106, %v993
  %1147 = vst.msk [vmem:[#allocation3 + $0x140] sm:$0xff] %vm1106, %v995
  %1148 = vst.msk [vmem:[#allocation3 + $0x148] sm:$0xff] %vm1106, %v997
  %1149 = vst.msk [vmem:[#allocation3 + $0x150] sm:$0xff] %vm1106, %v999
  %1150 = vst.msk [vmem:[#allocation3 + $0x158] sm:$0xff] %vm1106, %v1001
  %1151 = vst.msk [vmem:[#allocation3 + $0x160] sm:$0xff] %vm1106, %v1003
  %1152 = vst.msk [vmem:[#allocation3 + $0x168] sm:$0xff] %vm1106, %v1005
  %1153 = vst.msk [vmem:[#allocation3 + $0x170] sm:$0xff] %vm1106, %v1007
  %1154 = vst.msk [vmem:[#allocation3 + $0x178] sm:$0xff] %vm1106, %v1009
  %1155 = vst.msk [vmem:[#allocation3 + $0x180] sm:$0xff] %vm1106, %v1011
  %1156 = vst.msk [vmem:[#allocation3 + $0x188] sm:$0xff] %vm1106, %v1013
  %1157 = vst.msk [vmem:[#allocation3 + $0x190] sm:$0xff] %vm1106, %v1015
  %1158 = vst.msk [vmem:[#allocation3 + $0x198] sm:$0xff] %vm1106, %v1017
  %1159 = vst.msk [vmem:[#allocation3 + $0x1a0] sm:$0xff] %vm1106, %v1019
  %1160 = vst.msk [vmem:[#allocation3 + $0x1a8] sm:$0xff] %vm1106, %v1021
  %1161 = vst.msk [vmem:[#allocation3 + $0x1b0] sm:$0xff] %vm1106, %v1023
  %1162 = vst.msk [vmem:[#allocation3 + $0x1b8] sm:$0xff] %vm1106, %v1025
  %1163 = vst.msk [vmem:[#allocation3 + $0x1c0] sm:$0xff] %vm1106, %v1027
  %1164 = vst.msk [vmem:[#allocation3 + $0x1c8] sm:$0xff] %vm1106, %v1029
  %1165 = vst.msk [vmem:[#allocation3 + $0x1d0] sm:$0xff] %vm1106, %v1031
  %1166 = vst.msk [vmem:[#allocation3 + $0x1d8] sm:$0xff] %vm1106, %v1033
  %1167 = vst.msk [vmem:[#allocation3 + $0x1e0] sm:$0xff] %vm1106, %v1035
  %1168 = vst.msk [vmem:[#allocation3 + $0x1e8] sm:$0xff] %vm1106, %v1037
  %1169 = vst.msk [vmem:[#allocation3 + $0x1f0] sm:$0xff] %vm1106, %v1039
  %1170 = vst.msk [vmem:[#allocation3 + $0x1f8] sm:$0xff] %vm1106, %v1041
  %v1171 = vld [vmem:[%s208] sm:$0xff]
  %v1172 = vld [vmem:[%s208 + $0x8] sm:$0xff]
  %v1173 = vld [vmem:[%s208 + $0x18] sm:$0xff]
  %v1174 = vld [vmem:[%s208 + $0x20] sm:$0xff]
  %v1175 = vld [vmem:[%s208 + $0x30] sm:$0xff]
  %v1176 = vld [vmem:[%s208 + $0x38] sm:$0xff]
  %v1177 = vld [vmem:[%s208 + $0x48] sm:$0xff]
  %v1178 = vld [vmem:[%s208 + $0x50] sm:$0xff]
  %v1179 = vld [vmem:[%s208 + $0x60] sm:$0xff]
  %v1180 = vld [vmem:[%s208 + $0x68] sm:$0xff]
  %v1181 = vld [vmem:[%s208 + $0x78] sm:$0xff]
  %v1182 = vld [vmem:[%s208 + $0x80] sm:$0xff]
  %v1183 = vld [vmem:[%s208 + $0x90] sm:$0xff]
  %v1184 = vld [vmem:[%s208 + $0x98] sm:$0xff]
  %v1185 = vld [vmem:[%s208 + $0xa8] sm:$0xff]
  %v1186 = vld [vmem:[%s208 + $0xb0] sm:$0xff]
  %v1187 = vld [vmem:[%s208 + $0xc0] sm:$0xff]
  %v1188 = vld [vmem:[%s208 + $0xc8] sm:$0xff]
  %v1189 = vld [vmem:[%s208 + $0xd8] sm:$0xff]
  %v1190 = vld [vmem:[%s208 + $0xe0] sm:$0xff]
  %v1191 = vld [vmem:[%s208 + $0xf0] sm:$0xff]
  %v1192 = vld [vmem:[%s208 + $0xf8] sm:$0xff]
  %v1193 = vld [vmem:[%s208 + $0x108] sm:$0xff]
  %v1194 = vld [vmem:[%s208 + $0x110] sm:$0xff]
  %v1195 = vld [vmem:[%s208 + $0x120] sm:$0xff]
  %v1196 = vld [vmem:[%s208 + $0x128] sm:$0xff]
  %v1197 = vld [vmem:[%s208 + $0x138] sm:$0xff]
  %v1198 = vld [vmem:[%s208 + $0x140] sm:$0xff]
  %v1199 = vld [vmem:[%s208 + $0x150] sm:$0xff]
  %v1200 = vld [vmem:[%s208 + $0x158] sm:$0xff]
  %v1201 = vld [vmem:[%s208 + $0x168] sm:$0xff]
  %v1202 = vld [vmem:[%s208 + $0x170] sm:$0xff]
  %v1203 = vld [vmem:[%s208 + $0x1b0] sm:$0xff]
  %v1204 = vld [vmem:[%s208 + $0x1b8] sm:$0xff]
  %v1205 = vld [vmem:[%s208 + $0x1c8] sm:$0xff]
  %v1206 = vld [vmem:[%s208 + $0x1d0] sm:$0xff]
  %v1207 = vld [vmem:[%s208 + $0x1e0] sm:$0xff]
  %v1208 = vld [vmem:[%s208 + $0x1e8] sm:$0xff]
  %v1209 = vld [vmem:[%s208 + $0x1f8] sm:$0xff]
  %v1210 = vld [vmem:[%s208 + $0x200] sm:$0xff]
  %v1211 = vld [vmem:[%s208 + $0x210] sm:$0xff]
  %v1212 = vld [vmem:[%s208 + $0x218] sm:$0xff]
  %v1213 = vld [vmem:[%s208 + $0x228] sm:$0xff]
  %v1214 = vld [vmem:[%s208 + $0x230] sm:$0xff]
  %v1215 = vld [vmem:[%s208 + $0x240] sm:$0xff]
  %v1216 = vld [vmem:[%s208 + $0x248] sm:$0xff]
  %v1217 = vld [vmem:[%s208 + $0x258] sm:$0xff]
  %v1218 = vld [vmem:[%s208 + $0x260] sm:$0xff]
  %v1219 = vld [vmem:[%s208 + $0x270] sm:$0xff]
  %v1220 = vld [vmem:[%s208 + $0x278] sm:$0xff]
  %v1221 = vld [vmem:[%s208 + $0x288] sm:$0xff]
  %v1222 = vld [vmem:[%s208 + $0x290] sm:$0xff]
  %v1223 = vld [vmem:[%s208 + $0x2a0] sm:$0xff]
  %v1224 = vld [vmem:[%s208 + $0x2a8] sm:$0xff]
  %v1225 = vld [vmem:[%s208 + $0x2b8] sm:$0xff]
  %v1226 = vld [vmem:[%s208 + $0x2c0] sm:$0xff]
  %v1227 = vld [vmem:[%s208 + $0x2d0] sm:$0xff]
  %v1228 = vld [vmem:[%s208 + $0x2d8] sm:$0xff]
  %v1229 = vld [vmem:[%s208 + $0x2e8] sm:$0xff]
  %v1230 = vld [vmem:[%s208 + $0x2f0] sm:$0xff]
  %v1231 = vld [vmem:[%s208 + $0x300] sm:$0xff]
  %v1232 = vld [vmem:[%s208 + $0x308] sm:$0xff]
  %v1233 = vld [vmem:[%s208 + $0x318] sm:$0xff]
  %v1234 = vld [vmem:[%s208 + $0x320] sm:$0xff]
  %1299 = vrot.lane.b32.xlu0 %v1171, 3
  %v1300 = vpop.permute.xlu0 %1299
  %1301 = vrot.lane.b32.xlu0 %v1172, 3
  %v1302 = vpop.permute.xlu0 %1301
  %1303 = vrot.lane.b32.xlu0 %v1173, 3
  %v1304 = vpop.permute.xlu0 %1303
  %1305 = vrot.lane.b32.xlu0 %v1174, 3
  %v1306 = vpop.permute.xlu0 %1305
  %1307 = vrot.lane.b32.xlu0 %v1175, 3
  %v1308 = vpop.permute.xlu0 %1307
  %1309 = vrot.lane.b32.xlu0 %v1176, 3
  %v1310 = vpop.permute.xlu0 %1309
  %1311 = vrot.lane.b32.xlu0 %v1177, 3
  %v1312 = vpop.permute.xlu0 %1311
  %1313 = vrot.lane.b32.xlu0 %v1178, 3
  %v1314 = vpop.permute.xlu0 %1313
  %1315 = vrot.lane.b32.xlu0 %v1179, 3
  %v1316 = vpop.permute.xlu0 %1315
  %1317 = vrot.lane.b32.xlu0 %v1180, 3
  %v1318 = vpop.permute.xlu0 %1317
  %1319 = vrot.lane.b32.xlu0 %v1181, 3
  %v1320 = vpop.permute.xlu0 %1319
  %1321 = vrot.lane.b32.xlu0 %v1182, 3
  %v1322 = vpop.permute.xlu0 %1321
  %1323 = vrot.lane.b32.xlu0 %v1183, 3
  %v1324 = vpop.permute.xlu0 %1323
  %1325 = vrot.lane.b32.xlu0 %v1184, 3
  %v1326 = vpop.permute.xlu0 %1325
  %1327 = vrot.lane.b32.xlu0 %v1185, 3
  %v1328 = vpop.permute.xlu0 %1327
  %1329 = vrot.lane.b32.xlu0 %v1186, 3
  %v1330 = vpop.permute.xlu0 %1329
  %1331 = vrot.lane.b32.xlu0 %v1187, 3
  %v1332 = vpop.permute.xlu0 %1331
  %1333 = vrot.lane.b32.xlu0 %v1188, 3
  %v1334 = vpop.permute.xlu0 %1333
  %1335 = vrot.lane.b32.xlu0 %v1189, 3
  %v1336 = vpop.permute.xlu0 %1335
  %1337 = vrot.lane.b32.xlu0 %v1190, 3
  %v1338 = vpop.permute.xlu0 %1337
  %1339 = vrot.lane.b32.xlu0 %v1191, 3
  %v1340 = vpop.permute.xlu0 %1339
  %1341 = vrot.lane.b32.xlu0 %v1192, 3
  %v1342 = vpop.permute.xlu0 %1341
  %1343 = vrot.lane.b32.xlu0 %v1193, 3
  %v1344 = vpop.permute.xlu0 %1343
  %1345 = vrot.lane.b32.xlu0 %v1194, 3
  %v1346 = vpop.permute.xlu0 %1345
  %1347 = vrot.lane.b32.xlu0 %v1195, 3
  %v1348 = vpop.permute.xlu0 %1347
  %1349 = vrot.lane.b32.xlu0 %v1196, 3
  %v1350 = vpop.permute.xlu0 %1349
  %1351 = vrot.lane.b32.xlu0 %v1197, 3
  %v1352 = vpop.permute.xlu0 %1351
  %1353 = vrot.lane.b32.xlu0 %v1198, 3
  %v1354 = vpop.permute.xlu0 %1353
  %1355 = vrot.lane.b32.xlu0 %v1199, 3
  %v1356 = vpop.permute.xlu0 %1355
  %1357 = vrot.lane.b32.xlu0 %v1200, 3
  %v1358 = vpop.permute.xlu0 %1357
  %1359 = vrot.lane.b32.xlu0 %v1201, 3
  %v1360 = vpop.permute.xlu0 %1359
  %1361 = vrot.lane.b32.xlu0 %v1202, 3
  %v1362 = vpop.permute.xlu0 %1361
  %1363 = vrot.lane.b32.xlu0 %v1203, 3
  %v1364 = vpop.permute.xlu0 %1363
  %1365 = vrot.lane.b32.xlu0 %v1204, 3
  %v1366 = vpop.permute.xlu0 %1365
  %1367 = vrot.lane.b32.xlu0 %v1205, 3
  %v1368 = vpop.permute.xlu0 %1367
  %1369 = vrot.lane.b32.xlu0 %v1206, 3
  %v1370 = vpop.permute.xlu0 %1369
  %1371 = vrot.lane.b32.xlu0 %v1207, 3
  %v1372 = vpop.permute.xlu0 %1371
  %1373 = vrot.lane.b32.xlu0 %v1208, 3
  %v1374 = vpop.permute.xlu0 %1373
  %1375 = vrot.lane.b32.xlu0 %v1209, 3
  %v1376 = vpop.permute.xlu0 %1375
  %1377 = vrot.lane.b32.xlu0 %v1210, 3
  %v1378 = vpop.permute.xlu0 %1377
  %1379 = vrot.lane.b32.xlu0 %v1211, 3
  %v1380 = vpop.permute.xlu0 %1379
  %1381 = vrot.lane.b32.xlu0 %v1212, 3
  %v1382 = vpop.permute.xlu0 %1381
  %1383 = vrot.lane.b32.xlu0 %v1213, 3
  %v1384 = vpop.permute.xlu0 %1383
  %1385 = vrot.lane.b32.xlu0 %v1214, 3
  %v1386 = vpop.permute.xlu0 %1385
  %1387 = vrot.lane.b32.xlu0 %v1215, 3
  %v1388 = vpop.permute.xlu0 %1387
  %1389 = vrot.lane.b32.xlu0 %v1216, 3
  %v1390 = vpop.permute.xlu0 %1389
  %1391 = vrot.lane.b32.xlu0 %v1217, 3
  %v1392 = vpop.permute.xlu0 %1391
  %1393 = vrot.lane.b32.xlu0 %v1218, 3
  %v1394 = vpop.permute.xlu0 %1393
  %1395 = vrot.lane.b32.xlu0 %v1219, 3
  %v1396 = vpop.permute.xlu0 %1395
  %1397 = vrot.lane.b32.xlu0 %v1220, 3
  %v1398 = vpop.permute.xlu0 %1397
  %1399 = vrot.lane.b32.xlu0 %v1221, 3
  %v1400 = vpop.permute.xlu0 %1399
  %1401 = vrot.lane.b32.xlu0 %v1222, 3
  %v1402 = vpop.permute.xlu0 %1401
  %1403 = vrot.lane.b32.xlu0 %v1223, 3
  %v1404 = vpop.permute.xlu0 %1403
  %1405 = vrot.lane.b32.xlu0 %v1224, 3
  %v1406 = vpop.permute.xlu0 %1405
  %1407 = vrot.lane.b32.xlu0 %v1225, 3
  %v1408 = vpop.permute.xlu0 %1407
  %1409 = vrot.lane.b32.xlu0 %v1226, 3
  %v1410 = vpop.permute.xlu0 %1409
  %1411 = vrot.lane.b32.xlu0 %v1227, 3
  %v1412 = vpop.permute.xlu0 %1411
  %1413 = vrot.lane.b32.xlu0 %v1228, 3
  %v1414 = vpop.permute.xlu0 %1413
  %1415 = vrot.lane.b32.xlu0 %v1229, 3
  %v1416 = vpop.permute.xlu0 %1415
  %1417 = vrot.lane.b32.xlu0 %v1230, 3
  %v1418 = vpop.permute.xlu0 %1417
  %1419 = vrot.lane.b32.xlu0 %v1231, 3
  %v1420 = vpop.permute.xlu0 %1419
  %1421 = vrot.lane.b32.xlu0 %v1232, 3
  %v1422 = vpop.permute.xlu0 %1421
  %1423 = vrot.lane.b32.xlu0 %v1233, 3
  %v1424 = vpop.permute.xlu0 %1423
  %1425 = vrot.lane.b32.xlu0 %v1234, 3
  %v1426 = vpop.permute.xlu0 %1425
  %vm1491 = vcmask 31768
  %1492 = vst.msk [vmem:[#allocation3] sm:$0xff] %vm1491, %v1300
  %1493 = vst.msk [vmem:[#allocation3 + $0x8] sm:$0xff] %vm1491, %v1302
  %1494 = vst.msk [vmem:[#allocation3 + $0x10] sm:$0xff] %vm1491, %v1304
  %1495 = vst.msk [vmem:[#allocation3 + $0x18] sm:$0xff] %vm1491, %v1306
  %1496 = vst.msk [vmem:[#allocation3 + $0x20] sm:$0xff] %vm1491, %v1308
  %1497 = vst.msk [vmem:[#allocation3 + $0x28] sm:$0xff] %vm1491, %v1310
  %1498 = vst.msk [vmem:[#allocation3 + $0x30] sm:$0xff] %vm1491, %v1312
  %1499 = vst.msk [vmem:[#allocation3 + $0x38] sm:$0xff] %vm1491, %v1314
  %1500 = vst.msk [vmem:[#allocation3 + $0x40] sm:$0xff] %vm1491, %v1316
  %1501 = vst.msk [vmem:[#allocation3 + $0x48] sm:$0xff] %vm1491, %v1318
  %1502 = vst.msk [vmem:[#allocation3 + $0x50] sm:$0xff] %vm1491, %v1320
  %1503 = vst.msk [vmem:[#allocation3 + $0x58] sm:$0xff] %vm1491, %v1322
  %1504 = vst.msk [vmem:[#allocation3 + $0x60] sm:$0xff] %vm1491, %v1324
  %1505 = vst.msk [vmem:[#allocation3 + $0x68] sm:$0xff] %vm1491, %v1326
  %1506 = vst.msk [vmem:[#allocation3 + $0x70] sm:$0xff] %vm1491, %v1328
  %1507 = vst.msk [vmem:[#allocation3 + $0x78] sm:$0xff] %vm1491, %v1330
  %1508 = vst.msk [vmem:[#allocation3 + $0x80] sm:$0xff] %vm1491, %v1332
  %1509 = vst.msk [vmem:[#allocation3 + $0x88] sm:$0xff] %vm1491, %v1334
  %1510 = vst.msk [vmem:[#allocation3 + $0x90] sm:$0xff] %vm1491, %v1336
  %1511 = vst.msk [vmem:[#allocation3 + $0x98] sm:$0xff] %vm1491, %v1338
  %1512 = vst.msk [vmem:[#allocation3 + $0xa0] sm:$0xff] %vm1491, %v1340
  %1513 = vst.msk [vmem:[#allocation3 + $0xa8] sm:$0xff] %vm1491, %v1342
  %1514 = vst.msk [vmem:[#allocation3 + $0xb0] sm:$0xff] %vm1491, %v1344
  %1515 = vst.msk [vmem:[#allocation3 + $0xb8] sm:$0xff] %vm1491, %v1346
  %1516 = vst.msk [vmem:[#allocation3 + $0xc0] sm:$0xff] %vm1491, %v1348
  %1517 = vst.msk [vmem:[#allocation3 + $0xc8] sm:$0xff] %vm1491, %v1350
  %1518 = vst.msk [vmem:[#allocation3 + $0xd0] sm:$0xff] %vm1491, %v1352
  %1519 = vst.msk [vmem:[#allocation3 + $0xd8] sm:$0xff] %vm1491, %v1354
  %1520 = vst.msk [vmem:[#allocation3 + $0xe0] sm:$0xff] %vm1491, %v1356
  %1521 = vst.msk [vmem:[#allocation3 + $0xe8] sm:$0xff] %vm1491, %v1358
  %1522 = vst.msk [vmem:[#allocation3 + $0xf0] sm:$0xff] %vm1491, %v1360
  %1523 = vst.msk [vmem:[#allocation3 + $0xf8] sm:$0xff] %vm1491, %v1362
  %1524 = vst.msk [vmem:[#allocation3 + $0x100] sm:$0xff] %vm1491, %v1364
  %1525 = vst.msk [vmem:[#allocation3 + $0x108] sm:$0xff] %vm1491, %v1366
  %1526 = vst.msk [vmem:[#allocation3 + $0x110] sm:$0xff] %vm1491, %v1368
  %1527 = vst.msk [vmem:[#allocation3 + $0x118] sm:$0xff] %vm1491, %v1370
  %1528 = vst.msk [vmem:[#allocation3 + $0x120] sm:$0xff] %vm1491, %v1372
  %1529 = vst.msk [vmem:[#allocation3 + $0x128] sm:$0xff] %vm1491, %v1374
  %1530 = vst.msk [vmem:[#allocation3 + $0x130] sm:$0xff] %vm1491, %v1376
  %1531 = vst.msk [vmem:[#allocation3 + $0x138] sm:$0xff] %vm1491, %v1378
  %1532 = vst.msk [vmem:[#allocation3 + $0x140] sm:$0xff] %vm1491, %v1380
  %1533 = vst.msk [vmem:[#allocation3 + $0x148] sm:$0xff] %vm1491, %v1382
  %1534 = vst.msk [vmem:[#allocation3 + $0x150] sm:$0xff] %vm1491, %v1384
  %1535 = vst.msk [vmem:[#allocation3 + $0x158] sm:$0xff] %vm1491, %v1386
  %1536 = vst.msk [vmem:[#allocation3 + $0x160] sm:$0xff] %vm1491, %v1388
  %1537 = vst.msk [vmem:[#allocation3 + $0x168] sm:$0xff] %vm1491, %v1390
  %1538 = vst.msk [vmem:[#allocation3 + $0x170] sm:$0xff] %vm1491, %v1392
  %1539 = vst.msk [vmem:[#allocation3 + $0x178] sm:$0xff] %vm1491, %v1394
  %1540 = vst.msk [vmem:[#allocation3 + $0x180] sm:$0xff] %vm1491, %v1396
  %1541 = vst.msk [vmem:[#allocation3 + $0x188] sm:$0xff] %vm1491, %v1398
  %1542 = vst.msk [vmem:[#allocation3 + $0x190] sm:$0xff] %vm1491, %v1400
  %1543 = vst.msk [vmem:[#allocation3 + $0x198] sm:$0xff] %vm1491, %v1402
  %1544 = vst.msk [vmem:[#allocation3 + $0x1a0] sm:$0xff] %vm1491, %v1404
  %1545 = vst.msk [vmem:[#allocation3 + $0x1a8] sm:$0xff] %vm1491, %v1406
  %1546 = vst.msk [vmem:[#allocation3 + $0x1b0] sm:$0xff] %vm1491, %v1408
  %1547 = vst.msk [vmem:[#allocation3 + $0x1b8] sm:$0xff] %vm1491, %v1410
  %1548 = vst.msk [vmem:[#allocation3 + $0x1c0] sm:$0xff] %vm1491, %v1412
  %1549 = vst.msk [vmem:[#allocation3 + $0x1c8] sm:$0xff] %vm1491, %v1414
  %1550 = vst.msk [vmem:[#allocation3 + $0x1d0] sm:$0xff] %vm1491, %v1416
  %1551 = vst.msk [vmem:[#allocation3 + $0x1d8] sm:$0xff] %vm1491, %v1418
  %1552 = vst.msk [vmem:[#allocation3 + $0x1e0] sm:$0xff] %vm1491, %v1420
  %1553 = vst.msk [vmem:[#allocation3 + $0x1e8] sm:$0xff] %vm1491, %v1422
  %1554 = vst.msk [vmem:[#allocation3 + $0x1f0] sm:$0xff] %vm1491, %v1424
  %1555 = vst.msk [vmem:[#allocation3 + $0x1f8] sm:$0xff] %vm1491, %v1426
  %v1556 = vld [vmem:[%s208 + $0x1] sm:$0xff]
  %v1557 = vld [vmem:[%s208 + $0x9] sm:$0xff]
  %v1558 = vld [vmem:[%s208 + $0x19] sm:$0xff]
  %v1559 = vld [vmem:[%s208 + $0x21] sm:$0xff]
  %v1560 = vld [vmem:[%s208 + $0x31] sm:$0xff]
  %v1561 = vld [vmem:[%s208 + $0x39] sm:$0xff]
  %v1562 = vld [vmem:[%s208 + $0x49] sm:$0xff]
  %v1563 = vld [vmem:[%s208 + $0x51] sm:$0xff]
  %v1564 = vld [vmem:[%s208 + $0x61] sm:$0xff]
  %v1565 = vld [vmem:[%s208 + $0x69] sm:$0xff]
  %v1566 = vld [vmem:[%s208 + $0x79] sm:$0xff]
  %v1567 = vld [vmem:[%s208 + $0x81] sm:$0xff]
  %v1568 = vld [vmem:[%s208 + $0x91] sm:$0xff]
  %v1569 = vld [vmem:[%s208 + $0x99] sm:$0xff]
  %v1570 = vld [vmem:[%s208 + $0xa9] sm:$0xff]
  %v1571 = vld [vmem:[%s208 + $0xb1] sm:$0xff]
  %v1572 = vld [vmem:[%s208 + $0xc1] sm:$0xff]
  %v1573 = vld [vmem:[%s208 + $0xc9] sm:$0xff]
  %v1574 = vld [vmem:[%s208 + $0xd9] sm:$0xff]
  %v1575 = vld [vmem:[%s208 + $0xe1] sm:$0xff]
  %v1576 = vld [vmem:[%s208 + $0xf1] sm:$0xff]
  %v1577 = vld [vmem:[%s208 + $0xf9] sm:$0xff]
  %v1578 = vld [vmem:[%s208 + $0x109] sm:$0xff]
  %v1579 = vld [vmem:[%s208 + $0x111] sm:$0xff]
  %v1580 = vld [vmem:[%s208 + $0x121] sm:$0xff]
  %v1581 = vld [vmem:[%s208 + $0x129] sm:$0xff]
  %v1582 = vld [vmem:[%s208 + $0x139] sm:$0xff]
  %v1583 = vld [vmem:[%s208 + $0x141] sm:$0xff]
  %v1584 = vld [vmem:[%s208 + $0x151] sm:$0xff]
  %v1585 = vld [vmem:[%s208 + $0x159] sm:$0xff]
  %v1586 = vld [vmem:[%s208 + $0x169] sm:$0xff]
  %v1587 = vld [vmem:[%s208 + $0x171] sm:$0xff]
  %v1588 = vld [vmem:[%s208 + $0x1b1] sm:$0xff]
  %v1589 = vld [vmem:[%s208 + $0x1b9] sm:$0xff]
  %v1590 = vld [vmem:[%s208 + $0x1c9] sm:$0xff]
  %v1591 = vld [vmem:[%s208 + $0x1d1] sm:$0xff]
  %v1592 = vld [vmem:[%s208 + $0x1e1] sm:$0xff]
  %v1593 = vld [vmem:[%s208 + $0x1e9] sm:$0xff]
  %v1594 = vld [vmem:[%s208 + $0x1f9] sm:$0xff]
  %v1595 = vld [vmem:[%s208 + $0x201] sm:$0xff]
  %v1596 = vld [vmem:[%s208 + $0x211] sm:$0xff]
  %v1597 = vld [vmem:[%s208 + $0x219] sm:$0xff]
  %v1598 = vld [vmem:[%s208 + $0x229] sm:$0xff]
  %v1599 = vld [vmem:[%s208 + $0x231] sm:$0xff]
  %v1600 = vld [vmem:[%s208 + $0x241] sm:$0xff]
  %v1601 = vld [vmem:[%s208 + $0x249] sm:$0xff]
  %v1602 = vld [vmem:[%s208 + $0x259] sm:$0xff]
  %v1603 = vld [vmem:[%s208 + $0x261] sm:$0xff]
  %v1604 = vld [vmem:[%s208 + $0x271] sm:$0xff]
  %v1605 = vld [vmem:[%s208 + $0x279] sm:$0xff]
  %v1606 = vld [vmem:[%s208 + $0x289] sm:$0xff]
  %v1607 = vld [vmem:[%s208 + $0x291] sm:$0xff]
  %v1608 = vld [vmem:[%s208 + $0x2a1] sm:$0xff]
  %v1609 = vld [vmem:[%s208 + $0x2a9] sm:$0xff]
  %v1610 = vld [vmem:[%s208 + $0x2b9] sm:$0xff]
  %v1611 = vld [vmem:[%s208 + $0x2c1] sm:$0xff]
  %v1612 = vld [vmem:[%s208 + $0x2d1] sm:$0xff]
  %v1613 = vld [vmem:[%s208 + $0x2d9] sm:$0xff]
  %v1614 = vld [vmem:[%s208 + $0x2e9] sm:$0xff]
  %v1615 = vld [vmem:[%s208 + $0x2f1] sm:$0xff]
  %v1616 = vld [vmem:[%s208 + $0x301] sm:$0xff]
  %v1617 = vld [vmem:[%s208 + $0x309] sm:$0xff]
  %v1618 = vld [vmem:[%s208 + $0x319] sm:$0xff]
  %v1619 = vld [vmem:[%s208 + $0x321] sm:$0xff]
  %1684 = vrot.lane.b32.xlu0 %v1556, 4
  %v1685 = vpop.permute.xlu0 %1684
  %1686 = vrot.lane.b32.xlu0 %v1557, 4
  %v1687 = vpop.permute.xlu0 %1686
  %1688 = vrot.lane.b32.xlu0 %v1558, 4
  %v1689 = vpop.permute.xlu0 %1688
  %1690 = vrot.lane.b32.xlu0 %v1559, 4
  %v1691 = vpop.permute.xlu0 %1690
  %1692 = vrot.lane.b32.xlu0 %v1560, 4
  %v1693 = vpop.permute.xlu0 %1692
  %1694 = vrot.lane.b32.xlu0 %v1561, 4
  %v1695 = vpop.permute.xlu0 %1694
  %1696 = vrot.lane.b32.xlu0 %v1562, 4
  %v1697 = vpop.permute.xlu0 %1696
  %1698 = vrot.lane.b32.xlu0 %v1563, 4
  %v1699 = vpop.permute.xlu0 %1698
  %1700 = vrot.lane.b32.xlu0 %v1564, 4
  %v1701 = vpop.permute.xlu0 %1700
  %1702 = vrot.lane.b32.xlu0 %v1565, 4
  %v1703 = vpop.permute.xlu0 %1702
  %1704 = vrot.lane.b32.xlu0 %v1566, 4
  %v1705 = vpop.permute.xlu0 %1704
  %1706 = vrot.lane.b32.xlu0 %v1567, 4
  %v1707 = vpop.permute.xlu0 %1706
  %1708 = vrot.lane.b32.xlu0 %v1568, 4
  %v1709 = vpop.permute.xlu0 %1708
  %1710 = vrot.lane.b32.xlu0 %v1569, 4
  %v1711 = vpop.permute.xlu0 %1710
  %1712 = vrot.lane.b32.xlu0 %v1570, 4
  %v1713 = vpop.permute.xlu0 %1712
  %1714 = vrot.lane.b32.xlu0 %v1571, 4
  %v1715 = vpop.permute.xlu0 %1714
  %1716 = vrot.lane.b32.xlu0 %v1572, 4
  %v1717 = vpop.permute.xlu0 %1716
  %1718 = vrot.lane.b32.xlu0 %v1573, 4
  %v1719 = vpop.permute.xlu0 %1718
  %1720 = vrot.lane.b32.xlu0 %v1574, 4
  %v1721 = vpop.permute.xlu0 %1720
  %1722 = vrot.lane.b32.xlu0 %v1575, 4
  %v1723 = vpop.permute.xlu0 %1722
  %1724 = vrot.lane.b32.xlu0 %v1576, 4
  %v1725 = vpop.permute.xlu0 %1724
  %1726 = vrot.lane.b32.xlu0 %v1577, 4
  %v1727 = vpop.permute.xlu0 %1726
  %1728 = vrot.lane.b32.xlu0 %v1578, 4
  %v1729 = vpop.permute.xlu0 %1728
  %1730 = vrot.lane.b32.xlu0 %v1579, 4
  %v1731 = vpop.permute.xlu0 %1730
  %1732 = vrot.lane.b32.xlu0 %v1580, 4
  %v1733 = vpop.permute.xlu0 %1732
  %1734 = vrot.lane.b32.xlu0 %v1581, 4
  %v1735 = vpop.permute.xlu0 %1734
  %1736 = vrot.lane.b32.xlu0 %v1582, 4
  %v1737 = vpop.permute.xlu0 %1736
  %1738 = vrot.lane.b32.xlu0 %v1583, 4
  %v1739 = vpop.permute.xlu0 %1738
  %1740 = vrot.lane.b32.xlu0 %v1584, 4
  %v1741 = vpop.permute.xlu0 %1740
  %1742 = vrot.lane.b32.xlu0 %v1585, 4
  %v1743 = vpop.permute.xlu0 %1742
  %1744 = vrot.lane.b32.xlu0 %v1586, 4
  %v1745 = vpop.permute.xlu0 %1744
  %1746 = vrot.lane.b32.xlu0 %v1587, 4
  %v1747 = vpop.permute.xlu0 %1746
  %1748 = vrot.lane.b32.xlu0 %v1588, 4
  %v1749 = vpop.permute.xlu0 %1748
  %1750 = vrot.lane.b32.xlu0 %v1589, 4
  %v1751 = vpop.permute.xlu0 %1750
  %1752 = vrot.lane.b32.xlu0 %v1590, 4
  %v1753 = vpop.permute.xlu0 %1752
  %1754 = vrot.lane.b32.xlu0 %v1591, 4
  %v1755 = vpop.permute.xlu0 %1754
  %1756 = vrot.lane.b32.xlu0 %v1592, 4
  %v1757 = vpop.permute.xlu0 %1756
  %1758 = vrot.lane.b32.xlu0 %v1593, 4
  %v1759 = vpop.permute.xlu0 %1758
  %1760 = vrot.lane.b32.xlu0 %v1594, 4
  %v1761 = vpop.permute.xlu0 %1760
  %1762 = vrot.lane.b32.xlu0 %v1595, 4
  %v1763 = vpop.permute.xlu0 %1762
  %1764 = vrot.lane.b32.xlu0 %v1596, 4
  %v1765 = vpop.permute.xlu0 %1764
  %1766 = vrot.lane.b32.xlu0 %v1597, 4
  %v1767 = vpop.permute.xlu0 %1766
  %1768 = vrot.lane.b32.xlu0 %v1598, 4
  %v1769 = vpop.permute.xlu0 %1768
  %1770 = vrot.lane.b32.xlu0 %v1599, 4
  %v1771 = vpop.permute.xlu0 %1770
  %1772 = vrot.lane.b32.xlu0 %v1600, 4
  %v1773 = vpop.permute.xlu0 %1772
  %1774 = vrot.lane.b32.xlu0 %v1601, 4
  %v1775 = vpop.permute.xlu0 %1774
  %1776 = vrot.lane.b32.xlu0 %v1602, 4
  %v1777 = vpop.permute.xlu0 %1776
  %1778 = vrot.lane.b32.xlu0 %v1603, 4
  %v1779 = vpop.permute.xlu0 %1778
  %1780 = vrot.lane.b32.xlu0 %v1604, 4
  %v1781 = vpop.permute.xlu0 %1780
  %1782 = vrot.lane.b32.xlu0 %v1605, 4
  %v1783 = vpop.permute.xlu0 %1782
  %1784 = vrot.lane.b32.xlu0 %v1606, 4
  %v1785 = vpop.permute.xlu0 %1784
  %1786 = vrot.lane.b32.xlu0 %v1607, 4
  %v1787 = vpop.permute.xlu0 %1786
  %1788 = vrot.lane.b32.xlu0 %v1608, 4
  %v1789 = vpop.permute.xlu0 %1788
  %1790 = vrot.lane.b32.xlu0 %v1609, 4
  %v1791 = vpop.permute.xlu0 %1790
  %1792 = vrot.lane.b32.xlu0 %v1610, 4
  %v1793 = vpop.permute.xlu0 %1792
  %1794 = vrot.lane.b32.xlu0 %v1611, 4
  %v1795 = vpop.permute.xlu0 %1794
  %1796 = vrot.lane.b32.xlu0 %v1612, 4
  %v1797 = vpop.permute.xlu0 %1796
  %1798 = vrot.lane.b32.xlu0 %v1613, 4
  %v1799 = vpop.permute.xlu0 %1798
  %1800 = vrot.lane.b32.xlu0 %v1614, 4
  %v1801 = vpop.permute.xlu0 %1800
  %1802 = vrot.lane.b32.xlu0 %v1615, 4
  %v1803 = vpop.permute.xlu0 %1802
  %1804 = vrot.lane.b32.xlu0 %v1616, 4
  %v1805 = vpop.permute.xlu0 %1804
  %1806 = vrot.lane.b32.xlu0 %v1617, 4
  %v1807 = vpop.permute.xlu0 %1806
  %1808 = vrot.lane.b32.xlu0 %v1618, 4
  %v1809 = vpop.permute.xlu0 %1808
  %1810 = vrot.lane.b32.xlu0 %v1619, 4
  %v1811 = vpop.permute.xlu0 %1810
  %vm1876 = vcmask 39968
  %1877 = vst.msk [vmem:[#allocation3] sm:$0xff] %vm1876, %v1685
  %1878 = vst.msk [vmem:[#allocation3 + $0x8] sm:$0xff] %vm1876, %v1687
  %1879 = vst.msk [vmem:[#allocation3 + $0x10] sm:$0xff] %vm1876, %v1689
  %1880 = vst.msk [vmem:[#allocation3 + $0x18] sm:$0xff] %vm1876, %v1691
  %1881 = vst.msk [vmem:[#allocation3 + $0x20] sm:$0xff] %vm1876, %v1693
  %1882 = vst.msk [vmem:[#allocation3 + $0x28] sm:$0xff] %vm1876, %v1695
  %1883 = vst.msk [vmem:[#allocation3 + $0x30] sm:$0xff] %vm1876, %v1697
  %1884 = vst.msk [vmem:[#allocation3 + $0x38] sm:$0xff] %vm1876, %v1699
  %1885 = vst.msk [vmem:[#allocation3 + $0x40] sm:$0xff] %vm1876, %v1701
  %1886 = vst.msk [vmem:[#allocation3 + $0x48] sm:$0xff] %vm1876, %v1703
  %1887 = vst.msk [vmem:[#allocation3 + $0x50] sm:$0xff] %vm1876, %v1705
  %1888 = vst.msk [vmem:[#allocation3 + $0x58] sm:$0xff] %vm1876, %v1707
  %1889 = vst.msk [vmem:[#allocation3 + $0x60] sm:$0xff] %vm1876, %v1709
  %1890 = vst.msk [vmem:[#allocation3 + $0x68] sm:$0xff] %vm1876, %v1711
  %1891 = vst.msk [vmem:[#allocation3 + $0x70] sm:$0xff] %vm1876, %v1713
  %1892 = vst.msk [vmem:[#allocation3 + $0x78] sm:$0xff] %vm1876, %v1715
  %1893 = vst.msk [vmem:[#allocation3 + $0x80] sm:$0xff] %vm1876, %v1717
  %1894 = vst.msk [vmem:[#allocation3 + $0x88] sm:$0xff] %vm1876, %v1719
  %1895 = vst.msk [vmem:[#allocation3 + $0x90] sm:$0xff] %vm1876, %v1721
  %1896 = vst.msk [vmem:[#allocation3 + $0x98] sm:$0xff] %vm1876, %v1723
  %1897 = vst.msk [vmem:[#allocation3 + $0xa0] sm:$0xff] %vm1876, %v1725
  %1898 = vst.msk [vmem:[#allocation3 + $0xa8] sm:$0xff] %vm1876, %v1727
  %1899 = vst.msk [vmem:[#allocation3 + $0xb0] sm:$0xff] %vm1876, %v1729
  %1900 = vst.msk [vmem:[#allocation3 + $0xb8] sm:$0xff] %vm1876, %v1731
  %1901 = vst.msk [vmem:[#allocation3 + $0xc0] sm:$0xff] %vm1876, %v1733
  %1902 = vst.msk [vmem:[#allocation3 + $0xc8] sm:$0xff] %vm1876, %v1735
  %1903 = vst.msk [vmem:[#allocation3 + $0xd0] sm:$0xff] %vm1876, %v1737
  %1904 = vst.msk [vmem:[#allocation3 + $0xd8] sm:$0xff] %vm1876, %v1739
  %1905 = vst.msk [vmem:[#allocation3 + $0xe0] sm:$0xff] %vm1876, %v1741
  %1906 = vst.msk [vmem:[#allocation3 + $0xe8] sm:$0xff] %vm1876, %v1743
  %1907 = vst.msk [vmem:[#allocation3 + $0xf0] sm:$0xff] %vm1876, %v1745
  %1908 = vst.msk [vmem:[#allocation3 + $0xf8] sm:$0xff] %vm1876, %v1747
  %1909 = vst.msk [vmem:[#allocation3 + $0x100] sm:$0xff] %vm1876, %v1749
  %1910 = vst.msk [vmem:[#allocation3 + $0x108] sm:$0xff] %vm1876, %v1751
  %1911 = vst.msk [vmem:[#allocation3 + $0x110] sm:$0xff] %vm1876, %v1753
  %1912 = vst.msk [vmem:[#allocation3 + $0x118] sm:$0xff] %vm1876, %v1755
  %1913 = vst.msk [vmem:[#allocation3 + $0x120] sm:$0xff] %vm1876, %v1757
  %1914 = vst.msk [vmem:[#allocation3 + $0x128] sm:$0xff] %vm1876, %v1759
  %1915 = vst.msk [vmem:[#allocation3 + $0x130] sm:$0xff] %vm1876, %v1761
  %1916 = vst.msk [vmem:[#allocation3 + $0x138] sm:$0xff] %vm1876, %v1763
  %1917 = vst.msk [vmem:[#allocation3 + $0x140] sm:$0xff] %vm1876, %v1765
  %1918 = vst.msk [vmem:[#allocation3 + $0x148] sm:$0xff] %vm1876, %v1767
  %1919 = vst.msk [vmem:[#allocation3 + $0x150] sm:$0xff] %vm1876, %v1769
  %1920 = vst.msk [vmem:[#allocation3 + $0x158] sm:$0xff] %vm1876, %v1771
  %1921 = vst.msk [vmem:[#allocation3 + $0x160] sm:$0xff] %vm1876, %v1773
  %1922 = vst.msk [vmem:[#allocation3 + $0x168] sm:$0xff] %vm1876, %v1775
  %1923 = vst.msk [vmem:[#allocation3 + $0x170] sm:$0xff] %vm1876, %v1777
  %1924 = vst.msk [vmem:[#allocation3 + $0x178] sm:$0xff] %vm1876, %v1779
  %1925 = vst.msk [vmem:[#allocation3 + $0x180] sm:$0xff] %vm1876, %v1781
  %1926 = vst.msk [vmem:[#allocation3 + $0x188] sm:$0xff] %vm1876, %v1783
  %1927 = vst.msk [vmem:[#allocation3 + $0x190] sm:$0xff] %vm1876, %v1785
  %1928 = vst.msk [vmem:[#allocation3 + $0x198] sm:$0xff] %vm1876, %v1787
  %1929 = vst.msk [vmem:[#allocation3 + $0x1a0] sm:$0xff] %vm1876, %v1789
  %1930 = vst.msk [vmem:[#allocation3 + $0x1a8] sm:$0xff] %vm1876, %v1791
  %1931 = vst.msk [vmem:[#allocation3 + $0x1b0] sm:$0xff] %vm1876, %v1793
  %1932 = vst.msk [vmem:[#allocation3 + $0x1b8] sm:$0xff] %vm1876, %v1795
  %1933 = vst.msk [vmem:[#allocation3 + $0x1c0] sm:$0xff] %vm1876, %v1797
  %1934 = vst.msk [vmem:[#allocation3 + $0x1c8] sm:$0xff] %vm1876, %v1799
  %1935 = vst.msk [vmem:[#allocation3 + $0x1d0] sm:$0xff] %vm1876, %v1801
  %1936 = vst.msk [vmem:[#allocation3 + $0x1d8] sm:$0xff] %vm1876, %v1803
  %1937 = vst.msk [vmem:[#allocation3 + $0x1e0] sm:$0xff] %vm1876, %v1805
  %1938 = vst.msk [vmem:[#allocation3 + $0x1e8] sm:$0xff] %vm1876, %v1807
  %1939 = vst.msk [vmem:[#allocation3 + $0x1f0] sm:$0xff] %vm1876, %v1809
  %1940 = vst.msk [vmem:[#allocation3 + $0x1f8] sm:$0xff] %vm1876, %v1811
  %v1941 = vld [vmem:[%s208 + $0x2] sm:$0xff]
  %v1942 = vld [vmem:[%s208 + $0xa] sm:$0xff]
  %v1943 = vld [vmem:[%s208 + $0x1a] sm:$0xff]
  %v1944 = vld [vmem:[%s208 + $0x22] sm:$0xff]
  %v1945 = vld [vmem:[%s208 + $0x32] sm:$0xff]
  %v1946 = vld [vmem:[%s208 + $0x3a] sm:$0xff]
  %v1947 = vld [vmem:[%s208 + $0x4a] sm:$0xff]
  %v1948 = vld [vmem:[%s208 + $0x52] sm:$0xff]
  %v1949 = vld [vmem:[%s208 + $0x62] sm:$0xff]
  %v1950 = vld [vmem:[%s208 + $0x6a] sm:$0xff]
  %v1951 = vld [vmem:[%s208 + $0x7a] sm:$0xff]
  %v1952 = vld [vmem:[%s208 + $0x82] sm:$0xff]
  %v1953 = vld [vmem:[%s208 + $0x92] sm:$0xff]
  %v1954 = vld [vmem:[%s208 + $0x9a] sm:$0xff]
  %v1955 = vld [vmem:[%s208 + $0xaa] sm:$0xff]
  %v1956 = vld [vmem:[%s208 + $0xb2] sm:$0xff]
  %v1957 = vld [vmem:[%s208 + $0xc2] sm:$0xff]
  %v1958 = vld [vmem:[%s208 + $0xca] sm:$0xff]
  %v1959 = vld [vmem:[%s208 + $0xda] sm:$0xff]
  %v1960 = vld [vmem:[%s208 + $0xe2] sm:$0xff]
  %v1961 = vld [vmem:[%s208 + $0xf2] sm:$0xff]
  %v1962 = vld [vmem:[%s208 + $0xfa] sm:$0xff]
  %v1963 = vld [vmem:[%s208 + $0x10a] sm:$0xff]
  %v1964 = vld [vmem:[%s208 + $0x112] sm:$0xff]
  %v1965 = vld [vmem:[%s208 + $0x122] sm:$0xff]
  %v1966 = vld [vmem:[%s208 + $0x12a] sm:$0xff]
  %v1967 = vld [vmem:[%s208 + $0x13a] sm:$0xff]
  %v1968 = vld [vmem:[%s208 + $0x142] sm:$0xff]
  %v1969 = vld [vmem:[%s208 + $0x152] sm:$0xff]
  %v1970 = vld [vmem:[%s208 + $0x15a] sm:$0xff]
  %v1971 = vld [vmem:[%s208 + $0x16a] sm:$0xff]
  %v1972 = vld [vmem:[%s208 + $0x172] sm:$0xff]
  %v1973 = vld [vmem:[%s208 + $0x1b2] sm:$0xff]
  %v1974 = vld [vmem:[%s208 + $0x1ba] sm:$0xff]
  %v1975 = vld [vmem:[%s208 + $0x1ca] sm:$0xff]
  %v1976 = vld [vmem:[%s208 + $0x1d2] sm:$0xff]
  %v1977 = vld [vmem:[%s208 + $0x1e2] sm:$0xff]
  %v1978 = vld [vmem:[%s208 + $0x1ea] sm:$0xff]
  %v1979 = vld [vmem:[%s208 + $0x1fa] sm:$0xff]
  %v1980 = vld [vmem:[%s208 + $0x202] sm:$0xff]
  %v1981 = vld [vmem:[%s208 + $0x212] sm:$0xff]
  %v1982 = vld [vmem:[%s208 + $0x21a] sm:$0xff]
  %v1983 = vld [vmem:[%s208 + $0x22a] sm:$0xff]
  %v1984 = vld [vmem:[%s208 + $0x232] sm:$0xff]
  %v1985 = vld [vmem:[%s208 + $0x242] sm:$0xff]
  %v1986 = vld [vmem:[%s208 + $0x24a] sm:$0xff]
  %v1987 = vld [vmem:[%s208 + $0x25a] sm:$0xff]
  %v1988 = vld [vmem:[%s208 + $0x262] sm:$0xff]
  %v1989 = vld [vmem:[%s208 + $0x272] sm:$0xff]
  %v1990 = vld [vmem:[%s208 + $0x27a] sm:$0xff]
  %v1991 = vld [vmem:[%s208 + $0x28a] sm:$0xff]
  %v1992 = vld [vmem:[%s208 + $0x292] sm:$0xff]
  %v1993 = vld [vmem:[%s208 + $0x2a2] sm:$0xff]
  %v1994 = vld [vmem:[%s208 + $0x2aa] sm:$0xff]
  %v1995 = vld [vmem:[%s208 + $0x2ba] sm:$0xff]
  %v1996 = vld [vmem:[%s208 + $0x2c2] sm:$0xff]
  %v1997 = vld [vmem:[%s208 + $0x2d2] sm:$0xff]
  %v1998 = vld [vmem:[%s208 + $0x2da] sm:$0xff]
  %v1999 = vld [vmem:[%s208 + $0x2ea] sm:$0xff]
  %v2000 = vld [vmem:[%s208 + $0x2f2] sm:$0xff]
  %v2001 = vld [vmem:[%s208 + $0x302] sm:$0xff]
  %v2002 = vld [vmem:[%s208 + $0x30a] sm:$0xff]
  %v2003 = vld [vmem:[%s208 + $0x31a] sm:$0xff]
  %v2004 = vld [vmem:[%s208 + $0x322] sm:$0xff]
  %2069 = vrot.lane.b32.xlu0 %v1941, 5
  %v2070 = vpop.permute.xlu0 %2069
  %2071 = vrot.lane.b32.xlu0 %v1942, 5
  %v2072 = vpop.permute.xlu0 %2071
  %2073 = vrot.lane.b32.xlu0 %v1943, 5
  %v2074 = vpop.permute.xlu0 %2073
  %2075 = vrot.lane.b32.xlu0 %v1944, 5
  %v2076 = vpop.permute.xlu0 %2075
  %2077 = vrot.lane.b32.xlu0 %v1945, 5
  %v2078 = vpop.permute.xlu0 %2077
  %2079 = vrot.lane.b32.xlu0 %v1946, 5
  %v2080 = vpop.permute.xlu0 %2079
  %2081 = vrot.lane.b32.xlu0 %v1947, 5
  %v2082 = vpop.permute.xlu0 %2081
  %2083 = vrot.lane.b32.xlu0 %v1948, 5
  %v2084 = vpop.permute.xlu0 %2083
  %2085 = vrot.lane.b32.xlu0 %v1949, 5
  %v2086 = vpop.permute.xlu0 %2085
  %2087 = vrot.lane.b32.xlu0 %v1950, 5
  %v2088 = vpop.permute.xlu0 %2087
  %2089 = vrot.lane.b32.xlu0 %v1951, 5
  %v2090 = vpop.permute.xlu0 %2089
  %2091 = vrot.lane.b32.xlu0 %v1952, 5
  %v2092 = vpop.permute.xlu0 %2091
  %2093 = vrot.lane.b32.xlu0 %v1953, 5
  %v2094 = vpop.permute.xlu0 %2093
  %2095 = vrot.lane.b32.xlu0 %v1954, 5
  %v2096 = vpop.permute.xlu0 %2095
  %2097 = vrot.lane.b32.xlu0 %v1955, 5
  %v2098 = vpop.permute.xlu0 %2097
  %2099 = vrot.lane.b32.xlu0 %v1956, 5
  %v2100 = vpop.permute.xlu0 %2099
  %2101 = vrot.lane.b32.xlu0 %v1957, 5
  %v2102 = vpop.permute.xlu0 %2101
  %2103 = vrot.lane.b32.xlu0 %v1958, 5
  %v2104 = vpop.permute.xlu0 %2103
  %2105 = vrot.lane.b32.xlu0 %v1959, 5
  %v2106 = vpop.permute.xlu0 %2105
  %2107 = vrot.lane.b32.xlu0 %v1960, 5
  %v2108 = vpop.permute.xlu0 %2107
  %2109 = vrot.lane.b32.xlu0 %v1961, 5
  %v2110 = vpop.permute.xlu0 %2109
  %2111 = vrot.lane.b32.xlu0 %v1962, 5
  %v2112 = vpop.permute.xlu0 %2111
  %2113 = vrot.lane.b32.xlu0 %v1963, 5
  %v2114 = vpop.permute.xlu0 %2113
  %2115 = vrot.lane.b32.xlu0 %v1964, 5
  %v2116 = vpop.permute.xlu0 %2115
  %2117 = vrot.lane.b32.xlu0 %v1965, 5
  %v2118 = vpop.permute.xlu0 %2117
  %2119 = vrot.lane.b32.xlu0 %v1966, 5
  %v2120 = vpop.permute.xlu0 %2119
  %2121 = vrot.lane.b32.xlu0 %v1967, 5
  %v2122 = vpop.permute.xlu0 %2121
  %2123 = vrot.lane.b32.xlu0 %v1968, 5
  %v2124 = vpop.permute.xlu0 %2123
  %2125 = vrot.lane.b32.xlu0 %v1969, 5
  %v2126 = vpop.permute.xlu0 %2125
  %2127 = vrot.lane.b32.xlu0 %v1970, 5
  %v2128 = vpop.permute.xlu0 %2127
  %2129 = vrot.lane.b32.xlu0 %v1971, 5
  %v2130 = vpop.permute.xlu0 %2129
  %2131 = vrot.lane.b32.xlu0 %v1972, 5
  %v2132 = vpop.permute.xlu0 %2131
  %2133 = vrot.lane.b32.xlu0 %v1973, 5
  %v2134 = vpop.permute.xlu0 %2133
  %2135 = vrot.lane.b32.xlu0 %v1974, 5
  %v2136 = vpop.permute.xlu0 %2135
  %2137 = vrot.lane.b32.xlu0 %v1975, 5
  %v2138 = vpop.permute.xlu0 %2137
  %2139 = vrot.lane.b32.xlu0 %v1976, 5
  %v2140 = vpop.permute.xlu0 %2139
  %2141 = vrot.lane.b32.xlu0 %v1977, 5
  %v2142 = vpop.permute.xlu0 %2141
  %2143 = vrot.lane.b32.xlu0 %v1978, 5
  %v2144 = vpop.permute.xlu0 %2143
  %2145 = vrot.lane.b32.xlu0 %v1979, 5
  %v2146 = vpop.permute.xlu0 %2145
  %2147 = vrot.lane.b32.xlu0 %v1980, 5
  %v2148 = vpop.permute.xlu0 %2147
  %2149 = vrot.lane.b32.xlu0 %v1981, 5
  %v2150 = vpop.permute.xlu0 %2149
  %2151 = vrot.lane.b32.xlu0 %v1982, 5
  %v2152 = vpop.permute.xlu0 %2151
  %2153 = vrot.lane.b32.xlu0 %v1983, 5
  %v2154 = vpop.permute.xlu0 %2153
  %2155 = vrot.lane.b32.xlu0 %v1984, 5
  %v2156 = vpop.permute.xlu0 %2155
  %2157 = vrot.lane.b32.xlu0 %v1985, 5
  %v2158 = vpop.permute.xlu0 %2157
  %2159 = vrot.lane.b32.xlu0 %v1986, 5
  %v2160 = vpop.permute.xlu0 %2159
  %2161 = vrot.lane.b32.xlu0 %v1987, 5
  %v2162 = vpop.permute.xlu0 %2161
  %2163 = vrot.lane.b32.xlu0 %v1988, 5
  %v2164 = vpop.permute.xlu0 %2163
  %2165 = vrot.lane.b32.xlu0 %v1989, 5
  %v2166 = vpop.permute.xlu0 %2165
  %2167 = vrot.lane.b32.xlu0 %v1990, 5
  %v2168 = vpop.permute.xlu0 %2167
  %2169 = vrot.lane.b32.xlu0 %v1991, 5
  %v2170 = vpop.permute.xlu0 %2169
  %2171 = vrot.lane.b32.xlu0 %v1992, 5
  %v2172 = vpop.permute.xlu0 %2171
  %2173 = vrot.lane.b32.xlu0 %v1993, 5
  %v2174 = vpop.permute.xlu0 %2173
  %2175 = vrot.lane.b32.xlu0 %v1994, 5
  %v2176 = vpop.permute.xlu0 %2175
  %2177 = vrot.lane.b32.xlu0 %v1995, 5
  %v2178 = vpop.permute.xlu0 %2177
  %2179 = vrot.lane.b32.xlu0 %v1996, 5
  %v2180 = vpop.permute.xlu0 %2179
  %2181 = vrot.lane.b32.xlu0 %v1997, 5
  %v2182 = vpop.permute.xlu0 %2181
  %2183 = vrot.lane.b32.xlu0 %v1998, 5
  %v2184 = vpop.permute.xlu0 %2183
  %2185 = vrot.lane.b32.xlu0 %v1999, 5
  %v2186 = vpop.permute.xlu0 %2185
  %2187 = vrot.lane.b32.xlu0 %v2000, 5
  %v2188 = vpop.permute.xlu0 %2187
  %2189 = vrot.lane.b32.xlu0 %v2001, 5
  %v2190 = vpop.permute.xlu0 %2189
  %2191 = vrot.lane.b32.xlu0 %v2002, 5
  %v2192 = vpop.permute.xlu0 %2191
  %2193 = vrot.lane.b32.xlu0 %v2003, 5
  %v2194 = vpop.permute.xlu0 %2193
  %2195 = vrot.lane.b32.xlu0 %v2004, 5
  %v2196 = vpop.permute.xlu0 %2195
  %vm2261 = vcmask 48168
  %2262 = vst.msk [vmem:[#allocation3] sm:$0xff] %vm2261, %v2070
  %2263 = vst.msk [vmem:[#allocation3 + $0x8] sm:$0xff] %vm2261, %v2072
  %2264 = vst.msk [vmem:[#allocation3 + $0x10] sm:$0xff] %vm2261, %v2074
  %2265 = vst.msk [vmem:[#allocation3 + $0x18] sm:$0xff] %vm2261, %v2076
  %2266 = vst.msk [vmem:[#allocation3 + $0x20] sm:$0xff] %vm2261, %v2078
  %2267 = vst.msk [vmem:[#allocation3 + $0x28] sm:$0xff] %vm2261, %v2080
  %2268 = vst.msk [vmem:[#allocation3 + $0x30] sm:$0xff] %vm2261, %v2082
  %2269 = vst.msk [vmem:[#allocation3 + $0x38] sm:$0xff] %vm2261, %v2084
  %2270 = vst.msk [vmem:[#allocation3 + $0x40] sm:$0xff] %vm2261, %v2086
  %2271 = vst.msk [vmem:[#allocation3 + $0x48] sm:$0xff] %vm2261, %v2088
  %2272 = vst.msk [vmem:[#allocation3 + $0x50] sm:$0xff] %vm2261, %v2090
  %2273 = vst.msk [vmem:[#allocation3 + $0x58] sm:$0xff] %vm2261, %v2092
  %2274 = vst.msk [vmem:[#allocation3 + $0x60] sm:$0xff] %vm2261, %v2094
  %2275 = vst.msk [vmem:[#allocation3 + $0x68] sm:$0xff] %vm2261, %v2096
  %2276 = vst.msk [vmem:[#allocation3 + $0x70] sm:$0xff] %vm2261, %v2098
  %2277 = vst.msk [vmem:[#allocation3 + $0x78] sm:$0xff] %vm2261, %v2100
  %2278 = vst.msk [vmem:[#allocation3 + $0x80] sm:$0xff] %vm2261, %v2102
  %2279 = vst.msk [vmem:[#allocation3 + $0x88] sm:$0xff] %vm2261, %v2104
  %2280 = vst.msk [vmem:[#allocation3 + $0x90] sm:$0xff] %vm2261, %v2106
  %2281 = vst.msk [vmem:[#allocation3 + $0x98] sm:$0xff] %vm2261, %v2108
  %2282 = vst.msk [vmem:[#allocation3 + $0xa0] sm:$0xff] %vm2261, %v2110
  %2283 = vst.msk [vmem:[#allocation3 + $0xa8] sm:$0xff] %vm2261, %v2112
  %2284 = vst.msk [vmem:[#allocation3 + $0xb0] sm:$0xff] %vm2261, %v2114
  %2285 = vst.msk [vmem:[#allocation3 + $0xb8] sm:$0xff] %vm2261, %v2116
  %2286 = vst.msk [vmem:[#allocation3 + $0xc0] sm:$0xff] %vm2261, %v2118
  %2287 = vst.msk [vmem:[#allocation3 + $0xc8] sm:$0xff] %vm2261, %v2120
  %2288 = vst.msk [vmem:[#allocation3 + $0xd0] sm:$0xff] %vm2261, %v2122
  %2289 = vst.msk [vmem:[#allocation3 + $0xd8] sm:$0xff] %vm2261, %v2124
  %2290 = vst.msk [vmem:[#allocation3 + $0xe0] sm:$0xff] %vm2261, %v2126
  %2291 = vst.msk [vmem:[#allocation3 + $0xe8] sm:$0xff] %vm2261, %v2128
  %2292 = vst.msk [vmem:[#allocation3 + $0xf0] sm:$0xff] %vm2261, %v2130
  %2293 = vst.msk [vmem:[#allocation3 + $0xf8] sm:$0xff] %vm2261, %v2132
  %2294 = vst.msk [vmem:[#allocation3 + $0x100] sm:$0xff] %vm2261, %v2134
  %2295 = vst.msk [vmem:[#allocation3 + $0x108] sm:$0xff] %vm2261, %v2136
  %2296 = vst.msk [vmem:[#allocation3 + $0x110] sm:$0xff] %vm2261, %v2138
  %2297 = vst.msk [vmem:[#allocation3 + $0x118] sm:$0xff] %vm2261, %v2140
  %2298 = vst.msk [vmem:[#allocation3 + $0x120] sm:$0xff] %vm2261, %v2142
  %2299 = vst.msk [vmem:[#allocation3 + $0x128] sm:$0xff] %vm2261, %v2144
  %2300 = vst.msk [vmem:[#allocation3 + $0x130] sm:$0xff] %vm2261, %v2146
  %2301 = vst.msk [vmem:[#allocation3 + $0x138] sm:$0xff] %vm2261, %v2148
  %2302 = vst.msk [vmem:[#allocation3 + $0x140] sm:$0xff] %vm2261, %v2150
  %2303 = vst.msk [vmem:[#allocation3 + $0x148] sm:$0xff] %vm2261, %v2152
  %2304 = vst.msk [vmem:[#allocation3 + $0x150] sm:$0xff] %vm2261, %v2154
  %2305 = vst.msk [vmem:[#allocation3 + $0x158] sm:$0xff] %vm2261, %v2156
  %2306 = vst.msk [vmem:[#allocation3 + $0x160] sm:$0xff] %vm2261, %v2158
  %2307 = vst.msk [vmem:[#allocation3 + $0x168] sm:$0xff] %vm2261, %v2160
  %2308 = vst.msk [vmem:[#allocation3 + $0x170] sm:$0xff] %vm2261, %v2162
  %2309 = vst.msk [vmem:[#allocation3 + $0x178] sm:$0xff] %vm2261, %v2164
  %2310 = vst.msk [vmem:[#allocation3 + $0x180] sm:$0xff] %vm2261, %v2166
  %2311 = vst.msk [vmem:[#allocation3 + $0x188] sm:$0xff] %vm2261, %v2168
  %2312 = vst.msk [vmem:[#allocation3 + $0x190] sm:$0xff] %vm2261, %v2170
  %2313 = vst.msk [vmem:[#allocation3 + $0x198] sm:$0xff] %vm2261, %v2172
  %2314 = vst.msk [vmem:[#allocation3 + $0x1a0] sm:$0xff] %vm2261, %v2174
  %2315 = vst.msk [vmem:[#allocation3 + $0x1a8] sm:$0xff] %vm2261, %v2176
  %2316 = vst.msk [vmem:[#allocation3 + $0x1b0] sm:$0xff] %vm2261, %v2178
  %2317 = vst.msk [vmem:[#allocation3 + $0x1b8] sm:$0xff] %vm2261, %v2180
  %2318 = vst.msk [vmem:[#allocation3 + $0x1c0] sm:$0xff] %vm2261, %v2182
  %2319 = vst.msk [vmem:[#allocation3 + $0x1c8] sm:$0xff] %vm2261, %v2184
  %2320 = vst.msk [vmem:[#allocation3 + $0x1d0] sm:$0xff] %vm2261, %v2186
  %2321 = vst.msk [vmem:[#allocation3 + $0x1d8] sm:$0xff] %vm2261, %v2188
  %2322 = vst.msk [vmem:[#allocation3 + $0x1e0] sm:$0xff] %vm2261, %v2190
  %2323 = vst.msk [vmem:[#allocation3 + $0x1e8] sm:$0xff] %vm2261, %v2192
  %2324 = vst.msk [vmem:[#allocation3 + $0x1f0] sm:$0xff] %vm2261, %v2194
  %2325 = vst.msk [vmem:[#allocation3 + $0x1f8] sm:$0xff] %vm2261, %v2196
  %s2326 = scalar_lea.vmem [#allocation2], 48
  %v2327 = vld [vmem:[%s2326] sm:$0xff]
  %v2328 = vld [vmem:[%s2326 + $0x8] sm:$0xff]
  %v2329 = vld [vmem:[%s2326 + $0x18] sm:$0xff]
  %v2330 = vld [vmem:[%s2326 + $0x20] sm:$0xff]
  %v2331 = vld [vmem:[%s2326 + $0x30] sm:$0xff]
  %v2332 = vld [vmem:[%s2326 + $0x38] sm:$0xff]
  %v2333 = vld [vmem:[%s2326 + $0x48] sm:$0xff]
  %v2334 = vld [vmem:[%s2326 + $0x50] sm:$0xff]
  %v2335 = vld [vmem:[%s2326 + $0x60] sm:$0xff]
  %v2336 = vld [vmem:[%s2326 + $0x68] sm:$0xff]
  %v2337 = vld [vmem:[%s2326 + $0x78] sm:$0xff]
  %v2338 = vld [vmem:[%s2326 + $0x80] sm:$0xff]
  %v2339 = vld [vmem:[%s2326 + $0x90] sm:$0xff]
  %v2340 = vld [vmem:[%s2326 + $0x98] sm:$0xff]
  %v2341 = vld [vmem:[%s2326 + $0xa8] sm:$0xff]
  %v2342 = vld [vmem:[%s2326 + $0xb0] sm:$0xff]
  %v2343 = vld [vmem:[%s2326 + $0xc0] sm:$0xff]
  %v2344 = vld [vmem:[%s2326 + $0xc8] sm:$0xff]
  %v2345 = vld [vmem:[%s2326 + $0xd8] sm:$0xff]
  %v2346 = vld [vmem:[%s2326 + $0xe0] sm:$0xff]
  %v2347 = vld [vmem:[%s2326 + $0xf0] sm:$0xff]
  %v2348 = vld [vmem:[%s2326 + $0xf8] sm:$0xff]
  %v2349 = vld [vmem:[%s2326 + $0x108] sm:$0xff]
  %v2350 = vld [vmem:[%s2326 + $0x110] sm:$0xff]
  %v2351 = vld [vmem:[%s2326 + $0x120] sm:$0xff]
  %v2352 = vld [vmem:[%s2326 + $0x128] sm:$0xff]
  %v2353 = vld [vmem:[%s2326 + $0x138] sm:$0xff]
  %v2354 = vld [vmem:[%s2326 + $0x140] sm:$0xff]
  %v2355 = vld [vmem:[%s2326 + $0x150] sm:$0xff]
  %v2356 = vld [vmem:[%s2326 + $0x158] sm:$0xff]
  %v2357 = vld [vmem:[%s2326 + $0x168] sm:$0xff]
  %v2358 = vld [vmem:[%s2326 + $0x170] sm:$0xff]
  %v2359 = vld [vmem:[%s2326 + $0x1b0] sm:$0xff]
  %v2360 = vld [vmem:[%s2326 + $0x1b8] sm:$0xff]
  %v2361 = vld [vmem:[%s2326 + $0x1c8] sm:$0xff]
  %v2362 = vld [vmem:[%s2326 + $0x1d0] sm:$0xff]
  %v2363 = vld [vmem:[%s2326 + $0x1e0] sm:$0xff]
  %v2364 = vld [vmem:[%s2326 + $0x1e8] sm:$0xff]
  %v2365 = vld [vmem:[%s2326 + $0x1f8] sm:$0xff]
  %v2366 = vld [vmem:[%s2326 + $0x200] sm:$0xff]
  %v2367 = vld [vmem:[%s2326 + $0x210] sm:$0xff]
  %v2368 = vld [vmem:[%s2326 + $0x218] sm:$0xff]
  %v2369 = vld [vmem:[%s2326 + $0x228] sm:$0xff]
  %v2370 = vld [vmem:[%s2326 + $0x230] sm:$0xff]
  %v2371 = vld [vmem:[%s2326 + $0x240] sm:$0xff]
  %v2372 = vld [vmem:[%s2326 + $0x248] sm:$0xff]
  %v2373 = vld [vmem:[%s2326 + $0x258] sm:$0xff]
  %v2374 = vld [vmem:[%s2326 + $0x260] sm:$0xff]
  %v2375 = vld [vmem:[%s2326 + $0x270] sm:$0xff]
  %v2376 = vld [vmem:[%s2326 + $0x278] sm:$0xff]
  %v2377 = vld [vmem:[%s2326 + $0x288] sm:$0xff]
  %v2378 = vld [vmem:[%s2326 + $0x290] sm:$0xff]
  %v2379 = vld [vmem:[%s2326 + $0x2a0] sm:$0xff]
  %v2380 = vld [vmem:[%s2326 + $0x2a8] sm:$0xff]
  %v2381 = vld [vmem:[%s2326 + $0x2b8] sm:$0xff]
  %v2382 = vld [vmem:[%s2326 + $0x2c0] sm:$0xff]
  %v2383 = vld [vmem:[%s2326 + $0x2d0] sm:$0xff]
  %v2384 = vld [vmem:[%s2326 + $0x2d8] sm:$0xff]
  %v2385 = vld [vmem:[%s2326 + $0x2e8] sm:$0xff]
  %v2386 = vld [vmem:[%s2326 + $0x2f0] sm:$0xff]
  %v2387 = vld [vmem:[%s2326 + $0x300] sm:$0xff]
  %v2388 = vld [vmem:[%s2326 + $0x308] sm:$0xff]
  %v2389 = vld [vmem:[%s2326 + $0x318] sm:$0xff]
  %v2390 = vld [vmem:[%s2326 + $0x320] sm:$0xff]
  %2455 = vrot.lane.b32.xlu0 %v2327, 6
  %v2456 = vpop.permute.xlu0 %2455
  %2457 = vrot.lane.b32.xlu0 %v2328, 6
  %v2458 = vpop.permute.xlu0 %2457
  %2459 = vrot.lane.b32.xlu0 %v2329, 6
  %v2460 = vpop.permute.xlu0 %2459
  %2461 = vrot.lane.b32.xlu0 %v2330, 6
  %v2462 = vpop.permute.xlu0 %2461
  %2463 = vrot.lane.b32.xlu0 %v2331, 6
  %v2464 = vpop.permute.xlu0 %2463
  %2465 = vrot.lane.b32.xlu0 %v2332, 6
  %v2466 = vpop.permute.xlu0 %2465
  %2467 = vrot.lane.b32.xlu0 %v2333, 6
  %v2468 = vpop.permute.xlu0 %2467
  %2469 = vrot.lane.b32.xlu0 %v2334, 6
  %v2470 = vpop.permute.xlu0 %2469
  %2471 = vrot.lane.b32.xlu0 %v2335, 6
  %v2472 = vpop.permute.xlu0 %2471
  %2473 = vrot.lane.b32.xlu0 %v2336, 6
  %v2474 = vpop.permute.xlu0 %2473
  %2475 = vrot.lane.b32.xlu0 %v2337, 6
  %v2476 = vpop.permute.xlu0 %2475
  %2477 = vrot.lane.b32.xlu0 %v2338, 6
  %v2478 = vpop.permute.xlu0 %2477
  %2479 = vrot.lane.b32.xlu0 %v2339, 6
  %v2480 = vpop.permute.xlu0 %2479
  %2481 = vrot.lane.b32.xlu0 %v2340, 6
  %v2482 = vpop.permute.xlu0 %2481
  %2483 = vrot.lane.b32.xlu0 %v2341, 6
  %v2484 = vpop.permute.xlu0 %2483
  %2485 = vrot.lane.b32.xlu0 %v2342, 6
  %v2486 = vpop.permute.xlu0 %2485
  %2487 = vrot.lane.b32.xlu0 %v2343, 6
  %v2488 = vpop.permute.xlu0 %2487
  %2489 = vrot.lane.b32.xlu0 %v2344, 6
  %v2490 = vpop.permute.xlu0 %2489
  %2491 = vrot.lane.b32.xlu0 %v2345, 6
  %v2492 = vpop.permute.xlu0 %2491
  %2493 = vrot.lane.b32.xlu0 %v2346, 6
  %v2494 = vpop.permute.xlu0 %2493
  %2495 = vrot.lane.b32.xlu0 %v2347, 6
  %v2496 = vpop.permute.xlu0 %2495
  %2497 = vrot.lane.b32.xlu0 %v2348, 6
  %v2498 = vpop.permute.xlu0 %2497
  %2499 = vrot.lane.b32.xlu0 %v2349, 6
  %v2500 = vpop.permute.xlu0 %2499
  %2501 = vrot.lane.b32.xlu0 %v2350, 6
  %v2502 = vpop.permute.xlu0 %2501
  %2503 = vrot.lane.b32.xlu0 %v2351, 6
  %v2504 = vpop.permute.xlu0 %2503
  %2505 = vrot.lane.b32.xlu0 %v2352, 6
  %v2506 = vpop.permute.xlu0 %2505
  %2507 = vrot.lane.b32.xlu0 %v2353, 6
  %v2508 = vpop.permute.xlu0 %2507
  %2509 = vrot.lane.b32.xlu0 %v2354, 6
  %v2510 = vpop.permute.xlu0 %2509
  %2511 = vrot.lane.b32.xlu0 %v2355, 6
  %v2512 = vpop.permute.xlu0 %2511
  %2513 = vrot.lane.b32.xlu0 %v2356, 6
  %v2514 = vpop.permute.xlu0 %2513
  %2515 = vrot.lane.b32.xlu0 %v2357, 6
  %v2516 = vpop.permute.xlu0 %2515
  %2517 = vrot.lane.b32.xlu0 %v2358, 6
  %v2518 = vpop.permute.xlu0 %2517
  %2519 = vrot.lane.b32.xlu0 %v2359, 6
  %v2520 = vpop.permute.xlu0 %2519
  %2521 = vrot.lane.b32.xlu0 %v2360, 6
  %v2522 = vpop.permute.xlu0 %2521
  %2523 = vrot.lane.b32.xlu0 %v2361, 6
  %v2524 = vpop.permute.xlu0 %2523
  %2525 = vrot.lane.b32.xlu0 %v2362, 6
  %v2526 = vpop.permute.xlu0 %2525
  %2527 = vrot.lane.b32.xlu0 %v2363, 6
  %v2528 = vpop.permute.xlu0 %2527
  %2529 = vrot.lane.b32.xlu0 %v2364, 6
  %v2530 = vpop.permute.xlu0 %2529
  %2531 = vrot.lane.b32.xlu0 %v2365, 6
  %v2532 = vpop.permute.xlu0 %2531
  %2533 = vrot.lane.b32.xlu0 %v2366, 6
  %v2534 = vpop.permute.xlu0 %2533
  %2535 = vrot.lane.b32.xlu0 %v2367, 6
  %v2536 = vpop.permute.xlu0 %2535
  %2537 = vrot.lane.b32.xlu0 %v2368, 6
  %v2538 = vpop.permute.xlu0 %2537
  %2539 = vrot.lane.b32.xlu0 %v2369, 6
  %v2540 = vpop.permute.xlu0 %2539
  %2541 = vrot.lane.b32.xlu0 %v2370, 6
  %v2542 = vpop.permute.xlu0 %2541
  %2543 = vrot.lane.b32.xlu0 %v2371, 6
  %v2544 = vpop.permute.xlu0 %2543
  %2545 = vrot.lane.b32.xlu0 %v2372, 6
  %v2546 = vpop.permute.xlu0 %2545
  %2547 = vrot.lane.b32.xlu0 %v2373, 6
  %v2548 = vpop.permute.xlu0 %2547
  %2549 = vrot.lane.b32.xlu0 %v2374, 6
  %v2550 = vpop.permute.xlu0 %2549
  %2551 = vrot.lane.b32.xlu0 %v2375, 6
  %v2552 = vpop.permute.xlu0 %2551
  %2553 = vrot.lane.b32.xlu0 %v2376, 6
  %v2554 = vpop.permute.xlu0 %2553
  %2555 = vrot.lane.b32.xlu0 %v2377, 6
  %v2556 = vpop.permute.xlu0 %2555
  %2557 = vrot.lane.b32.xlu0 %v2378, 6
  %v2558 = vpop.permute.xlu0 %2557
  %2559 = vrot.lane.b32.xlu0 %v2379, 6
  %v2560 = vpop.permute.xlu0 %2559
  %2561 = vrot.lane.b32.xlu0 %v2380, 6
  %v2562 = vpop.permute.xlu0 %2561
  %2563 = vrot.lane.b32.xlu0 %v2381, 6
  %v2564 = vpop.permute.xlu0 %2563
  %2565 = vrot.lane.b32.xlu0 %v2382, 6
  %v2566 = vpop.permute.xlu0 %2565
  %2567 = vrot.lane.b32.xlu0 %v2383, 6
  %v2568 = vpop.permute.xlu0 %2567
  %2569 = vrot.lane.b32.xlu0 %v2384, 6
  %v2570 = vpop.permute.xlu0 %2569
  %2571 = vrot.lane.b32.xlu0 %v2385, 6
  %v2572 = vpop.permute.xlu0 %2571
  %2573 = vrot.lane.b32.xlu0 %v2386, 6
  %v2574 = vpop.permute.xlu0 %2573
  %2575 = vrot.lane.b32.xlu0 %v2387, 6
  %v2576 = vpop.permute.xlu0 %2575
  %2577 = vrot.lane.b32.xlu0 %v2388, 6
  %v2578 = vpop.permute.xlu0 %2577
  %2579 = vrot.lane.b32.xlu0 %v2389, 6
  %v2580 = vpop.permute.xlu0 %2579
  %2581 = vrot.lane.b32.xlu0 %v2390, 6
  %v2582 = vpop.permute.xlu0 %2581
  %vm2647 = vcmask 56368
  %2648 = vst.msk [vmem:[#allocation3] sm:$0xff] %vm2647, %v2456
  %2649 = vst.msk [vmem:[#allocation3 + $0x8] sm:$0xff] %vm2647, %v2458
  %2650 = vst.msk [vmem:[#allocation3 + $0x10] sm:$0xff] %vm2647, %v2460
  %2651 = vst.msk [vmem:[#allocation3 + $0x18] sm:$0xff] %vm2647, %v2462
  %2652 = vst.msk [vmem:[#allocation3 + $0x20] sm:$0xff] %vm2647, %v2464
  %2653 = vst.msk [vmem:[#allocation3 + $0x28] sm:$0xff] %vm2647, %v2466
  %2654 = vst.msk [vmem:[#allocation3 + $0x30] sm:$0xff] %vm2647, %v2468
  %2655 = vst.msk [vmem:[#allocation3 + $0x38] sm:$0xff] %vm2647, %v2470
  %2656 = vst.msk [vmem:[#allocation3 + $0x40] sm:$0xff] %vm2647, %v2472
  %2657 = vst.msk [vmem:[#allocation3 + $0x48] sm:$0xff] %vm2647, %v2474
  %2658 = vst.msk [vmem:[#allocation3 + $0x50] sm:$0xff] %vm2647, %v2476
  %2659 = vst.msk [vmem:[#allocation3 + $0x58] sm:$0xff] %vm2647, %v2478
  %2660 = vst.msk [vmem:[#allocation3 + $0x60] sm:$0xff] %vm2647, %v2480
  %2661 = vst.msk [vmem:[#allocation3 + $0x68] sm:$0xff] %vm2647, %v2482
  %2662 = vst.msk [vmem:[#allocation3 + $0x70] sm:$0xff] %vm2647, %v2484
  %2663 = vst.msk [vmem:[#allocation3 + $0x78] sm:$0xff] %vm2647, %v2486
  %2664 = vst.msk [vmem:[#allocation3 + $0x80] sm:$0xff] %vm2647, %v2488
  %2665 = vst.msk [vmem:[#allocation3 + $0x88] sm:$0xff] %vm2647, %v2490
  %2666 = vst.msk [vmem:[#allocation3 + $0x90] sm:$0xff] %vm2647, %v2492
  %2667 = vst.msk [vmem:[#allocation3 + $0x98] sm:$0xff] %vm2647, %v2494
  %2668 = vst.msk [vmem:[#allocation3 + $0xa0] sm:$0xff] %vm2647, %v2496
  %2669 = vst.msk [vmem:[#allocation3 + $0xa8] sm:$0xff] %vm2647, %v2498
  %2670 = vst.msk [vmem:[#allocation3 + $0xb0] sm:$0xff] %vm2647, %v2500
  %2671 = vst.msk [vmem:[#allocation3 + $0xb8] sm:$0xff] %vm2647, %v2502
  %2672 = vst.msk [vmem:[#allocation3 + $0xc0] sm:$0xff] %vm2647, %v2504
  %2673 = vst.msk [vmem:[#allocation3 + $0xc8] sm:$0xff] %vm2647, %v2506
  %2674 = vst.msk [vmem:[#allocation3 + $0xd0] sm:$0xff] %vm2647, %v2508
  %2675 = vst.msk [vmem:[#allocation3 + $0xd8] sm:$0xff] %vm2647, %v2510
  %2676 = vst.msk [vmem:[#allocation3 + $0xe0] sm:$0xff] %vm2647, %v2512
  %2677 = vst.msk [vmem:[#allocation3 + $0xe8] sm:$0xff] %vm2647, %v2514
  %2678 = vst.msk [vmem:[#allocation3 + $0xf0] sm:$0xff] %vm2647, %v2516
  %2679 = vst.msk [vmem:[#allocation3 + $0xf8] sm:$0xff] %vm2647, %v2518
  %2680 = vst.msk [vmem:[#allocation3 + $0x100] sm:$0xff] %vm2647, %v2520
  %2681 = vst.msk [vmem:[#allocation3 + $0x108] sm:$0xff] %vm2647, %v2522
  %2682 = vst.msk [vmem:[#allocation3 + $0x110] sm:$0xff] %vm2647, %v2524
  %2683 = vst.msk [vmem:[#allocation3 + $0x118] sm:$0xff] %vm2647, %v2526
  %2684 = vst.msk [vmem:[#allocation3 + $0x120] sm:$0xff] %vm2647, %v2528
  %2685 = vst.msk [vmem:[#allocation3 + $0x128] sm:$0xff] %vm2647, %v2530
  %2686 = vst.msk [vmem:[#allocation3 + $0x130] sm:$0xff] %vm2647, %v2532
  %2687 = vst.msk [vmem:[#allocation3 + $0x138] sm:$0xff] %vm2647, %v2534
  %2688 = vst.msk [vmem:[#allocation3 + $0x140] sm:$0xff] %vm2647, %v2536
  %2689 = vst.msk [vmem:[#allocation3 + $0x148] sm:$0xff] %vm2647, %v2538
  %2690 = vst.msk [vmem:[#allocation3 + $0x150] sm:$0xff] %vm2647, %v2540
  %2691 = vst.msk [vmem:[#allocation3 + $0x158] sm:$0xff] %vm2647, %v2542
  %2692 = vst.msk [vmem:[#allocation3 + $0x160] sm:$0xff] %vm2647, %v2544
  %2693 = vst.msk [vmem:[#allocation3 + $0x168] sm:$0xff] %vm2647, %v2546
  %2694 = vst.msk [vmem:[#allocation3 + $0x170] sm:$0xff] %vm2647, %v2548
  %2695 = vst.msk [vmem:[#allocation3 + $0x178] sm:$0xff] %vm2647, %v2550
  %2696 = vst.msk [vmem:[#allocation3 + $0x180] sm:$0xff] %vm2647, %v2552
  %2697 = vst.msk [vmem:[#allocation3 + $0x188] sm:$0xff] %vm2647, %v2554
  %2698 = vst.msk [vmem:[#allocation3 + $0x190] sm:$0xff] %vm2647, %v2556
  %2699 = vst.msk [vmem:[#allocation3 + $0x198] sm:$0xff] %vm2647, %v2558
  %2700 = vst.msk [vmem:[#allocation3 + $0x1a0] sm:$0xff] %vm2647, %v2560
  %2701 = vst.msk [vmem:[#allocation3 + $0x1a8] sm:$0xff] %vm2647, %v2562
  %2702 = vst.msk [vmem:[#allocation3 + $0x1b0] sm:$0xff] %vm2647, %v2564
  %2703 = vst.msk [vmem:[#allocation3 + $0x1b8] sm:$0xff] %vm2647, %v2566
  %2704 = vst.msk [vmem:[#allocation3 + $0x1c0] sm:$0xff] %vm2647, %v2568
  %2705 = vst.msk [vmem:[#allocation3 + $0x1c8] sm:$0xff] %vm2647, %v2570
  %2706 = vst.msk [vmem:[#allocation3 + $0x1d0] sm:$0xff] %vm2647, %v2572
  %2707 = vst.msk [vmem:[#allocation3 + $0x1d8] sm:$0xff] %vm2647, %v2574
  %2708 = vst.msk [vmem:[#allocation3 + $0x1e0] sm:$0xff] %vm2647, %v2576
  %2709 = vst.msk [vmem:[#allocation3 + $0x1e8] sm:$0xff] %vm2647, %v2578
  %2710 = vst.msk [vmem:[#allocation3 + $0x1f0] sm:$0xff] %vm2647, %v2580
  %2711 = vst.msk [vmem:[#allocation3 + $0x1f8] sm:$0xff] %vm2647, %v2582
  %v2712 = vld [vmem:[%s2326 + $0x1] sm:$0xff]
  %v2713 = vld [vmem:[%s2326 + $0x9] sm:$0xff]
  %v2714 = vld [vmem:[%s2326 + $0x19] sm:$0xff]
  %v2715 = vld [vmem:[%s2326 + $0x21] sm:$0xff]
  %v2716 = vld [vmem:[%s2326 + $0x31] sm:$0xff]
  %v2717 = vld [vmem:[%s2326 + $0x39] sm:$0xff]
  %v2718 = vld [vmem:[%s2326 + $0x49] sm:$0xff]
  %v2719 = vld [vmem:[%s2326 + $0x51] sm:$0xff]
  %v2720 = vld [vmem:[%s2326 + $0x61] sm:$0xff]
  %v2721 = vld [vmem:[%s2326 + $0x69] sm:$0xff]
  %v2722 = vld [vmem:[%s2326 + $0x79] sm:$0xff]
  %v2723 = vld [vmem:[%s2326 + $0x81] sm:$0xff]
  %v2724 = vld [vmem:[%s2326 + $0x91] sm:$0xff]
  %v2725 = vld [vmem:[%s2326 + $0x99] sm:$0xff]
  %v2726 = vld [vmem:[%s2326 + $0xa9] sm:$0xff]
  %v2727 = vld [vmem:[%s2326 + $0xb1] sm:$0xff]
  %v2728 = vld [vmem:[%s2326 + $0xc1] sm:$0xff]
  %v2729 = vld [vmem:[%s2326 + $0xc9] sm:$0xff]
  %v2730 = vld [vmem:[%s2326 + $0xd9] sm:$0xff]
  %v2731 = vld [vmem:[%s2326 + $0xe1] sm:$0xff]
  %v2732 = vld [vmem:[%s2326 + $0xf1] sm:$0xff]
  %v2733 = vld [vmem:[%s2326 + $0xf9] sm:$0xff]
  %v2734 = vld [vmem:[%s2326 + $0x109] sm:$0xff]
  %v2735 = vld [vmem:[%s2326 + $0x111] sm:$0xff]
  %v2736 = vld [vmem:[%s2326 + $0x121] sm:$0xff]
  %v2737 = vld [vmem:[%s2326 + $0x129] sm:$0xff]
  %v2738 = vld [vmem:[%s2326 + $0x139] sm:$0xff]
  %v2739 = vld [vmem:[%s2326 + $0x141] sm:$0xff]
  %v2740 = vld [vmem:[%s2326 + $0x151] sm:$0xff]
  %v2741 = vld [vmem:[%s2326 + $0x159] sm:$0xff]
  %v2742 = vld [vmem:[%s2326 + $0x169] sm:$0xff]
  %v2743 = vld [vmem:[%s2326 + $0x171] sm:$0xff]
  %v2744 = vld [vmem:[%s2326 + $0x1b1] sm:$0xff]
  %v2745 = vld [vmem:[%s2326 + $0x1b9] sm:$0xff]
  %v2746 = vld [vmem:[%s2326 + $0x1c9] sm:$0xff]
  %v2747 = vld [vmem:[%s2326 + $0x1d1] sm:$0xff]
  %v2748 = vld [vmem:[%s2326 + $0x1e1] sm:$0xff]
  %v2749 = vld [vmem:[%s2326 + $0x1e9] sm:$0xff]
  %v2750 = vld [vmem:[%s2326 + $0x1f9] sm:$0xff]
  %v2751 = vld [vmem:[%s2326 + $0x201] sm:$0xff]
  %v2752 = vld [vmem:[%s2326 + $0x211] sm:$0xff]
  %v2753 = vld [vmem:[%s2326 + $0x219] sm:$0xff]
  %v2754 = vld [vmem:[%s2326 + $0x229] sm:$0xff]
  %v2755 = vld [vmem:[%s2326 + $0x231] sm:$0xff]
  %v2756 = vld [vmem:[%s2326 + $0x241] sm:$0xff]
  %v2757 = vld [vmem:[%s2326 + $0x249] sm:$0xff]
  %v2758 = vld [vmem:[%s2326 + $0x259] sm:$0xff]
  %v2759 = vld [vmem:[%s2326 + $0x261] sm:$0xff]
  %v2760 = vld [vmem:[%s2326 + $0x271] sm:$0xff]
  %v2761 = vld [vmem:[%s2326 + $0x279] sm:$0xff]
  %v2762 = vld [vmem:[%s2326 + $0x289] sm:$0xff]
  %v2763 = vld [vmem:[%s2326 + $0x291] sm:$0xff]
  %v2764 = vld [vmem:[%s2326 + $0x2a1] sm:$0xff]
  %v2765 = vld [vmem:[%s2326 + $0x2a9] sm:$0xff]
  %v2766 = vld [vmem:[%s2326 + $0x2b9] sm:$0xff]
  %v2767 = vld [vmem:[%s2326 + $0x2c1] sm:$0xff]
  %v2768 = vld [vmem:[%s2326 + $0x2d1] sm:$0xff]
  %v2769 = vld [vmem:[%s2326 + $0x2d9] sm:$0xff]
  %v2770 = vld [vmem:[%s2326 + $0x2e9] sm:$0xff]
  %v2771 = vld [vmem:[%s2326 + $0x2f1] sm:$0xff]
  %v2772 = vld [vmem:[%s2326 + $0x301] sm:$0xff]
  %v2773 = vld [vmem:[%s2326 + $0x309] sm:$0xff]
  %v2774 = vld [vmem:[%s2326 + $0x319] sm:$0xff]
  %v2775 = vld [vmem:[%s2326 + $0x321] sm:$0xff]
  %2840 = vrot.lane.b32.xlu0 %v2712, 7
  %v2841 = vpop.permute.xlu0 %2840
  %2842 = vrot.lane.b32.xlu0 %v2713, 7
  %v2843 = vpop.permute.xlu0 %2842
  %2844 = vrot.lane.b32.xlu0 %v2714, 7
  %v2845 = vpop.permute.xlu0 %2844
  %2846 = vrot.lane.b32.xlu0 %v2715, 7
  %v2847 = vpop.permute.xlu0 %2846
  %2848 = vrot.lane.b32.xlu0 %v2716, 7
  %v2849 = vpop.permute.xlu0 %2848
  %2850 = vrot.lane.b32.xlu0 %v2717, 7
  %v2851 = vpop.permute.xlu0 %2850
  %2852 = vrot.lane.b32.xlu0 %v2718, 7
  %v2853 = vpop.permute.xlu0 %2852
  %2854 = vrot.lane.b32.xlu0 %v2719, 7
  %v2855 = vpop.permute.xlu0 %2854
  %2856 = vrot.lane.b32.xlu0 %v2720, 7
  %v2857 = vpop.permute.xlu0 %2856
  %2858 = vrot.lane.b32.xlu0 %v2721, 7
  %v2859 = vpop.permute.xlu0 %2858
  %2860 = vrot.lane.b32.xlu0 %v2722, 7
  %v2861 = vpop.permute.xlu0 %2860
  %2862 = vrot.lane.b32.xlu0 %v2723, 7
  %v2863 = vpop.permute.xlu0 %2862
  %2864 = vrot.lane.b32.xlu0 %v2724, 7
  %v2865 = vpop.permute.xlu0 %2864
  %2866 = vrot.lane.b32.xlu0 %v2725, 7
  %v2867 = vpop.permute.xlu0 %2866
  %2868 = vrot.lane.b32.xlu0 %v2726, 7
  %v2869 = vpop.permute.xlu0 %2868
  %2870 = vrot.lane.b32.xlu0 %v2727, 7
  %v2871 = vpop.permute.xlu0 %2870
  %2872 = vrot.lane.b32.xlu0 %v2728, 7
  %v2873 = vpop.permute.xlu0 %2872
  %2874 = vrot.lane.b32.xlu0 %v2729, 7
  %v2875 = vpop.permute.xlu0 %2874
  %2876 = vrot.lane.b32.xlu0 %v2730, 7
  %v2877 = vpop.permute.xlu0 %2876
  %2878 = vrot.lane.b32.xlu0 %v2731, 7
  %v2879 = vpop.permute.xlu0 %2878
  %2880 = vrot.lane.b32.xlu0 %v2732, 7
  %v2881 = vpop.permute.xlu0 %2880
  %2882 = vrot.lane.b32.xlu0 %v2733, 7
  %v2883 = vpop.permute.xlu0 %2882
  %2884 = vrot.lane.b32.xlu0 %v2734, 7
  %v2885 = vpop.permute.xlu0 %2884
  %2886 = vrot.lane.b32.xlu0 %v2735, 7
  %v2887 = vpop.permute.xlu0 %2886
  %2888 = vrot.lane.b32.xlu0 %v2736, 7
  %v2889 = vpop.permute.xlu0 %2888
  %2890 = vrot.lane.b32.xlu0 %v2737, 7
  %v2891 = vpop.permute.xlu0 %2890
  %2892 = vrot.lane.b32.xlu0 %v2738, 7
  %v2893 = vpop.permute.xlu0 %2892
  %2894 = vrot.lane.b32.xlu0 %v2739, 7
  %v2895 = vpop.permute.xlu0 %2894
  %2896 = vrot.lane.b32.xlu0 %v2740, 7
  %v2897 = vpop.permute.xlu0 %2896
  %2898 = vrot.lane.b32.xlu0 %v2741, 7
  %v2899 = vpop.permute.xlu0 %2898
  %2900 = vrot.lane.b32.xlu0 %v2742, 7
  %v2901 = vpop.permute.xlu0 %2900
  %2902 = vrot.lane.b32.xlu0 %v2743, 7
  %v2903 = vpop.permute.xlu0 %2902
  %2904 = vrot.lane.b32.xlu0 %v2744, 7
  %v2905 = vpop.permute.xlu0 %2904
  %2906 = vrot.lane.b32.xlu0 %v2745, 7
  %v2907 = vpop.permute.xlu0 %2906
  %2908 = vrot.lane.b32.xlu0 %v2746, 7
  %v2909 = vpop.permute.xlu0 %2908
  %2910 = vrot.lane.b32.xlu0 %v2747, 7
  %v2911 = vpop.permute.xlu0 %2910
  %2912 = vrot.lane.b32.xlu0 %v2748, 7
  %v2913 = vpop.permute.xlu0 %2912
  %2914 = vrot.lane.b32.xlu0 %v2749, 7
  %v2915 = vpop.permute.xlu0 %2914
  %2916 = vrot.lane.b32.xlu0 %v2750, 7
  %v2917 = vpop.permute.xlu0 %2916
  %2918 = vrot.lane.b32.xlu0 %v2751, 7
  %v2919 = vpop.permute.xlu0 %2918
  %2920 = vrot.lane.b32.xlu0 %v2752, 7
  %v2921 = vpop.permute.xlu0 %2920
  %2922 = vrot.lane.b32.xlu0 %v2753, 7
  %v2923 = vpop.permute.xlu0 %2922
  %2924 = vrot.lane.b32.xlu0 %v2754, 7
  %v2925 = vpop.permute.xlu0 %2924
  %2926 = vrot.lane.b32.xlu0 %v2755, 7
  %v2927 = vpop.permute.xlu0 %2926
  %2928 = vrot.lane.b32.xlu0 %v2756, 7
  %v2929 = vpop.permute.xlu0 %2928
  %2930 = vrot.lane.b32.xlu0 %v2757, 7
  %v2931 = vpop.permute.xlu0 %2930
  %2932 = vrot.lane.b32.xlu0 %v2758, 7
  %v2933 = vpop.permute.xlu0 %2932
  %2934 = vrot.lane.b32.xlu0 %v2759, 7
  %v2935 = vpop.permute.xlu0 %2934
  %2936 = vrot.lane.b32.xlu0 %v2760, 7
  %v2937 = vpop.permute.xlu0 %2936
  %2938 = vrot.lane.b32.xlu0 %v2761, 7
  %v2939 = vpop.permute.xlu0 %2938
  %2940 = vrot.lane.b32.xlu0 %v2762, 7
  %v2941 = vpop.permute.xlu0 %2940
  %2942 = vrot.lane.b32.xlu0 %v2763, 7
  %v2943 = vpop.permute.xlu0 %2942
  %2944 = vrot.lane.b32.xlu0 %v2764, 7
  %v2945 = vpop.permute.xlu0 %2944
  %2946 = vrot.lane.b32.xlu0 %v2765, 7
  %v2947 = vpop.permute.xlu0 %2946
  %2948 = vrot.lane.b32.xlu0 %v2766, 7
  %v2949 = vpop.permute.xlu0 %2948
  %2950 = vrot.lane.b32.xlu0 %v2767, 7
  %v2951 = vpop.permute.xlu0 %2950
  %2952 = vrot.lane.b32.xlu0 %v2768, 7
  %v2953 = vpop.permute.xlu0 %2952
  %2954 = vrot.lane.b32.xlu0 %v2769, 7
  %v2955 = vpop.permute.xlu0 %2954
  %2956 = vrot.lane.b32.xlu0 %v2770, 7
  %v2957 = vpop.permute.xlu0 %2956
  %2958 = vrot.lane.b32.xlu0 %v2771, 7
  %v2959 = vpop.permute.xlu0 %2958
  %2960 = vrot.lane.b32.xlu0 %v2772, 7
  %v2961 = vpop.permute.xlu0 %2960
  %2962 = vrot.lane.b32.xlu0 %v2773, 7
  %v2963 = vpop.permute.xlu0 %2962
  %2964 = vrot.lane.b32.xlu0 %v2774, 7
  %v2965 = vpop.permute.xlu0 %2964
  %2966 = vrot.lane.b32.xlu0 %v2775, 7
  %v2967 = vpop.permute.xlu0 %2966
  %vm3032 = vcmask 64568
  %3033 = vst.msk [vmem:[#allocation3] sm:$0xff] %vm3032, %v2841
  %3034 = vst.msk [vmem:[#allocation3 + $0x8] sm:$0xff] %vm3032, %v2843
  %3035 = vst.msk [vmem:[#allocation3 + $0x10] sm:$0xff] %vm3032, %v2845
  %3036 = vst.msk [vmem:[#allocation3 + $0x18] sm:$0xff] %vm3032, %v2847
  %3037 = vst.msk [vmem:[#allocation3 + $0x20] sm:$0xff] %vm3032, %v2849
  %3038 = vst.msk [vmem:[#allocation3 + $0x28] sm:$0xff] %vm3032, %v2851
  %3039 = vst.msk [vmem:[#allocation3 + $0x30] sm:$0xff] %vm3032, %v2853
  %3040 = vst.msk [vmem:[#allocation3 + $0x38] sm:$0xff] %vm3032, %v2855
  %3041 = vst.msk [vmem:[#allocation3 + $0x40] sm:$0xff] %vm3032, %v2857
  %3042 = vst.msk [vmem:[#allocation3 + $0x48] sm:$0xff] %vm3032, %v2859
  %3043 = vst.msk [vmem:[#allocation3 + $0x50] sm:$0xff] %vm3032, %v2861
  %3044 = vst.msk [vmem:[#allocation3 + $0x58] sm:$0xff] %vm3032, %v2863
  %3045 = vst.msk [vmem:[#allocation3 + $0x60] sm:$0xff] %vm3032, %v2865
  %3046 = vst.msk [vmem:[#allocation3 + $0x68] sm:$0xff] %vm3032, %v2867
  %3047 = vst.msk [vmem:[#allocation3 + $0x70] sm:$0xff] %vm3032, %v2869
  %3048 = vst.msk [vmem:[#allocation3 + $0x78] sm:$0xff] %vm3032, %v2871
  %3049 = vst.msk [vmem:[#allocation3 + $0x80] sm:$0xff] %vm3032, %v2873
  %3050 = vst.msk [vmem:[#allocation3 + $0x88] sm:$0xff] %vm3032, %v2875
  %3051 = vst.msk [vmem:[#allocation3 + $0x90] sm:$0xff] %vm3032, %v2877
  %3052 = vst.msk [vmem:[#allocation3 + $0x98] sm:$0xff] %vm3032, %v2879
  %3053 = vst.msk [vmem:[#allocation3 + $0xa0] sm:$0xff] %vm3032, %v2881
  %3054 = vst.msk [vmem:[#allocation3 + $0xa8] sm:$0xff] %vm3032, %v2883
  %3055 = vst.msk [vmem:[#allocation3 + $0xb0] sm:$0xff] %vm3032, %v2885
  %3056 = vst.msk [vmem:[#allocation3 + $0xb8] sm:$0xff] %vm3032, %v2887
  %3057 = vst.msk [vmem:[#allocation3 + $0xc0] sm:$0xff] %vm3032, %v2889
  %3058 = vst.msk [vmem:[#allocation3 + $0xc8] sm:$0xff] %vm3032, %v2891
  %3059 = vst.msk [vmem:[#allocation3 + $0xd0] sm:$0xff] %vm3032, %v2893
  %3060 = vst.msk [vmem:[#allocation3 + $0xd8] sm:$0xff] %vm3032, %v2895
  %3061 = vst.msk [vmem:[#allocation3 + $0xe0] sm:$0xff] %vm3032, %v2897
  %3062 = vst.msk [vmem:[#allocation3 + $0xe8] sm:$0xff] %vm3032, %v2899
  %3063 = vst.msk [vmem:[#allocation3 + $0xf0] sm:$0xff] %vm3032, %v2901
  %3064 = vst.msk [vmem:[#allocation3 + $0xf8] sm:$0xff] %vm3032, %v2903
  %3065 = vst.msk [vmem:[#allocation3 + $0x100] sm:$0xff] %vm3032, %v2905
  %3066 = vst.msk [vmem:[#allocation3 + $0x108] sm:$0xff] %vm3032, %v2907
  %3067 = vst.msk [vmem:[#allocation3 + $0x110] sm:$0xff] %vm3032, %v2909
  %3068 = vst.msk [vmem:[#allocation3 + $0x118] sm:$0xff] %vm3032, %v2911
  %3069 = vst.msk [vmem:[#allocation3 + $0x120] sm:$0xff] %vm3032, %v2913
  %3070 = vst.msk [vmem:[#allocation3 + $0x128] sm:$0xff] %vm3032, %v2915
  %3071 = vst.msk [vmem:[#allocation3 + $0x130] sm:$0xff] %vm3032, %v2917
  %3072 = vst.msk [vmem:[#allocation3 + $0x138] sm:$0xff] %vm3032, %v2919
  %3073 = vst.msk [vmem:[#allocation3 + $0x140] sm:$0xff] %vm3032, %v2921
  %3074 = vst.msk [vmem:[#allocation3 + $0x148] sm:$0xff] %vm3032, %v2923
  %3075 = vst.msk [vmem:[#allocation3 + $0x150] sm:$0xff] %vm3032, %v2925
  %3076 = vst.msk [vmem:[#allocation3 + $0x158] sm:$0xff] %vm3032, %v2927
  %3077 = vst.msk [vmem:[#allocation3 + $0x160] sm:$0xff] %vm3032, %v2929
  %3078 = vst.msk [vmem:[#allocation3 + $0x168] sm:$0xff] %vm3032, %v2931
  %3079 = vst.msk [vmem:[#allocation3 + $0x170] sm:$0xff] %vm3032, %v2933
  %3080 = vst.msk [vmem:[#allocation3 + $0x178] sm:$0xff] %vm3032, %v2935
  %3081 = vst.msk [vmem:[#allocation3 + $0x180] sm:$0xff] %vm3032, %v2937
  %3082 = vst.msk [vmem:[#allocation3 + $0x188] sm:$0xff] %vm3032, %v2939
  %3083 = vst.msk [vmem:[#allocation3 + $0x190] sm:$0xff] %vm3032, %v2941
  %3084 = vst.msk [vmem:[#allocation3 + $0x198] sm:$0xff] %vm3032, %v2943
  %3085 = vst.msk [vmem:[#allocation3 + $0x1a0] sm:$0xff] %vm3032, %v2945
  %3086 = vst.msk [vmem:[#allocation3 + $0x1a8] sm:$0xff] %vm3032, %v2947
  %3087 = vst.msk [vmem:[#allocation3 + $0x1b0] sm:$0xff] %vm3032, %v2949
  %3088 = vst.msk [vmem:[#allocation3 + $0x1b8] sm:$0xff] %vm3032, %v2951
  %3089 = vst.msk [vmem:[#allocation3 + $0x1c0] sm:$0xff] %vm3032, %v2953
  %3090 = vst.msk [vmem:[#allocation3 + $0x1c8] sm:$0xff] %vm3032, %v2955
  %3091 = vst.msk [vmem:[#allocation3 + $0x1d0] sm:$0xff] %vm3032, %v2957
  %3092 = vst.msk [vmem:[#allocation3 + $0x1d8] sm:$0xff] %vm3032, %v2959
  %3093 = vst.msk [vmem:[#allocation3 + $0x1e0] sm:$0xff] %vm3032, %v2961
  %3094 = vst.msk [vmem:[#allocation3 + $0x1e8] sm:$0xff] %vm3032, %v2963
  %3095 = vst.msk [vmem:[#allocation3 + $0x1f0] sm:$0xff] %vm3032, %v2965
  %3096 = vst.msk [vmem:[#allocation3 + $0x1f8] sm:$0xff] %vm3032, %v2967
  %v3097 = vld [vmem:[%s2326 + $0x2] sm:$0xff]
  %v3098 = vld [vmem:[%s2326 + $0xa] sm:$0xff]
  %v3099 = vld [vmem:[%s2326 + $0x1a] sm:$0xff]
  %v3100 = vld [vmem:[%s2326 + $0x22] sm:$0xff]
  %v3101 = vld [vmem:[%s2326 + $0x32] sm:$0xff]
  %v3102 = vld [vmem:[%s2326 + $0x3a] sm:$0xff]
  %v3103 = vld [vmem:[%s2326 + $0x4a] sm:$0xff]
  %v3104 = vld [vmem:[%s2326 + $0x52] sm:$0xff]
  %v3105 = vld [vmem:[%s2326 + $0x62] sm:$0xff]
  %v3106 = vld [vmem:[%s2326 + $0x6a] sm:$0xff]
  %v3107 = vld [vmem:[%s2326 + $0x7a] sm:$0xff]
  %v3108 = vld [vmem:[%s2326 + $0x82] sm:$0xff]
  %v3109 = vld [vmem:[%s2326 + $0x92] sm:$0xff]
  %v3110 = vld [vmem:[%s2326 + $0x9a] sm:$0xff]
  %v3111 = vld [vmem:[%s2326 + $0xaa] sm:$0xff]
  %v3112 = vld [vmem:[%s2326 + $0xb2] sm:$0xff]
  %v3113 = vld [vmem:[%s2326 + $0xc2] sm:$0xff]
  %v3114 = vld [vmem:[%s2326 + $0xca] sm:$0xff]
  %v3115 = vld [vmem:[%s2326 + $0xda] sm:$0xff]
  %v3116 = vld [vmem:[%s2326 + $0xe2] sm:$0xff]
  %v3117 = vld [vmem:[%s2326 + $0xf2] sm:$0xff]
  %v3118 = vld [vmem:[%s2326 + $0xfa] sm:$0xff]
  %v3119 = vld [vmem:[%s2326 + $0x10a] sm:$0xff]
  %v3120 = vld [vmem:[%s2326 + $0x112] sm:$0xff]
  %v3121 = vld [vmem:[%s2326 + $0x122] sm:$0xff]
  %v3122 = vld [vmem:[%s2326 + $0x12a] sm:$0xff]
  %v3123 = vld [vmem:[%s2326 + $0x13a] sm:$0xff]
  %v3124 = vld [vmem:[%s2326 + $0x142] sm:$0xff]
  %v3125 = vld [vmem:[%s2326 + $0x152] sm:$0xff]
  %v3126 = vld [vmem:[%s2326 + $0x15a] sm:$0xff]
  %v3127 = vld [vmem:[%s2326 + $0x16a] sm:$0xff]
  %v3128 = vld [vmem:[%s2326 + $0x172] sm:$0xff]
  %v3129 = vld [vmem:[%s2326 + $0x1b2] sm:$0xff]
  %v3130 = vld [vmem:[%s2326 + $0x1ba] sm:$0xff]
  %v3131 = vld [vmem:[%s2326 + $0x1ca] sm:$0xff]
  %v3132 = vld [vmem:[%s2326 + $0x1d2] sm:$0xff]
  %v3133 = vld [vmem:[%s2326 + $0x1e2] sm:$0xff]
  %v3134 = vld [vmem:[%s2326 + $0x1ea] sm:$0xff]
  %v3135 = vld [vmem:[%s2326 + $0x1fa] sm:$0xff]
  %v3136 = vld [vmem:[%s2326 + $0x202] sm:$0xff]
  %v3137 = vld [vmem:[%s2326 + $0x212] sm:$0xff]
  %v3138 = vld [vmem:[%s2326 + $0x21a] sm:$0xff]
  %v3139 = vld [vmem:[%s2326 + $0x22a] sm:$0xff]
  %v3140 = vld [vmem:[%s2326 + $0x232] sm:$0xff]
  %v3141 = vld [vmem:[%s2326 + $0x242] sm:$0xff]
  %v3142 = vld [vmem:[%s2326 + $0x24a] sm:$0xff]
  %v3143 = vld [vmem:[%s2326 + $0x25a] sm:$0xff]
  %v3144 = vld [vmem:[%s2326 + $0x262] sm:$0xff]
  %v3145 = vld [vmem:[%s2326 + $0x272] sm:$0xff]
  %v3146 = vld [vmem:[%s2326 + $0x27a] sm:$0xff]
  %v3147 = vld [vmem:[%s2326 + $0x28a] sm:$0xff]
  %v3148 = vld [vmem:[%s2326 + $0x292] sm:$0xff]
  %v3149 = vld [vmem:[%s2326 + $0x2a2] sm:$0xff]
  %v3150 = vld [vmem:[%s2326 + $0x2aa] sm:$0xff]
  %v3151 = vld [vmem:[%s2326 + $0x2ba] sm:$0xff]
  %v3152 = vld [vmem:[%s2326 + $0x2c2] sm:$0xff]
  %v3153 = vld [vmem:[%s2326 + $0x2d2] sm:$0xff]
  %v3154 = vld [vmem:[%s2326 + $0x2da] sm:$0xff]
  %v3155 = vld [vmem:[%s2326 + $0x2ea] sm:$0xff]
  %v3156 = vld [vmem:[%s2326 + $0x2f2] sm:$0xff]
  %v3157 = vld [vmem:[%s2326 + $0x302] sm:$0xff]
  %v3158 = vld [vmem:[%s2326 + $0x30a] sm:$0xff]
  %v3159 = vld [vmem:[%s2326 + $0x31a] sm:$0xff]
  %v3160 = vld [vmem:[%s2326 + $0x322] sm:$0xff]
  %3225 = vrot.lane.b32.xlu0 %v3097, 8
  %v3226 = vpop.permute.xlu0 %3225
  %3227 = vrot.lane.b32.xlu0 %v3098, 8
  %v3228 = vpop.permute.xlu0 %3227
  %3229 = vrot.lane.b32.xlu0 %v3099, 8
  %v3230 = vpop.permute.xlu0 %3229
  %3231 = vrot.lane.b32.xlu0 %v3100, 8
  %v3232 = vpop.permute.xlu0 %3231
  %3233 = vrot.lane.b32.xlu0 %v3101, 8
  %v3234 = vpop.permute.xlu0 %3233
  %3235 = vrot.lane.b32.xlu0 %v3102, 8
  %v3236 = vpop.permute.xlu0 %3235
  %3237 = vrot.lane.b32.xlu0 %v3103, 8
  %v3238 = vpop.permute.xlu0 %3237
  %3239 = vrot.lane.b32.xlu0 %v3104, 8
  %v3240 = vpop.permute.xlu0 %3239
  %3241 = vrot.lane.b32.xlu0 %v3105, 8
  %v3242 = vpop.permute.xlu0 %3241
  %3243 = vrot.lane.b32.xlu0 %v3106, 8
  %v3244 = vpop.permute.xlu0 %3243
  %3245 = vrot.lane.b32.xlu0 %v3107, 8
  %v3246 = vpop.permute.xlu0 %3245
  %3247 = vrot.lane.b32.xlu0 %v3108, 8
  %v3248 = vpop.permute.xlu0 %3247
  %3249 = vrot.lane.b32.xlu0 %v3109, 8
  %v3250 = vpop.permute.xlu0 %3249
  %3251 = vrot.lane.b32.xlu0 %v3110, 8
  %v3252 = vpop.permute.xlu0 %3251
  %3253 = vrot.lane.b32.xlu0 %v3111, 8
  %v3254 = vpop.permute.xlu0 %3253
  %3255 = vrot.lane.b32.xlu0 %v3112, 8
  %v3256 = vpop.permute.xlu0 %3255
  %3257 = vrot.lane.b32.xlu0 %v3113, 8
  %v3258 = vpop.permute.xlu0 %3257
  %3259 = vrot.lane.b32.xlu0 %v3114, 8
  %v3260 = vpop.permute.xlu0 %3259
  %3261 = vrot.lane.b32.xlu0 %v3115, 8
  %v3262 = vpop.permute.xlu0 %3261
  %3263 = vrot.lane.b32.xlu0 %v3116, 8
  %v3264 = vpop.permute.xlu0 %3263
  %3265 = vrot.lane.b32.xlu0 %v3117, 8
  %v3266 = vpop.permute.xlu0 %3265
  %3267 = vrot.lane.b32.xlu0 %v3118, 8
  %v3268 = vpop.permute.xlu0 %3267
  %3269 = vrot.lane.b32.xlu0 %v3119, 8
  %v3270 = vpop.permute.xlu0 %3269
  %3271 = vrot.lane.b32.xlu0 %v3120, 8
  %v3272 = vpop.permute.xlu0 %3271
  %3273 = vrot.lane.b32.xlu0 %v3121, 8
  %v3274 = vpop.permute.xlu0 %3273
  %3275 = vrot.lane.b32.xlu0 %v3122, 8
  %v3276 = vpop.permute.xlu0 %3275
  %3277 = vrot.lane.b32.xlu0 %v3123, 8
  %v3278 = vpop.permute.xlu0 %3277
  %3279 = vrot.lane.b32.xlu0 %v3124, 8
  %v3280 = vpop.permute.xlu0 %3279
  %3281 = vrot.lane.b32.xlu0 %v3125, 8
  %v3282 = vpop.permute.xlu0 %3281
  %3283 = vrot.lane.b32.xlu0 %v3126, 8
  %v3284 = vpop.permute.xlu0 %3283
  %3285 = vrot.lane.b32.xlu0 %v3127, 8
  %v3286 = vpop.permute.xlu0 %3285
  %3287 = vrot.lane.b32.xlu0 %v3128, 8
  %v3288 = vpop.permute.xlu0 %3287
  %3289 = vrot.lane.b32.xlu0 %v3129, 8
  %v3290 = vpop.permute.xlu0 %3289
  %3291 = vrot.lane.b32.xlu0 %v3130, 8
  %v3292 = vpop.permute.xlu0 %3291
  %3293 = vrot.lane.b32.xlu0 %v3131, 8
  %v3294 = vpop.permute.xlu0 %3293
  %3295 = vrot.lane.b32.xlu0 %v3132, 8
  %v3296 = vpop.permute.xlu0 %3295
  %3297 = vrot.lane.b32.xlu0 %v3133, 8
  %v3298 = vpop.permute.xlu0 %3297
  %3299 = vrot.lane.b32.xlu0 %v3134, 8
  %v3300 = vpop.permute.xlu0 %3299
  %3301 = vrot.lane.b32.xlu0 %v3135, 8
  %v3302 = vpop.permute.xlu0 %3301
  %3303 = vrot.lane.b32.xlu0 %v3136, 8
  %v3304 = vpop.permute.xlu0 %3303
  %3305 = vrot.lane.b32.xlu0 %v3137, 8
  %v3306 = vpop.permute.xlu0 %3305
  %3307 = vrot.lane.b32.xlu0 %v3138, 8
  %v3308 = vpop.permute.xlu0 %3307
  %3309 = vrot.lane.b32.xlu0 %v3139, 8
  %v3310 = vpop.permute.xlu0 %3309
  %3311 = vrot.lane.b32.xlu0 %v3140, 8
  %v3312 = vpop.permute.xlu0 %3311
  %3313 = vrot.lane.b32.xlu0 %v3141, 8
  %v3314 = vpop.permute.xlu0 %3313
  %3315 = vrot.lane.b32.xlu0 %v3142, 8
  %v3316 = vpop.permute.xlu0 %3315
  %3317 = vrot.lane.b32.xlu0 %v3143, 8
  %v3318 = vpop.permute.xlu0 %3317
  %3319 = vrot.lane.b32.xlu0 %v3144, 8
  %v3320 = vpop.permute.xlu0 %3319
  %3321 = vrot.lane.b32.xlu0 %v3145, 8
  %v3322 = vpop.permute.xlu0 %3321
  %3323 = vrot.lane.b32.xlu0 %v3146, 8
  %v3324 = vpop.permute.xlu0 %3323
  %3325 = vrot.lane.b32.xlu0 %v3147, 8
  %v3326 = vpop.permute.xlu0 %3325
  %3327 = vrot.lane.b32.xlu0 %v3148, 8
  %v3328 = vpop.permute.xlu0 %3327
  %3329 = vrot.lane.b32.xlu0 %v3149, 8
  %v3330 = vpop.permute.xlu0 %3329
  %3331 = vrot.lane.b32.xlu0 %v3150, 8
  %v3332 = vpop.permute.xlu0 %3331
  %3333 = vrot.lane.b32.xlu0 %v3151, 8
  %v3334 = vpop.permute.xlu0 %3333
  %3335 = vrot.lane.b32.xlu0 %v3152, 8
  %v3336 = vpop.permute.xlu0 %3335
  %3337 = vrot.lane.b32.xlu0 %v3153, 8
  %v3338 = vpop.permute.xlu0 %3337
  %3339 = vrot.lane.b32.xlu0 %v3154, 8
  %v3340 = vpop.permute.xlu0 %3339
  %3341 = vrot.lane.b32.xlu0 %v3155, 8
  %v3342 = vpop.permute.xlu0 %3341
  %3343 = vrot.lane.b32.xlu0 %v3156, 8
  %v3344 = vpop.permute.xlu0 %3343
  %3345 = vrot.lane.b32.xlu0 %v3157, 8
  %v3346 = vpop.permute.xlu0 %3345
  %3347 = vrot.lane.b32.xlu0 %v3158, 8
  %v3348 = vpop.permute.xlu0 %3347
  %3349 = vrot.lane.b32.xlu0 %v3159, 8
  %v3350 = vpop.permute.xlu0 %3349
  %3351 = vrot.lane.b32.xlu0 %v3160, 8
  %v3352 = vpop.permute.xlu0 %3351
  %vm3417 = vcmask 72768
  %3418 = vst.msk [vmem:[#allocation3] sm:$0xff] %vm3417, %v3226
  %3419 = vst.msk [vmem:[#allocation3 + $0x8] sm:$0xff] %vm3417, %v3228
  %3420 = vst.msk [vmem:[#allocation3 + $0x10] sm:$0xff] %vm3417, %v3230
  %3421 = vst.msk [vmem:[#allocation3 + $0x18] sm:$0xff] %vm3417, %v3232
  %3422 = vst.msk [vmem:[#allocation3 + $0x20] sm:$0xff] %vm3417, %v3234
  %3423 = vst.msk [vmem:[#allocation3 + $0x28] sm:$0xff] %vm3417, %v3236
  %3424 = vst.msk [vmem:[#allocation3 + $0x30] sm:$0xff] %vm3417, %v3238
  %3425 = vst.msk [vmem:[#allocation3 + $0x38] sm:$0xff] %vm3417, %v3240
  %3426 = vst.msk [vmem:[#allocation3 + $0x40] sm:$0xff] %vm3417, %v3242
  %3427 = vst.msk [vmem:[#allocation3 + $0x48] sm:$0xff] %vm3417, %v3244
  %3428 = vst.msk [vmem:[#allocation3 + $0x50] sm:$0xff] %vm3417, %v3246
  %3429 = vst.msk [vmem:[#allocation3 + $0x58] sm:$0xff] %vm3417, %v3248
  %3430 = vst.msk [vmem:[#allocation3 + $0x60] sm:$0xff] %vm3417, %v3250
  %3431 = vst.msk [vmem:[#allocation3 + $0x68] sm:$0xff] %vm3417, %v3252
  %3432 = vst.msk [vmem:[#allocation3 + $0x70] sm:$0xff] %vm3417, %v3254
  %3433 = vst.msk [vmem:[#allocation3 + $0x78] sm:$0xff] %vm3417, %v3256
  %3434 = vst.msk [vmem:[#allocation3 + $0x80] sm:$0xff] %vm3417, %v3258
  %3435 = vst.msk [vmem:[#allocation3 + $0x88] sm:$0xff] %vm3417, %v3260
  %3436 = vst.msk [vmem:[#allocation3 + $0x90] sm:$0xff] %vm3417, %v3262
  %3437 = vst.msk [vmem:[#allocation3 + $0x98] sm:$0xff] %vm3417, %v3264
  %3438 = vst.msk [vmem:[#allocation3 + $0xa0] sm:$0xff] %vm3417, %v3266
  %3439 = vst.msk [vmem:[#allocation3 + $0xa8] sm:$0xff] %vm3417, %v3268
  %3440 = vst.msk [vmem:[#allocation3 + $0xb0] sm:$0xff] %vm3417, %v3270
  %3441 = vst.msk [vmem:[#allocation3 + $0xb8] sm:$0xff] %vm3417, %v3272
  %3442 = vst.msk [vmem:[#allocation3 + $0xc0] sm:$0xff] %vm3417, %v3274
  %3443 = vst.msk [vmem:[#allocation3 + $0xc8] sm:$0xff] %vm3417, %v3276
  %3444 = vst.msk [vmem:[#allocation3 + $0xd0] sm:$0xff] %vm3417, %v3278
  %3445 = vst.msk [vmem:[#allocation3 + $0xd8] sm:$0xff] %vm3417, %v3280
  %3446 = vst.msk [vmem:[#allocation3 + $0xe0] sm:$0xff] %vm3417, %v3282
  %3447 = vst.msk [vmem:[#allocation3 + $0xe8] sm:$0xff] %vm3417, %v3284
  %3448 = vst.msk [vmem:[#allocation3 + $0xf0] sm:$0xff] %vm3417, %v3286
  %3449 = vst.msk [vmem:[#allocation3 + $0xf8] sm:$0xff] %vm3417, %v3288
  %3450 = vst.msk [vmem:[#allocation3 + $0x100] sm:$0xff] %vm3417, %v3290
  %3451 = vst.msk [vmem:[#allocation3 + $0x108] sm:$0xff] %vm3417, %v3292
  %3452 = vst.msk [vmem:[#allocation3 + $0x110] sm:$0xff] %vm3417, %v3294
  %3453 = vst.msk [vmem:[#allocation3 + $0x118] sm:$0xff] %vm3417, %v3296
  %3454 = vst.msk [vmem:[#allocation3 + $0x120] sm:$0xff] %vm3417, %v3298
  %3455 = vst.msk [vmem:[#allocation3 + $0x128] sm:$0xff] %vm3417, %v3300
  %3456 = vst.msk [vmem:[#allocation3 + $0x130] sm:$0xff] %vm3417, %v3302
  %3457 = vst.msk [vmem:[#allocation3 + $0x138] sm:$0xff] %vm3417, %v3304
  %3458 = vst.msk [vmem:[#allocation3 + $0x140] sm:$0xff] %vm3417, %v3306
  %3459 = vst.msk [vmem:[#allocation3 + $0x148] sm:$0xff] %vm3417, %v3308
  %3460 = vst.msk [vmem:[#allocation3 + $0x150] sm:$0xff] %vm3417, %v3310
  %3461 = vst.msk [vmem:[#allocation3 + $0x158] sm:$0xff] %vm3417, %v3312
  %3462 = vst.msk [vmem:[#allocation3 + $0x160] sm:$0xff] %vm3417, %v3314
  %3463 = vst.msk [vmem:[#allocation3 + $0x168] sm:$0xff] %vm3417, %v3316
  %3464 = vst.msk [vmem:[#allocation3 + $0x170] sm:$0xff] %vm3417, %v3318
  %3465 = vst.msk [vmem:[#allocation3 + $0x178] sm:$0xff] %vm3417, %v3320
  %3466 = vst.msk [vmem:[#allocation3 + $0x180] sm:$0xff] %vm3417, %v3322
  %3467 = vst.msk [vmem:[#allocation3 + $0x188] sm:$0xff] %vm3417, %v3324
  %3468 = vst.msk [vmem:[#allocation3 + $0x190] sm:$0xff] %vm3417, %v3326
  %3469 = vst.msk [vmem:[#allocation3 + $0x198] sm:$0xff] %vm3417, %v3328
  %3470 = vst.msk [vmem:[#allocation3 + $0x1a0] sm:$0xff] %vm3417, %v3330
  %3471 = vst.msk [vmem:[#allocation3 + $0x1a8] sm:$0xff] %vm3417, %v3332
  %3472 = vst.msk [vmem:[#allocation3 + $0x1b0] sm:$0xff] %vm3417, %v3334
  %3473 = vst.msk [vmem:[#allocation3 + $0x1b8] sm:$0xff] %vm3417, %v3336
  %3474 = vst.msk [vmem:[#allocation3 + $0x1c0] sm:$0xff] %vm3417, %v3338
  %3475 = vst.msk [vmem:[#allocation3 + $0x1c8] sm:$0xff] %vm3417, %v3340
  %3476 = vst.msk [vmem:[#allocation3 + $0x1d0] sm:$0xff] %vm3417, %v3342
  %3477 = vst.msk [vmem:[#allocation3 + $0x1d8] sm:$0xff] %vm3417, %v3344
  %3478 = vst.msk [vmem:[#allocation3 + $0x1e0] sm:$0xff] %vm3417, %v3346
  %3479 = vst.msk [vmem:[#allocation3 + $0x1e8] sm:$0xff] %vm3417, %v3348
  %3480 = vst.msk [vmem:[#allocation3 + $0x1f0] sm:$0xff] %vm3417, %v3350
  %3481 = vst.msk [vmem:[#allocation3 + $0x1f8] sm:$0xff] %vm3417, %v3352
  %v3482 = vld [vmem:[#allocation3] sm:$0xff]
  %v3483 = vld [vmem:[#allocation3 + $0x8] sm:$0xff]
  %v3484 = vld [vmem:[#allocation3 + $0x10] sm:$0xff]
  %v3485 = vld [vmem:[#allocation3 + $0x18] sm:$0xff]
  %v3486 = vld [vmem:[#allocation3 + $0x20] sm:$0xff]
  %v3487 = vld [vmem:[#allocation3 + $0x28] sm:$0xff]
  %v3488 = vld [vmem:[#allocation3 + $0x30] sm:$0xff]
  %v3489 = vld [vmem:[#allocation3 + $0x38] sm:$0xff]
  %v3490 = vld [vmem:[#allocation3 + $0x40] sm:$0xff]
  %v3491 = vld [vmem:[#allocation3 + $0x48] sm:$0xff]
  %v3492 = vld [vmem:[#allocation3 + $0x50] sm:$0xff]
  %v3493 = vld [vmem:[#allocation3 + $0x58] sm:$0xff]
  %v3494 = vld [vmem:[#allocation3 + $0x60] sm:$0xff]
  %v3495 = vld [vmem:[#allocation3 + $0x68] sm:$0xff]
  %v3496 = vld [vmem:[#allocation3 + $0x70] sm:$0xff]
  %v3497 = vld [vmem:[#allocation3 + $0x78] sm:$0xff]
  %v3498 = vld [vmem:[#allocation3 + $0x80] sm:$0xff]
  %v3499 = vld [vmem:[#allocation3 + $0x88] sm:$0xff]
  %v3500 = vld [vmem:[#allocation3 + $0x90] sm:$0xff]
  %v3501 = vld [vmem:[#allocation3 + $0x98] sm:$0xff]
  %v3502 = vld [vmem:[#allocation3 + $0xa0] sm:$0xff]
  %v3503 = vld [vmem:[#allocation3 + $0xa8] sm:$0xff]
  %v3504 = vld [vmem:[#allocation3 + $0xb0] sm:$0xff]
  %v3505 = vld [vmem:[#allocation3 + $0xb8] sm:$0xff]
  %v3506 = vld [vmem:[#allocation3 + $0xc0] sm:$0xff]
  %v3507 = vld [vmem:[#allocation3 + $0xc8] sm:$0xff]
  %v3508 = vld [vmem:[#allocation3 + $0xd0] sm:$0xff]
  %v3509 = vld [vmem:[#allocation3 + $0xd8] sm:$0xff]
  %v3510 = vld [vmem:[#allocation3 + $0xe0] sm:$0xff]
  %v3511 = vld [vmem:[#allocation3 + $0xe8] sm:$0xff]
  %v3512 = vld [vmem:[#allocation3 + $0xf0] sm:$0xff]
  %v3513 = vld [vmem:[#allocation3 + $0xf8] sm:$0xff]
  %v3514 = vld [vmem:[#allocation3 + $0x100] sm:$0xff]
  %v3515 = vld [vmem:[#allocation3 + $0x108] sm:$0xff]
  %v3516 = vld [vmem:[#allocation3 + $0x110] sm:$0xff]
  %v3517 = vld [vmem:[#allocation3 + $0x118] sm:$0xff]
  %v3518 = vld [vmem:[#allocation3 + $0x120] sm:$0xff]
  %v3519 = vld [vmem:[#allocation3 + $0x128] sm:$0xff]
  %v3520 = vld [vmem:[#allocation3 + $0x130] sm:$0xff]
  %v3521 = vld [vmem:[#allocation3 + $0x138] sm:$0xff]
  %v3522 = vld [vmem:[#allocation3 + $0x140] sm:$0xff]
  %v3523 = vld [vmem:[#allocation3 + $0x148] sm:$0xff]
  %v3524 = vld [vmem:[#allocation3 + $0x150] sm:$0xff]
  %v3525 = vld [vmem:[#allocation3 + $0x158] sm:$0xff]
  %v3526 = vld [vmem:[#allocation3 + $0x160] sm:$0xff]
  %v3527 = vld [vmem:[#allocation3 + $0x168] sm:$0xff]
  %v3528 = vld [vmem:[#allocation3 + $0x170] sm:$0xff]
  %v3529 = vld [vmem:[#allocation3 + $0x178] sm:$0xff]
  %v3530 = vld [vmem:[#allocation3 + $0x180] sm:$0xff]
  %v3531 = vld [vmem:[#allocation3 + $0x188] sm:$0xff]
  %v3532 = vld [vmem:[#allocation3 + $0x190] sm:$0xff]
  %v3533 = vld [vmem:[#allocation3 + $0x198] sm:$0xff]
  %v3534 = vld [vmem:[#allocation3 + $0x1a0] sm:$0xff]
  %v3535 = vld [vmem:[#allocation3 + $0x1a8] sm:$0xff]
  %v3536 = vld [vmem:[#allocation3 + $0x1b0] sm:$0xff]
  %v3537 = vld [vmem:[#allocation3 + $0x1b8] sm:$0xff]
  %v3538 = vld [vmem:[#allocation3 + $0x1c0] sm:$0xff]
  %v3539 = vld [vmem:[#allocation3 + $0x1c8] sm:$0xff]
  %v3540 = vld [vmem:[#allocation3 + $0x1d0] sm:$0xff]
  %v3541 = vld [vmem:[#allocation3 + $0x1d8] sm:$0xff]
  %v3542 = vld [vmem:[#allocation3 + $0x1e0] sm:$0xff]
  %v3543 = vld [vmem:[#allocation3 + $0x1e8] sm:$0xff]
  %v3544 = vld [vmem:[#allocation3 + $0x1f0] sm:$0xff]
  %v3545 = vld [vmem:[#allocation3 + $0x1f8] sm:$0xff]
  %v3546 = vld [vmem:[%s1] sm:$0xff]
  %v3547 = vld [vmem:[%s1 + $0x8] sm:$0x1]
  %vm3548 = vcmask 72704
  %v3550 = vsel %vm3548, %v3482, 0
  %v3553 = vsel %vm3548, %v3483, 0
  %v3556 = vsel %vm3548, %v3484, 0
  %v3559 = vsel %vm3548, %v3485, 0
  %v3562 = vsel %vm3548, %v3486, 0
  %v3565 = vsel %vm3548, %v3487, 0
  %v3568 = vsel %vm3548, %v3488, 0
  %v3571 = vsel %vm3548, %v3489, 0
  %v3574 = vsel %vm3548, %v3490, 0
  %v3577 = vsel %vm3548, %v3491, 0
  %v3580 = vsel %vm3548, %v3492, 0
  %v3583 = vsel %vm3548, %v3493, 0
  %v3586 = vsel %vm3548, %v3494, 0
  %v3589 = vsel %vm3548, %v3495, 0
  %v3592 = vsel %vm3548, %v3496, 0
  %v3595 = vsel %vm3548, %v3497, 0
  %v3598 = vsel %vm3548, %v3498, 0
  %v3601 = vsel %vm3548, %v3499, 0
  %v3604 = vsel %vm3548, %v3500, 0
  %v3607 = vsel %vm3548, %v3501, 0
  %v3610 = vsel %vm3548, %v3502, 0
  %v3613 = vsel %vm3548, %v3503, 0
  %v3616 = vsel %vm3548, %v3504, 0
  %v3619 = vsel %vm3548, %v3505, 0
  %v3622 = vsel %vm3548, %v3506, 0
  %v3625 = vsel %vm3548, %v3507, 0
  %v3628 = vsel %vm3548, %v3508, 0
  %v3631 = vsel %vm3548, %v3509, 0
  %v3634 = vsel %vm3548, %v3510, 0
  %v3637 = vsel %vm3548, %v3511, 0
  %v3640 = vsel %vm3548, %v3512, 0
  %v3643 = vsel %vm3548, %v3513, 0
  %v3646 = vsel %vm3548, %v3514, 0
  %v3649 = vsel %vm3548, %v3515, 0
  %v3652 = vsel %vm3548, %v3516, 0
  %v3655 = vsel %vm3548, %v3517, 0
  %v3658 = vsel %vm3548, %v3518, 0
  %v3661 = vsel %vm3548, %v3519, 0
  %v3664 = vsel %vm3548, %v3520, 0
  %v3667 = vsel %vm3548, %v3521, 0
  %v3670 = vsel %vm3548, %v3522, 0
  %v3673 = vsel %vm3548, %v3523, 0
  %v3676 = vsel %vm3548, %v3524, 0
  %v3679 = vsel %vm3548, %v3525, 0
  %v3682 = vsel %vm3548, %v3526, 0
  %v3685 = vsel %vm3548, %v3527, 0
  %v3688 = vsel %vm3548, %v3528, 0
  %v3691 = vsel %vm3548, %v3529, 0
  %v3694 = vsel %vm3548, %v3530, 0
  %v3697 = vsel %vm3548, %v3531, 0
  %v3700 = vsel %vm3548, %v3532, 0
  %v3703 = vsel %vm3548, %v3533, 0
  %v3706 = vsel %vm3548, %v3534, 0
  %v3709 = vsel %vm3548, %v3535, 0
  %v3712 = vsel %vm3548, %v3536, 0
  %v3715 = vsel %vm3548, %v3537, 0
  %v3718 = vsel %vm3548, %v3538, 0
  %v3721 = vsel %vm3548, %v3539, 0
  %v3724 = vsel %vm3548, %v3540, 0
  %v3727 = vsel %vm3548, %v3541, 0
  %v3730 = vsel %vm3548, %v3542, 0
  %v3733 = vsel %vm3548, %v3543, 0
  %v3736 = vsel %vm3548, %v3544, 0
  %v3739 = vsel %vm3548, %v3545, 0
  %vm3741 = vcmask 1040384
  %v3743 = vsel %vm3741, %v3547, 0
  %3745 = vmatprep.subr.mxu0 0.0
  %3746 = vmatpush1.msra.mxu0 %v3546
  %3747 = vmatprep.subr.mxu0 0.0
  %3748 = vmatpush1.msra.mxu0 %v3743
  %3749 = vmatprep.subr.mxu0 0.0
  %3750 = vmatpush1.msra.mxu0 0.0
  %3751 = vmatprep.subr.mxu0 0.0
  %3752 = vmatpush1.msra.mxu0 0.0
  %3753 = vmatprep.subr.mxu0 0.0
  %3754 = vmatpush1.msra.mxu0 0.0
  %3755 = vmatprep.subr.mxu0 0.0
  %3756 = vmatpush1.msra.mxu0 0.0
  %3757 = vmatprep.subr.mxu0 0.0
  %3758 = vmatpush1.msra.mxu0 0.0
  %3759 = vmatprep.subr.mxu0 0.0
  %3760 = vmatpush1.msra.mxu0 0.0
  %3761 = vmatprep.subr.mxu0 0.0
  %3762 = vmatpush1.msra.mxu0 0.0
  %3763 = vmatprep.subr.mxu0 0.0
  %3764 = vmatpush1.msra.mxu0 0.0
  %3765 = vmatprep.subr.mxu0 0.0
  %3766 = vmatpush1.msra.mxu0 0.0
  %3767 = vmatprep.subr.mxu0 0.0
  %3768 = vmatpush1.msra.mxu0 0.0
  %3769 = vmatprep.subr.mxu0 0.0
  %3770 = vmatpush1.msra.mxu0 0.0
  %3771 = vmatprep.subr.mxu0 0.0
  %3772 = vmatpush1.msra.mxu0 0.0
  %3773 = vmatprep.subr.mxu0 0.0
  %3774 = vmatpush1.msra.mxu0 0.0
  %3775 = vmatprep.subr.mxu0 0.0
  %3776 = vmatpush1.msra.mxu0 0.0
  %3777 = vmatprep.subr.mxu0 0.0
  %3778 = vmatpush1.msra.mxu0 0.0
  %3779 = vmatprep.subr.mxu0 0.0
  %3780 = vmatpush1.msra.mxu0 0.0
  %3781 = vmatprep.subr.mxu0 0.0
  %3782 = vmatpush1.msra.mxu0 0.0
  %3783 = vmatprep.subr.mxu0 0.0
  %3784 = vmatpush1.msra.mxu0 0.0
  %3785 = vmatprep.subr.mxu0 0.0
  %3786 = vmatpush1.msra.mxu0 0.0
  %3787 = vmatprep.subr.mxu0 0.0
  %3788 = vmatpush1.msra.mxu0 0.0
  %3789 = vmatprep.subr.mxu0 0.0
  %3790 = vmatpush1.msra.mxu0 0.0
  %3791 = vmatprep.subr.mxu0 0.0
  %3792 = vmatpush1.msra.mxu0 0.0
  %3793 = vmatprep.subr.mxu0 0.0
  %3794 = vmatpush1.msra.mxu0 0.0
  %3795 = vmatprep.subr.mxu0 0.0
  %3796 = vmatpush1.msra.mxu0 0.0
  %3797 = vmatprep.subr.mxu0 0.0
  %3798 = vmatpush1.msra.mxu0 0.0
  %3799 = vmatprep.subr.mxu0 0.0
  %3800 = vmatpush1.msra.mxu0 0.0
  %3801 = vmatprep.subr.mxu0 0.0
  %3802 = vmatpush1.msra.mxu0 0.0
  %3803 = vmatprep.subr.mxu0 0.0
  %3804 = vmatpush1.msra.mxu0 0.0
  %3805 = vmatprep.subr.mxu0 0.0
  %3806 = vmatpush1.msra.mxu0 0.0
  %3807 = vmatprep.subr.mxu0 0.0
  %3808 = vmatpush1.msra.mxu0 0.0
  %3809 = vmatprep.mubr.f32.mxu0 0.0
  %3810 = vmatmul.mubr.f32.gmra.mrb[0].mxu0 %v3550
  %v3811 = vpop.f32.mrb[0].mxu0
  %v3812 = vadd.f32 0.0, %v3811
  %v3813 = vpop.f32.mrb[0].mxu0
  %3814 = vmatprep.mubr.f32.mxu0 0.0
  %3815 = vmatmul.mubr.f32.gmra.mrb[0].mxu0 %v3553
  %v3816 = vpop.f32.mrb[0].mxu0
  %v3817 = vadd.f32 0.0, %v3816
  %v3818 = vpop.f32.mrb[0].mxu0
  %3819 = vmatprep.mubr.f32.mxu0 0.0
  %3820 = vmatmul.mubr.f32.gmra.mrb[0].mxu0 %v3556
  %v3821 = vpop.f32.mrb[0].mxu0
  %v3822 = vadd.f32 0.0, %v3821
  %v3823 = vpop.f32.mrb[0].mxu0
  %3824 = vmatprep.mubr.f32.mxu0 0.0
  %3825 = vmatmul.mubr.f32.gmra.mrb[0].mxu0 %v3559
  %v3826 = vpop.f32.mrb[0].mxu0
  %v3827 = vadd.f32 0.0, %v3826
  %v3828 = vpop.f32.mrb[0].mxu0
  %3829 = vmatprep.mubr.f32.mxu0 0.0
  %3830 = vmatmul.mubr.f32.gmra.mrb[0].mxu0 %v3562
  %v3831 = vpop.f32.mrb[0].mxu0
  %v3832 = vadd.f32 0.0, %v3831
  %v3833 = vpop.f32.mrb[0].mxu0
  %3834 = vmatprep.mubr.f32.mxu0 0.0
  %3835 = vmatmul.mubr.f32.gmra.mrb[0].mxu0 %v3565
  %v3836 = vpop.f32.mrb[0].mxu0
  %v3837 = vadd.f32 0.0, %v3836
  %v3838 = vpop.f32.mrb[0].mxu0
  %3839 = vmatprep.mubr.f32.mxu0 0.0
  %3840 = vmatmul.mubr.f32.gmra.mrb[0].mxu0 %v3568
  %v3841 = vpop.f32.mrb[0].mxu0
  %v3842 = vadd.f32 0.0, %v3841
  %v3843 = vpop.f32.mrb[0].mxu0
  %3844 = vmatprep.mubr.f32.mxu0 0.0
  %3845 = vmatmul.mubr.f32.gmra.mrb[0].mxu0 %v3571
  %v3846 = vpop.f32.mrb[0].mxu0
  %v3847 = vadd.f32 0.0, %v3846
  %v3848 = vpop.f32.mrb[0].mxu0
  %3849 = vmatprep.mubr.f32.mxu0 0.0
  %3850 = vmatmul.mubr.f32.gmra.mrb[0].mxu0 %v3574
  %v3851 = vpop.f32.mrb[0].mxu0
  %v3852 = vadd.f32 0.0, %v3851
  %v3853 = vpop.f32.mrb[0].mxu0
  %3854 = vmatprep.mubr.f32.mxu0 0.0
  %3855 = vmatmul.mubr.f32.gmra.mrb[0].mxu0 %v3577
  %v3856 = vpop.f32.mrb[0].mxu0
  %v3857 = vadd.f32 0.0, %v3856
  %v3858 = vpop.f32.mrb[0].mxu0
  %3859 = vmatprep.mubr.f32.mxu0 0.0
  %3860 = vmatmul.mubr.f32.gmra.mrb[0].mxu0 %v3580
  %v3861 = vpop.f32.mrb[0].mxu0
  %v3862 = vadd.f32 0.0, %v3861
  %v3863 = vpop.f32.mrb[0].mxu0
  %3864 = vmatprep.mubr.f32.mxu0 0.0
  %3865 = vmatmul.mubr.f32.gmra.mrb[0].mxu0 %v3583
  %v3866 = vpop.f32.mrb[0].mxu0
  %v3867 = vadd.f32 0.0, %v3866
  %v3868 = vpop.f32.mrb[0].mxu0
  %3869 = vmatprep.mubr.f32.mxu0 0.0
  %3870 = vmatmul.mubr.f32.gmra.mrb[0].mxu0 %v3586
  %v3871 = vpop.f32.mrb[0].mxu0
  %v3872 = vadd.f32 0.0, %v3871
  %v3873 = vpop.f32.mrb[0].mxu0
  %3874 = vmatprep.mubr.f32.mxu0 0.0
  %3875 = vmatmul.mubr.f32.gmra.mrb[0].mxu0 %v3589
  %v3876 = vpop.f32.mrb[0].mxu0
  %v3877 = vadd.f32 0.0, %v3876
  %v3878 = vpop.f32.mrb[0].mxu0
  %3879 = vmatprep.mubr.f32.mxu0 0.0
  %3880 = vmatmul.mubr.f32.gmra.mrb[0].mxu0 %v3592
  %v3881 = vpop.f32.mrb[0].mxu0
  %v3882 = vadd.f32 0.0, %v3881
  %v3883 = vpop.f32.mrb[0].mxu0
  %3884 = vmatprep.mubr.f32.mxu0 0.0
  %3885 = vmatmul.mubr.f32.gmra.mrb[0].mxu0 %v3595
  %v3886 = vpop.f32.mrb[0].mxu0
  %v3887 = vadd.f32 0.0, %v3886
  %v3888 = vpop.f32.mrb[0].mxu0
  %3889 = vmatprep.mubr.f32.mxu0 0.0
  %3890 = vmatmul.mubr.f32.gmra.mrb[0].mxu0 %v3598
  %v3891 = vpop.f32.mrb[0].mxu0
  %v3892 = vadd.f32 0.0, %v3891
  %v3893 = vpop.f32.mrb[0].mxu0
  %3894 = vmatprep.mubr.f32.mxu0 0.0
  %3895 = vmatmul.mubr.f32.gmra.mrb[0].mxu0 %v3601
  %v3896 = vpop.f32.mrb[0].mxu0
  %v3897 = vadd.f32 0.0, %v3896
  %v3898 = vpop.f32.mrb[0].mxu0
  %3899 = vmatprep.mubr.f32.mxu0 0.0
  %3900 = vmatmul.mubr.f32.gmra.mrb[0].mxu0 %v3604
  %v3901 = vpop.f32.mrb[0].mxu0
  %v3902 = vadd.f32 0.0, %v3901
  %v3903 = vpop.f32.mrb[0].mxu0
  %3904 = vmatprep.mubr.f32.mxu0 0.0
  %3905 = vmatmul.mubr.f32.gmra.mrb[0].mxu0 %v3607
  %v3906 = vpop.f32.mrb[0].mxu0
  %v3907 = vadd.f32 0.0, %v3906
  %v3908 = vpop.f32.mrb[0].mxu0
  %3909 = vmatprep.mubr.f32.mxu0 0.0
  %3910 = vmatmul.mubr.f32.gmra.mrb[0].mxu0 %v3610
  %v3911 = vpop.f32.mrb[0].mxu0
  %v3912 = vadd.f32 0.0, %v3911
  %v3913 = vpop.f32.mrb[0].mxu0
  %3914 = vmatprep.mubr.f32.mxu0 0.0
  %3915 = vmatmul.mubr.f32.gmra.mrb[0].mxu0 %v3613
  %v3916 = vpop.f32.mrb[0].mxu0
  %v3917 = vadd.f32 0.0, %v3916
  %v3918 = vpop.f32.mrb[0].mxu0
  %3919 = vmatprep.mubr.f32.mxu0 0.0
  %3920 = vmatmul.mubr.f32.gmra.mrb[0].mxu0 %v3616
  %v3921 = vpop.f32.mrb[0].mxu0
  %v3922 = vadd.f32 0.0, %v3921
  %v3923 = vpop.f32.mrb[0].mxu0
  %3924 = vmatprep.mubr.f32.mxu0 0.0
  %3925 = vmatmul.mubr.f32.gmra.mrb[0].mxu0 %v3619
  %v3926 = vpop.f32.mrb[0].mxu0
  %v3927 = vadd.f32 0.0, %v3926
  %v3928 = vpop.f32.mrb[0].mxu0
  %3929 = vmatprep.mubr.f32.mxu0 0.0
  %3930 = vmatmul.mubr.f32.gmra.mrb[0].mxu0 %v3622
  %v3931 = vpop.f32.mrb[0].mxu0
  %v3932 = vadd.f32 0.0, %v3931
  %v3933 = vpop.f32.mrb[0].mxu0
  %3934 = vmatprep.mubr.f32.mxu0 0.0
  %3935 = vmatmul.mubr.f32.gmra.mrb[0].mxu0 %v3625
  %v3936 = vpop.f32.mrb[0].mxu0
  %v3937 = vadd.f32 0.0, %v3936
  %v3938 = vpop.f32.mrb[0].mxu0
  %3939 = vmatprep.mubr.f32.mxu0 0.0
  %3940 = vmatmul.mubr.f32.gmra.mrb[0].mxu0 %v3628
  %v3941 = vpop.f32.mrb[0].mxu0
  %v3942 = vadd.f32 0.0, %v3941
  %v3943 = vpop.f32.mrb[0].mxu0
  %3944 = vmatprep.mubr.f32.mxu0 0.0
  %3945 = vmatmul.mubr.f32.gmra.mrb[0].mxu0 %v3631
  %v3946 = vpop.f32.mrb[0].mxu0
  %v3947 = vadd.f32 0.0, %v3946
  %v3948 = vpop.f32.mrb[0].mxu0
  %3949 = vmatprep.mubr.f32.mxu0 0.0
  %3950 = vmatmul.mubr.f32.gmra.mrb[0].mxu0 %v3634
  %v3951 = vpop.f32.mrb[0].mxu0
  %v3952 = vadd.f32 0.0, %v3951
  %v3953 = vpop.f32.mrb[0].mxu0
  %3954 = vmatprep.mubr.f32.mxu0 0.0
  %3955 = vmatmul.mubr.f32.gmra.mrb[0].mxu0 %v3637
  %v3956 = vpop.f32.mrb[0].mxu0
  %v3957 = vadd.f32 0.0, %v3956
  %v3958 = vpop.f32.mrb[0].mxu0
  %3959 = vmatprep.mubr.f32.mxu0 0.0
  %3960 = vmatmul.mubr.f32.gmra.mrb[0].mxu0 %v3640
  %v3961 = vpop.f32.mrb[0].mxu0
  %v3962 = vadd.f32 0.0, %v3961
  %v3963 = vpop.f32.mrb[0].mxu0
  %3964 = vmatprep.mubr.f32.mxu0 0.0
  %3965 = vmatmul.mubr.f32.gmra.mrb[0].mxu0 %v3643
  %v3966 = vpop.f32.mrb[0].mxu0
  %v3967 = vadd.f32 0.0, %v3966
  %v3968 = vpop.f32.mrb[0].mxu0
  %3969 = vmatprep.mubr.f32.mxu0 0.0
  %3970 = vmatmul.mubr.f32.gmra.mrb[0].mxu0 %v3646
  %v3971 = vpop.f32.mrb[0].mxu0
  %v3972 = vadd.f32 0.0, %v3971
  %v3973 = vpop.f32.mrb[0].mxu0
  %3974 = vmatprep.mubr.f32.mxu0 0.0
  %3975 = vmatmul.mubr.f32.gmra.mrb[0].mxu0 %v3649
  %v3976 = vpop.f32.mrb[0].mxu0
  %v3977 = vadd.f32 0.0, %v3976
  %v3978 = vpop.f32.mrb[0].mxu0
  %3979 = vmatprep.mubr.f32.mxu0 0.0
  %3980 = vmatmul.mubr.f32.gmra.mrb[0].mxu0 %v3652
  %v3981 = vpop.f32.mrb[0].mxu0
  %v3982 = vadd.f32 0.0, %v3981
  %v3983 = vpop.f32.mrb[0].mxu0
  %3984 = vmatprep.mubr.f32.mxu0 0.0
  %3985 = vmatmul.mubr.f32.gmra.mrb[0].mxu0 %v3655
  %v3986 = vpop.f32.mrb[0].mxu0
  %v3987 = vadd.f32 0.0, %v3986
  %v3988 = vpop.f32.mrb[0].mxu0
  %3989 = vmatprep.mubr.f32.mxu0 0.0
  %3990 = vmatmul.mubr.f32.gmra.mrb[0].mxu0 %v3658
  %v3991 = vpop.f32.mrb[0].mxu0
  %v3992 = vadd.f32 0.0, %v3991
  %v3993 = vpop.f32.mrb[0].mxu0
  %3994 = vmatprep.mubr.f32.mxu0 0.0
  %3995 = vmatmul.mubr.f32.gmra.mrb[0].mxu0 %v3661
  %v3996 = vpop.f32.mrb[0].mxu0
  %v3997 = vadd.f32 0.0, %v3996
  %v3998 = vpop.f32.mrb[0].mxu0
  %3999 = vmatprep.mubr.f32.mxu0 0.0
  %4000 = vmatmul.mubr.f32.gmra.mrb[0].mxu0 %v3664
  %v4001 = vpop.f32.mrb[0].mxu0
  %v4002 = vadd.f32 0.0, %v4001
  %v4003 = vpop.f32.mrb[0].mxu0
  %4004 = vmatprep.mubr.f32.mxu0 0.0
  %4005 = vmatmul.mubr.f32.gmra.mrb[0].mxu0 %v3667
  %v4006 = vpop.f32.mrb[0].mxu0
  %v4007 = vadd.f32 0.0, %v4006
  %v4008 = vpop.f32.mrb[0].mxu0
  %4009 = vmatprep.mubr.f32.mxu0 0.0
  %4010 = vmatmul.mubr.f32.gmra.mrb[0].mxu0 %v3670
  %v4011 = vpop.f32.mrb[0].mxu0
  %v4012 = vadd.f32 0.0, %v4011
  %v4013 = vpop.f32.mrb[0].mxu0
  %4014 = vmatprep.mubr.f32.mxu0 0.0
  %4015 = vmatmul.mubr.f32.gmra.mrb[0].mxu0 %v3673
  %v4016 = vpop.f32.mrb[0].mxu0
  %v4017 = vadd.f32 0.0, %v4016
  %v4018 = vpop.f32.mrb[0].mxu0
  %4019 = vmatprep.mubr.f32.mxu0 0.0
  %4020 = vmatmul.mubr.f32.gmra.mrb[0].mxu0 %v3676
  %v4021 = vpop.f32.mrb[0].mxu0
  %v4022 = vadd.f32 0.0, %v4021
  %v4023 = vpop.f32.mrb[0].mxu0
  %4024 = vmatprep.mubr.f32.mxu0 0.0
  %4025 = vmatmul.mubr.f32.gmra.mrb[0].mxu0 %v3679
  %v4026 = vpop.f32.mrb[0].mxu0
  %v4027 = vadd.f32 0.0, %v4026
  %v4028 = vpop.f32.mrb[0].mxu0
  %4029 = vmatprep.mubr.f32.mxu0 0.0
  %4030 = vmatmul.mubr.f32.gmra.mrb[0].mxu0 %v3682
  %v4031 = vpop.f32.mrb[0].mxu0
  %v4032 = vadd.f32 0.0, %v4031
  %v4033 = vpop.f32.mrb[0].mxu0
  %4034 = vmatprep.mubr.f32.mxu0 0.0
  %4035 = vmatmul.mubr.f32.gmra.mrb[0].mxu0 %v3685
  %v4036 = vpop.f32.mrb[0].mxu0
  %v4037 = vadd.f32 0.0, %v4036
  %v4038 = vpop.f32.mrb[0].mxu0
  %4039 = vmatprep.mubr.f32.mxu0 0.0
  %4040 = vmatmul.mubr.f32.gmra.mrb[0].mxu0 %v3688
  %v4041 = vpop.f32.mrb[0].mxu0
  %v4042 = vadd.f32 0.0, %v4041
  %v4043 = vpop.f32.mrb[0].mxu0
  %4044 = vmatprep.mubr.f32.mxu0 0.0
  %4045 = vmatmul.mubr.f32.gmra.mrb[0].mxu0 %v3691
  %v4046 = vpop.f32.mrb[0].mxu0
  %v4047 = vadd.f32 0.0, %v4046
  %v4048 = vpop.f32.mrb[0].mxu0
  %4049 = vmatprep.mubr.f32.mxu0 0.0
  %4050 = vmatmul.mubr.f32.gmra.mrb[0].mxu0 %v3694
  %v4051 = vpop.f32.mrb[0].mxu0
  %v4052 = vadd.f32 0.0, %v4051
  %v4053 = vpop.f32.mrb[0].mxu0
  %4054 = vmatprep.mubr.f32.mxu0 0.0
  %4055 = vmatmul.mubr.f32.gmra.mrb[0].mxu0 %v3697
  %v4056 = vpop.f32.mrb[0].mxu0
  %v4057 = vadd.f32 0.0, %v4056
  %v4058 = vpop.f32.mrb[0].mxu0
  %4059 = vmatprep.mubr.f32.mxu0 0.0
  %4060 = vmatmul.mubr.f32.gmra.mrb[0].mxu0 %v3700
  %v4061 = vpop.f32.mrb[0].mxu0
  %v4062 = vadd.f32 0.0, %v4061
  %v4063 = vpop.f32.mrb[0].mxu0
  %4064 = vmatprep.mubr.f32.mxu0 0.0
  %4065 = vmatmul.mubr.f32.gmra.mrb[0].mxu0 %v3703
  %v4066 = vpop.f32.mrb[0].mxu0
  %v4067 = vadd.f32 0.0, %v4066
  %v4068 = vpop.f32.mrb[0].mxu0
  %4069 = vmatprep.mubr.f32.mxu0 0.0
  %4070 = vmatmul.mubr.f32.gmra.mrb[0].mxu0 %v3706
  %v4071 = vpop.f32.mrb[0].mxu0
  %v4072 = vadd.f32 0.0, %v4071
  %v4073 = vpop.f32.mrb[0].mxu0
  %4074 = vmatprep.mubr.f32.mxu0 0.0
  %4075 = vmatmul.mubr.f32.gmra.mrb[0].mxu0 %v3709
  %v4076 = vpop.f32.mrb[0].mxu0
  %v4077 = vadd.f32 0.0, %v4076
  %v4078 = vpop.f32.mrb[0].mxu0
  %4079 = vmatprep.mubr.f32.mxu0 0.0
  %4080 = vmatmul.mubr.f32.gmra.mrb[0].mxu0 %v3712
  %v4081 = vpop.f32.mrb[0].mxu0
  %v4082 = vadd.f32 0.0, %v4081
  %v4083 = vpop.f32.mrb[0].mxu0
  %4084 = vmatprep.mubr.f32.mxu0 0.0
  %4085 = vmatmul.mubr.f32.gmra.mrb[0].mxu0 %v3715
  %v4086 = vpop.f32.mrb[0].mxu0
  %v4087 = vadd.f32 0.0, %v4086
  %v4088 = vpop.f32.mrb[0].mxu0
  %4089 = vmatprep.mubr.f32.mxu0 0.0
  %4090 = vmatmul.mubr.f32.gmra.mrb[0].mxu0 %v3718
  %v4091 = vpop.f32.mrb[0].mxu0
  %v4092 = vadd.f32 0.0, %v4091
  %v4093 = vpop.f32.mrb[0].mxu0
  %4094 = vmatprep.mubr.f32.mxu0 0.0
  %4095 = vmatmul.mubr.f32.gmra.mrb[0].mxu0 %v3721
  %v4096 = vpop.f32.mrb[0].mxu0
  %v4097 = vadd.f32 0.0, %v4096
  %v4098 = vpop.f32.mrb[0].mxu0
  %4099 = vmatprep.mubr.f32.mxu0 0.0
  %4100 = vmatmul.mubr.f32.gmra.mrb[0].mxu0 %v3724
  %v4101 = vpop.f32.mrb[0].mxu0
  %v4102 = vadd.f32 0.0, %v4101
  %v4103 = vpop.f32.mrb[0].mxu0
  %4104 = vmatprep.mubr.f32.mxu0 0.0
  %4105 = vmatmul.mubr.f32.gmra.mrb[0].mxu0 %v3727
  %v4106 = vpop.f32.mrb[0].mxu0
  %v4107 = vadd.f32 0.0, %v4106
  %v4108 = vpop.f32.mrb[0].mxu0
  %4109 = vmatprep.mubr.f32.mxu0 0.0
  %4110 = vmatmul.mubr.f32.gmra.mrb[0].mxu0 %v3730
  %v4111 = vpop.f32.mrb[0].mxu0
  %v4112 = vadd.f32 0.0, %v4111
  %v4113 = vpop.f32.mrb[0].mxu0
  %4114 = vmatprep.mubr.f32.mxu0 0.0
  %4115 = vmatmul.mubr.f32.gmra.mrb[0].mxu0 %v3733
  %v4116 = vpop.f32.mrb[0].mxu0
  %v4117 = vadd.f32 0.0, %v4116
  %v4118 = vpop.f32.mrb[0].mxu0
  %4119 = vmatprep.mubr.f32.mxu0 0.0
  %4120 = vmatmul.mubr.f32.gmra.mrb[0].mxu0 %v3736
  %v4121 = vpop.f32.mrb[0].mxu0
  %v4122 = vadd.f32 0.0, %v4121
  %v4123 = vpop.f32.mrb[0].mxu0
  %4124 = vmatprep.mubr.f32.mxu0 0.0
  %4125 = vmatmul.mubr.f32.gmra.mrb[0].mxu0 %v3739
  %v4126 = vpop.f32.mrb[0].mxu0
  %v4127 = vadd.f32 0.0, %v4126
  %v4128 = vpop.f32.mrb[0].mxu0
  %4129 = vdwg.mxu0
  %v4130 = vmax.f32 %v3812, %v3822
  %v4131 = vmax.f32 %v3817, %v3827
  %v4132 = vmax.f32 %v3832, %v3842
  %v4133 = vmax.f32 %v3837, %v3847
  %v4134 = vmax.f32 %v3852, %v3862
  %v4135 = vmax.f32 %v3857, %v3867
  %v4136 = vmax.f32 %v3872, %v3882
  %v4137 = vmax.f32 %v3877, %v3887
  %v4138 = vmax.f32 %v3892, %v3902
  %v4139 = vmax.f32 %v3897, %v3907
  %v4140 = vmax.f32 %v3912, %v3922
  %v4141 = vmax.f32 %v3917, %v3927
  %v4142 = vmax.f32 %v3932, %v3942
  %v4143 = vmax.f32 %v3937, %v3947
  %v4144 = vmax.f32 %v3952, %v3962
  %v4145 = vmax.f32 %v3957, %v3967
  %v4146 = vmax.f32 %v3972, %v3982
  %v4147 = vmax.f32 %v3977, %v3987
  %v4148 = vmax.f32 %v3992, %v4002
  %v4149 = vmax.f32 %v3997, %v4007
  %v4150 = vmax.f32 %v4012, %v4022
  %v4151 = vmax.f32 %v4017, %v4027
  %v4152 = vmax.f32 %v4032, %v4042
  %v4153 = vmax.f32 %v4037, %v4047
  %v4154 = vmax.f32 %v4052, %v4062
  %v4155 = vmax.f32 %v4057, %v4067
  %v4156 = vmax.f32 %v4072, %v4082
  %v4157 = vmax.f32 %v4077, %v4087
  %v4158 = vmax.f32 %v4092, %v4102
  %v4159 = vmax.f32 %v4097, %v4107
  %v4160 = vmax.f32 %v4112, %v4122
  %v4161 = vmax.f32 %v4117, %v4127
  %v4162 = vld [vmem:[%s2] sm:$0x1]
  %v4164 = vlaneseq
  %v4165 = vshrl.u32 %v4164, 7
  %v4166 = vsub.s32 0, %v4165
  %v4167 = vrot.slane %v4162, %v4166
  %v4169 = vadd.f32 %v4130, %v4167
  %v4170 = vadd.f32 %v4131, %v4167
  %v4171 = vadd.f32 %v4132, %v4167
  %v4172 = vadd.f32 %v4133, %v4167
  %v4173 = vadd.f32 %v4134, %v4167
  %v4174 = vadd.f32 %v4135, %v4167
  %v4175 = vadd.f32 %v4136, %v4167
  %v4176 = vadd.f32 %v4137, %v4167
  %v4177 = vadd.f32 %v4138, %v4167
  %v4178 = vadd.f32 %v4139, %v4167
  %v4179 = vadd.f32 %v4140, %v4167
  %v4180 = vadd.f32 %v4141, %v4167
  %v4181 = vadd.f32 %v4142, %v4167
  %v4182 = vadd.f32 %v4143, %v4167
  %v4183 = vadd.f32 %v4144, %v4167
  %v4184 = vadd.f32 %v4145, %v4167
  %v4185 = vadd.f32 %v4146, %v4167
  %v4186 = vadd.f32 %v4147, %v4167
  %v4187 = vadd.f32 %v4148, %v4167
  %v4188 = vadd.f32 %v4149, %v4167
  %v4189 = vadd.f32 %v4150, %v4167
  %v4190 = vadd.f32 %v4151, %v4167
  %v4191 = vadd.f32 %v4152, %v4167
  %v4192 = vadd.f32 %v4153, %v4167
  %v4193 = vadd.f32 %v4154, %v4167
  %v4194 = vadd.f32 %v4155, %v4167
  %v4195 = vadd.f32 %v4156, %v4167
  %v4196 = vadd.f32 %v4157, %v4167
  %v4197 = vadd.f32 %v4158, %v4167
  %v4198 = vadd.f32 %v4159, %v4167
  %v4199 = vadd.f32 %v4160, %v4167
  %v4200 = vadd.f32 %v4161, %v4167
  %v4201 = vmax.f32 %v4169, 0.0
  %v4202 = vmax.f32 %v4170, 0.0
  %v4203 = vmax.f32 %v4171, 0.0
  %v4204 = vmax.f32 %v4172, 0.0
  %v4205 = vmax.f32 %v4173, 0.0
  %v4206 = vmax.f32 %v4174, 0.0
  %v4207 = vmax.f32 %v4175, 0.0
  %v4208 = vmax.f32 %v4176, 0.0
  %v4209 = vmax.f32 %v4177, 0.0
  %v4210 = vmax.f32 %v4178, 0.0
  %v4211 = vmax.f32 %v4179, 0.0
  %v4212 = vmax.f32 %v4180, 0.0
  %v4213 = vmax.f32 %v4181, 0.0
  %v4214 = vmax.f32 %v4182, 0.0
  %v4215 = vmax.f32 %v4183, 0.0
  %v4216 = vmax.f32 %v4184, 0.0
  %v4217 = vmax.f32 %v4185, 0.0
  %v4218 = vmax.f32 %v4186, 0.0
  %v4219 = vmax.f32 %v4187, 0.0
  %v4220 = vmax.f32 %v4188, 0.0
  %v4221 = vmax.f32 %v4189, 0.0
  %v4222 = vmax.f32 %v4190, 0.0
  %v4223 = vmax.f32 %v4191, 0.0
  %v4224 = vmax.f32 %v4192, 0.0
  %v4225 = vmax.f32 %v4193, 0.0
  %v4226 = vmax.f32 %v4194, 0.0
  %v4227 = vmax.f32 %v4195, 0.0
  %v4228 = vmax.f32 %v4196, 0.0
  %v4229 = vmax.f32 %v4197, 0.0
  %v4230 = vmax.f32 %v4198, 0.0
  %v4231 = vmax.f32 %v4199, 0.0
  %v4232 = vmax.f32 %v4200, 0.0
  %vm4233 = vcmask 64512
  %4234 = vst.msk [vmem:[#allocation4] sm:$0xff] %vm4233, %v4201
  %4235 = vst.msk [vmem:[#allocation4 + $0x8] sm:$0xff] %vm4233, %v4202
  %4236 = vst.msk [vmem:[#allocation4 + $0x10] sm:$0xff] %vm4233, %v4203
  %4237 = vst.msk [vmem:[#allocation4 + $0x18] sm:$0xff] %vm4233, %v4204
  %4238 = vst.msk [vmem:[#allocation4 + $0x20] sm:$0xff] %vm4233, %v4205
  %4239 = vst.msk [vmem:[#allocation4 + $0x28] sm:$0xff] %vm4233, %v4206
  %4240 = vst.msk [vmem:[#allocation4 + $0x30] sm:$0xff] %vm4233, %v4207
  %4241 = vst.msk [vmem:[#allocation4 + $0x38] sm:$0xff] %vm4233, %v4208
  %4242 = vst.msk [vmem:[#allocation4 + $0x40] sm:$0xff] %vm4233, %v4209
  %4243 = vst.msk [vmem:[#allocation4 + $0x48] sm:$0xff] %vm4233, %v4210
  %4244 = vst.msk [vmem:[#allocation4 + $0x50] sm:$0xff] %vm4233, %v4211
  %4245 = vst.msk [vmem:[#allocation4 + $0x58] sm:$0xff] %vm4233, %v4212
  %4246 = vst.msk [vmem:[#allocation4 + $0x60] sm:$0xff] %vm4233, %v4213
  %4247 = vst.msk [vmem:[#allocation4 + $0x68] sm:$0xff] %vm4233, %v4214
  %4248 = vst.msk [vmem:[#allocation4 + $0x70] sm:$0xff] %vm4233, %v4215
  %4249 = vst.msk [vmem:[#allocation4 + $0x78] sm:$0xff] %vm4233, %v4216
  %4250 = vst.msk [vmem:[#allocation4 + $0x80] sm:$0xff] %vm4233, %v4217
  %4251 = vst.msk [vmem:[#allocation4 + $0x88] sm:$0xff] %vm4233, %v4218
  %4252 = vst.msk [vmem:[#allocation4 + $0x90] sm:$0xff] %vm4233, %v4219
  %4253 = vst.msk [vmem:[#allocation4 + $0x98] sm:$0xff] %vm4233, %v4220
  %4254 = vst.msk [vmem:[#allocation4 + $0xa0] sm:$0xff] %vm4233, %v4221
  %4255 = vst.msk [vmem:[#allocation4 + $0xa8] sm:$0xff] %vm4233, %v4222
  %4256 = vst.msk [vmem:[#allocation4 + $0xb0] sm:$0xff] %vm4233, %v4223
  %4257 = vst.msk [vmem:[#allocation4 + $0xb8] sm:$0xff] %vm4233, %v4224
  %4258 = vst.msk [vmem:[#allocation4 + $0xc0] sm:$0xff] %vm4233, %v4225
  %4259 = vst.msk [vmem:[#allocation4 + $0xc8] sm:$0xff] %vm4233, %v4226
  %4260 = vst.msk [vmem:[#allocation4 + $0xd0] sm:$0xff] %vm4233, %v4227
  %4261 = vst.msk [vmem:[#allocation4 + $0xd8] sm:$0xff] %vm4233, %v4228
  %4262 = vst.msk [vmem:[#allocation4 + $0xe0] sm:$0xff] %vm4233, %v4229
  %4263 = vst.msk [vmem:[#allocation4 + $0xe8] sm:$0xff] %vm4233, %v4230
  %4264 = vst.msk [vmem:[#allocation4 + $0xf0] sm:$0xff] %vm4233, %v4231
  %4265 = vst.msk [vmem:[#allocation4 + $0xf8] sm:$0xff] %vm4233, %v4232
  %4266 = vst.msk [vmem:[#allocation5] sm:$0xff] %vm4233, 0.0
  %vm4267 = vcmask 58368
  %4268 = vst.msk [vmem:[#allocation5 + $0x8] sm:$0x3] %vm4267, 0.0
  %4269 = vst.msk [vmem:[#allocation5 + $0x10] sm:$0xff] %vm4233, 0.0
  %4270 = vst.msk [vmem:[#allocation5 + $0x18] sm:$0x3] %vm4267, 0.0
  %4271 = vst.msk [vmem:[#allocation5 + $0x20] sm:$0xff] %vm4233, 0.0
  %4272 = vst.msk [vmem:[#allocation5 + $0x28] sm:$0x3] %vm4267, 0.0
  %4273 = vst.msk [vmem:[#allocation5 + $0x30] sm:$0xff] %vm4233, 0.0
  %4274 = vst.msk [vmem:[#allocation5 + $0x38] sm:$0x3] %vm4267, 0.0
  %4275 = vst.msk [vmem:[#allocation5 + $0x40] sm:$0xff] %vm4233, 0.0
  %4276 = vst.msk [vmem:[#allocation5 + $0x48] sm:$0x3] %vm4267, 0.0
  %4277 = vst.msk [vmem:[#allocation5 + $0x50] sm:$0xff] %vm4233, 0.0
  %4278 = vst.msk [vmem:[#allocation5 + $0x58] sm:$0x3] %vm4267, 0.0
  %4279 = vst.msk [vmem:[#allocation5 + $0x60] sm:$0xff] %vm4233, 0.0
  %4280 = vst.msk [vmem:[#allocation5 + $0x68] sm:$0x3] %vm4267, 0.0
  %4281 = vst.msk [vmem:[#allocation5 + $0x70] sm:$0xff] %vm4233, 0.0
  %4282 = vst.msk [vmem:[#allocation5 + $0x78] sm:$0x3] %vm4267, 0.0
  %4283 = vst.msk [vmem:[#allocation5 + $0x80] sm:$0xff] %vm4233, 0.0
  %4284 = vst.msk [vmem:[#allocation5 + $0x88] sm:$0x3] %vm4267, 0.0
  %4285 = vst.msk [vmem:[#allocation5 + $0x90] sm:$0xff] %vm4233, 0.0
  %4286 = vst.msk [vmem:[#allocation5 + $0x98] sm:$0x3] %vm4267, 0.0
  %4287 = vst.msk [vmem:[#allocation5 + $0xa0] sm:$0xff] %vm4233, 0.0
  %4288 = vst.msk [vmem:[#allocation5 + $0xa8] sm:$0x3] %vm4267, 0.0
  %4289 = vst.msk [vmem:[#allocation5 + $0xb0] sm:$0xff] %vm4233, 0.0
  %4290 = vst.msk [vmem:[#allocation5 + $0xb8] sm:$0x3] %vm4267, 0.0
  %4291 = vst.msk [vmem:[#allocation5 + $0xc0] sm:$0xff] %vm4233, 0.0
  %4292 = vst.msk [vmem:[#allocation5 + $0xc8] sm:$0x3] %vm4267, 0.0
  %4293 = vst.msk [vmem:[#allocation5 + $0xd0] sm:$0xff] %vm4233, 0.0
  %4294 = vst.msk [vmem:[#allocation5 + $0xd8] sm:$0x3] %vm4267, 0.0
  %4295 = vst.msk [vmem:[#allocation5 + $0xe0] sm:$0xff] %vm4233, 0.0
  %4296 = vst.msk [vmem:[#allocation5 + $0xe8] sm:$0x3] %vm4267, 0.0
  %4297 = vst.msk [vmem:[#allocation5 + $0xf0] sm:$0xff] %vm4233, 0.0
  %4298 = vst.msk [vmem:[#allocation5 + $0xf8] sm:$0x3] %vm4267, 0.0
  %4299 = vst.msk [vmem:[#allocation5 + $0x100] sm:$0xff] %vm4233, 0.0
  %4300 = vst.msk [vmem:[#allocation5 + $0x108] sm:$0x3] %vm4267, 0.0
  %4301 = vst.msk [vmem:[#allocation5 + $0x110] sm:$0xff] %vm4233, 0.0
  %4302 = vst.msk [vmem:[#allocation5 + $0x118] sm:$0x3] %vm4267, 0.0
  %4303 = vst.msk [vmem:[#allocation5 + $0x120] sm:$0xff] %vm4233, 0.0
  %4304 = vst.msk [vmem:[#allocation5 + $0x128] sm:$0x3] %vm4267, 0.0
  %4305 = vst.msk [vmem:[#allocation5 + $0x130] sm:$0xff] %vm4233, 0.0
  %4306 = vst.msk [vmem:[#allocation5 + $0x138] sm:$0x3] %vm4267, 0.0
  %v4307 = vld [vmem:[#allocation4] sm:$0x1]
  %v4308 = vld [vmem:[#allocation4 + $0x10] sm:$0x1]
  %v4309 = vld [vmem:[#allocation4 + $0x20] sm:$0x1]
  %v4310 = vld [vmem:[#allocation4 + $0x30] sm:$0x1]
  %v4311 = vld [vmem:[#allocation4 + $0x40] sm:$0x1]
  %v4312 = vld [vmem:[#allocation4 + $0x50] sm:$0x1]
  %v4313 = vld [vmem:[#allocation4 + $0x60] sm:$0x1]
  %v4314 = vld [vmem:[#allocation4 + $0x70] sm:$0x1]
  %v4315 = vld [vmem:[#allocation4 + $0x80] sm:$0x1]
  %v4316 = vld [vmem:[#allocation4 + $0x90] sm:$0x1]
  %v4317 = vld [vmem:[#allocation4 + $0xa0] sm:$0x1]
  %v4318 = vld [vmem:[#allocation4 + $0xb0] sm:$0x1]
  %v4319 = vld [vmem:[#allocation4 + $0xc0] sm:$0x1]
  %v4320 = vld [vmem:[#allocation4 + $0xd0] sm:$0x1]
  %v4321 = vld [vmem:[#allocation4 + $0xe0] sm:$0x1]
  %v4322 = vld [vmem:[#allocation4 + $0xf0] sm:$0x1]
  %v4323 = vld [vmem:[#allocation4 + $0x1] sm:$0x1]
  %v4324 = vld [vmem:[#allocation4 + $0x11] sm:$0x1]
  %v4325 = vld [vmem:[#allocation4 + $0x21] sm:$0x1]
  %v4326 = vld [vmem:[#allocation4 + $0x31] sm:$0x1]
  %v4327 = vld [vmem:[#allocation4 + $0x41] sm:$0x1]
  %v4328 = vld [vmem:[#allocation4 + $0x51] sm:$0x1]
  %v4329 = vld [vmem:[#allocation4 + $0x61] sm:$0x1]
  %v4330 = vld [vmem:[#allocation4 + $0x71] sm:$0x1]
  %v4331 = vld [vmem:[#allocation4 + $0x81] sm:$0x1]
  %v4332 = vld [vmem:[#allocation4 + $0x91] sm:$0x1]
  %v4333 = vld [vmem:[#allocation4 + $0xa1] sm:$0x1]
  %v4334 = vld [vmem:[#allocation4 + $0xb1] sm:$0x1]
  %v4335 = vld [vmem:[#allocation4 + $0xc1] sm:$0x1]
  %v4336 = vld [vmem:[#allocation4 + $0xd1] sm:$0x1]
  %v4337 = vld [vmem:[#allocation4 + $0xe1] sm:$0x1]
  %v4338 = vld [vmem:[#allocation4 + $0xf1] sm:$0x1]
  %v4339 = vmax.f32 %v4307, %v4323
  %v4340 = vmax.f32 %v4308, %v4324
  %v4341 = vmax.f32 %v4309, %v4325
  %v4342 = vmax.f32 %v4310, %v4326
  %v4343 = vmax.f32 %v4311, %v4327
  %v4344 = vmax.f32 %v4312, %v4328
  %v4345 = vmax.f32 %v4313, %v4329
  %v4346 = vmax.f32 %v4314, %v4330
  %v4347 = vmax.f32 %v4315, %v4331
  %v4348 = vmax.f32 %v4316, %v4332
  %v4349 = vmax.f32 %v4317, %v4333
  %v4350 = vmax.f32 %v4318, %v4334
  %v4351 = vmax.f32 %v4319, %v4335
  %v4352 = vmax.f32 %v4320, %v4336
  %v4353 = vmax.f32 %v4321, %v4337
  %v4354 = vmax.f32 %v4322, %v4338
  %s4355 = scalar_lea.vmem [#allocation5], 16
  %vm4356 = vcmask 57344
  %4357 = vst.msk [vmem:[%s4355 + $0x1] sm:$0x1] %vm4356, %v4339
  %4358 = vst.msk [vmem:[%s4355 + $0x11] sm:$0x1] %vm4356, %v4340
  %4359 = vst.msk [vmem:[%s4355 + $0x21] sm:$0x1] %vm4356, %v4341
  %4360 = vst.msk [vmem:[%s4355 + $0x31] sm:$0x1] %vm4356, %v4342
  %4361 = vst.msk [vmem:[%s4355 + $0x41] sm:$0x1] %vm4356, %v4343
  %4362 = vst.msk [vmem:[%s4355 + $0x51] sm:$0x1] %vm4356, %v4344
  %4363 = vst.msk [vmem:[%s4355 + $0x61] sm:$0x1] %vm4356, %v4345
  %4364 = vst.msk [vmem:[%s4355 + $0x71] sm:$0x1] %vm4356, %v4346
  %4365 = vst.msk [vmem:[%s4355 + $0xa1] sm:$0x1] %vm4356, %v4347
  %4366 = vst.msk [vmem:[%s4355 + $0xb1] sm:$0x1] %vm4356, %v4348
  %4367 = vst.msk [vmem:[%s4355 + $0xc1] sm:$0x1] %vm4356, %v4349
  %4368 = vst.msk [vmem:[%s4355 + $0xd1] sm:$0x1] %vm4356, %v4350
  %4369 = vst.msk [vmem:[%s4355 + $0xe1] sm:$0x1] %vm4356, %v4351
  %4370 = vst.msk [vmem:[%s4355 + $0xf1] sm:$0x1] %vm4356, %v4352
  %4371 = vst.msk [vmem:[%s4355 + $0x101] sm:$0x1] %vm4356, %v4353
  %4372 = vst.msk [vmem:[%s4355 + $0x111] sm:$0x1] %vm4356, %v4354
  %v4373 = vld [vmem:[#allocation4 + $0x2] sm:$0x1]
  %v4374 = vld [vmem:[#allocation4 + $0x12] sm:$0x1]
  %v4375 = vld [vmem:[#allocation4 + $0x22] sm:$0x1]
  %v4376 = vld [vmem:[#allocation4 + $0x32] sm:$0x1]
  %v4377 = vld [vmem:[#allocation4 + $0x42] sm:$0x1]
  %v4378 = vld [vmem:[#allocation4 + $0x52] sm:$0x1]
  %v4379 = vld [vmem:[#allocation4 + $0x62] sm:$0x1]
  %v4380 = vld [vmem:[#allocation4 + $0x72] sm:$0x1]
  %v4381 = vld [vmem:[#allocation4 + $0x82] sm:$0x1]
  %v4382 = vld [vmem:[#allocation4 + $0x92] sm:$0x1]
  %v4383 = vld [vmem:[#allocation4 + $0xa2] sm:$0x1]
  %v4384 = vld [vmem:[#allocation4 + $0xb2] sm:$0x1]
  %v4385 = vld [vmem:[#allocation4 + $0xc2] sm:$0x1]
  %v4386 = vld [vmem:[#allocation4 + $0xd2] sm:$0x1]
  %v4387 = vld [vmem:[#allocation4 + $0xe2] sm:$0x1]
  %v4388 = vld [vmem:[#allocation4 + $0xf2] sm:$0x1]
  %v4389 = vld [vmem:[#allocation4 + $0x3] sm:$0x1]
  %v4390 = vld [vmem:[#allocation4 + $0x13] sm:$0x1]
  %v4391 = vld [vmem:[#allocation4 + $0x23] sm:$0x1]
  %v4392 = vld [vmem:[#allocation4 + $0x33] sm:$0x1]
  %v4393 = vld [vmem:[#allocation4 + $0x43] sm:$0x1]
  %v4394 = vld [vmem:[#allocation4 + $0x53] sm:$0x1]
  %v4395 = vld [vmem:[#allocation4 + $0x63] sm:$0x1]
  %v4396 = vld [vmem:[#allocation4 + $0x73] sm:$0x1]
  %v4397 = vld [vmem:[#allocation4 + $0x83] sm:$0x1]
  %v4398 = vld [vmem:[#allocation4 + $0x93] sm:$0x1]
  %v4399 = vld [vmem:[#allocation4 + $0xa3] sm:$0x1]
  %v4400 = vld [vmem:[#allocation4 + $0xb3] sm:$0x1]
  %v4401 = vld [vmem:[#allocation4 + $0xc3] sm:$0x1]
  %v4402 = vld [vmem:[#allocation4 + $0xd3] sm:$0x1]
  %v4403 = vld [vmem:[#allocation4 + $0xe3] sm:$0x1]
  %v4404 = vld [vmem:[#allocation4 + $0xf3] sm:$0x1]
  %v4405 = vmax.f32 %v4373, %v4389
  %v4406 = vmax.f32 %v4374, %v4390
  %v4407 = vmax.f32 %v4375, %v4391
  %v4408 = vmax.f32 %v4376, %v4392
  %v4409 = vmax.f32 %v4377, %v4393
  %v4410 = vmax.f32 %v4378, %v4394
  %v4411 = vmax.f32 %v4379, %v4395
  %v4412 = vmax.f32 %v4380, %v4396
  %v4413 = vmax.f32 %v4381, %v4397
  %v4414 = vmax.f32 %v4382, %v4398
  %v4415 = vmax.f32 %v4383, %v4399
  %v4416 = vmax.f32 %v4384, %v4400
  %v4417 = vmax.f32 %v4385, %v4401
  %v4418 = vmax.f32 %v4386, %v4402
  %v4419 = vmax.f32 %v4387, %v4403
  %v4420 = vmax.f32 %v4388, %v4404
  %4421 = vst.msk [vmem:[%s4355 + $0x2] sm:$0x1] %vm4356, %v4405
  %4422 = vst.msk [vmem:[%s4355 + $0x12] sm:$0x1] %vm4356, %v4406
  %4423 = vst.msk [vmem:[%s4355 + $0x22] sm:$0x1] %vm4356, %v4407
  %4424 = vst.msk [vmem:[%s4355 + $0x32] sm:$0x1] %vm4356, %v4408
  %4425 = vst.msk [vmem:[%s4355 + $0x42] sm:$0x1] %vm4356, %v4409
  %4426 = vst.msk [vmem:[%s4355 + $0x52] sm:$0x1] %vm4356, %v4410
  %4427 = vst.msk [vmem:[%s4355 + $0x62] sm:$0x1] %vm4356, %v4411
  %4428 = vst.msk [vmem:[%s4355 + $0x72] sm:$0x1] %vm4356, %v4412
  %4429 = vst.msk [vmem:[%s4355 + $0xa2] sm:$0x1] %vm4356, %v4413
  %4430 = vst.msk [vmem:[%s4355 + $0xb2] sm:$0x1] %vm4356, %v4414
  %4431 = vst.msk [vmem:[%s4355 + $0xc2] sm:$0x1] %vm4356, %v4415
  %4432 = vst.msk [vmem:[%s4355 + $0xd2] sm:$0x1] %vm4356, %v4416
  %4433 = vst.msk [vmem:[%s4355 + $0xe2] sm:$0x1] %vm4356, %v4417
  %4434 = vst.msk [vmem:[%s4355 + $0xf2] sm:$0x1] %vm4356, %v4418
  %4435 = vst.msk [vmem:[%s4355 + $0x102] sm:$0x1] %vm4356, %v4419
  %4436 = vst.msk [vmem:[%s4355 + $0x112] sm:$0x1] %vm4356, %v4420
  %v4437 = vld [vmem:[#allocation4 + $0x4] sm:$0x1]
  %v4438 = vld [vmem:[#allocation4 + $0x14] sm:$0x1]
  %v4439 = vld [vmem:[#allocation4 + $0x24] sm:$0x1]
  %v4440 = vld [vmem:[#allocation4 + $0x34] sm:$0x1]
  %v4441 = vld [vmem:[#allocation4 + $0x44] sm:$0x1]
  %v4442 = vld [vmem:[#allocation4 + $0x54] sm:$0x1]
  %v4443 = vld [vmem:[#allocation4 + $0x64] sm:$0x1]
  %v4444 = vld [vmem:[#allocation4 + $0x74] sm:$0x1]
  %v4445 = vld [vmem:[#allocation4 + $0x84] sm:$0x1]
  %v4446 = vld [vmem:[#allocation4 + $0x94] sm:$0x1]
  %v4447 = vld [vmem:[#allocation4 + $0xa4] sm:$0x1]
  %v4448 = vld [vmem:[#allocation4 + $0xb4] sm:$0x1]
  %v4449 = vld [vmem:[#allocation4 + $0xc4] sm:$0x1]
  %v4450 = vld [vmem:[#allocation4 + $0xd4] sm:$0x1]
  %v4451 = vld [vmem:[#allocation4 + $0xe4] sm:$0x1]
  %v4452 = vld [vmem:[#allocation4 + $0xf4] sm:$0x1]
  %v4453 = vld [vmem:[#allocation4 + $0x5] sm:$0x1]
  %v4454 = vld [vmem:[#allocation4 + $0x15] sm:$0x1]
  %v4455 = vld [vmem:[#allocation4 + $0x25] sm:$0x1]
  %v4456 = vld [vmem:[#allocation4 + $0x35] sm:$0x1]
  %v4457 = vld [vmem:[#allocation4 + $0x45] sm:$0x1]
  %v4458 = vld [vmem:[#allocation4 + $0x55] sm:$0x1]
  %v4459 = vld [vmem:[#allocation4 + $0x65] sm:$0x1]
  %v4460 = vld [vmem:[#allocation4 + $0x75] sm:$0x1]
  %v4461 = vld [vmem:[#allocation4 + $0x85] sm:$0x1]
  %v4462 = vld [vmem:[#allocation4 + $0x95] sm:$0x1]
  %v4463 = vld [vmem:[#allocation4 + $0xa5] sm:$0x1]
  %v4464 = vld [vmem:[#allocation4 + $0xb5] sm:$0x1]
  %v4465 = vld [vmem:[#allocation4 + $0xc5] sm:$0x1]
  %v4466 = vld [vmem:[#allocation4 + $0xd5] sm:$0x1]
  %v4467 = vld [vmem:[#allocation4 + $0xe5] sm:$0x1]
  %v4468 = vld [vmem:[#allocation4 + $0xf5] sm:$0x1]
  %v4469 = vmax.f32 %v4437, %v4453
  %v4470 = vmax.f32 %v4438, %v4454
  %v4471 = vmax.f32 %v4439, %v4455
  %v4472 = vmax.f32 %v4440, %v4456
  %v4473 = vmax.f32 %v4441, %v4457
  %v4474 = vmax.f32 %v4442, %v4458
  %v4475 = vmax.f32 %v4443, %v4459
  %v4476 = vmax.f32 %v4444, %v4460
  %v4477 = vmax.f32 %v4445, %v4461
  %v4478 = vmax.f32 %v4446, %v4462
  %v4479 = vmax.f32 %v4447, %v4463
  %v4480 = vmax.f32 %v4448, %v4464
  %v4481 = vmax.f32 %v4449, %v4465
  %v4482 = vmax.f32 %v4450, %v4466
  %v4483 = vmax.f32 %v4451, %v4467
  %v4484 = vmax.f32 %v4452, %v4468
  %4485 = vst.msk [vmem:[%s4355 + $0x3] sm:$0x1] %vm4356, %v4469
  %4486 = vst.msk [vmem:[%s4355 + $0x13] sm:$0x1] %vm4356, %v4470
  %4487 = vst.msk [vmem:[%s4355 + $0x23] sm:$0x1] %vm4356, %v4471
  %4488 = vst.msk [vmem:[%s4355 + $0x33] sm:$0x1] %vm4356, %v4472
  %4489 = vst.msk [vmem:[%s4355 + $0x43] sm:$0x1] %vm4356, %v4473
  %4490 = vst.msk [vmem:[%s4355 + $0x53] sm:$0x1] %vm4356, %v4474
  %4491 = vst.msk [vmem:[%s4355 + $0x63] sm:$0x1] %vm4356, %v4475
  %4492 = vst.msk [vmem:[%s4355 + $0x73] sm:$0x1] %vm4356, %v4476
  %4493 = vst.msk [vmem:[%s4355 + $0xa3] sm:$0x1] %vm4356, %v4477
  %4494 = vst.msk [vmem:[%s4355 + $0xb3] sm:$0x1] %vm4356, %v4478
  %4495 = vst.msk [vmem:[%s4355 + $0xc3] sm:$0x1] %vm4356, %v4479
  %4496 = vst.msk [vmem:[%s4355 + $0xd3] sm:$0x1] %vm4356, %v4480
  %4497 = vst.msk [vmem:[%s4355 + $0xe3] sm:$0x1] %vm4356, %v4481
  %4498 = vst.msk [vmem:[%s4355 + $0xf3] sm:$0x1] %vm4356, %v4482
  %4499 = vst.msk [vmem:[%s4355 + $0x103] sm:$0x1] %vm4356, %v4483
  %4500 = vst.msk [vmem:[%s4355 + $0x113] sm:$0x1] %vm4356, %v4484
  %v4501 = vld [vmem:[#allocation4 + $0x6] sm:$0x1]
  %v4502 = vld [vmem:[#allocation4 + $0x16] sm:$0x1]
  %v4503 = vld [vmem:[#allocation4 + $0x26] sm:$0x1]
  %v4504 = vld [vmem:[#allocation4 + $0x36] sm:$0x1]
  %v4505 = vld [vmem:[#allocation4 + $0x46] sm:$0x1]
  %v4506 = vld [vmem:[#allocation4 + $0x56] sm:$0x1]
  %v4507 = vld [vmem:[#allocation4 + $0x66] sm:$0x1]
  %v4508 = vld [vmem:[#allocation4 + $0x76] sm:$0x1]
  %v4509 = vld [vmem:[#allocation4 + $0x86] sm:$0x1]
  %v4510 = vld [vmem:[#allocation4 + $0x96] sm:$0x1]
  %v4511 = vld [vmem:[#allocation4 + $0xa6] sm:$0x1]
  %v4512 = vld [vmem:[#allocation4 + $0xb6] sm:$0x1]
  %v4513 = vld [vmem:[#allocation4 + $0xc6] sm:$0x1]
  %v4514 = vld [vmem:[#allocation4 + $0xd6] sm:$0x1]
  %v4515 = vld [vmem:[#allocation4 + $0xe6] sm:$0x1]
  %v4516 = vld [vmem:[#allocation4 + $0xf6] sm:$0x1]
  %v4517 = vld [vmem:[#allocation4 + $0x7] sm:$0x1]
  %v4518 = vld [vmem:[#allocation4 + $0x17] sm:$0x1]
  %v4519 = vld [vmem:[#allocation4 + $0x27] sm:$0x1]
  %v4520 = vld [vmem:[#allocation4 + $0x37] sm:$0x1]
  %v4521 = vld [vmem:[#allocation4 + $0x47] sm:$0x1]
  %v4522 = vld [vmem:[#allocation4 + $0x57] sm:$0x1]
  %v4523 = vld [vmem:[#allocation4 + $0x67] sm:$0x1]
  %v4524 = vld [vmem:[#allocation4 + $0x77] sm:$0x1]
  %v4525 = vld [vmem:[#allocation4 + $0x87] sm:$0x1]
  %v4526 = vld [vmem:[#allocation4 + $0x97] sm:$0x1]
  %v4527 = vld [vmem:[#allocation4 + $0xa7] sm:$0x1]
  %v4528 = vld [vmem:[#allocation4 + $0xb7] sm:$0x1]
  %v4529 = vld [vmem:[#allocation4 + $0xc7] sm:$0x1]
  %v4530 = vld [vmem:[#allocation4 + $0xd7] sm:$0x1]
  %v4531 = vld [vmem:[#allocation4 + $0xe7] sm:$0x1]
  %v4532 = vld [vmem:[#allocation4 + $0xf7] sm:$0x1]
  %v4533 = vmax.f32 %v4501, %v4517
  %v4534 = vmax.f32 %v4502, %v4518
  %v4535 = vmax.f32 %v4503, %v4519
  %v4536 = vmax.f32 %v4504, %v4520
  %v4537 = vmax.f32 %v4505, %v4521
  %v4538 = vmax.f32 %v4506, %v4522
  %v4539 = vmax.f32 %v4507, %v4523
  %v4540 = vmax.f32 %v4508, %v4524
  %v4541 = vmax.f32 %v4509, %v4525
  %v4542 = vmax.f32 %v4510, %v4526
  %v4543 = vmax.f32 %v4511, %v4527
  %v4544 = vmax.f32 %v4512, %v4528
  %v4545 = vmax.f32 %v4513, %v4529
  %v4546 = vmax.f32 %v4514, %v4530
  %v4547 = vmax.f32 %v4515, %v4531
  %v4548 = vmax.f32 %v4516, %v4532
  %4549 = vst.msk [vmem:[%s4355 + $0x4] sm:$0x1] %vm4356, %v4533
  %4550 = vst.msk [vmem:[%s4355 + $0x14] sm:$0x1] %vm4356, %v4534
  %4551 = vst.msk [vmem:[%s4355 + $0x24] sm:$0x1] %vm4356, %v4535
  %4552 = vst.msk [vmem:[%s4355 + $0x34] sm:$0x1] %vm4356, %v4536
  %4553 = vst.msk [vmem:[%s4355 + $0x44] sm:$0x1] %vm4356, %v4537
  %4554 = vst.msk [vmem:[%s4355 + $0x54] sm:$0x1] %vm4356, %v4538
  %4555 = vst.msk [vmem:[%s4355 + $0x64] sm:$0x1] %vm4356, %v4539
  %4556 = vst.msk [vmem:[%s4355 + $0x74] sm:$0x1] %vm4356, %v4540
  %4557 = vst.msk [vmem:[%s4355 + $0xa4] sm:$0x1] %vm4356, %v4541
  %4558 = vst.msk [vmem:[%s4355 + $0xb4] sm:$0x1] %vm4356, %v4542
  %4559 = vst.msk [vmem:[%s4355 + $0xc4] sm:$0x1] %vm4356, %v4543
  %4560 = vst.msk [vmem:[%s4355 + $0xd4] sm:$0x1] %vm4356, %v4544
  %4561 = vst.msk [vmem:[%s4355 + $0xe4] sm:$0x1] %vm4356, %v4545
  %4562 = vst.msk [vmem:[%s4355 + $0xf4] sm:$0x1] %vm4356, %v4546
  %4563 = vst.msk [vmem:[%s4355 + $0x104] sm:$0x1] %vm4356, %v4547
  %4564 = vst.msk [vmem:[%s4355 + $0x114] sm:$0x1] %vm4356, %v4548
  %v4565 = vld [vmem:[#allocation4 + $0x8] sm:$0x1]
  %v4566 = vld [vmem:[#allocation4 + $0x18] sm:$0x1]
  %v4567 = vld [vmem:[#allocation4 + $0x28] sm:$0x1]
  %v4568 = vld [vmem:[#allocation4 + $0x38] sm:$0x1]
  %v4569 = vld [vmem:[#allocation4 + $0x48] sm:$0x1]
  %v4570 = vld [vmem:[#allocation4 + $0x58] sm:$0x1]
  %v4571 = vld [vmem:[#allocation4 + $0x68] sm:$0x1]
  %v4572 = vld [vmem:[#allocation4 + $0x78] sm:$0x1]
  %v4573 = vld [vmem:[#allocation4 + $0x88] sm:$0x1]
  %v4574 = vld [vmem:[#allocation4 + $0x98] sm:$0x1]
  %v4575 = vld [vmem:[#allocation4 + $0xa8] sm:$0x1]
  %v4576 = vld [vmem:[#allocation4 + $0xb8] sm:$0x1]
  %v4577 = vld [vmem:[#allocation4 + $0xc8] sm:$0x1]
  %v4578 = vld [vmem:[#allocation4 + $0xd8] sm:$0x1]
  %v4579 = vld [vmem:[#allocation4 + $0xe8] sm:$0x1]
  %v4580 = vld [vmem:[#allocation4 + $0xf8] sm:$0x1]
  %v4581 = vld [vmem:[#allocation4 + $0x9] sm:$0x1]
  %v4582 = vld [vmem:[#allocation4 + $0x19] sm:$0x1]
  %v4583 = vld [vmem:[#allocation4 + $0x29] sm:$0x1]
  %v4584 = vld [vmem:[#allocation4 + $0x39] sm:$0x1]
  %v4585 = vld [vmem:[#allocation4 + $0x49] sm:$0x1]
  %v4586 = vld [vmem:[#allocation4 + $0x59] sm:$0x1]
  %v4587 = vld [vmem:[#allocation4 + $0x69] sm:$0x1]
  %v4588 = vld [vmem:[#allocation4 + $0x79] sm:$0x1]
  %v4589 = vld [vmem:[#allocation4 + $0x89] sm:$0x1]
  %v4590 = vld [vmem:[#allocation4 + $0x99] sm:$0x1]
  %v4591 = vld [vmem:[#allocation4 + $0xa9] sm:$0x1]
  %v4592 = vld [vmem:[#allocation4 + $0xb9] sm:$0x1]
  %v4593 = vld [vmem:[#allocation4 + $0xc9] sm:$0x1]
  %v4594 = vld [vmem:[#allocation4 + $0xd9] sm:$0x1]
  %v4595 = vld [vmem:[#allocation4 + $0xe9] sm:$0x1]
  %v4596 = vld [vmem:[#allocation4 + $0xf9] sm:$0x1]
  %v4597 = vmax.f32 %v4565, %v4581
  %v4598 = vmax.f32 %v4566, %v4582
  %v4599 = vmax.f32 %v4567, %v4583
  %v4600 = vmax.f32 %v4568, %v4584
  %v4601 = vmax.f32 %v4569, %v4585
  %v4602 = vmax.f32 %v4570, %v4586
  %v4603 = vmax.f32 %v4571, %v4587
  %v4604 = vmax.f32 %v4572, %v4588
  %v4605 = vmax.f32 %v4573, %v4589
  %v4606 = vmax.f32 %v4574, %v4590
  %v4607 = vmax.f32 %v4575, %v4591
  %v4608 = vmax.f32 %v4576, %v4592
  %v4609 = vmax.f32 %v4577, %v4593
  %v4610 = vmax.f32 %v4578, %v4594
  %v4611 = vmax.f32 %v4579, %v4595
  %v4612 = vmax.f32 %v4580, %v4596
  %4613 = vst.msk [vmem:[%s4355 + $0x5] sm:$0x1] %vm4356, %v4597
  %4614 = vst.msk [vmem:[%s4355 + $0x15] sm:$0x1] %vm4356, %v4598
  %4615 = vst.msk [vmem:[%s4355 + $0x25] sm:$0x1] %vm4356, %v4599
  %4616 = vst.msk [vmem:[%s4355 + $0x35] sm:$0x1] %vm4356, %v4600
  %4617 = vst.msk [vmem:[%s4355 + $0x45] sm:$0x1] %vm4356, %v4601
  %4618 = vst.msk [vmem:[%s4355 + $0x55] sm:$0x1] %vm4356, %v4602
  %4619 = vst.msk [vmem:[%s4355 + $0x65] sm:$0x1] %vm4356, %v4603
  %4620 = vst.msk [vmem:[%s4355 + $0x75] sm:$0x1] %vm4356, %v4604
  %4621 = vst.msk [vmem:[%s4355 + $0xa5] sm:$0x1] %vm4356, %v4605
  %4622 = vst.msk [vmem:[%s4355 + $0xb5] sm:$0x1] %vm4356, %v4606
  %4623 = vst.msk [vmem:[%s4355 + $0xc5] sm:$0x1] %vm4356, %v4607
  %4624 = vst.msk [vmem:[%s4355 + $0xd5] sm:$0x1] %vm4356, %v4608
  %4625 = vst.msk [vmem:[%s4355 + $0xe5] sm:$0x1] %vm4356, %v4609
  %4626 = vst.msk [vmem:[%s4355 + $0xf5] sm:$0x1] %vm4356, %v4610
  %4627 = vst.msk [vmem:[%s4355 + $0x105] sm:$0x1] %vm4356, %v4611
  %4628 = vst.msk [vmem:[%s4355 + $0x115] sm:$0x1] %vm4356, %v4612
  %v4629 = vld [vmem:[#allocation4 + $0xa] sm:$0x1]
  %v4630 = vld [vmem:[#allocation4 + $0x1a] sm:$0x1]
  %v4631 = vld [vmem:[#allocation4 + $0x2a] sm:$0x1]
  %v4632 = vld [vmem:[#allocation4 + $0x3a] sm:$0x1]
  %v4633 = vld [vmem:[#allocation4 + $0x4a] sm:$0x1]
  %v4634 = vld [vmem:[#allocation4 + $0x5a] sm:$0x1]
  %v4635 = vld [vmem:[#allocation4 + $0x6a] sm:$0x1]
  %v4636 = vld [vmem:[#allocation4 + $0x7a] sm:$0x1]
  %v4637 = vld [vmem:[#allocation4 + $0x8a] sm:$0x1]
  %v4638 = vld [vmem:[#allocation4 + $0x9a] sm:$0x1]
  %v4639 = vld [vmem:[#allocation4 + $0xaa] sm:$0x1]
  %v4640 = vld [vmem:[#allocation4 + $0xba] sm:$0x1]
  %v4641 = vld [vmem:[#allocation4 + $0xca] sm:$0x1]
  %v4642 = vld [vmem:[#allocation4 + $0xda] sm:$0x1]
  %v4643 = vld [vmem:[#allocation4 + $0xea] sm:$0x1]
  %v4644 = vld [vmem:[#allocation4 + $0xfa] sm:$0x1]
  %v4645 = vld [vmem:[#allocation4 + $0xb] sm:$0x1]
  %v4646 = vld [vmem:[#allocation4 + $0x1b] sm:$0x1]
  %v4647 = vld [vmem:[#allocation4 + $0x2b] sm:$0x1]
  %v4648 = vld [vmem:[#allocation4 + $0x3b] sm:$0x1]
  %v4649 = vld [vmem:[#allocation4 + $0x4b] sm:$0x1]
  %v4650 = vld [vmem:[#allocation4 + $0x5b] sm:$0x1]
  %v4651 = vld [vmem:[#allocation4 + $0x6b] sm:$0x1]
  %v4652 = vld [vmem:[#allocation4 + $0x7b] sm:$0x1]
  %v4653 = vld [vmem:[#allocation4 + $0x8b] sm:$0x1]
  %v4654 = vld [vmem:[#allocation4 + $0x9b] sm:$0x1]
  %v4655 = vld [vmem:[#allocation4 + $0xab] sm:$0x1]
  %v4656 = vld [vmem:[#allocation4 + $0xbb] sm:$0x1]
  %v4657 = vld [vmem:[#allocation4 + $0xcb] sm:$0x1]
  %v4658 = vld [vmem:[#allocation4 + $0xdb] sm:$0x1]
  %v4659 = vld [vmem:[#allocation4 + $0xeb] sm:$0x1]
  %v4660 = vld [vmem:[#allocation4 + $0xfb] sm:$0x1]
  %v4661 = vmax.f32 %v4629, %v4645
  %v4662 = vmax.f32 %v4630, %v4646
  %v4663 = vmax.f32 %v4631, %v4647
  %v4664 = vmax.f32 %v4632, %v4648
  %v4665 = vmax.f32 %v4633, %v4649
  %v4666 = vmax.f32 %v4634, %v4650
  %v4667 = vmax.f32 %v4635, %v4651
  %v4668 = vmax.f32 %v4636, %v4652
  %v4669 = vmax.f32 %v4637, %v4653
  %v4670 = vmax.f32 %v4638, %v4654
  %v4671 = vmax.f32 %v4639, %v4655
  %v4672 = vmax.f32 %v4640, %v4656
  %v4673 = vmax.f32 %v4641, %v4657
  %v4674 = vmax.f32 %v4642, %v4658
  %v4675 = vmax.f32 %v4643, %v4659
  %v4676 = vmax.f32 %v4644, %v4660
  %4677 = vst.msk [vmem:[%s4355 + $0x6] sm:$0x1] %vm4356, %v4661
  %4678 = vst.msk [vmem:[%s4355 + $0x16] sm:$0x1] %vm4356, %v4662
  %4679 = vst.msk [vmem:[%s4355 + $0x26] sm:$0x1] %vm4356, %v4663
  %4680 = vst.msk [vmem:[%s4355 + $0x36] sm:$0x1] %vm4356, %v4664
  %4681 = vst.msk [vmem:[%s4355 + $0x46] sm:$0x1] %vm4356, %v4665
  %4682 = vst.msk [vmem:[%s4355 + $0x56] sm:$0x1] %vm4356, %v4666
  %4683 = vst.msk [vmem:[%s4355 + $0x66] sm:$0x1] %vm4356, %v4667
  %4684 = vst.msk [vmem:[%s4355 + $0x76] sm:$0x1] %vm4356, %v4668
  %4685 = vst.msk [vmem:[%s4355 + $0xa6] sm:$0x1] %vm4356, %v4669
  %4686 = vst.msk [vmem:[%s4355 + $0xb6] sm:$0x1] %vm4356, %v4670
  %4687 = vst.msk [vmem:[%s4355 + $0xc6] sm:$0x1] %vm4356, %v4671
  %4688 = vst.msk [vmem:[%s4355 + $0xd6] sm:$0x1] %vm4356, %v4672
  %4689 = vst.msk [vmem:[%s4355 + $0xe6] sm:$0x1] %vm4356, %v4673
  %4690 = vst.msk [vmem:[%s4355 + $0xf6] sm:$0x1] %vm4356, %v4674
  %4691 = vst.msk [vmem:[%s4355 + $0x106] sm:$0x1] %vm4356, %v4675
  %4692 = vst.msk [vmem:[%s4355 + $0x116] sm:$0x1] %vm4356, %v4676
  %v4693 = vld [vmem:[#allocation4 + $0xc] sm:$0x1]
  %v4694 = vld [vmem:[#allocation4 + $0x1c] sm:$0x1]
  %v4695 = vld [vmem:[#allocation4 + $0x2c] sm:$0x1]
  %v4696 = vld [vmem:[#allocation4 + $0x3c] sm:$0x1]
  %v4697 = vld [vmem:[#allocation4 + $0x4c] sm:$0x1]
  %v4698 = vld [vmem:[#allocation4 + $0x5c] sm:$0x1]
  %v4699 = vld [vmem:[#allocation4 + $0x6c] sm:$0x1]
  %v4700 = vld [vmem:[#allocation4 + $0x7c] sm:$0x1]
  %v4701 = vld [vmem:[#allocation4 + $0x8c] sm:$0x1]
  %v4702 = vld [vmem:[#allocation4 + $0x9c] sm:$0x1]
  %v4703 = vld [vmem:[#allocation4 + $0xac] sm:$0x1]
  %v4704 = vld [vmem:[#allocation4 + $0xbc] sm:$0x1]
  %v4705 = vld [vmem:[#allocation4 + $0xcc] sm:$0x1]
  %v4706 = vld [vmem:[#allocation4 + $0xdc] sm:$0x1]
  %v4707 = vld [vmem:[#allocation4 + $0xec] sm:$0x1]
  %v4708 = vld [vmem:[#allocation4 + $0xfc] sm:$0x1]
  %v4709 = vld [vmem:[#allocation4 + $0xd] sm:$0x1]
  %v4710 = vld [vmem:[#allocation4 + $0x1d] sm:$0x1]
  %v4711 = vld [vmem:[#allocation4 + $0x2d] sm:$0x1]
  %v4712 = vld [vmem:[#allocation4 + $0x3d] sm:$0x1]
  %v4713 = vld [vmem:[#allocation4 + $0x4d] sm:$0x1]
  %v4714 = vld [vmem:[#allocation4 + $0x5d] sm:$0x1]
  %v4715 = vld [vmem:[#allocation4 + $0x6d] sm:$0x1]
  %v4716 = vld [vmem:[#allocation4 + $0x7d] sm:$0x1]
  %v4717 = vld [vmem:[#allocation4 + $0x8d] sm:$0x1]
  %v4718 = vld [vmem:[#allocation4 + $0x9d] sm:$0x1]
  %v4719 = vld [vmem:[#allocation4 + $0xad] sm:$0x1]
  %v4720 = vld [vmem:[#allocation4 + $0xbd] sm:$0x1]
  %v4721 = vld [vmem:[#allocation4 + $0xcd] sm:$0x1]
  %v4722 = vld [vmem:[#allocation4 + $0xdd] sm:$0x1]
  %v4723 = vld [vmem:[#allocation4 + $0xed] sm:$0x1]
  %v4724 = vld [vmem:[#allocation4 + $0xfd] sm:$0x1]
  %v4725 = vmax.f32 %v4693, %v4709
  %v4726 = vmax.f32 %v4694, %v4710
  %v4727 = vmax.f32 %v4695, %v4711
  %v4728 = vmax.f32 %v4696, %v4712
  %v4729 = vmax.f32 %v4697, %v4713
  %v4730 = vmax.f32 %v4698, %v4714
  %v4731 = vmax.f32 %v4699, %v4715
  %v4732 = vmax.f32 %v4700, %v4716
  %v4733 = vmax.f32 %v4701, %v4717
  %v4734 = vmax.f32 %v4702, %v4718
  %v4735 = vmax.f32 %v4703, %v4719
  %v4736 = vmax.f32 %v4704, %v4720
  %v4737 = vmax.f32 %v4705, %v4721
  %v4738 = vmax.f32 %v4706, %v4722
  %v4739 = vmax.f32 %v4707, %v4723
  %v4740 = vmax.f32 %v4708, %v4724
  %4741 = vst.msk [vmem:[%s4355 + $0x7] sm:$0x1] %vm4356, %v4725
  %4742 = vst.msk [vmem:[%s4355 + $0x17] sm:$0x1] %vm4356, %v4726
  %4743 = vst.msk [vmem:[%s4355 + $0x27] sm:$0x1] %vm4356, %v4727
  %4744 = vst.msk [vmem:[%s4355 + $0x37] sm:$0x1] %vm4356, %v4728
  %4745 = vst.msk [vmem:[%s4355 + $0x47] sm:$0x1] %vm4356, %v4729
  %4746 = vst.msk [vmem:[%s4355 + $0x57] sm:$0x1] %vm4356, %v4730
  %4747 = vst.msk [vmem:[%s4355 + $0x67] sm:$0x1] %vm4356, %v4731
  %4748 = vst.msk [vmem:[%s4355 + $0x77] sm:$0x1] %vm4356, %v4732
  %4749 = vst.msk [vmem:[%s4355 + $0xa7] sm:$0x1] %vm4356, %v4733
  %4750 = vst.msk [vmem:[%s4355 + $0xb7] sm:$0x1] %vm4356, %v4734
  %4751 = vst.msk [vmem:[%s4355 + $0xc7] sm:$0x1] %vm4356, %v4735
  %4752 = vst.msk [vmem:[%s4355 + $0xd7] sm:$0x1] %vm4356, %v4736
  %4753 = vst.msk [vmem:[%s4355 + $0xe7] sm:$0x1] %vm4356, %v4737
  %4754 = vst.msk [vmem:[%s4355 + $0xf7] sm:$0x1] %vm4356, %v4738
  %4755 = vst.msk [vmem:[%s4355 + $0x107] sm:$0x1] %vm4356, %v4739
  %4756 = vst.msk [vmem:[%s4355 + $0x117] sm:$0x1] %vm4356, %v4740
  %v4757 = vld [vmem:[#allocation4 + $0xe] sm:$0x1]
  %v4758 = vld [vmem:[#allocation4 + $0x1e] sm:$0x1]
  %v4759 = vld [vmem:[#allocation4 + $0x2e] sm:$0x1]
  %v4760 = vld [vmem:[#allocation4 + $0x3e] sm:$0x1]
  %v4761 = vld [vmem:[#allocation4 + $0x4e] sm:$0x1]
  %v4762 = vld [vmem:[#allocation4 + $0x5e] sm:$0x1]
  %v4763 = vld [vmem:[#allocation4 + $0x6e] sm:$0x1]
  %v4764 = vld [vmem:[#allocation4 + $0x7e] sm:$0x1]
  %v4765 = vld [vmem:[#allocation4 + $0x8e] sm:$0x1]
  %v4766 = vld [vmem:[#allocation4 + $0x9e] sm:$0x1]
  %v4767 = vld [vmem:[#allocation4 + $0xae] sm:$0x1]
  %v4768 = vld [vmem:[#allocation4 + $0xbe] sm:$0x1]
  %v4769 = vld [vmem:[#allocation4 + $0xce] sm:$0x1]
  %v4770 = vld [vmem:[#allocation4 + $0xde] sm:$0x1]
  %v4771 = vld [vmem:[#allocation4 + $0xee] sm:$0x1]
  %v4772 = vld [vmem:[#allocation4 + $0xfe] sm:$0x1]
  %v4773 = vld [vmem:[#allocation4 + $0xf] sm:$0x1]
  %v4774 = vld [vmem:[#allocation4 + $0x1f] sm:$0x1]
  %v4775 = vld [vmem:[#allocation4 + $0x2f] sm:$0x1]
  %v4776 = vld [vmem:[#allocation4 + $0x3f] sm:$0x1]
  %v4777 = vld [vmem:[#allocation4 + $0x4f] sm:$0x1]
  %v4778 = vld [vmem:[#allocation4 + $0x5f] sm:$0x1]
  %v4779 = vld [vmem:[#allocation4 + $0x6f] sm:$0x1]
  %v4780 = vld [vmem:[#allocation4 + $0x7f] sm:$0x1]
  %v4781 = vld [vmem:[#allocation4 + $0x8f] sm:$0x1]
  %v4782 = vld [vmem:[#allocation4 + $0x9f] sm:$0x1]
  %v4783 = vld [vmem:[#allocation4 + $0xaf] sm:$0x1]
  %v4784 = vld [vmem:[#allocation4 + $0xbf] sm:$0x1]
  %v4785 = vld [vmem:[#allocation4 + $0xcf] sm:$0x1]
  %v4786 = vld [vmem:[#allocation4 + $0xdf] sm:$0x1]
  %v4787 = vld [vmem:[#allocation4 + $0xef] sm:$0x1]
  %v4788 = vld [vmem:[#allocation4 + $0xff] sm:$0x1]
  %v4789 = vmax.f32 %v4757, %v4773
  %v4790 = vmax.f32 %v4758, %v4774
  %v4791 = vmax.f32 %v4759, %v4775
  %v4792 = vmax.f32 %v4760, %v4776
  %v4793 = vmax.f32 %v4761, %v4777
  %v4794 = vmax.f32 %v4762, %v4778
  %v4795 = vmax.f32 %v4763, %v4779
  %v4796 = vmax.f32 %v4764, %v4780
  %v4797 = vmax.f32 %v4765, %v4781
  %v4798 = vmax.f32 %v4766, %v4782
  %v4799 = vmax.f32 %v4767, %v4783
  %v4800 = vmax.f32 %v4768, %v4784
  %v4801 = vmax.f32 %v4769, %v4785
  %v4802 = vmax.f32 %v4770, %v4786
  %v4803 = vmax.f32 %v4771, %v4787
  %v4804 = vmax.f32 %v4772, %v4788
  %4805 = vst.msk [vmem:[%s4355 + $0x8] sm:$0x1] %vm4356, %v4789
  %4806 = vst.msk [vmem:[%s4355 + $0x18] sm:$0x1] %vm4356, %v4790
  %4807 = vst.msk [vmem:[%s4355 + $0x28] sm:$0x1] %vm4356, %v4791
  %4808 = vst.msk [vmem:[%s4355 + $0x38] sm:$0x1] %vm4356, %v4792
  %4809 = vst.msk [vmem:[%s4355 + $0x48] sm:$0x1] %vm4356, %v4793
  %4810 = vst.msk [vmem:[%s4355 + $0x58] sm:$0x1] %vm4356, %v4794
  %4811 = vst.msk [vmem:[%s4355 + $0x68] sm:$0x1] %vm4356, %v4795
  %4812 = vst.msk [vmem:[%s4355 + $0x78] sm:$0x1] %vm4356, %v4796
  %4813 = vst.msk [vmem:[%s4355 + $0xa8] sm:$0x1] %vm4356, %v4797
  %4814 = vst.msk [vmem:[%s4355 + $0xb8] sm:$0x1] %vm4356, %v4798
  %4815 = vst.msk [vmem:[%s4355 + $0xc8] sm:$0x1] %vm4356, %v4799
  %4816 = vst.msk [vmem:[%s4355 + $0xd8] sm:$0x1] %vm4356, %v4800
  %4817 = vst.msk [vmem:[%s4355 + $0xe8] sm:$0x1] %vm4356, %v4801
  %4818 = vst.msk [vmem:[%s4355 + $0xf8] sm:$0x1] %vm4356, %v4802
  %4819 = vst.msk [vmem:[%s4355 + $0x108] sm:$0x1] %vm4356, %v4803
  %4820 = vst.msk [vmem:[%s4355 + $0x118] sm:$0x1] %vm4356, %v4804
  %v4821 = vld [vmem:[#allocation5] sm:$0xff]
  %v4822 = vld [vmem:[#allocation5 + $0x10] sm:$0xff]
  %v4823 = vld [vmem:[#allocation5 + $0x20] sm:$0xff]
  %v4824 = vld [vmem:[#allocation5 + $0x30] sm:$0xff]
  %v4825 = vld [vmem:[#allocation5 + $0x40] sm:$0xff]
  %v4826 = vld [vmem:[#allocation5 + $0x50] sm:$0xff]
  %v4827 = vld [vmem:[#allocation5 + $0x60] sm:$0xff]
  %v4828 = vld [vmem:[#allocation5 + $0x70] sm:$0xff]
  %v4829 = vld [vmem:[#allocation5 + $0xa0] sm:$0xff]
  %v4830 = vld [vmem:[#allocation5 + $0xb0] sm:$0xff]
  %v4831 = vld [vmem:[#allocation5 + $0xc0] sm:$0xff]
  %v4832 = vld [vmem:[#allocation5 + $0xd0] sm:$0xff]
  %v4833 = vld [vmem:[#allocation5 + $0xe0] sm:$0xff]
  %v4834 = vld [vmem:[#allocation5 + $0xf0] sm:$0xff]
  %v4835 = vld [vmem:[#allocation5 + $0x100] sm:$0xff]
  %v4836 = vld [vmem:[#allocation5 + $0x110] sm:$0xff]
  %4837 = vst.msk [vmem:[#allocation6] sm:$0xff] %vm4233, %v4821
  %4838 = vst.msk [vmem:[#allocation6 + $0x8] sm:$0xff] %vm4233, %v4822
  %4839 = vst.msk [vmem:[#allocation6 + $0x10] sm:$0xff] %vm4233, %v4823
  %4840 = vst.msk [vmem:[#allocation6 + $0x18] sm:$0xff] %vm4233, %v4824
  %4841 = vst.msk [vmem:[#allocation6 + $0x20] sm:$0xff] %vm4233, %v4825
  %4842 = vst.msk [vmem:[#allocation6 + $0x28] sm:$0xff] %vm4233, %v4826
  %4843 = vst.msk [vmem:[#allocation6 + $0x30] sm:$0xff] %vm4233, %v4827
  %4844 = vst.msk [vmem:[#allocation6 + $0x38] sm:$0xff] %vm4233, %v4828
  %4845 = vst.msk [vmem:[#allocation6 + $0x40] sm:$0xff] %vm4233, %v4829
  %4846 = vst.msk [vmem:[#allocation6 + $0x48] sm:$0xff] %vm4233, %v4830
  %4847 = vst.msk [vmem:[#allocation6 + $0x50] sm:$0xff] %vm4233, %v4831
  %4848 = vst.msk [vmem:[#allocation6 + $0x58] sm:$0xff] %vm4233, %v4832
  %4849 = vst.msk [vmem:[#allocation6 + $0x60] sm:$0xff] %vm4233, %v4833
  %4850 = vst.msk [vmem:[#allocation6 + $0x68] sm:$0xff] %vm4233, %v4834
  %4851 = vst.msk [vmem:[#allocation6 + $0x70] sm:$0xff] %vm4233, %v4835
  %4852 = vst.msk [vmem:[#allocation6 + $0x78] sm:$0xff] %vm4233, %v4836
  %v4853 = vld [vmem:[#allocation5 + $0x1] sm:$0xff]
  %v4854 = vld [vmem:[#allocation5 + $0x11] sm:$0xff]
  %v4855 = vld [vmem:[#allocation5 + $0x21] sm:$0xff]
  %v4856 = vld [vmem:[#allocation5 + $0x31] sm:$0xff]
  %v4857 = vld [vmem:[#allocation5 + $0x41] sm:$0xff]
  %v4858 = vld [vmem:[#allocation5 + $0x51] sm:$0xff]
  %v4859 = vld [vmem:[#allocation5 + $0x61] sm:$0xff]
  %v4860 = vld [vmem:[#allocation5 + $0x71] sm:$0xff]
  %v4861 = vld [vmem:[#allocation5 + $0xa1] sm:$0xff]
  %v4862 = vld [vmem:[#allocation5 + $0xb1] sm:$0xff]
  %v4863 = vld [vmem:[#allocation5 + $0xc1] sm:$0xff]
  %v4864 = vld [vmem:[#allocation5 + $0xd1] sm:$0xff]
  %v4865 = vld [vmem:[#allocation5 + $0xe1] sm:$0xff]
  %v4866 = vld [vmem:[#allocation5 + $0xf1] sm:$0xff]
  %v4867 = vld [vmem:[#allocation5 + $0x101] sm:$0xff]
  %v4868 = vld [vmem:[#allocation5 + $0x111] sm:$0xff]
  %4885 = vrot.lane.b32.xlu0 %v4853, 8
  %v4886 = vpop.permute.xlu0 %4885
  %4887 = vrot.lane.b32.xlu0 %v4854, 8
  %v4888 = vpop.permute.xlu0 %4887
  %4889 = vrot.lane.b32.xlu0 %v4855, 8
  %v4890 = vpop.permute.xlu0 %4889
  %4891 = vrot.lane.b32.xlu0 %v4856, 8
  %v4892 = vpop.permute.xlu0 %4891
  %4893 = vrot.lane.b32.xlu0 %v4857, 8
  %v4894 = vpop.permute.xlu0 %4893
  %4895 = vrot.lane.b32.xlu0 %v4858, 8
  %v4896 = vpop.permute.xlu0 %4895
  %4897 = vrot.lane.b32.xlu0 %v4859, 8
  %v4898 = vpop.permute.xlu0 %4897
  %4899 = vrot.lane.b32.xlu0 %v4860, 8
  %v4900 = vpop.permute.xlu0 %4899
  %4901 = vrot.lane.b32.xlu0 %v4861, 8
  %v4902 = vpop.permute.xlu0 %4901
  %4903 = vrot.lane.b32.xlu0 %v4862, 8
  %v4904 = vpop.permute.xlu0 %4903
  %4905 = vrot.lane.b32.xlu0 %v4863, 8
  %v4906 = vpop.permute.xlu0 %4905
  %4907 = vrot.lane.b32.xlu0 %v4864, 8
  %v4908 = vpop.permute.xlu0 %4907
  %4909 = vrot.lane.b32.xlu0 %v4865, 8
  %v4910 = vpop.permute.xlu0 %4909
  %4911 = vrot.lane.b32.xlu0 %v4866, 8
  %v4912 = vpop.permute.xlu0 %4911
  %4913 = vrot.lane.b32.xlu0 %v4867, 8
  %v4914 = vpop.permute.xlu0 %4913
  %4915 = vrot.lane.b32.xlu0 %v4868, 8
  %v4916 = vpop.permute.xlu0 %4915
  %vm4933 = vcmask 130112
  %4934 = vst.msk [vmem:[#allocation6] sm:$0xff] %vm4933, %v4886
  %4935 = vst.msk [vmem:[#allocation6 + $0x8] sm:$0xff] %vm4933, %v4888
  %4936 = vst.msk [vmem:[#allocation6 + $0x10] sm:$0xff] %vm4933, %v4890
  %4937 = vst.msk [vmem:[#allocation6 + $0x18] sm:$0xff] %vm4933, %v4892
  %4938 = vst.msk [vmem:[#allocation6 + $0x20] sm:$0xff] %vm4933, %v4894
  %4939 = vst.msk [vmem:[#allocation6 + $0x28] sm:$0xff] %vm4933, %v4896
  %4940 = vst.msk [vmem:[#allocation6 + $0x30] sm:$0xff] %vm4933, %v4898
  %4941 = vst.msk [vmem:[#allocation6 + $0x38] sm:$0xff] %vm4933, %v4900
  %4942 = vst.msk [vmem:[#allocation6 + $0x40] sm:$0xff] %vm4933, %v4902
  %4943 = vst.msk [vmem:[#allocation6 + $0x48] sm:$0xff] %vm4933, %v4904
  %4944 = vst.msk [vmem:[#allocation6 + $0x50] sm:$0xff] %vm4933, %v4906
  %4945 = vst.msk [vmem:[#allocation6 + $0x58] sm:$0xff] %vm4933, %v4908
  %4946 = vst.msk [vmem:[#allocation6 + $0x60] sm:$0xff] %vm4933, %v4910
  %4947 = vst.msk [vmem:[#allocation6 + $0x68] sm:$0xff] %vm4933, %v4912
  %4948 = vst.msk [vmem:[#allocation6 + $0x70] sm:$0xff] %vm4933, %v4914
  %4949 = vst.msk [vmem:[#allocation6 + $0x78] sm:$0xff] %vm4933, %v4916
  %v4950 = vld [vmem:[#allocation5 + $0x2] sm:$0xff]
  %v4951 = vld [vmem:[#allocation5 + $0x12] sm:$0xff]
  %v4952 = vld [vmem:[#allocation5 + $0x22] sm:$0xff]
  %v4953 = vld [vmem:[#allocation5 + $0x32] sm:$0xff]
  %v4954 = vld [vmem:[#allocation5 + $0x42] sm:$0xff]
  %v4955 = vld [vmem:[#allocation5 + $0x52] sm:$0xff]
  %v4956 = vld [vmem:[#allocation5 + $0x62] sm:$0xff]
  %v4957 = vld [vmem:[#allocation5 + $0x72] sm:$0xff]
  %v4958 = vld [vmem:[#allocation5 + $0xa2] sm:$0xff]
  %v4959 = vld [vmem:[#allocation5 + $0xb2] sm:$0xff]
  %v4960 = vld [vmem:[#allocation5 + $0xc2] sm:$0xff]
  %v4961 = vld [vmem:[#allocation5 + $0xd2] sm:$0xff]
  %v4962 = vld [vmem:[#allocation5 + $0xe2] sm:$0xff]
  %v4963 = vld [vmem:[#allocation5 + $0xf2] sm:$0xff]
  %v4964 = vld [vmem:[#allocation5 + $0x102] sm:$0xff]
  %v4965 = vld [vmem:[#allocation5 + $0x112] sm:$0xff]
  %4982 = vrot.lane.b32.xlu0 %v4950, 16
  %v4983 = vpop.permute.xlu0 %4982
  %4984 = vrot.lane.b32.xlu0 %v4951, 16
  %v4985 = vpop.permute.xlu0 %4984
  %4986 = vrot.lane.b32.xlu0 %v4952, 16
  %v4987 = vpop.permute.xlu0 %4986
  %4988 = vrot.lane.b32.xlu0 %v4953, 16
  %v4989 = vpop.permute.xlu0 %4988
  %4990 = vrot.lane.b32.xlu0 %v4954, 16
  %v4991 = vpop.permute.xlu0 %4990
  %4992 = vrot.lane.b32.xlu0 %v4955, 16
  %v4993 = vpop.permute.xlu0 %4992
  %4994 = vrot.lane.b32.xlu0 %v4956, 16
  %v4995 = vpop.permute.xlu0 %4994
  %4996 = vrot.lane.b32.xlu0 %v4957, 16
  %v4997 = vpop.permute.xlu0 %4996
  %4998 = vrot.lane.b32.xlu0 %v4958, 16
  %v4999 = vpop.permute.xlu0 %4998
  %5000 = vrot.lane.b32.xlu0 %v4959, 16
  %v5001 = vpop.permute.xlu0 %5000
  %5002 = vrot.lane.b32.xlu0 %v4960, 16
  %v5003 = vpop.permute.xlu0 %5002
  %5004 = vrot.lane.b32.xlu0 %v4961, 16
  %v5005 = vpop.permute.xlu0 %5004
  %5006 = vrot.lane.b32.xlu0 %v4962, 16
  %v5007 = vpop.permute.xlu0 %5006
  %5008 = vrot.lane.b32.xlu0 %v4963, 16
  %v5009 = vpop.permute.xlu0 %5008
  %5010 = vrot.lane.b32.xlu0 %v4964, 16
  %v5011 = vpop.permute.xlu0 %5010
  %5012 = vrot.lane.b32.xlu0 %v4965, 16
  %v5013 = vpop.permute.xlu0 %5012
  %vm5030 = vcmask 195712
  %5031 = vst.msk [vmem:[#allocation6] sm:$0xff] %vm5030, %v4983
  %5032 = vst.msk [vmem:[#allocation6 + $0x8] sm:$0xff] %vm5030, %v4985
  %5033 = vst.msk [vmem:[#allocation6 + $0x10] sm:$0xff] %vm5030, %v4987
  %5034 = vst.msk [vmem:[#allocation6 + $0x18] sm:$0xff] %vm5030, %v4989
  %5035 = vst.msk [vmem:[#allocation6 + $0x20] sm:$0xff] %vm5030, %v4991
  %5036 = vst.msk [vmem:[#allocation6 + $0x28] sm:$0xff] %vm5030, %v4993
  %5037 = vst.msk [vmem:[#allocation6 + $0x30] sm:$0xff] %vm5030, %v4995
  %5038 = vst.msk [vmem:[#allocation6 + $0x38] sm:$0xff] %vm5030, %v4997
  %5039 = vst.msk [vmem:[#allocation6 + $0x40] sm:$0xff] %vm5030, %v4999
  %5040 = vst.msk [vmem:[#allocation6 + $0x48] sm:$0xff] %vm5030, %v5001
  %5041 = vst.msk [vmem:[#allocation6 + $0x50] sm:$0xff] %vm5030, %v5003
  %5042 = vst.msk [vmem:[#allocation6 + $0x58] sm:$0xff] %vm5030, %v5005
  %5043 = vst.msk [vmem:[#allocation6 + $0x60] sm:$0xff] %vm5030, %v5007
  %5044 = vst.msk [vmem:[#allocation6 + $0x68] sm:$0xff] %vm5030, %v5009
  %5045 = vst.msk [vmem:[#allocation6 + $0x70] sm:$0xff] %vm5030, %v5011
  %5046 = vst.msk [vmem:[#allocation6 + $0x78] sm:$0xff] %vm5030, %v5013
  %v5047 = vld [vmem:[%s4355] sm:$0xff]
  %v5048 = vld [vmem:[%s4355 + $0x10] sm:$0xff]
  %v5049 = vld [vmem:[%s4355 + $0x20] sm:$0xff]
  %v5050 = vld [vmem:[%s4355 + $0x30] sm:$0xff]
  %v5051 = vld [vmem:[%s4355 + $0x40] sm:$0xff]
  %v5052 = vld [vmem:[%s4355 + $0x50] sm:$0xff]
  %v5053 = vld [vmem:[%s4355 + $0x60] sm:$0xff]
  %v5054 = vld [vmem:[%s4355 + $0x70] sm:$0xff]
  %v5055 = vld [vmem:[%s4355 + $0xa0] sm:$0xff]
  %v5056 = vld [vmem:[%s4355 + $0xb0] sm:$0xff]
  %v5057 = vld [vmem:[%s4355 + $0xc0] sm:$0xff]
  %v5058 = vld [vmem:[%s4355 + $0xd0] sm:$0xff]
  %v5059 = vld [vmem:[%s4355 + $0xe0] sm:$0xff]
  %v5060 = vld [vmem:[%s4355 + $0xf0] sm:$0xff]
  %v5061 = vld [vmem:[%s4355 + $0x100] sm:$0xff]
  %v5062 = vld [vmem:[%s4355 + $0x110] sm:$0xff]
  %5079 = vrot.lane.b32.xlu0 %v5047, 24
  %v5080 = vpop.permute.xlu0 %5079
  %5081 = vrot.lane.b32.xlu0 %v5048, 24
  %v5082 = vpop.permute.xlu0 %5081
  %5083 = vrot.lane.b32.xlu0 %v5049, 24
  %v5084 = vpop.permute.xlu0 %5083
  %5085 = vrot.lane.b32.xlu0 %v5050, 24
  %v5086 = vpop.permute.xlu0 %5085
  %5087 = vrot.lane.b32.xlu0 %v5051, 24
  %v5088 = vpop.permute.xlu0 %5087
  %5089 = vrot.lane.b32.xlu0 %v5052, 24
  %v5090 = vpop.permute.xlu0 %5089
  %5091 = vrot.lane.b32.xlu0 %v5053, 24
  %v5092 = vpop.permute.xlu0 %5091
  %5093 = vrot.lane.b32.xlu0 %v5054, 24
  %v5094 = vpop.permute.xlu0 %5093
  %5095 = vrot.lane.b32.xlu0 %v5055, 24
  %v5096 = vpop.permute.xlu0 %5095
  %5097 = vrot.lane.b32.xlu0 %v5056, 24
  %v5098 = vpop.permute.xlu0 %5097
  %5099 = vrot.lane.b32.xlu0 %v5057, 24
  %v5100 = vpop.permute.xlu0 %5099
  %5101 = vrot.lane.b32.xlu0 %v5058, 24
  %v5102 = vpop.permute.xlu0 %5101
  %5103 = vrot.lane.b32.xlu0 %v5059, 24
  %v5104 = vpop.permute.xlu0 %5103
  %5105 = vrot.lane.b32.xlu0 %v5060, 24
  %v5106 = vpop.permute.xlu0 %5105
  %5107 = vrot.lane.b32.xlu0 %v5061, 24
  %v5108 = vpop.permute.xlu0 %5107
  %5109 = vrot.lane.b32.xlu0 %v5062, 24
  %v5110 = vpop.permute.xlu0 %5109
  %vm5127 = vcmask 261312
  %5128 = vst.msk [vmem:[#allocation6] sm:$0xff] %vm5127, %v5080
  %5129 = vst.msk [vmem:[#allocation6 + $0x8] sm:$0xff] %vm5127, %v5082
  %5130 = vst.msk [vmem:[#allocation6 + $0x10] sm:$0xff] %vm5127, %v5084
  %5131 = vst.msk [vmem:[#allocation6 + $0x18] sm:$0xff] %vm5127, %v5086
  %5132 = vst.msk [vmem:[#allocation6 + $0x20] sm:$0xff] %vm5127, %v5088
  %5133 = vst.msk [vmem:[#allocation6 + $0x28] sm:$0xff] %vm5127, %v5090
  %5134 = vst.msk [vmem:[#allocation6 + $0x30] sm:$0xff] %vm5127, %v5092
  %5135 = vst.msk [vmem:[#allocation6 + $0x38] sm:$0xff] %vm5127, %v5094
  %5136 = vst.msk [vmem:[#allocation6 + $0x40] sm:$0xff] %vm5127, %v5096
  %5137 = vst.msk [vmem:[#allocation6 + $0x48] sm:$0xff] %vm5127, %v5098
  %5138 = vst.msk [vmem:[#allocation6 + $0x50] sm:$0xff] %vm5127, %v5100
  %5139 = vst.msk [vmem:[#allocation6 + $0x58] sm:$0xff] %vm5127, %v5102
  %5140 = vst.msk [vmem:[#allocation6 + $0x60] sm:$0xff] %vm5127, %v5104
  %5141 = vst.msk [vmem:[#allocation6 + $0x68] sm:$0xff] %vm5127, %v5106
  %5142 = vst.msk [vmem:[#allocation6 + $0x70] sm:$0xff] %vm5127, %v5108
  %5143 = vst.msk [vmem:[#allocation6 + $0x78] sm:$0xff] %vm5127, %v5110
  %v5144 = vld [vmem:[%s4355 + $0x1] sm:$0xff]
  %v5145 = vld [vmem:[%s4355 + $0x11] sm:$0xff]
  %v5146 = vld [vmem:[%s4355 + $0x21] sm:$0xff]
  %v5147 = vld [vmem:[%s4355 + $0x31] sm:$0xff]
  %v5148 = vld [vmem:[%s4355 + $0x41] sm:$0xff]
  %v5149 = vld [vmem:[%s4355 + $0x51] sm:$0xff]
  %v5150 = vld [vmem:[%s4355 + $0x61] sm:$0xff]
  %v5151 = vld [vmem:[%s4355 + $0x71] sm:$0xff]
  %v5152 = vld [vmem:[%s4355 + $0xa1] sm:$0xff]
  %v5153 = vld [vmem:[%s4355 + $0xb1] sm:$0xff]
  %v5154 = vld [vmem:[%s4355 + $0xc1] sm:$0xff]
  %v5155 = vld [vmem:[%s4355 + $0xd1] sm:$0xff]
  %v5156 = vld [vmem:[%s4355 + $0xe1] sm:$0xff]
  %v5157 = vld [vmem:[%s4355 + $0xf1] sm:$0xff]
  %v5158 = vld [vmem:[%s4355 + $0x101] sm:$0xff]
  %v5159 = vld [vmem:[%s4355 + $0x111] sm:$0xff]
  %5176 = vrot.lane.b32.xlu0 %v5144, 32
  %v5177 = vpop.permute.xlu0 %5176
  %5178 = vrot.lane.b32.xlu0 %v5145, 32
  %v5179 = vpop.permute.xlu0 %5178
  %5180 = vrot.lane.b32.xlu0 %v5146, 32
  %v5181 = vpop.permute.xlu0 %5180
  %5182 = vrot.lane.b32.xlu0 %v5147, 32
  %v5183 = vpop.permute.xlu0 %5182
  %5184 = vrot.lane.b32.xlu0 %v5148, 32
  %v5185 = vpop.permute.xlu0 %5184
  %5186 = vrot.lane.b32.xlu0 %v5149, 32
  %v5187 = vpop.permute.xlu0 %5186
  %5188 = vrot.lane.b32.xlu0 %v5150, 32
  %v5189 = vpop.permute.xlu0 %5188
  %5190 = vrot.lane.b32.xlu0 %v5151, 32
  %v5191 = vpop.permute.xlu0 %5190
  %5192 = vrot.lane.b32.xlu0 %v5152, 32
  %v5193 = vpop.permute.xlu0 %5192
  %5194 = vrot.lane.b32.xlu0 %v5153, 32
  %v5195 = vpop.permute.xlu0 %5194
  %5196 = vrot.lane.b32.xlu0 %v5154, 32
  %v5197 = vpop.permute.xlu0 %5196
  %5198 = vrot.lane.b32.xlu0 %v5155, 32
  %v5199 = vpop.permute.xlu0 %5198
  %5200 = vrot.lane.b32.xlu0 %v5156, 32
  %v5201 = vpop.permute.xlu0 %5200
  %5202 = vrot.lane.b32.xlu0 %v5157, 32
  %v5203 = vpop.permute.xlu0 %5202
  %5204 = vrot.lane.b32.xlu0 %v5158, 32
  %v5205 = vpop.permute.xlu0 %5204
  %5206 = vrot.lane.b32.xlu0 %v5159, 32
  %v5207 = vpop.permute.xlu0 %5206
  %vm5224 = vcmask 326912
  %5225 = vst.msk [vmem:[#allocation6] sm:$0xff] %vm5224, %v5177
  %5226 = vst.msk [vmem:[#allocation6 + $0x8] sm:$0xff] %vm5224, %v5179
  %5227 = vst.msk [vmem:[#allocation6 + $0x10] sm:$0xff] %vm5224, %v5181
  %5228 = vst.msk [vmem:[#allocation6 + $0x18] sm:$0xff] %vm5224, %v5183
  %5229 = vst.msk [vmem:[#allocation6 + $0x20] sm:$0xff] %vm5224, %v5185
  %5230 = vst.msk [vmem:[#allocation6 + $0x28] sm:$0xff] %vm5224, %v5187
  %5231 = vst.msk [vmem:[#allocation6 + $0x30] sm:$0xff] %vm5224, %v5189
  %5232 = vst.msk [vmem:[#allocation6 + $0x38] sm:$0xff] %vm5224, %v5191
  %5233 = vst.msk [vmem:[#allocation6 + $0x40] sm:$0xff] %vm5224, %v5193
  %5234 = vst.msk [vmem:[#allocation6 + $0x48] sm:$0xff] %vm5224, %v5195
  %5235 = vst.msk [vmem:[#allocation6 + $0x50] sm:$0xff] %vm5224, %v5197
  %5236 = vst.msk [vmem:[#allocation6 + $0x58] sm:$0xff] %vm5224, %v5199
  %5237 = vst.msk [vmem:[#allocation6 + $0x60] sm:$0xff] %vm5224, %v5201
  %5238 = vst.msk [vmem:[#allocation6 + $0x68] sm:$0xff] %vm5224, %v5203
  %5239 = vst.msk [vmem:[#allocation6 + $0x70] sm:$0xff] %vm5224, %v5205
  %5240 = vst.msk [vmem:[#allocation6 + $0x78] sm:$0xff] %vm5224, %v5207
  %v5241 = vld [vmem:[%s4355 + $0x2] sm:$0xff]
  %v5242 = vld [vmem:[%s4355 + $0x12] sm:$0xff]
  %v5243 = vld [vmem:[%s4355 + $0x22] sm:$0xff]
  %v5244 = vld [vmem:[%s4355 + $0x32] sm:$0xff]
  %v5245 = vld [vmem:[%s4355 + $0x42] sm:$0xff]
  %v5246 = vld [vmem:[%s4355 + $0x52] sm:$0xff]
  %v5247 = vld [vmem:[%s4355 + $0x62] sm:$0xff]
  %v5248 = vld [vmem:[%s4355 + $0x72] sm:$0xff]
  %v5249 = vld [vmem:[%s4355 + $0xa2] sm:$0xff]
  %v5250 = vld [vmem:[%s4355 + $0xb2] sm:$0xff]
  %v5251 = vld [vmem:[%s4355 + $0xc2] sm:$0xff]
  %v5252 = vld [vmem:[%s4355 + $0xd2] sm:$0xff]
  %v5253 = vld [vmem:[%s4355 + $0xe2] sm:$0xff]
  %v5254 = vld [vmem:[%s4355 + $0xf2] sm:$0xff]
  %v5255 = vld [vmem:[%s4355 + $0x102] sm:$0xff]
  %v5256 = vld [vmem:[%s4355 + $0x112] sm:$0xff]
  %5273 = vrot.lane.b32.xlu0 %v5241, 40
  %v5274 = vpop.permute.xlu0 %5273
  %5275 = vrot.lane.b32.xlu0 %v5242, 40
  %v5276 = vpop.permute.xlu0 %5275
  %5277 = vrot.lane.b32.xlu0 %v5243, 40
  %v5278 = vpop.permute.xlu0 %5277
  %5279 = vrot.lane.b32.xlu0 %v5244, 40
  %v5280 = vpop.permute.xlu0 %5279
  %5281 = vrot.lane.b32.xlu0 %v5245, 40
  %v5282 = vpop.permute.xlu0 %5281
  %5283 = vrot.lane.b32.xlu0 %v5246, 40
  %v5284 = vpop.permute.xlu0 %5283
  %5285 = vrot.lane.b32.xlu0 %v5247, 40
  %v5286 = vpop.permute.xlu0 %5285
  %5287 = vrot.lane.b32.xlu0 %v5248, 40
  %v5288 = vpop.permute.xlu0 %5287
  %5289 = vrot.lane.b32.xlu0 %v5249, 40
  %v5290 = vpop.permute.xlu0 %5289
  %5291 = vrot.lane.b32.xlu0 %v5250, 40
  %v5292 = vpop.permute.xlu0 %5291
  %5293 = vrot.lane.b32.xlu0 %v5251, 40
  %v5294 = vpop.permute.xlu0 %5293
  %5295 = vrot.lane.b32.xlu0 %v5252, 40
  %v5296 = vpop.permute.xlu0 %5295
  %5297 = vrot.lane.b32.xlu0 %v5253, 40
  %v5298 = vpop.permute.xlu0 %5297
  %5299 = vrot.lane.b32.xlu0 %v5254, 40
  %v5300 = vpop.permute.xlu0 %5299
  %5301 = vrot.lane.b32.xlu0 %v5255, 40
  %v5302 = vpop.permute.xlu0 %5301
  %5303 = vrot.lane.b32.xlu0 %v5256, 40
  %v5304 = vpop.permute.xlu0 %5303
  %vm5321 = vcmask 392512
  %5322 = vst.msk [vmem:[#allocation6] sm:$0xff] %vm5321, %v5274
  %5323 = vst.msk [vmem:[#allocation6 + $0x8] sm:$0xff] %vm5321, %v5276
  %5324 = vst.msk [vmem:[#allocation6 + $0x10] sm:$0xff] %vm5321, %v5278
  %5325 = vst.msk [vmem:[#allocation6 + $0x18] sm:$0xff] %vm5321, %v5280
  %5326 = vst.msk [vmem:[#allocation6 + $0x20] sm:$0xff] %vm5321, %v5282
  %5327 = vst.msk [vmem:[#allocation6 + $0x28] sm:$0xff] %vm5321, %v5284
  %5328 = vst.msk [vmem:[#allocation6 + $0x30] sm:$0xff] %vm5321, %v5286
  %5329 = vst.msk [vmem:[#allocation6 + $0x38] sm:$0xff] %vm5321, %v5288
  %5330 = vst.msk [vmem:[#allocation6 + $0x40] sm:$0xff] %vm5321, %v5290
  %5331 = vst.msk [vmem:[#allocation6 + $0x48] sm:$0xff] %vm5321, %v5292
  %5332 = vst.msk [vmem:[#allocation6 + $0x50] sm:$0xff] %vm5321, %v5294
  %5333 = vst.msk [vmem:[#allocation6 + $0x58] sm:$0xff] %vm5321, %v5296
  %5334 = vst.msk [vmem:[#allocation6 + $0x60] sm:$0xff] %vm5321, %v5298
  %5335 = vst.msk [vmem:[#allocation6 + $0x68] sm:$0xff] %vm5321, %v5300
  %5336 = vst.msk [vmem:[#allocation6 + $0x70] sm:$0xff] %vm5321, %v5302
  %5337 = vst.msk [vmem:[#allocation6 + $0x78] sm:$0xff] %vm5321, %v5304
  %s5338 = scalar_lea.vmem [#allocation5], 32
  %v5339 = vld [vmem:[%s5338] sm:$0xff]
  %v5340 = vld [vmem:[%s5338 + $0x10] sm:$0xff]
  %v5341 = vld [vmem:[%s5338 + $0x20] sm:$0xff]
  %v5342 = vld [vmem:[%s5338 + $0x30] sm:$0xff]
  %v5343 = vld [vmem:[%s5338 + $0x40] sm:$0xff]
  %v5344 = vld [vmem:[%s5338 + $0x50] sm:$0xff]
  %v5345 = vld [vmem:[%s5338 + $0x60] sm:$0xff]
  %v5346 = vld [vmem:[%s5338 + $0x70] sm:$0xff]
  %v5347 = vld [vmem:[%s5338 + $0xa0] sm:$0xff]
  %v5348 = vld [vmem:[%s5338 + $0xb0] sm:$0xff]
  %v5349 = vld [vmem:[%s5338 + $0xc0] sm:$0xff]
  %v5350 = vld [vmem:[%s5338 + $0xd0] sm:$0xff]
  %v5351 = vld [vmem:[%s5338 + $0xe0] sm:$0xff]
  %v5352 = vld [vmem:[%s5338 + $0xf0] sm:$0xff]
  %v5353 = vld [vmem:[%s5338 + $0x100] sm:$0xff]
  %v5354 = vld [vmem:[%s5338 + $0x110] sm:$0xff]
  %5371 = vrot.lane.b32.xlu0 %v5339, 48
  %v5372 = vpop.permute.xlu0 %5371
  %5373 = vrot.lane.b32.xlu0 %v5340, 48
  %v5374 = vpop.permute.xlu0 %5373
  %5375 = vrot.lane.b32.xlu0 %v5341, 48
  %v5376 = vpop.permute.xlu0 %5375
  %5377 = vrot.lane.b32.xlu0 %v5342, 48
  %v5378 = vpop.permute.xlu0 %5377
  %5379 = vrot.lane.b32.xlu0 %v5343, 48
  %v5380 = vpop.permute.xlu0 %5379
  %5381 = vrot.lane.b32.xlu0 %v5344, 48
  %v5382 = vpop.permute.xlu0 %5381
  %5383 = vrot.lane.b32.xlu0 %v5345, 48
  %v5384 = vpop.permute.xlu0 %5383
  %5385 = vrot.lane.b32.xlu0 %v5346, 48
  %v5386 = vpop.permute.xlu0 %5385
  %5387 = vrot.lane.b32.xlu0 %v5347, 48
  %v5388 = vpop.permute.xlu0 %5387
  %5389 = vrot.lane.b32.xlu0 %v5348, 48
  %v5390 = vpop.permute.xlu0 %5389
  %5391 = vrot.lane.b32.xlu0 %v5349, 48
  %v5392 = vpop.permute.xlu0 %5391
  %5393 = vrot.lane.b32.xlu0 %v5350, 48
  %v5394 = vpop.permute.xlu0 %5393
  %5395 = vrot.lane.b32.xlu0 %v5351, 48
  %v5396 = vpop.permute.xlu0 %5395
  %5397 = vrot.lane.b32.xlu0 %v5352, 48
  %v5398 = vpop.permute.xlu0 %5397
  %5399 = vrot.lane.b32.xlu0 %v5353, 48
  %v5400 = vpop.permute.xlu0 %5399
  %5401 = vrot.lane.b32.xlu0 %v5354, 48
  %v5402 = vpop.permute.xlu0 %5401
  %vm5419 = vcmask 458112
  %5420 = vst.msk [vmem:[#allocation6] sm:$0xff] %vm5419, %v5372
  %5421 = vst.msk [vmem:[#allocation6 + $0x8] sm:$0xff] %vm5419, %v5374
  %5422 = vst.msk [vmem:[#allocation6 + $0x10] sm:$0xff] %vm5419, %v5376
  %5423 = vst.msk [vmem:[#allocation6 + $0x18] sm:$0xff] %vm5419, %v5378
  %5424 = vst.msk [vmem:[#allocation6 + $0x20] sm:$0xff] %vm5419, %v5380
  %5425 = vst.msk [vmem:[#allocation6 + $0x28] sm:$0xff] %vm5419, %v5382
  %5426 = vst.msk [vmem:[#allocation6 + $0x30] sm:$0xff] %vm5419, %v5384
  %5427 = vst.msk [vmem:[#allocation6 + $0x38] sm:$0xff] %vm5419, %v5386
  %5428 = vst.msk [vmem:[#allocation6 + $0x40] sm:$0xff] %vm5419, %v5388
  %5429 = vst.msk [vmem:[#allocation6 + $0x48] sm:$0xff] %vm5419, %v5390
  %5430 = vst.msk [vmem:[#allocation6 + $0x50] sm:$0xff] %vm5419, %v5392
  %5431 = vst.msk [vmem:[#allocation6 + $0x58] sm:$0xff] %vm5419, %v5394
  %5432 = vst.msk [vmem:[#allocation6 + $0x60] sm:$0xff] %vm5419, %v5396
  %5433 = vst.msk [vmem:[#allocation6 + $0x68] sm:$0xff] %vm5419, %v5398
  %5434 = vst.msk [vmem:[#allocation6 + $0x70] sm:$0xff] %vm5419, %v5400
  %5435 = vst.msk [vmem:[#allocation6 + $0x78] sm:$0xff] %vm5419, %v5402
  %v5436 = vld [vmem:[%s5338 + $0x1] sm:$0xff]
  %v5437 = vld [vmem:[%s5338 + $0x11] sm:$0xff]
  %v5438 = vld [vmem:[%s5338 + $0x21] sm:$0xff]
  %v5439 = vld [vmem:[%s5338 + $0x31] sm:$0xff]
  %v5440 = vld [vmem:[%s5338 + $0x41] sm:$0xff]
  %v5441 = vld [vmem:[%s5338 + $0x51] sm:$0xff]
  %v5442 = vld [vmem:[%s5338 + $0x61] sm:$0xff]
  %v5443 = vld [vmem:[%s5338 + $0x71] sm:$0xff]
  %v5444 = vld [vmem:[%s5338 + $0xa1] sm:$0xff]
  %v5445 = vld [vmem:[%s5338 + $0xb1] sm:$0xff]
  %v5446 = vld [vmem:[%s5338 + $0xc1] sm:$0xff]
  %v5447 = vld [vmem:[%s5338 + $0xd1] sm:$0xff]
  %v5448 = vld [vmem:[%s5338 + $0xe1] sm:$0xff]
  %v5449 = vld [vmem:[%s5338 + $0xf1] sm:$0xff]
  %v5450 = vld [vmem:[%s5338 + $0x101] sm:$0xff]
  %v5451 = vld [vmem:[%s5338 + $0x111] sm:$0xff]
  %5468 = vrot.lane.b32.xlu0 %v5436, 56
  %v5469 = vpop.permute.xlu0 %5468
  %5470 = vrot.lane.b32.xlu0 %v5437, 56
  %v5471 = vpop.permute.xlu0 %5470
  %5472 = vrot.lane.b32.xlu0 %v5438, 56
  %v5473 = vpop.permute.xlu0 %5472
  %5474 = vrot.lane.b32.xlu0 %v5439, 56
  %v5475 = vpop.permute.xlu0 %5474
  %5476 = vrot.lane.b32.xlu0 %v5440, 56
  %v5477 = vpop.permute.xlu0 %5476
  %5478 = vrot.lane.b32.xlu0 %v5441, 56
  %v5479 = vpop.permute.xlu0 %5478
  %5480 = vrot.lane.b32.xlu0 %v5442, 56
  %v5481 = vpop.permute.xlu0 %5480
  %5482 = vrot.lane.b32.xlu0 %v5443, 56
  %v5483 = vpop.permute.xlu0 %5482
  %5484 = vrot.lane.b32.xlu0 %v5444, 56
  %v5485 = vpop.permute.xlu0 %5484
  %5486 = vrot.lane.b32.xlu0 %v5445, 56
  %v5487 = vpop.permute.xlu0 %5486
  %5488 = vrot.lane.b32.xlu0 %v5446, 56
  %v5489 = vpop.permute.xlu0 %5488
  %5490 = vrot.lane.b32.xlu0 %v5447, 56
  %v5491 = vpop.permute.xlu0 %5490
  %5492 = vrot.lane.b32.xlu0 %v5448, 56
  %v5493 = vpop.permute.xlu0 %5492
  %5494 = vrot.lane.b32.xlu0 %v5449, 56
  %v5495 = vpop.permute.xlu0 %5494
  %5496 = vrot.lane.b32.xlu0 %v5450, 56
  %v5497 = vpop.permute.xlu0 %5496
  %5498 = vrot.lane.b32.xlu0 %v5451, 56
  %v5499 = vpop.permute.xlu0 %5498
  %vm5516 = vcmask 523712
  %5517 = vst.msk [vmem:[#allocation6] sm:$0xff] %vm5516, %v5469
  %5518 = vst.msk [vmem:[#allocation6 + $0x8] sm:$0xff] %vm5516, %v5471
  %5519 = vst.msk [vmem:[#allocation6 + $0x10] sm:$0xff] %vm5516, %v5473
  %5520 = vst.msk [vmem:[#allocation6 + $0x18] sm:$0xff] %vm5516, %v5475
  %5521 = vst.msk [vmem:[#allocation6 + $0x20] sm:$0xff] %vm5516, %v5477
  %5522 = vst.msk [vmem:[#allocation6 + $0x28] sm:$0xff] %vm5516, %v5479
  %5523 = vst.msk [vmem:[#allocation6 + $0x30] sm:$0xff] %vm5516, %v5481
  %5524 = vst.msk [vmem:[#allocation6 + $0x38] sm:$0xff] %vm5516, %v5483
  %5525 = vst.msk [vmem:[#allocation6 + $0x40] sm:$0xff] %vm5516, %v5485
  %5526 = vst.msk [vmem:[#allocation6 + $0x48] sm:$0xff] %vm5516, %v5487
  %5527 = vst.msk [vmem:[#allocation6 + $0x50] sm:$0xff] %vm5516, %v5489
  %5528 = vst.msk [vmem:[#allocation6 + $0x58] sm:$0xff] %vm5516, %v5491
  %5529 = vst.msk [vmem:[#allocation6 + $0x60] sm:$0xff] %vm5516, %v5493
  %5530 = vst.msk [vmem:[#allocation6 + $0x68] sm:$0xff] %vm5516, %v5495
  %5531 = vst.msk [vmem:[#allocation6 + $0x70] sm:$0xff] %vm5516, %v5497
  %5532 = vst.msk [vmem:[#allocation6 + $0x78] sm:$0xff] %vm5516, %v5499
  %v5533 = vld [vmem:[%s5338 + $0x2] sm:$0xff]
  %v5534 = vld [vmem:[%s5338 + $0x12] sm:$0xff]
  %v5535 = vld [vmem:[%s5338 + $0x22] sm:$0xff]
  %v5536 = vld [vmem:[%s5338 + $0x32] sm:$0xff]
  %v5537 = vld [vmem:[%s5338 + $0x42] sm:$0xff]
  %v5538 = vld [vmem:[%s5338 + $0x52] sm:$0xff]
  %v5539 = vld [vmem:[%s5338 + $0x62] sm:$0xff]
  %v5540 = vld [vmem:[%s5338 + $0x72] sm:$0xff]
  %v5541 = vld [vmem:[%s5338 + $0xa2] sm:$0xff]
  %v5542 = vld [vmem:[%s5338 + $0xb2] sm:$0xff]
  %v5543 = vld [vmem:[%s5338 + $0xc2] sm:$0xff]
  %v5544 = vld [vmem:[%s5338 + $0xd2] sm:$0xff]
  %v5545 = vld [vmem:[%s5338 + $0xe2] sm:$0xff]
  %v5546 = vld [vmem:[%s5338 + $0xf2] sm:$0xff]
  %v5547 = vld [vmem:[%s5338 + $0x102] sm:$0xff]
  %v5548 = vld [vmem:[%s5338 + $0x112] sm:$0xff]
  %5565 = vrot.lane.b32.xlu0 %v5533, 64
  %v5566 = vpop.permute.xlu0 %5565
  %5567 = vrot.lane.b32.xlu0 %v5534, 64
  %v5568 = vpop.permute.xlu0 %5567
  %5569 = vrot.lane.b32.xlu0 %v5535, 64
  %v5570 = vpop.permute.xlu0 %5569
  %5571 = vrot.lane.b32.xlu0 %v5536, 64
  %v5572 = vpop.permute.xlu0 %5571
  %5573 = vrot.lane.b32.xlu0 %v5537, 64
  %v5574 = vpop.permute.xlu0 %5573
  %5575 = vrot.lane.b32.xlu0 %v5538, 64
  %v5576 = vpop.permute.xlu0 %5575
  %5577 = vrot.lane.b32.xlu0 %v5539, 64
  %v5578 = vpop.permute.xlu0 %5577
  %5579 = vrot.lane.b32.xlu0 %v5540, 64
  %v5580 = vpop.permute.xlu0 %5579
  %5581 = vrot.lane.b32.xlu0 %v5541, 64
  %v5582 = vpop.permute.xlu0 %5581
  %5583 = vrot.lane.b32.xlu0 %v5542, 64
  %v5584 = vpop.permute.xlu0 %5583
  %5585 = vrot.lane.b32.xlu0 %v5543, 64
  %v5586 = vpop.permute.xlu0 %5585
  %5587 = vrot.lane.b32.xlu0 %v5544, 64
  %v5588 = vpop.permute.xlu0 %5587
  %5589 = vrot.lane.b32.xlu0 %v5545, 64
  %v5590 = vpop.permute.xlu0 %5589
  %5591 = vrot.lane.b32.xlu0 %v5546, 64
  %v5592 = vpop.permute.xlu0 %5591
  %5593 = vrot.lane.b32.xlu0 %v5547, 64
  %v5594 = vpop.permute.xlu0 %5593
  %5595 = vrot.lane.b32.xlu0 %v5548, 64
  %v5596 = vpop.permute.xlu0 %5595
  %vm5613 = vcmask 589312
  %5614 = vst.msk [vmem:[#allocation6] sm:$0xff] %vm5613, %v5566
  %5615 = vst.msk [vmem:[#allocation6 + $0x8] sm:$0xff] %vm5613, %v5568
  %5616 = vst.msk [vmem:[#allocation6 + $0x10] sm:$0xff] %vm5613, %v5570
  %5617 = vst.msk [vmem:[#allocation6 + $0x18] sm:$0xff] %vm5613, %v5572
  %5618 = vst.msk [vmem:[#allocation6 + $0x20] sm:$0xff] %vm5613, %v5574
  %5619 = vst.msk [vmem:[#allocation6 + $0x28] sm:$0xff] %vm5613, %v5576
  %5620 = vst.msk [vmem:[#allocation6 + $0x30] sm:$0xff] %vm5613, %v5578
  %5621 = vst.msk [vmem:[#allocation6 + $0x38] sm:$0xff] %vm5613, %v5580
  %5622 = vst.msk [vmem:[#allocation6 + $0x40] sm:$0xff] %vm5613, %v5582
  %5623 = vst.msk [vmem:[#allocation6 + $0x48] sm:$0xff] %vm5613, %v5584
  %5624 = vst.msk [vmem:[#allocation6 + $0x50] sm:$0xff] %vm5613, %v5586
  %5625 = vst.msk [vmem:[#allocation6 + $0x58] sm:$0xff] %vm5613, %v5588
  %5626 = vst.msk [vmem:[#allocation6 + $0x60] sm:$0xff] %vm5613, %v5590
  %5627 = vst.msk [vmem:[#allocation6 + $0x68] sm:$0xff] %vm5613, %v5592
  %5628 = vst.msk [vmem:[#allocation6 + $0x70] sm:$0xff] %vm5613, %v5594
  %5629 = vst.msk [vmem:[#allocation6 + $0x78] sm:$0xff] %vm5613, %v5596
  %v5630 = vld [vmem:[#allocation6] sm:$0xff]
  %v5631 = vld [vmem:[#allocation6 + $0x8] sm:$0xff]
  %v5632 = vld [vmem:[#allocation6 + $0x10] sm:$0xff]
  %v5633 = vld [vmem:[#allocation6 + $0x18] sm:$0xff]
  %v5634 = vld [vmem:[#allocation6 + $0x20] sm:$0xff]
  %v5635 = vld [vmem:[#allocation6 + $0x28] sm:$0xff]
  %v5636 = vld [vmem:[#allocation6 + $0x30] sm:$0xff]
  %v5637 = vld [vmem:[#allocation6 + $0x38] sm:$0xff]
  %v5638 = vld [vmem:[#allocation6 + $0x40] sm:$0xff]
  %v5639 = vld [vmem:[#allocation6 + $0x48] sm:$0xff]
  %v5640 = vld [vmem:[#allocation6 + $0x50] sm:$0xff]
  %v5641 = vld [vmem:[#allocation6 + $0x58] sm:$0xff]
  %v5642 = vld [vmem:[#allocation6 + $0x60] sm:$0xff]
  %v5643 = vld [vmem:[#allocation6 + $0x68] sm:$0xff]
  %v5644 = vld [vmem:[#allocation6 + $0x70] sm:$0xff]
  %v5645 = vld [vmem:[#allocation6 + $0x78] sm:$0xff]
  %v5646 = vld [vmem:[%s3] sm:$0xff]
  %v5647 = vld [vmem:[%s3 + $0x8] sm:$0xff]
  %v5648 = vld [vmem:[%s3 + $0x10] sm:$0xff]
  %v5649 = vld [vmem:[%s3 + $0x18] sm:$0xff]
  %v5650 = vld [vmem:[%s3 + $0x20] sm:$0xff]
  %v5651 = vld [vmem:[%s3 + $0x28] sm:$0xff]
  %v5652 = vld [vmem:[%s3 + $0x30] sm:$0xff]
  %v5653 = vld [vmem:[%s3 + $0x38] sm:$0xff]
  %v5654 = vld [vmem:[%s3 + $0x40] sm:$0xff]
  %vm5655 = vcmask 588800
  %v5657 = vsel %vm5655, %v5630, 0
  %v5660 = vsel %vm5655, %v5631, 0
  %v5663 = vsel %vm5655, %v5632, 0
  %v5666 = vsel %vm5655, %v5633, 0
  %v5669 = vsel %vm5655, %v5634, 0
  %v5672 = vsel %vm5655, %v5635, 0
  %v5675 = vsel %vm5655, %v5636, 0
  %v5678 = vsel %vm5655, %v5637, 0
  %v5681 = vsel %vm5655, %v5638, 0
  %v5684 = vsel %vm5655, %v5639, 0
  %v5687 = vsel %vm5655, %v5640, 0
  %v5690 = vsel %vm5655, %v5641, 0
  %v5693 = vsel %vm5655, %v5642, 0
  %v5696 = vsel %vm5655, %v5643, 0
  %v5699 = vsel %vm5655, %v5644, 0
  %v5702 = vsel %vm5655, %v5645, 0
  %5704 = vmatprep.subr.mxu0 0.0
  %5705 = vmatpush1.msra.mxu0 %v5646
  %5706 = vmatprep.subr.mxu0 0.0
  %5707 = vmatpush1.msra.mxu0 %v5647
  %5708 = vmatprep.subr.mxu0 0.0
  %5709 = vmatpush1.msra.mxu0 %v5648
  %5710 = vmatprep.subr.mxu0 0.0
  %5711 = vmatpush1.msra.mxu0 %v5649
  %5712 = vmatprep.subr.mxu0 0.0
  %5713 = vmatpush1.msra.mxu0 %v5650
  %5714 = vmatprep.subr.mxu0 0.0
  %5715 = vmatpush1.msra.mxu0 %v5651
  %5716 = vmatprep.subr.mxu0 0.0
  %5717 = vmatpush1.msra.mxu0 %v5652
  %5718 = vmatprep.subr.mxu0 0.0
  %5719 = vmatpush1.msra.mxu0 %v5653
  %5720 = vmatprep.subr.mxu0 0.0
  %5721 = vmatpush1.msra.mxu0 %v5654
  %5722 = vmatprep.subr.mxu0 0.0
  %5723 = vmatpush1.msra.mxu0 0.0
  %5724 = vmatprep.subr.mxu0 0.0
  %5725 = vmatpush1.msra.mxu0 0.0
  %5726 = vmatprep.subr.mxu0 0.0
  %5727 = vmatpush1.msra.mxu0 0.0
  %5728 = vmatprep.subr.mxu0 0.0
  %5729 = vmatpush1.msra.mxu0 0.0
  %5730 = vmatprep.subr.mxu0 0.0
  %5731 = vmatpush1.msra.mxu0 0.0
  %5732 = vmatprep.subr.mxu0 0.0
  %5733 = vmatpush1.msra.mxu0 0.0
  %5734 = vmatprep.subr.mxu0 0.0
  %5735 = vmatpush1.msra.mxu0 0.0
  %5736 = vmatprep.subr.mxu0 0.0
  %5737 = vmatpush1.msra.mxu0 0.0
  %5738 = vmatprep.subr.mxu0 0.0
  %5739 = vmatpush1.msra.mxu0 0.0
  %5740 = vmatprep.subr.mxu0 0.0
  %5741 = vmatpush1.msra.mxu0 0.0
  %5742 = vmatprep.subr.mxu0 0.0
  %5743 = vmatpush1.msra.mxu0 0.0
  %5744 = vmatprep.subr.mxu0 0.0
  %5745 = vmatpush1.msra.mxu0 0.0
  %5746 = vmatprep.subr.mxu0 0.0
  %5747 = vmatpush1.msra.mxu0 0.0
  %5748 = vmatprep.subr.mxu0 0.0
  %5749 = vmatpush1.msra.mxu0 0.0
  %5750 = vmatprep.subr.mxu0 0.0
  %5751 = vmatpush1.msra.mxu0 0.0
  %5752 = vmatprep.subr.mxu0 0.0
  %5753 = vmatpush1.msra.mxu0 0.0
  %5754 = vmatprep.subr.mxu0 0.0
  %5755 = vmatpush1.msra.mxu0 0.0
  %5756 = vmatprep.subr.mxu0 0.0
  %5757 = vmatpush1.msra.mxu0 0.0
  %5758 = vmatprep.subr.mxu0 0.0
  %5759 = vmatpush1.msra.mxu0 0.0
  %5760 = vmatprep.subr.mxu0 0.0
  %5761 = vmatpush1.msra.mxu0 0.0
  %5762 = vmatprep.subr.mxu0 0.0
  %5763 = vmatpush1.msra.mxu0 0.0
  %5764 = vmatprep.subr.mxu0 0.0
  %5765 = vmatpush1.msra.mxu0 0.0
  %5766 = vmatprep.subr.mxu0 0.0
  %5767 = vmatpush1.msra.mxu0 0.0
  %5768 = vmatprep.mubr.f32.mxu0 0.0
  %5769 = vmatmul.mubr.f32.gmra.mrb[0].mxu0 %v5657
  %v5770 = vpop.f32.mrb[0].mxu0
  %v5771 = vadd.f32 0.0, %v5770
  %v5772 = vpop.f32.mrb[0].mxu0
  %5773 = vmatprep.mubr.f32.mxu0 0.0
  %5774 = vmatmul.mubr.f32.gmra.mrb[0].mxu0 %v5660
  %v5775 = vpop.f32.mrb[0].mxu0
  %v5776 = vadd.f32 0.0, %v5775
  %v5777 = vpop.f32.mrb[0].mxu0
  %5778 = vmatprep.mubr.f32.mxu0 0.0
  %5779 = vmatmul.mubr.f32.gmra.mrb[0].mxu0 %v5663
  %v5780 = vpop.f32.mrb[0].mxu0
  %v5781 = vadd.f32 0.0, %v5780
  %v5782 = vpop.f32.mrb[0].mxu0
  %5783 = vmatprep.mubr.f32.mxu0 0.0
  %5784 = vmatmul.mubr.f32.gmra.mrb[0].mxu0 %v5666
  %v5785 = vpop.f32.mrb[0].mxu0
  %v5786 = vadd.f32 0.0, %v5785
  %v5787 = vpop.f32.mrb[0].mxu0
  %5788 = vmatprep.mubr.f32.mxu0 0.0
  %5789 = vmatmul.mubr.f32.gmra.mrb[0].mxu0 %v5669
  %v5790 = vpop.f32.mrb[0].mxu0
  %v5791 = vadd.f32 0.0, %v5790
  %v5792 = vpop.f32.mrb[0].mxu0
  %5793 = vmatprep.mubr.f32.mxu0 0.0
  %5794 = vmatmul.mubr.f32.gmra.mrb[0].mxu0 %v5672
  %v5795 = vpop.f32.mrb[0].mxu0
  %v5796 = vadd.f32 0.0, %v5795
  %v5797 = vpop.f32.mrb[0].mxu0
  %5798 = vmatprep.mubr.f32.mxu0 0.0
  %5799 = vmatmul.mubr.f32.gmra.mrb[0].mxu0 %v5675
  %v5800 = vpop.f32.mrb[0].mxu0
  %v5801 = vadd.f32 0.0, %v5800
  %v5802 = vpop.f32.mrb[0].mxu0
  %5803 = vmatprep.mubr.f32.mxu0 0.0
  %5804 = vmatmul.mubr.f32.gmra.mrb[0].mxu0 %v5678
  %v5805 = vpop.f32.mrb[0].mxu0
  %v5806 = vadd.f32 0.0, %v5805
  %v5807 = vpop.f32.mrb[0].mxu0
  %5808 = vmatprep.mubr.f32.mxu0 0.0
  %5809 = vmatmul.mubr.f32.gmra.mrb[0].mxu0 %v5681
  %v5810 = vpop.f32.mrb[0].mxu0
  %v5811 = vadd.f32 0.0, %v5810
  %v5812 = vpop.f32.mrb[0].mxu0
  %5813 = vmatprep.mubr.f32.mxu0 0.0
  %5814 = vmatmul.mubr.f32.gmra.mrb[0].mxu0 %v5684
  %v5815 = vpop.f32.mrb[0].mxu0
  %v5816 = vadd.f32 0.0, %v5815
  %v5817 = vpop.f32.mrb[0].mxu0
  %5818 = vmatprep.mubr.f32.mxu0 0.0
  %5819 = vmatmul.mubr.f32.gmra.mrb[0].mxu0 %v5687
  %v5820 = vpop.f32.mrb[0].mxu0
  %v5821 = vadd.f32 0.0, %v5820
  %v5822 = vpop.f32.mrb[0].mxu0
  %5823 = vmatprep.mubr.f32.mxu0 0.0
  %5824 = vmatmul.mubr.f32.gmra.mrb[0].mxu0 %v5690
  %v5825 = vpop.f32.mrb[0].mxu0
  %v5826 = vadd.f32 0.0, %v5825
  %v5827 = vpop.f32.mrb[0].mxu0
  %5828 = vmatprep.mubr.f32.mxu0 0.0
  %5829 = vmatmul.mubr.f32.gmra.mrb[0].mxu0 %v5693
  %v5830 = vpop.f32.mrb[0].mxu0
  %v5831 = vadd.f32 0.0, %v5830
  %v5832 = vpop.f32.mrb[0].mxu0
  %5833 = vmatprep.mubr.f32.mxu0 0.0
  %5834 = vmatmul.mubr.f32.gmra.mrb[0].mxu0 %v5696
  %v5835 = vpop.f32.mrb[0].mxu0
  %v5836 = vadd.f32 0.0, %v5835
  %v5837 = vpop.f32.mrb[0].mxu0
  %5838 = vmatprep.mubr.f32.mxu0 0.0
  %5839 = vmatmul.mubr.f32.gmra.mrb[0].mxu0 %v5699
  %v5840 = vpop.f32.mrb[0].mxu0
  %v5841 = vadd.f32 0.0, %v5840
  %v5842 = vpop.f32.mrb[0].mxu0
  %5843 = vmatprep.mubr.f32.mxu0 0.0
  %5844 = vmatmul.mubr.f32.gmra.mrb[0].mxu0 %v5702
  %v5845 = vpop.f32.mrb[0].mxu0
  %v5846 = vadd.f32 0.0, %v5845
  %v5847 = vpop.f32.mrb[0].mxu0
  %5848 = vdwg.mxu0
  %v5849 = vmax.f32 %v5771, %v5776
  %v5850 = vmax.f32 %v5781, %v5786
  %v5851 = vmax.f32 %v5791, %v5796
  %v5852 = vmax.f32 %v5801, %v5806
  %v5853 = vmax.f32 %v5811, %v5816
  %v5854 = vmax.f32 %v5821, %v5826
  %v5855 = vmax.f32 %v5831, %v5836
  %v5856 = vmax.f32 %v5841, %v5846
  %v5857 = vld [vmem:[%s4] sm:$0x1]
  %v5859 = vlaneseq
  %v5860 = vshrl.u32 %v5859, 7
  %v5861 = vsub.s32 0, %v5860
  %v5862 = vrot.slane %v5857, %v5861
  %v5864 = vadd.f32 %v5849, %v5862
  %v5865 = vadd.f32 %v5850, %v5862
  %v5866 = vadd.f32 %v5851, %v5862
  %v5867 = vadd.f32 %v5852, %v5862
  %v5868 = vadd.f32 %v5853, %v5862
  %v5869 = vadd.f32 %v5854, %v5862
  %v5870 = vadd.f32 %v5855, %v5862
  %v5871 = vadd.f32 %v5856, %v5862
  %v5872 = vmax.f32 %v5864, 0.0
  %v5873 = vmax.f32 %v5865, 0.0
  %v5874 = vmax.f32 %v5866, 0.0
  %v5875 = vmax.f32 %v5867, 0.0
  %v5876 = vmax.f32 %v5868, 0.0
  %v5877 = vmax.f32 %v5869, 0.0
  %v5878 = vmax.f32 %v5870, 0.0
  %v5879 = vmax.f32 %v5871, 0.0
  %vm5880 = vcmask 130048
  %5881 = vst.msk [vmem:[#allocation7] sm:$0xff] %vm5880, %v5872
  %5882 = vst.msk [vmem:[#allocation7 + $0x8] sm:$0xff] %vm5880, %v5873
  %5883 = vst.msk [vmem:[#allocation7 + $0x10] sm:$0xff] %vm5880, %v5874
  %5884 = vst.msk [vmem:[#allocation7 + $0x18] sm:$0xff] %vm5880, %v5875
  %5885 = vst.msk [vmem:[#allocation7 + $0x20] sm:$0xff] %vm5880, %v5876
  %5886 = vst.msk [vmem:[#allocation7 + $0x28] sm:$0xff] %vm5880, %v5877
  %5887 = vst.msk [vmem:[#allocation7 + $0x30] sm:$0xff] %vm5880, %v5878
  %5888 = vst.msk [vmem:[#allocation7 + $0x38] sm:$0xff] %vm5880, %v5879
  %v5889 = vld [vmem:[#allocation7] sm:$0x1]
  %v5890 = vld [vmem:[#allocation7 + $0x20] sm:$0x1]
  %v5891 = vld [vmem:[#allocation7 + $0x1] sm:$0x1]
  %v5892 = vld [vmem:[#allocation7 + $0x21] sm:$0x1]
  %v5893 = vmax.f32 %v5889, %v5891
  %v5894 = vmax.f32 %v5890, %v5892
  %v5898 = vunpack.c.l.s4 1983009808
  %v5899 = vunpack.c.0.s8 %v5898
  %v5900 = vlaneseq
  %v5901 = vshrl.u32 %v5900, 7
  %v5902 = vsub.s32 %v5899, %v5901
  %v5903 = vrot.slane %v5893, %v5902
  %v5905 = vunpack.c.l.s4 1983009808
  %v5906 = vunpack.c.0.s8 %v5905
  %v5907 = vlaneseq
  %v5908 = vshrl.u32 %v5907, 7
  %v5909 = vsub.s32 %v5906, %v5908
  %v5910 = vrot.slane %v5894, %v5909
  %vm5911 = vcmask 1044484
  %v5912 = vsel %vm5911, %v5903, %v5903
  %vm5913 = vcmask 1046534
  %v5914 = vsel %vm5913, %v5903, %v5912
  %v5915 = vrot.slane %v5910, 7
  %vm5916 = vcmask 1041409
  %v5917 = vsel %vm5916, %v5915, %v5914
  %vm5918 = vcmask 1043459
  %v5919 = vsel %vm5918, %v5915, %v5917
  %vm5920 = vcmask 1045509
  %v5921 = vsel %vm5920, %v5915, %v5919
  %vm5922 = vcmask 1047559
  %v5923 = vsel %vm5922, %v5915, %v5921
  %vm5925 = vcmask 123904
  %5926 = vst.msk [vmem:[#allocation8] sm:$0x3] %vm5925, %v5923
  %v5927 = vld [vmem:[#allocation7 + $0x2] sm:$0x1]
  %v5928 = vld [vmem:[#allocation7 + $0x22] sm:$0x1]
  %v5929 = vld [vmem:[#allocation7 + $0x3] sm:$0x1]
  %v5930 = vld [vmem:[#allocation7 + $0x23] sm:$0x1]
  %v5931 = vmax.f32 %v5927, %v5929
  %v5932 = vmax.f32 %v5928, %v5930
  %v5936 = vunpack.c.l.s4 1983009808
  %v5937 = vunpack.c.0.s8 %v5936
  %v5938 = vlaneseq
  %v5939 = vshrl.u32 %v5938, 7
  %v5940 = vsub.s32 %v5937, %v5939
  %v5941 = vrot.slane %v5931, %v5940
  %v5943 = vunpack.c.l.s4 1983009808
  %v5944 = vunpack.c.0.s8 %v5943
  %v5945 = vlaneseq
  %v5946 = vshrl.u32 %v5945, 7
  %v5947 = vsub.s32 %v5944, %v5946
  %v5948 = vrot.slane %v5932, %v5947
  %v5949 = vsel %vm5911, %v5941, %v5941
  %v5950 = vsel %vm5913, %v5941, %v5949
  %v5951 = vrot.slane %v5948, 7
  %v5952 = vsel %vm5916, %v5951, %v5950
  %v5953 = vsel %vm5918, %v5951, %v5952
  %v5954 = vsel %vm5920, %v5951, %v5953
  %v5955 = vsel %vm5922, %v5951, %v5954
  %5956 = vrot.lane.b32.xlu0 %v5955, 16
  %v5957 = vpop.permute.xlu0 %5956
  %vm5959 = vcmask 255104
  %5960 = vst.msk [vmem:[#allocation8] sm:$0x3] %vm5959, %v5957
  %v5961 = vld [vmem:[#allocation7 + $0x4] sm:$0x1]
  %v5962 = vld [vmem:[#allocation7 + $0x24] sm:$0x1]
  %v5963 = vld [vmem:[#allocation7 + $0x5] sm:$0x1]
  %v5964 = vld [vmem:[#allocation7 + $0x25] sm:$0x1]
  %v5965 = vmax.f32 %v5961, %v5963
  %v5966 = vmax.f32 %v5962, %v5964
  %v5970 = vunpack.c.l.s4 1983009808
  %v5971 = vunpack.c.0.s8 %v5970
  %v5972 = vlaneseq
  %v5973 = vshrl.u32 %v5972, 7
  %v5974 = vsub.s32 %v5971, %v5973
  %v5975 = vrot.slane %v5965, %v5974
  %v5977 = vunpack.c.l.s4 1983009808
  %v5978 = vunpack.c.0.s8 %v5977
  %v5979 = vlaneseq
  %v5980 = vshrl.u32 %v5979, 7
  %v5981 = vsub.s32 %v5978, %v5980
  %v5982 = vrot.slane %v5966, %v5981
  %v5983 = vsel %vm5911, %v5975, %v5975
  %v5984 = vsel %vm5913, %v5975, %v5983
  %v5985 = vrot.slane %v5982, 7
  %v5986 = vsel %vm5916, %v5985, %v5984
  %v5987 = vsel %vm5918, %v5985, %v5986
  %v5988 = vsel %vm5920, %v5985, %v5987
  %v5989 = vsel %vm5922, %v5985, %v5988
  %5990 = vrot.lane.b32.xlu0 %v5989, 32
  %v5991 = vpop.permute.xlu0 %5990
  %vm5993 = vcmask 386304
  %5994 = vst.msk [vmem:[#allocation8] sm:$0x3] %vm5993, %v5991
  %v5995 = vld [vmem:[#allocation7 + $0x6] sm:$0x1]
  %v5996 = vld [vmem:[#allocation7 + $0x26] sm:$0x1]
  %v5997 = vld [vmem:[#allocation7 + $0x7] sm:$0x1]
  %v5998 = vld [vmem:[#allocation7 + $0x27] sm:$0x1]
  %v5999 = vmax.f32 %v5995, %v5997
  %v6000 = vmax.f32 %v5996, %v5998
  %v6004 = vunpack.c.l.s4 1983009808
  %v6005 = vunpack.c.0.s8 %v6004
  %v6006 = vlaneseq
  %v6007 = vshrl.u32 %v6006, 7
  %v6008 = vsub.s32 %v6005, %v6007
  %v6009 = vrot.slane %v5999, %v6008
  %v6011 = vunpack.c.l.s4 1983009808
  %v6012 = vunpack.c.0.s8 %v6011
  %v6013 = vlaneseq
  %v6014 = vshrl.u32 %v6013, 7
  %v6015 = vsub.s32 %v6012, %v6014
  %v6016 = vrot.slane %v6000, %v6015
  %v6017 = vsel %vm5911, %v6009, %v6009
  %v6018 = vsel %vm5913, %v6009, %v6017
  %v6019 = vrot.slane %v6016, 7
  %v6020 = vsel %vm5916, %v6019, %v6018
  %v6021 = vsel %vm5918, %v6019, %v6020
  %v6022 = vsel %vm5920, %v6019, %v6021
  %v6023 = vsel %vm5922, %v6019, %v6022
  %6024 = vrot.lane.b32.xlu0 %v6023, 48
  %v6025 = vpop.permute.xlu0 %6024
  %vm6027 = vcmask 517504
  %6028 = vst.msk [vmem:[#allocation8] sm:$0x3] %vm6027, %v6025
  %s6029 = scalar_lea.vmem [#allocation7], 8
  %v6030 = vld [vmem:[%s6029] sm:$0x1]
  %v6031 = vld [vmem:[%s6029 + $0x20] sm:$0x1]
  %v6032 = vld [vmem:[%s6029 + $0x1] sm:$0x1]
  %v6033 = vld [vmem:[%s6029 + $0x21] sm:$0x1]
  %v6034 = vmax.f32 %v6030, %v6032
  %v6035 = vmax.f32 %v6031, %v6033
  %v6039 = vunpack.c.l.s4 1983009808
  %v6040 = vunpack.c.0.s8 %v6039
  %v6041 = vlaneseq
  %v6042 = vshrl.u32 %v6041, 7
  %v6043 = vsub.s32 %v6040, %v6042
  %v6044 = vrot.slane %v6034, %v6043
  %v6046 = vunpack.c.l.s4 1983009808
  %v6047 = vunpack.c.0.s8 %v6046
  %v6048 = vlaneseq
  %v6049 = vshrl.u32 %v6048, 7
  %v6050 = vsub.s32 %v6047, %v6049
  %v6051 = vrot.slane %v6035, %v6050
  %v6052 = vsel %vm5911, %v6044, %v6044
  %v6053 = vsel %vm5913, %v6044, %v6052
  %v6054 = vrot.slane %v6051, 7
  %v6055 = vsel %vm5916, %v6054, %v6053
  %v6056 = vsel %vm5918, %v6054, %v6055
  %v6057 = vsel %vm5920, %v6054, %v6056
  %v6058 = vsel %vm5922, %v6054, %v6057
  %6059 = vrot.lane.b32.xlu0 %v6058, 64
  %v6060 = vpop.permute.xlu0 %6059
  %vm6062 = vcmask 648704
  %6063 = vst.msk [vmem:[#allocation8] sm:$0x3] %vm6062, %v6060
  %v6064 = vld [vmem:[%s6029 + $0x2] sm:$0x1]
  %v6065 = vld [vmem:[%s6029 + $0x22] sm:$0x1]
  %v6066 = vld [vmem:[%s6029 + $0x3] sm:$0x1]
  %v6067 = vld [vmem:[%s6029 + $0x23] sm:$0x1]
  %v6068 = vmax.f32 %v6064, %v6066
  %v6069 = vmax.f32 %v6065, %v6067
  %v6073 = vunpack.c.l.s4 1983009808
  %v6074 = vunpack.c.0.s8 %v6073
  %v6075 = vlaneseq
  %v6076 = vshrl.u32 %v6075, 7
  %v6077 = vsub.s32 %v6074, %v6076
  %v6078 = vrot.slane %v6068, %v6077
  %v6080 = vunpack.c.l.s4 1983009808
  %v6081 = vunpack.c.0.s8 %v6080
  %v6082 = vlaneseq
  %v6083 = vshrl.u32 %v6082, 7
  %v6084 = vsub.s32 %v6081, %v6083
  %v6085 = vrot.slane %v6069, %v6084
  %v6086 = vsel %vm5911, %v6078, %v6078
  %v6087 = vsel %vm5913, %v6078, %v6086
  %v6088 = vrot.slane %v6085, 7
  %v6089 = vsel %vm5916, %v6088, %v6087
  %v6090 = vsel %vm5918, %v6088, %v6089
  %v6091 = vsel %vm5920, %v6088, %v6090
  %v6092 = vsel %vm5922, %v6088, %v6091
  %6093 = vrot.lane.b32.xlu0 %v6092, 80
  %v6094 = vpop.permute.xlu0 %6093
  %vm6096 = vcmask 779904
  %6097 = vst.msk [vmem:[#allocation8] sm:$0x3] %vm6096, %v6094
  %v6098 = vld [vmem:[%s6029 + $0x4] sm:$0x1]
  %v6099 = vld [vmem:[%s6029 + $0x24] sm:$0x1]
  %v6100 = vld [vmem:[%s6029 + $0x5] sm:$0x1]
  %v6101 = vld [vmem:[%s6029 + $0x25] sm:$0x1]
  %v6102 = vmax.f32 %v6098, %v6100
  %v6103 = vmax.f32 %v6099, %v6101
  %v6107 = vunpack.c.l.s4 1983009808
  %v6108 = vunpack.c.0.s8 %v6107
  %v6109 = vlaneseq
  %v6110 = vshrl.u32 %v6109, 7
  %v6111 = vsub.s32 %v6108, %v6110
  %v6112 = vrot.slane %v6102, %v6111
  %v6114 = vunpack.c.l.s4 1983009808
  %v6115 = vunpack.c.0.s8 %v6114
  %v6116 = vlaneseq
  %v6117 = vshrl.u32 %v6116, 7
  %v6118 = vsub.s32 %v6115, %v6117
  %v6119 = vrot.slane %v6103, %v6118
  %v6120 = vsel %vm5911, %v6112, %v6112
  %v6121 = vsel %vm5913, %v6112, %v6120
  %v6122 = vrot.slane %v6119, 7
  %v6123 = vsel %vm5916, %v6122, %v6121
  %v6124 = vsel %vm5918, %v6122, %v6123
  %v6125 = vsel %vm5920, %v6122, %v6124
  %v6126 = vsel %vm5922, %v6122, %v6125
  %6127 = vrot.lane.b32.xlu0 %v6126, 96
  %v6128 = vpop.permute.xlu0 %6127
  %vm6130 = vcmask 911104
  %6131 = vst.msk [vmem:[#allocation8] sm:$0x3] %vm6130, %v6128
  %v6132 = vld [vmem:[%s6029 + $0x6] sm:$0x1]
  %v6133 = vld [vmem:[%s6029 + $0x26] sm:$0x1]
  %v6134 = vld [vmem:[%s6029 + $0x7] sm:$0x1]
  %v6135 = vld [vmem:[%s6029 + $0x27] sm:$0x1]
  %v6136 = vmax.f32 %v6132, %v6134
  %v6137 = vmax.f32 %v6133, %v6135
  %v6141 = vunpack.c.l.s4 1983009808
  %v6142 = vunpack.c.0.s8 %v6141
  %v6143 = vlaneseq
  %v6144 = vshrl.u32 %v6143, 7
  %v6145 = vsub.s32 %v6142, %v6144
  %v6146 = vrot.slane %v6136, %v6145
  %v6148 = vunpack.c.l.s4 1983009808
  %v6149 = vunpack.c.0.s8 %v6148
  %v6150 = vlaneseq
  %v6151 = vshrl.u32 %v6150, 7
  %v6152 = vsub.s32 %v6149, %v6151
  %v6153 = vrot.slane %v6137, %v6152
  %v6154 = vsel %vm5911, %v6146, %v6146
  %v6155 = vsel %vm5913, %v6146, %v6154
  %v6156 = vrot.slane %v6153, 7
  %v6157 = vsel %vm5916, %v6156, %v6155
  %v6158 = vsel %vm5918, %v6156, %v6157
  %v6159 = vsel %vm5920, %v6156, %v6158
  %v6160 = vsel %vm5922, %v6156, %v6159
  %6161 = vrot.lane.b32.xlu0 %v6160, 112
  %v6162 = vpop.permute.xlu0 %6161
  %vm6164 = vcmask 1042304
  %6165 = vst.msk [vmem:[#allocation8] sm:$0x3] %vm6164, %v6162
  %s6166 = scalar_lea.vmem [#allocation7], 16
  %v6167 = vld [vmem:[%s6166] sm:$0x1]
  %v6168 = vld [vmem:[%s6166 + $0x20] sm:$0x1]
  %v6169 = vld [vmem:[%s6166 + $0x1] sm:$0x1]
  %v6170 = vld [vmem:[%s6166 + $0x21] sm:$0x1]
  %v6171 = vmax.f32 %v6167, %v6169
  %v6172 = vmax.f32 %v6168, %v6170
  %v6176 = vunpack.c.l.s4 1983009808
  %v6177 = vunpack.c.0.s8 %v6176
  %v6178 = vlaneseq
  %v6179 = vshrl.u32 %v6178, 7
  %v6180 = vsub.s32 %v6177, %v6179
  %v6181 = vrot.slane %v6171, %v6180
  %v6183 = vunpack.c.l.s4 1983009808
  %v6184 = vunpack.c.0.s8 %v6183
  %v6185 = vlaneseq
  %v6186 = vshrl.u32 %v6185, 7
  %v6187 = vsub.s32 %v6184, %v6186
  %v6188 = vrot.slane %v6172, %v6187
  %v6189 = vsel %vm5911, %v6181, %v6181
  %v6190 = vsel %vm5913, %v6181, %v6189
  %v6191 = vrot.slane %v6188, 7
  %v6192 = vsel %vm5916, %v6191, %v6190
  %v6193 = vsel %vm5918, %v6191, %v6192
  %v6194 = vsel %vm5920, %v6191, %v6193
  %v6195 = vsel %vm5922, %v6191, %v6194
  %6197 = vst.msk [vmem:[#allocation8 + $0x2] sm:$0x3] %vm5925, %v6195
  %v6198 = vld [vmem:[%s6166 + $0x2] sm:$0x1]
  %v6199 = vld [vmem:[%s6166 + $0x22] sm:$0x1]
  %v6200 = vld [vmem:[%s6166 + $0x3] sm:$0x1]
  %v6201 = vld [vmem:[%s6166 + $0x23] sm:$0x1]
  %v6202 = vmax.f32 %v6198, %v6200
  %v6203 = vmax.f32 %v6199, %v6201
  %v6207 = vunpack.c.l.s4 1983009808
  %v6208 = vunpack.c.0.s8 %v6207
  %v6209 = vlaneseq
  %v6210 = vshrl.u32 %v6209, 7
  %v6211 = vsub.s32 %v6208, %v6210
  %v6212 = vrot.slane %v6202, %v6211
  %v6214 = vunpack.c.l.s4 1983009808
  %v6215 = vunpack.c.0.s8 %v6214
  %v6216 = vlaneseq
  %v6217 = vshrl.u32 %v6216, 7
  %v6218 = vsub.s32 %v6215, %v6217
  %v6219 = vrot.slane %v6203, %v6218
  %v6220 = vsel %vm5911, %v6212, %v6212
  %v6221 = vsel %vm5913, %v6212, %v6220
  %v6222 = vrot.slane %v6219, 7
  %v6223 = vsel %vm5916, %v6222, %v6221
  %v6224 = vsel %vm5918, %v6222, %v6223
  %v6225 = vsel %vm5920, %v6222, %v6224
  %v6226 = vsel %vm5922, %v6222, %v6225
  %6227 = vrot.lane.b32.xlu0 %v6226, 16
  %v6228 = vpop.permute.xlu0 %6227
  %6230 = vst.msk [vmem:[#allocation8 + $0x2] sm:$0x3] %vm5959, %v6228
  %v6231 = vld [vmem:[%s6166 + $0x4] sm:$0x1]
  %v6232 = vld [vmem:[%s6166 + $0x24] sm:$0x1]
  %v6233 = vld [vmem:[%s6166 + $0x5] sm:$0x1]
  %v6234 = vld [vmem:[%s6166 + $0x25] sm:$0x1]
  %v6235 = vmax.f32 %v6231, %v6233
  %v6236 = vmax.f32 %v6232, %v6234
  %v6240 = vunpack.c.l.s4 1983009808
  %v6241 = vunpack.c.0.s8 %v6240
  %v6242 = vlaneseq
  %v6243 = vshrl.u32 %v6242, 7
  %v6244 = vsub.s32 %v6241, %v6243
  %v6245 = vrot.slane %v6235, %v6244
  %v6247 = vunpack.c.l.s4 1983009808
  %v6248 = vunpack.c.0.s8 %v6247
  %v6249 = vlaneseq
  %v6250 = vshrl.u32 %v6249, 7
  %v6251 = vsub.s32 %v6248, %v6250
  %v6252 = vrot.slane %v6236, %v6251
  %v6253 = vsel %vm5911, %v6245, %v6245
  %v6254 = vsel %vm5913, %v6245, %v6253
  %v6255 = vrot.slane %v6252, 7
  %v6256 = vsel %vm5916, %v6255, %v6254
  %v6257 = vsel %vm5918, %v6255, %v6256
  %v6258 = vsel %vm5920, %v6255, %v6257
  %v6259 = vsel %vm5922, %v6255, %v6258
  %6260 = vrot.lane.b32.xlu0 %v6259, 32
  %v6261 = vpop.permute.xlu0 %6260
  %6263 = vst.msk [vmem:[#allocation8 + $0x2] sm:$0x3] %vm5993, %v6261
  %v6264 = vld [vmem:[%s6166 + $0x6] sm:$0x1]
  %v6265 = vld [vmem:[%s6166 + $0x26] sm:$0x1]
  %v6266 = vld [vmem:[%s6166 + $0x7] sm:$0x1]
  %v6267 = vld [vmem:[%s6166 + $0x27] sm:$0x1]
  %v6268 = vmax.f32 %v6264, %v6266
  %v6269 = vmax.f32 %v6265, %v6267
  %v6273 = vunpack.c.l.s4 1983009808
  %v6274 = vunpack.c.0.s8 %v6273
  %v6275 = vlaneseq
  %v6276 = vshrl.u32 %v6275, 7
  %v6277 = vsub.s32 %v6274, %v6276
  %v6278 = vrot.slane %v6268, %v6277
  %v6280 = vunpack.c.l.s4 1983009808
  %v6281 = vunpack.c.0.s8 %v6280
  %v6282 = vlaneseq
  %v6283 = vshrl.u32 %v6282, 7
  %v6284 = vsub.s32 %v6281, %v6283
  %v6285 = vrot.slane %v6269, %v6284
  %v6286 = vsel %vm5911, %v6278, %v6278
  %v6287 = vsel %vm5913, %v6278, %v6286
  %v6288 = vrot.slane %v6285, 7
  %v6289 = vsel %vm5916, %v6288, %v6287
  %v6290 = vsel %vm5918, %v6288, %v6289
  %v6291 = vsel %vm5920, %v6288, %v6290
  %v6292 = vsel %vm5922, %v6288, %v6291
  %6293 = vrot.lane.b32.xlu0 %v6292, 48
  %v6294 = vpop.permute.xlu0 %6293
  %6296 = vst.msk [vmem:[#allocation8 + $0x2] sm:$0x3] %vm6027, %v6294
  %s6297 = scalar_lea.vmem [#allocation7], 24
  %v6298 = vld [vmem:[%s6297] sm:$0x1]
  %v6299 = vld [vmem:[%s6297 + $0x20] sm:$0x1]
  %v6300 = vld [vmem:[%s6297 + $0x1] sm:$0x1]
  %v6301 = vld [vmem:[%s6297 + $0x21] sm:$0x1]
  %v6302 = vmax.f32 %v6298, %v6300
  %v6303 = vmax.f32 %v6299, %v6301
  %v6307 = vunpack.c.l.s4 1983009808
  %v6308 = vunpack.c.0.s8 %v6307
  %v6309 = vlaneseq
  %v6310 = vshrl.u32 %v6309, 7
  %v6311 = vsub.s32 %v6308, %v6310
  %v6312 = vrot.slane %v6302, %v6311
  %v6314 = vunpack.c.l.s4 1983009808
  %v6315 = vunpack.c.0.s8 %v6314
  %v6316 = vlaneseq
  %v6317 = vshrl.u32 %v6316, 7
  %v6318 = vsub.s32 %v6315, %v6317
  %v6319 = vrot.slane %v6303, %v6318
  %v6320 = vsel %vm5911, %v6312, %v6312
  %v6321 = vsel %vm5913, %v6312, %v6320
  %v6322 = vrot.slane %v6319, 7
  %v6323 = vsel %vm5916, %v6322, %v6321
  %v6324 = vsel %vm5918, %v6322, %v6323
  %v6325 = vsel %vm5920, %v6322, %v6324
  %v6326 = vsel %vm5922, %v6322, %v6325
  %6327 = vrot.lane.b32.xlu0 %v6326, 64
  %v6328 = vpop.permute.xlu0 %6327
  %6330 = vst.msk [vmem:[#allocation8 + $0x2] sm:$0x3] %vm6062, %v6328
  %v6331 = vld [vmem:[%s6297 + $0x2] sm:$0x1]
  %v6332 = vld [vmem:[%s6297 + $0x22] sm:$0x1]
  %v6333 = vld [vmem:[%s6297 + $0x3] sm:$0x1]
  %v6334 = vld [vmem:[%s6297 + $0x23] sm:$0x1]
  %v6335 = vmax.f32 %v6331, %v6333
  %v6336 = vmax.f32 %v6332, %v6334
  %v6340 = vunpack.c.l.s4 1983009808
  %v6341 = vunpack.c.0.s8 %v6340
  %v6342 = vlaneseq
  %v6343 = vshrl.u32 %v6342, 7
  %v6344 = vsub.s32 %v6341, %v6343
  %v6345 = vrot.slane %v6335, %v6344
  %v6347 = vunpack.c.l.s4 1983009808
  %v6348 = vunpack.c.0.s8 %v6347
  %v6349 = vlaneseq
  %v6350 = vshrl.u32 %v6349, 7
  %v6351 = vsub.s32 %v6348, %v6350
  %v6352 = vrot.slane %v6336, %v6351
  %v6353 = vsel %vm5911, %v6345, %v6345
  %v6354 = vsel %vm5913, %v6345, %v6353
  %v6355 = vrot.slane %v6352, 7
  %v6356 = vsel %vm5916, %v6355, %v6354
  %v6357 = vsel %vm5918, %v6355, %v6356
  %v6358 = vsel %vm5920, %v6355, %v6357
  %v6359 = vsel %vm5922, %v6355, %v6358
  %6360 = vrot.lane.b32.xlu0 %v6359, 80
  %v6361 = vpop.permute.xlu0 %6360
  %6363 = vst.msk [vmem:[#allocation8 + $0x2] sm:$0x3] %vm6096, %v6361
  %v6364 = vld [vmem:[%s6297 + $0x4] sm:$0x1]
  %v6365 = vld [vmem:[%s6297 + $0x24] sm:$0x1]
  %v6366 = vld [vmem:[%s6297 + $0x5] sm:$0x1]
  %v6367 = vld [vmem:[%s6297 + $0x25] sm:$0x1]
  %v6368 = vmax.f32 %v6364, %v6366
  %v6369 = vmax.f32 %v6365, %v6367
  %v6373 = vunpack.c.l.s4 1983009808
  %v6374 = vunpack.c.0.s8 %v6373
  %v6375 = vlaneseq
  %v6376 = vshrl.u32 %v6375, 7
  %v6377 = vsub.s32 %v6374, %v6376
  %v6378 = vrot.slane %v6368, %v6377
  %v6380 = vunpack.c.l.s4 1983009808
  %v6381 = vunpack.c.0.s8 %v6380
  %v6382 = vlaneseq
  %v6383 = vshrl.u32 %v6382, 7
  %v6384 = vsub.s32 %v6381, %v6383
  %v6385 = vrot.slane %v6369, %v6384
  %v6386 = vsel %vm5911, %v6378, %v6378
  %v6387 = vsel %vm5913, %v6378, %v6386
  %v6388 = vrot.slane %v6385, 7
  %v6389 = vsel %vm5916, %v6388, %v6387
  %v6390 = vsel %vm5918, %v6388, %v6389
  %v6391 = vsel %vm5920, %v6388, %v6390
  %v6392 = vsel %vm5922, %v6388, %v6391
  %6393 = vrot.lane.b32.xlu0 %v6392, 96
  %v6394 = vpop.permute.xlu0 %6393
  %6396 = vst.msk [vmem:[#allocation8 + $0x2] sm:$0x3] %vm6130, %v6394
  %v6397 = vld [vmem:[%s6297 + $0x6] sm:$0x1]
  %v6398 = vld [vmem:[%s6297 + $0x26] sm:$0x1]
  %v6399 = vld [vmem:[%s6297 + $0x7] sm:$0x1]
  %v6400 = vld [vmem:[%s6297 + $0x27] sm:$0x1]
  %v6401 = vmax.f32 %v6397, %v6399
  %v6402 = vmax.f32 %v6398, %v6400
  %v6406 = vunpack.c.l.s4 1983009808
  %v6407 = vunpack.c.0.s8 %v6406
  %v6408 = vlaneseq
  %v6409 = vshrl.u32 %v6408, 7
  %v6410 = vsub.s32 %v6407, %v6409
  %v6411 = vrot.slane %v6401, %v6410
  %v6413 = vunpack.c.l.s4 1983009808
  %v6414 = vunpack.c.0.s8 %v6413
  %v6415 = vlaneseq
  %v6416 = vshrl.u32 %v6415, 7
  %v6417 = vsub.s32 %v6414, %v6416
  %v6418 = vrot.slane %v6402, %v6417
  %v6419 = vsel %vm5911, %v6411, %v6411
  %v6420 = vsel %vm5913, %v6411, %v6419
  %v6421 = vrot.slane %v6418, 7
  %v6422 = vsel %vm5916, %v6421, %v6420
  %v6423 = vsel %vm5918, %v6421, %v6422
  %v6424 = vsel %vm5920, %v6421, %v6423
  %v6425 = vsel %vm5922, %v6421, %v6424
  %6426 = vrot.lane.b32.xlu0 %v6425, 112
  %v6427 = vpop.permute.xlu0 %6426
  %6429 = vst.msk [vmem:[#allocation8 + $0x2] sm:$0x3] %vm6164, %v6427
  %v6430 = vld [vmem:[#allocation8] sm:$0xf]
  %v6431 = vld [vmem:[%s5] sm:$0xff]
  %v6432 = vld [vmem:[%s5 + $0x8] sm:$0xff]
  %v6433 = vld [vmem:[%s5 + $0x10] sm:$0xff]
  %v6434 = vld [vmem:[%s5 + $0x18] sm:$0xff]
  %v6435 = vld [vmem:[%s5 + $0x20] sm:$0xff]
  %v6436 = vld [vmem:[%s5 + $0x28] sm:$0xff]
  %v6437 = vld [vmem:[%s5 + $0x30] sm:$0xff]
  %v6438 = vld [vmem:[%s5 + $0x38] sm:$0xff]
  %v6439 = vld [vmem:[%s5 + $0x40] sm:$0xff]
  %v6440 = vld [vmem:[%s5 + $0x48] sm:$0xff]
  %v6441 = vld [vmem:[%s5 + $0x50] sm:$0xff]
  %v6442 = vld [vmem:[%s5 + $0x58] sm:$0xff]
  %v6443 = vld [vmem:[%s5 + $0x60] sm:$0xff]
  %v6444 = vld [vmem:[%s5 + $0x68] sm:$0xff]
  %v6445 = vld [vmem:[%s5 + $0x70] sm:$0xff]
  %v6446 = vld [vmem:[%s5 + $0x78] sm:$0xff]
  %v6447 = vld [vmem:[%s5 + $0x80] sm:$0xff]
  %v6448 = vld [vmem:[%s5 + $0x88] sm:$0xff]
  %v6449 = vld [vmem:[%s5 + $0x90] sm:$0xff]
  %v6450 = vld [vmem:[%s5 + $0x98] sm:$0xff]
  %v6451 = vld [vmem:[%s5 + $0xa0] sm:$0xff]
  %v6452 = vld [vmem:[%s5 + $0xa8] sm:$0xff]
  %v6453 = vld [vmem:[%s5 + $0xb0] sm:$0xff]
  %v6454 = vld [vmem:[%s5 + $0xb8] sm:$0xff]
  %v6455 = vld [vmem:[%s5 + $0xc0] sm:$0xff]
  %v6456 = vld [vmem:[%s5 + $0xc8] sm:$0xff]
  %v6457 = vld [vmem:[%s5 + $0xd0] sm:$0xff]
  %v6458 = vld [vmem:[%s5 + $0xd8] sm:$0xff]
  %v6459 = vld [vmem:[%s5 + $0xe0] sm:$0xff]
  %v6460 = vld [vmem:[%s5 + $0xe8] sm:$0xff]
  %v6461 = vld [vmem:[%s5 + $0xf0] sm:$0xff]
  %v6462 = vld [vmem:[%s5 + $0xf8] sm:$0xff]
  %v6463 = vld [vmem:[%s6] sm:$0x1]
  %v6465 = vlaneseq
  %v6466 = vshrl.u32 %v6465, 7
  %v6467 = vsub.s32 0, %v6466
  %v6468 = vrot.slane %v6463, %v6467
  %v6472 = vunpack.c.l.s4 1983009808
  %v6473 = vunpack.c.0.s8 %v6472
  %v6474 = vlaneseq
  %v6475 = vshrl.u32 %v6474, 7
  %v6476 = vsub.s32 %v6473, %v6475
  %v6477 = vrot.slane %v6430, %v6476
  %v6478 = vcombine.high %v6477, %v6477
  %6481 = vmatprep.subr.mxu0 0.0
  %6482 = vmatpush1.msra.mxu0 %v6431
  %6483 = vmatprep.subr.mxu0 0.0
  %6484 = vmatpush1.msra.mxu0 %v6432
  %6485 = vmatprep.subr.mxu0 0.0
  %6486 = vmatpush1.msra.mxu0 %v6433
  %6487 = vmatprep.subr.mxu0 0.0
  %6488 = vmatpush1.msra.mxu0 %v6434
  %6489 = vmatprep.subr.mxu0 0.0
  %6490 = vmatpush1.msra.mxu0 %v6435
  %6491 = vmatprep.subr.mxu0 0.0
  %6492 = vmatpush1.msra.mxu0 %v6436
  %6493 = vmatprep.subr.mxu0 0.0
  %6494 = vmatpush1.msra.mxu0 %v6437
  %6495 = vmatprep.subr.mxu0 0.0
  %6496 = vmatpush1.msra.mxu0 %v6438
  %6497 = vmatprep.subr.mxu0 0.0
  %6498 = vmatpush1.msra.mxu0 %v6439
  %6499 = vmatprep.subr.mxu0 0.0
  %6500 = vmatpush1.msra.mxu0 %v6440
  %6501 = vmatprep.subr.mxu0 0.0
  %6502 = vmatpush1.msra.mxu0 %v6441
  %6503 = vmatprep.subr.mxu0 0.0
  %6504 = vmatpush1.msra.mxu0 %v6442
  %6505 = vmatprep.subr.mxu0 0.0
  %6506 = vmatpush1.msra.mxu0 %v6443
  %6507 = vmatprep.subr.mxu0 0.0
  %6508 = vmatpush1.msra.mxu0 %v6444
  %6509 = vmatprep.subr.mxu0 0.0
  %6510 = vmatpush1.msra.mxu0 %v6445
  %6511 = vmatprep.subr.mxu0 0.0
  %6512 = vmatpush1.msra.mxu0 %v6446
  %6513 = vmatprep.subr.mxu0 0.0
  %6514 = vmatpush1.msra.mxu0 %v6447
  %6515 = vmatprep.subr.mxu0 0.0
  %6516 = vmatpush1.msra.mxu0 %v6448
  %6517 = vmatprep.subr.mxu0 0.0
  %6518 = vmatpush1.msra.mxu0 %v6449
  %6519 = vmatprep.subr.mxu0 0.0
  %6520 = vmatpush1.msra.mxu0 %v6450
  %6521 = vmatprep.subr.mxu0 0.0
  %6522 = vmatpush1.msra.mxu0 %v6451
  %6523 = vmatprep.subr.mxu0 0.0
  %6524 = vmatpush1.msra.mxu0 %v6452
  %6525 = vmatprep.subr.mxu0 0.0
  %6526 = vmatpush1.msra.mxu0 %v6453
  %6527 = vmatprep.subr.mxu0 0.0
  %6528 = vmatpush1.msra.mxu0 %v6454
  %6529 = vmatprep.subr.mxu0 0.0
  %6530 = vmatpush1.msra.mxu0 %v6455
  %6531 = vmatprep.subr.mxu0 0.0
  %6532 = vmatpush1.msra.mxu0 %v6456
  %6533 = vmatprep.subr.mxu0 0.0
  %6534 = vmatpush1.msra.mxu0 %v6457
  %6535 = vmatprep.subr.mxu0 0.0
  %6536 = vmatpush1.msra.mxu0 %v6458
  %6537 = vmatprep.subr.mxu0 0.0
  %6538 = vmatpush1.msra.mxu0 %v6459
  %6539 = vmatprep.subr.mxu0 0.0
  %6540 = vmatpush1.msra.mxu0 %v6460
  %6541 = vmatprep.subr.mxu0 0.0
  %6542 = vmatpush1.msra.mxu0 %v6461
  %6543 = vmatprep.subr.mxu0 0.0
  %6544 = vmatpush1.msra.mxu0 %v6462
  %6545 = vmatprep.mubr.f32.mxu0 %v6478
  %6546 = vmatmul.mubr.f32.gmra.mrb[0].mxu0 %v6477
  %v6547 = vpop.f32.mrb[0].mxu0
  %v6548 = vadd.f32 %v6468, %v6547
  %v6549 = vpop.f32.mrb[0].mxu0
  %6550 = vdwg.mxu0
  %v6551 = vmax.f32 %v6548, 0.0
  %v6552 = vld [vmem:[%s7] sm:$0xff]
  %v6553 = vld [vmem:[%s7 + $0x8] sm:$0xff]
  %v6554 = vld [vmem:[%s7 + $0x10] sm:$0xff]
  %v6555 = vld [vmem:[%s7 + $0x18] sm:$0xff]
  %v6556 = vld [vmem:[#allocation9] sm:$0x1]
  %v6558 = vlaneseq
  %v6559 = vshrl.u32 %v6558, 7
  %v6560 = vsub.s32 0, %v6559
  %v6561 = vrot.slane %v6556, %v6560
  %vm6563 = vcmask 261120
  %v6565 = vsel %vm6563, %v6551, 0
  %6567 = vmatprep.subr.mxu0 0.0
  %6568 = vmatpush1.msra.mxu0 %v6552
  %6569 = vmatprep.subr.mxu0 0.0
  %6570 = vmatpush1.msra.mxu0 %v6553
  %6571 = vmatprep.subr.mxu0 0.0
  %6572 = vmatpush1.msra.mxu0 %v6554
  %6573 = vmatprep.subr.mxu0 0.0
  %6574 = vmatpush1.msra.mxu0 %v6555
  %6575 = vmatprep.subr.mxu0 0.0
  %6576 = vmatpush1.msra.mxu0 0.0
  %6577 = vmatprep.subr.mxu0 0.0
  %6578 = vmatpush1.msra.mxu0 0.0
  %6579 = vmatprep.subr.mxu0 0.0
  %6580 = vmatpush1.msra.mxu0 0.0
  %6581 = vmatprep.subr.mxu0 0.0
  %6582 = vmatpush1.msra.mxu0 0.0
  %6583 = vmatprep.subr.mxu0 0.0
  %6584 = vmatpush1.msra.mxu0 0.0
  %6585 = vmatprep.subr.mxu0 0.0
  %6586 = vmatpush1.msra.mxu0 0.0
  %6587 = vmatprep.subr.mxu0 0.0
  %6588 = vmatpush1.msra.mxu0 0.0
  %6589 = vmatprep.subr.mxu0 0.0
  %6590 = vmatpush1.msra.mxu0 0.0
  %6591 = vmatprep.subr.mxu0 0.0
  %6592 = vmatpush1.msra.mxu0 0.0
  %6593 = vmatprep.subr.mxu0 0.0
  %6594 = vmatpush1.msra.mxu0 0.0
  %6595 = vmatprep.subr.mxu0 0.0
  %6596 = vmatpush1.msra.mxu0 0.0
  %6597 = vmatprep.subr.mxu0 0.0
  %6598 = vmatpush1.msra.mxu0 0.0
  %6599 = vmatprep.subr.mxu0 0.0
  %6600 = vmatpush1.msra.mxu0 0.0
  %6601 = vmatprep.subr.mxu0 0.0
  %6602 = vmatpush1.msra.mxu0 0.0
  %6603 = vmatprep.subr.mxu0 0.0
  %6604 = vmatpush1.msra.mxu0 0.0
  %6605 = vmatprep.subr.mxu0 0.0
  %6606 = vmatpush1.msra.mxu0 0.0
  %6607 = vmatprep.subr.mxu0 0.0
  %6608 = vmatpush1.msra.mxu0 0.0
  %6609 = vmatprep.subr.mxu0 0.0
  %6610 = vmatpush1.msra.mxu0 0.0
  %6611 = vmatprep.subr.mxu0 0.0
  %6612 = vmatpush1.msra.mxu0 0.0
  %6613 = vmatprep.subr.mxu0 0.0
  %6614 = vmatpush1.msra.mxu0 0.0
  %6615 = vmatprep.subr.mxu0 0.0
  %6616 = vmatpush1.msra.mxu0 0.0
  %6617 = vmatprep.subr.mxu0 0.0
  %6618 = vmatpush1.msra.mxu0 0.0
  %6619 = vmatprep.subr.mxu0 0.0
  %6620 = vmatpush1.msra.mxu0 0.0
  %6621 = vmatprep.subr.mxu0 0.0
  %6622 = vmatpush1.msra.mxu0 0.0
  %6623 = vmatprep.subr.mxu0 0.0
  %6624 = vmatpush1.msra.mxu0 0.0
  %6625 = vmatprep.subr.mxu0 0.0
  %6626 = vmatpush1.msra.mxu0 0.0
  %6627 = vmatprep.subr.mxu0 0.0
  %6628 = vmatpush1.msra.mxu0 0.0
  %6629 = vmatprep.subr.mxu0 0.0
  %6630 = vmatpush1.msra.mxu0 0.0
  %6631 = vmatprep.mubr.f32.mxu0 0.0
  %6632 = vmatmul.mubr.f32.gmra.mrb[0].mxu0 %v6565
  %v6633 = vpop.f32.mrb[0].mxu0
  %v6634 = vadd.f32 %v6561, %v6633
  %v6635 = vpop.f32.mrb[0].mxu0
  %6636 = vdwg.mxu0
  %v6637 = vsub.f32 0.0, %v6634
  %v6638 = vmul.f32 %v6637, 1.442695
  %v6639 = vpow.pop %v6638
  %v6640 = vadd.f32 %v6639, 1.0
  %v6641 = vrcp.pop %v6640
  %v6642 = vmul.f32 1.0, %v6641
  %6643 = vst.msk [vmem:[%s9] sm:$0x3] %vm37, %v6642
  // Predicated region
  $region38: #{cnn_forward.1} parent=0 // pred_check
    _
  $region39: #{cnn_forward.1} parent=0 // pred_check_branch
    %6645 = sbr.rel (0) target = $region41
  $region40: #{cnn_forward.1} parent=0 // pred_region
    _
  $region41: #{cnn_forward.1} parent=0 // pred_fallthru
    _
  // Predicated region
  $region42: #{cnn_forward.1} parent=0 // pred_check
    _
  $region43: #{cnn_forward.1} parent=0 // pred_check_branch
    %6647 = sbr.rel (0) target = $region45
  $region44: #{cnn_forward.1} parent=0 // pred_region
    _
  $region45: #{cnn_forward.1} parent=0 // pred_fallthru
    _

</llo_original>
